<compile_context>
chip_gen: v5e
topology: v5e:2x2
jax: 0.10.0
libtpu: 0.0.40
codegen_flags: <defaults>
</compile_context>

<pallas_src>
import jax
import jax.numpy as jnp
from jax.experimental import pallas as pl
from jax.experimental.pallas import tpu as pltpu


def _sigmoid(v):
    # One EUP transcendental per vreg; exact sigmoid, no overflow for large |v|.
    return 0.5 * jnp.tanh(0.5 * v) + 0.5


def _lenet_kernel(cols1_ref, w1_ref, b1_ref, w2_ref, b2_ref, w3_ref, b3_ref,
                  w4_ref, b4_ref, w5_ref, b5_ref, o_ref, pool1_ref, x3_ref):
    """Entire LeNet forward for one batch tile; everything stays in VMEM/vregs."""
    f32 = jnp.float32
    T = o_ref.shape[0]          # batch tile
    R = 196 * T                 # rows of the (14x14, batch-minor) pool1 plane

    # ---- conv1 (im2col matmul over the 4 pooling phases) + sigmoid + pool ----
    # cols1 rows:   (Y*14 + X) * T + n            (pooled position, batch minor)
    # cols1 lanes:  phase*25 + (kh*5 + kw)        (phase = a*2 + b of AvgPool2d)
    # w1 is block-diagonal (100, 24), so z1 lane p*6+c is conv1 phase p, chan c.
    z1 = jnp.dot(cols1_ref[...], w1_ref[...], preferred_element_type=f32) + b1_ref[...]
    s1 = _sigmoid(z1)                                           # (196T, 24)
    # AvgPool2d(2,2): mean of the 4 phases (the 0.25 is folded into w2).
    pool1 = s1[:, 0:6] + s1[:, 6:12] + s1[:, 12:18] + s1[:, 18:24]   # (196T, 6)

    # Stage pool1 in a flat scratch; pad rows so every row-shifted tap load below
    # stays in bounds (padding only feeds conv2 rows that are later discarded).
    pool1_ref[0:R, :] = pool1
    pool1_ref[R:256 * T, :] = jnp.zeros((60 * T, 6), f32)

    # ---- conv2 (6->16, 5x5 valid) as 25 row-shifted MXU dots -----------------
    # Output row (y*14+x)*T + n needs pool1 row ((y+i)*14 + (x+j))*T + n, i.e. a
    # constant row shift of (i*14+j)*T per tap -> contiguous slice loads.
    acc2 = jnp.dot(pool1_ref[0:R, :], w2_ref[0:6, :],
                   preferred_element_type=f32) + b2_ref[...]
    for t in range(1, 25):
        i, j = t // 5, t % 5
        s = (i * 14 + j) * T
        acc2 = acc2 + jnp.dot(pool1_ref[s:s + R, :], w2_ref[t * 6:(t + 1) * 6, :],
                              preferred_element_type=f32)
    s2 = _sigmoid(acc2)                                         # (196T, 16)

    # ---- AvgPool2d(2,2) + Flatten -> lane-dense (T, 400) ---------------------
    # Siblings of pooled cell (yy,xx) sit at row offsets {0,1,14,15}*T from the
    # base row (28yy+2xx)*T; 0.25 is folded into w3.
    for yy in range(5):
        for xx in range(5):
            base = (28 * yy + 2 * xx) * T
            v = (s2[base:base + T, :] +
                 s2[base + T:base + 2 * T, :] +
                 s2[base + 14 * T:base + 15 * T, :] +
                 s2[base + 15 * T:base + 16 * T, :])            # (T, 16)
            k = yy * 5 + xx
            x3_ref[:, k * 16:(k + 1) * 16] = v

    # ---- fc1 + sigmoid, fc2 + sigmoid, fc3 (three MXU dots) ------------------
    h = _sigmoid(jnp.dot(x3_ref[...], w3_ref[...], preferred_element_type=f32)
                 + b3_ref[...])
    h = _sigmoid(jnp.dot(h, w4_ref[...], preferred_element_type=f32) + b4_ref[...])
    o_ref[...] = jnp.dot(h, w5_ref[...], preferred_element_type=f32) + b5_ref[...]


def lenet_forward(x, params):
    """x: (N, 1, 28, 28) float32; params in PyTorch layout."""
    (w1, b1, w2, b2, w3, b3, w4, b4, w5, b5) = params
    f32 = jnp.float32
    n = x.shape[0]

    # Batch tiling: one grid step per tile (tiles run in parallel across cores).
    if n <= 16:
        tile, n_pad = n, n
    else:
        tile = 16
        n_pad = ((n + tile - 1) // tile) * tile
    num_tiles = n_pad // tile
    R = 196 * tile

    # ---- tiny one-time layout prep in the wrapper (XLA on kB-sized data) -----
    xin = x[:, 0]
    if n_pad != n:
        xin = jnp.pad(xin, ((0, n_pad - n), (0, 0), (0, 0)))
    xpad = jnp.pad(xin, ((0, 0), (2, 2), (2, 2)))                  # (n_pad, 32, 32)

    # conv1 im2col for the 4 AvgPool phases: [n, Y, X, p, kh*5+kw]
    phase_cols = []
    for a in (0, 1):
        for b in (0, 1):
            taps = [xpad[:, a + i:a + i + 28:2, b + j:b + j + 28:2]
                    for i in range(5) for j in range(5)]
            phase_cols.append(jnp.stack(taps, axis=-1))            # (n_pad,14,14,25)
    cols1 = jnp.stack(phase_cols, axis=3)                          # (n_pad,14,14,4,25)
    cols1 = cols1.reshape(n_pad, 196, 100)
    # tile-major, then (pooled position major, batch minor) inside each tile
    cols1 = (cols1.reshape(num_tiles, tile, 196, 100)
                  .transpose(0, 2, 1, 3)
                  .reshape(num_tiles * R, 100))

    # Pre-permuted weights (one-time relayout, removes all in-kernel relayouts).
    w1m = w1.reshape(6, 25).T                                      # (25, 6)
    w1blk = jnp.kron(jnp.eye(4, dtype=f32), w1m)                   # (100, 24) block-diag
    b1c = jnp.tile(b1, 4).reshape(1, 24)
    w2c = 0.25 * w2.transpose(2, 3, 1, 0).reshape(150, 16)         # rows=(kh,kw,cin); pool1 /4 folded
    b2c = b2.reshape(1, 16)
    w3c = 0.25 * w3.reshape(120, 16, 5, 5).transpose(2, 3, 1, 0).reshape(400, 120)
    b3c = b3.reshape(1, 120)                                       # rows=(y,x,c); pool2 /4 folded
    w4c = w4.T
    b4c = b4.reshape(1, 84)
    w5c = w5.T
    b5c = b5.reshape(1, 10)

    def const_spec(arr):
        return pl.BlockSpec(arr.shape, lambda bidx: (0, 0))

    out = pl.pallas_call(
        _lenet_kernel,
        out_shape=jax.ShapeDtypeStruct((n_pad, 10), f32),
        grid=(num_tiles,),
        in_specs=[pl.BlockSpec((R, 100), lambda bidx: (bidx, 0)),
                  const_spec(w1blk), const_spec(b1c),
                  const_spec(w2c), const_spec(b2c),
                  const_spec(w3c), const_spec(b3c),
                  const_spec(w4c), const_spec(b4c),
                  const_spec(w5c), const_spec(b5c)],
        out_specs=pl.BlockSpec((tile, 10), lambda bidx: (bidx, 0)),
        scratch_shapes=[pltpu.VMEM((256 * tile, 6), f32),          # staged pool1 (+ pad rows)
                        pltpu.VMEM((tile, 400), f32)],             # pooled/flattened fc1 input
        compiler_params=pltpu.CompilerParams(
            dimension_semantics=("parallel",),
            vmem_limit_bytes=64 * 1024 * 1024),
    )(cols1, w1blk, b1c, w2c, b2c, w3c, b3c, w4c, b4c, w5c, b5c)

    return out[:n] if n_pad != n else out


def init_params(key):
    """Deterministic init mimicking PyTorch's uniform(-1/sqrt(fan_in), +)."""
    ks = jax.random.split(key, 10)

    def u(k, shape, fan_in):
        bound = 1.0 / jnp.sqrt(jnp.float32(fan_in))
        return jax.random.uniform(k, shape, jnp.float32, -bound, bound)

    w1 = u(ks[0], (6, 1, 5, 5), 1 * 25);   b1 = u(ks[1], (6,), 1 * 25)
    w2 = u(ks[2], (16, 6, 5, 5), 6 * 25);  b2 = u(ks[3], (16,), 6 * 25)
    w3 = u(ks[4], (120, 400), 400);        b3 = u(ks[5], (120,), 400)
    w4 = u(ks[6], (84, 120), 120);         b4 = u(ks[7], (84,), 120)
    w5 = u(ks[8], (10, 84), 84);           b5 = u(ks[9], (10,), 84)
    return (w1, b1, w2, b2, w3, b3, w4, b4, w5, b5)


if __name__ == "__main__":
    key = jax.random.PRNGKey(0)
    pkey, xkey = jax.random.split(key)
    params = init_params(pkey)
    # LeNet's 16*5*5 flatten implies 28x28 inputs; small batch of 2.
    x = jax.random.normal(xkey, (2, 1, 28, 28), jnp.float32)

    out = jax.jit(lenet_forward)(x, params)
    out = jax.block_until_ready(out)
    assert out.shape == (2, 10) and out.dtype == jnp.float32
    print("KERNEL_OK")
</pallas_src>

<mosaic_0001>
module attributes {stable_mosaic.version = 11 : i64} {
  func.func @_lenet_kernel(%arg0: i32, %arg1: memref<392x100xf32, #tpu.memory_space<vmem>>, %arg2: memref<100x24xf32, #tpu.memory_space<vmem>>, %arg3: memref<1x24xf32, #tpu.memory_space<vmem>>, %arg4: memref<150x16xf32, #tpu.memory_space<vmem>>, %arg5: memref<1x16xf32, #tpu.memory_space<vmem>>, %arg6: memref<400x120xf32, #tpu.memory_space<vmem>>, %arg7: memref<1x120xf32, #tpu.memory_space<vmem>>, %arg8: memref<120x84xf32, #tpu.memory_space<vmem>>, %arg9: memref<1x84xf32, #tpu.memory_space<vmem>>, %arg10: memref<84x10xf32, #tpu.memory_space<vmem>>, %arg11: memref<1x10xf32, #tpu.memory_space<vmem>>, %arg12: memref<2x10xf32, #tpu.memory_space<vmem>>, %arg13: memref<512x6xf32, #tpu.memory_space<vmem>>, %arg14: memref<2x400xf32, #tpu.memory_space<vmem>>) attributes {dimension_semantics = [#tpu.dimension_semantics<parallel>], iteration_bounds = array<i64: 1>, scalar_prefetch = 0 : i64, scratch_operands = 2 : i64, tpu.core_type = #tpu.core_type<tc>, window_params = [{transform_indices = @transform_0, window_bounds = array<i64: 392, 100>}, {pipeline_mode = #tpu.pipeline_mode<synchronous>, transform_indices = @transform_1, window_bounds = array<i64: 100, 24>}, {pipeline_mode = #tpu.pipeline_mode<synchronous>, transform_indices = @transform_2, window_bounds = array<i64: 1, 24>}, {pipeline_mode = #tpu.pipeline_mode<synchronous>, transform_indices = @transform_3, window_bounds = array<i64: 150, 16>}, {pipeline_mode = #tpu.pipeline_mode<synchronous>, transform_indices = @transform_4, window_bounds = array<i64: 1, 16>}, {pipeline_mode = #tpu.pipeline_mode<synchronous>, transform_indices = @transform_5, window_bounds = array<i64: 400, 120>}, {pipeline_mode = #tpu.pipeline_mode<synchronous>, transform_indices = @transform_6, window_bounds = array<i64: 1, 120>}, {pipeline_mode = #tpu.pipeline_mode<synchronous>, transform_indices = @transform_7, window_bounds = array<i64: 120, 84>}, {pipeline_mode = #tpu.pipeline_mode<synchronous>, transform_indices = @transform_8, window_bounds = array<i64: 1, 84>}, {pipeline_mode = #tpu.pipeline_mode<synchronous>, transform_indices = @transform_9, window_bounds = array<i64: 84, 10>}, {pipeline_mode = #tpu.pipeline_mode<synchronous>, transform_indices = @transform_10, window_bounds = array<i64: 1, 10>}, {transform_indices = @transform_11, window_bounds = array<i64: 2, 10>}]} {
    %c0 = arith.constant 0 : index
    %c0_0 = arith.constant 0 : index
    %0 = vector.load %arg1[%c0, %c0_0] : memref<392x100xf32, #tpu.memory_space<vmem>>, vector<392x100xf32>
    %c0_1 = arith.constant 0 : index
    %c0_2 = arith.constant 0 : index
    %1 = vector.load %arg2[%c0_1, %c0_2] : memref<100x24xf32, #tpu.memory_space<vmem>>, vector<100x24xf32>
    %cst = arith.constant dense<0.000000e+00> : vector<392x24xf32>
    %2 = tpu.matmul %0, %1, %cst {dimension_numbers = #tpu.dot_dimension_numbers<[1], [0], [0], [1], [0, 0, 1, 1], [], []>} : vector<392x100xf32>, vector<100x24xf32>, vector<392x24xf32> -> vector<392x24xf32>
    %c0_3 = arith.constant 0 : index
    %c0_4 = arith.constant 0 : index
    %3 = vector.load %arg3[%c0_3, %c0_4] : memref<1x24xf32, #tpu.memory_space<vmem>>, vector<1x24xf32>
    %4 = vector.broadcast %3 : vector<1x24xf32> to vector<392x24xf32>
    %5 = arith.addf %2, %4 : vector<392x24xf32>
    %cst_5 = arith.constant 5.000000e-01 : f32
    %6 = vector.broadcast %cst_5 : f32 to vector<392x24xf32>
    %7 = arith.mulf %6, %5 : vector<392x24xf32>
    %8 = math.tanh %7 : vector<392x24xf32>
    %cst_6 = arith.constant 5.000000e-01 : f32
    %9 = vector.broadcast %cst_6 : f32 to vector<392x24xf32>
    %10 = arith.mulf %9, %8 : vector<392x24xf32>
    %cst_7 = arith.constant 5.000000e-01 : f32
    %11 = vector.broadcast %cst_7 : f32 to vector<392x24xf32>
    %12 = arith.addf %10, %11 : vector<392x24xf32>
    %13 = vector.extract_strided_slice %12 {offsets = [0, 0], sizes = [392, 6], strides = [1, 1]} : vector<392x24xf32> to vector<392x6xf32>
    %14 = vector.extract_strided_slice %12 {offsets = [0, 6], sizes = [392, 6], strides = [1, 1]} : vector<392x24xf32> to vector<392x6xf32>
    %15 = arith.addf %13, %14 : vector<392x6xf32>
    %16 = vector.extract_strided_slice %12 {offsets = [0, 12], sizes = [392, 6], strides = [1, 1]} : vector<392x24xf32> to vector<392x6xf32>
    %17 = arith.addf %15, %16 : vector<392x6xf32>
    %18 = vector.extract_strided_slice %12 {offsets = [0, 18], sizes = [392, 6], strides = [1, 1]} : vector<392x24xf32> to vector<392x6xf32>
    %19 = arith.addf %17, %18 : vector<392x6xf32>
    %c0_8 = arith.constant 0 : index
    %c0_9 = arith.constant 0 : index
    %20 = vector.load %arg13[%c0_8, %c0_9] : memref<512x6xf32, #tpu.memory_space<vmem>>, vector<392x6xf32>
    tpu.vector_store %arg13[%c0_8, %c0_9], %19 {strides = array<i32>} : memref<512x6xf32, #tpu.memory_space<vmem>>, vector<392x6xf32>,
    %cst_10 = arith.constant 0.000000e+00 : f32
    %21 = vector.broadcast %cst_10 : f32 to vector<120x6xf32>
    %c392 = arith.constant 392 : index
    %c0_11 = arith.constant 0 : index
    %22 = vector.load %arg13[%c392, %c0_11] : memref<512x6xf32, #tpu.memory_space<vmem>>, vector<120x6xf32>
    tpu.vector_store %arg13[%c392, %c0_11], %21 {strides = array<i32>} : memref<512x6xf32, #tpu.memory_space<vmem>>, vector<120x6xf32>,
    %c0_12 = arith.constant 0 : index
    %c0_13 = arith.constant 0 : index
    %23 = vector.load %arg13[%c0_12, %c0_13] : memref<512x6xf32, #tpu.memory_space<vmem>>, vector<392x6xf32>
    %c0_14 = arith.constant 0 : index
    %c0_15 = arith.constant 0 : index
    %24 = vector.load %arg4[%c0_14, %c0_15] : memref<150x16xf32, #tpu.memory_space<vmem>>, vector<6x16xf32>
    %cst_16 = arith.constant dense<0.000000e+00> : vector<392x16xf32>
    %25 = tpu.matmul %23, %24, %cst_16 {dimension_numbers = #tpu.dot_dimension_numbers<[1], [0], [0], [1], [0, 0, 1, 1], [], []>} : vector<392x6xf32>, vector<6x16xf32>, vector<392x16xf32> -> vector<392x16xf32>
    %c0_17 = arith.constant 0 : index
    %c0_18 = arith.constant 0 : index
    %26 = vector.load %arg5[%c0_17, %c0_18] : memref<1x16xf32, #tpu.memory_space<vmem>>, vector<1x16xf32>
    %27 = vector.broadcast %26 : vector<1x16xf32> to vector<392x16xf32>
    %28 = arith.addf %25, %27 : vector<392x16xf32>
    %c2 = arith.constant 2 : index
    %c0_19 = arith.constant 0 : index
    %29 = vector.load %arg13[%c2, %c0_19] : memref<512x6xf32, #tpu.memory_space<vmem>>, vector<392x6xf32>
    %c6 = arith.constant 6 : index
    %c0_20 = arith.constant 0 : index
    %30 = vector.load %arg4[%c6, %c0_20] : memref<150x16xf32, #tpu.memory_space<vmem>>, vector<6x16xf32>
    %cst_21 = arith.constant dense<0.000000e+00> : vector<392x16xf32>
    %31 = tpu.matmul %29, %30, %cst_21 {dimension_numbers = #tpu.dot_dimension_numbers<[1], [0], [0], [1], [0, 0, 1, 1], [], []>} : vector<392x6xf32>, vector<6x16xf32>, vector<392x16xf32> -> vector<392x16xf32>
    %32 = arith.addf %28, %31 : vector<392x16xf32>
    %c4 = arith.constant 4 : index
    %c0_22 = arith.constant 0 : index
    %33 = vector.load %arg13[%c4, %c0_22] : memref<512x6xf32, #tpu.memory_space<vmem>>, vector<392x6xf32>
    %c12 = arith.constant 12 : index
    %c0_23 = arith.constant 0 : index
    %34 = vector.load %arg4[%c12, %c0_23] : memref<150x16xf32, #tpu.memory_space<vmem>>, vector<6x16xf32>
    %cst_24 = arith.constant dense<0.000000e+00> : vector<392x16xf32>
    %35 = tpu.matmul %33, %34, %cst_24 {dimension_numbers = #tpu.dot_dimension_numbers<[1], [0], [0], [1], [0, 0, 1, 1], [], []>} : vector<392x6xf32>, vector<6x16xf32>, vector<392x16xf32> -> vector<392x16xf32>
    %36 = arith.addf %32, %35 : vector<392x16xf32>
    %c6_25 = arith.constant 6 : index
    %c0_26 = arith.constant 0 : index
    %37 = vector.load %arg13[%c6_25, %c0_26] : memref<512x6xf32, #tpu.memory_space<vmem>>, vector<392x6xf32>
    %c18 = arith.constant 18 : index
    %c0_27 = arith.constant 0 : index
    %38 = vector.load %arg4[%c18, %c0_27] : memref<150x16xf32, #tpu.memory_space<vmem>>, vector<6x16xf32>
    %cst_28 = arith.constant dense<0.000000e+00> : vector<392x16xf32>
    %39 = tpu.matmul %37, %38, %cst_28 {dimension_numbers = #tpu.dot_dimension_numbers<[1], [0], [0], [1], [0, 0, 1, 1], [], []>} : vector<392x6xf32>, vector<6x16xf32>, vector<392x16xf32> -> vector<392x16xf32>
    %40 = arith.addf %36, %39 : vector<392x16xf32>
    %c8 = arith.constant 8 : index
    %c0_29 = arith.constant 0 : index
    %41 = vector.load %arg13[%c8, %c0_29] : memref<512x6xf32, #tpu.memory_space<vmem>>, vector<392x6xf32>
    %c24 = arith.constant 24 : index
    %c0_30 = arith.constant 0 : index
    %42 = vector.load %arg4[%c24, %c0_30] : memref<150x16xf32, #tpu.memory_space<vmem>>, vector<6x16xf32>
    %cst_31 = arith.constant dense<0.000000e+00> : vector<392x16xf32>
    %43 = tpu.matmul %41, %42, %cst_31 {dimension_numbers = #tpu.dot_dimension_numbers<[1], [0], [0], [1], [0, 0, 1, 1], [], []>} : vector<392x6xf32>, vector<6x16xf32>, vector<392x16xf32> -> vector<392x16xf32>
    %44 = arith.addf %40, %43 : vector<392x16xf32>
    %c28 = arith.constant 28 : index
    %c0_32 = arith.constant 0 : index
    %45 = vector.load %arg13[%c28, %c0_32] : memref<512x6xf32, #tpu.memory_space<vmem>>, vector<392x6xf32>
    %c30 = arith.constant 30 : index
    %c0_33 = arith.constant 0 : index
    %46 = vector.load %arg4[%c30, %c0_33] : memref<150x16xf32, #tpu.memory_space<vmem>>, vector<6x16xf32>
    %cst_34 = arith.constant dense<0.000000e+00> : vector<392x16xf32>
    %47 = tpu.matmul %45, %46, %cst_34 {dimension_numbers = #tpu.dot_dimension_numbers<[1], [0], [0], [1], [0, 0, 1, 1], [], []>} : vector<392x6xf32>, vector<6x16xf32>, vector<392x16xf32> -> vector<392x16xf32>
    %48 = arith.addf %44, %47 : vector<392x16xf32>
    %c30_35 = arith.constant 30 : index
    %c0_36 = arith.constant 0 : index
    %49 = vector.load %arg13[%c30_35, %c0_36] : memref<512x6xf32, #tpu.memory_space<vmem>>, vector<392x6xf32>
    %c36 = arith.constant 36 : index
    %c0_37 = arith.constant 0 : index
    %50 = vector.load %arg4[%c36, %c0_37] : memref<150x16xf32, #tpu.memory_space<vmem>>, vector<6x16xf32>
    %cst_38 = arith.constant dense<0.000000e+00> : vector<392x16xf32>
    %51 = tpu.matmul %49, %50, %cst_38 {dimension_numbers = #tpu.dot_dimension_numbers<[1], [0], [0], [1], [0, 0, 1, 1], [], []>} : vector<392x6xf32>, vector<6x16xf32>, vector<392x16xf32> -> vector<392x16xf32>
    %52 = arith.addf %48, %51 : vector<392x16xf32>
    %c32 = arith.constant 32 : index
    %c0_39 = arith.constant 0 : index
    %53 = vector.load %arg13[%c32, %c0_39] : memref<512x6xf32, #tpu.memory_space<vmem>>, vector<392x6xf32>
    %c42 = arith.constant 42 : index
    %c0_40 = arith.constant 0 : index
    %54 = vector.load %arg4[%c42, %c0_40] : memref<150x16xf32, #tpu.memory_space<vmem>>, vector<6x16xf32>
    %cst_41 = arith.constant dense<0.000000e+00> : vector<392x16xf32>
    %55 = tpu.matmul %53, %54, %cst_41 {dimension_numbers = #tpu.dot_dimension_numbers<[1], [0], [0], [1], [0, 0, 1, 1], [], []>} : vector<392x6xf32>, vector<6x16xf32>, vector<392x16xf32> -> vector<392x16xf32>
    %56 = arith.addf %52, %55 : vector<392x16xf32>
    %c34 = arith.constant 34 : index
    %c0_42 = arith.constant 0 : index
    %57 = vector.load %arg13[%c34, %c0_42] : memref<512x6xf32, #tpu.memory_space<vmem>>, vector<392x6xf32>
    %c48 = arith.constant 48 : index
    %c0_43 = arith.constant 0 : index
    %58 = vector.load %arg4[%c48, %c0_43] : memref<150x16xf32, #tpu.memory_space<vmem>>, vector<6x16xf32>
    %cst_44 = arith.constant dense<0.000000e+00> : vector<392x16xf32>
    %59 = tpu.matmul %57, %58, %cst_44 {dimension_numbers = #tpu.dot_dimension_numbers<[1], [0], [0], [1], [0, 0, 1, 1], [], []>} : vector<392x6xf32>, vector<6x16xf32>, vector<392x16xf32> -> vector<392x16xf32>
    %60 = arith.addf %56, %59 : vector<392x16xf32>
    %c36_45 = arith.constant 36 : index
    %c0_46 = arith.constant 0 : index
    %61 = vector.load %arg13[%c36_45, %c0_46] : memref<512x6xf32, #tpu.memory_space<vmem>>, vector<392x6xf32>
    %c54 = arith.constant 54 : index
    %c0_47 = arith.constant 0 : index
    %62 = vector.load %arg4[%c54, %c0_47] : memref<150x16xf32, #tpu.memory_space<vmem>>, vector<6x16xf32>
    %cst_48 = arith.constant dense<0.000000e+00> : vector<392x16xf32>
    %63 = tpu.matmul %61, %62, %cst_48 {dimension_numbers = #tpu.dot_dimension_numbers<[1], [0], [0], [1], [0, 0, 1, 1], [], []>} : vector<392x6xf32>, vector<6x16xf32>, vector<392x16xf32> -> vector<392x16xf32>
    %64 = arith.addf %60, %63 : vector<392x16xf32>
    %c56 = arith.constant 56 : index
    %c0_49 = arith.constant 0 : index
    %65 = vector.load %arg13[%c56, %c0_49] : memref<512x6xf32, #tpu.memory_space<vmem>>, vector<392x6xf32>
    %c60 = arith.constant 60 : index
    %c0_50 = arith.constant 0 : index
    %66 = vector.load %arg4[%c60, %c0_50] : memref<150x16xf32, #tpu.memory_space<vmem>>, vector<6x16xf32>
    %cst_51 = arith.constant dense<0.000000e+00> : vector<392x16xf32>
    %67 = tpu.matmul %65, %66, %cst_51 {dimension_numbers = #tpu.dot_dimension_numbers<[1], [0], [0], [1], [0, 0, 1, 1], [], []>} : vector<392x6xf32>, vector<6x16xf32>, vector<392x16xf32> -> vector<392x16xf32>
    %68 = arith.addf %64, %67 : vector<392x16xf32>
    %c58 = arith.constant 58 : index
    %c0_52 = arith.constant 0 : index
    %69 = vector.load %arg13[%c58, %c0_52] : memref<512x6xf32, #tpu.memory_space<vmem>>, vector<392x6xf32>
    %c66 = arith.constant 66 : index
    %c0_53 = arith.constant 0 : index
    %70 = vector.load %arg4[%c66, %c0_53] : memref<150x16xf32, #tpu.memory_space<vmem>>, vector<6x16xf32>
    %cst_54 = arith.constant dense<0.000000e+00> : vector<392x16xf32>
    %71 = tpu.matmul %69, %70, %cst_54 {dimension_numbers = #tpu.dot_dimension_numbers<[1], [0], [0], [1], [0, 0, 1, 1], [], []>} : vector<392x6xf32>, vector<6x16xf32>, vector<392x16xf32> -> vector<392x16xf32>
    %72 = arith.addf %68, %71 : vector<392x16xf32>
    %c60_55 = arith.constant 60 : index
    %c0_56 = arith.constant 0 : index
    %73 = vector.load %arg13[%c60_55, %c0_56] : memref<512x6xf32, #tpu.memory_space<vmem>>, vector<392x6xf32>
    %c72 = arith.constant 72 : index
    %c0_57 = arith.constant 0 : index
    %74 = vector.load %arg4[%c72, %c0_57] : memref<150x16xf32, #tpu.memory_space<vmem>>, vector<6x16xf32>
    %cst_58 = arith.constant dense<0.000000e+00> : vector<392x16xf32>
    %75 = tpu.matmul %73, %74, %cst_58 {dimension_numbers = #tpu.dot_dimension_numbers<[1], [0], [0], [1], [0, 0, 1, 1], [], []>} : vector<392x6xf32>, vector<6x16xf32>, vector<392x16xf32> -> vector<392x16xf32>
    %76 = arith.addf %72, %75 : vector<392x16xf32>
    %c62 = arith.constant 62 : index
    %c0_59 = arith.constant 0 : index
    %77 = vector.load %arg13[%c62, %c0_59] : memref<512x6xf32, #tpu.memory_space<vmem>>, vector<392x6xf32>
    %c78 = arith.constant 78 : index
    %c0_60 = arith.constant 0 : index
    %78 = vector.load %arg4[%c78, %c0_60] : memref<150x16xf32, #tpu.memory_space<vmem>>, vector<6x16xf32>
    %cst_61 = arith.constant dense<0.000000e+00> : vector<392x16xf32>
    %79 = tpu.matmul %77, %78, %cst_61 {dimension_numbers = #tpu.dot_dimension_numbers<[1], [0], [0], [1], [0, 0, 1, 1], [], []>} : vector<392x6xf32>, vector<6x16xf32>, vector<392x16xf32> -> vector<392x16xf32>
    %80 = arith.addf %76, %79 : vector<392x16xf32>
    %c64 = arith.constant 64 : index
    %c0_62 = arith.constant 0 : index
    %81 = vector.load %arg13[%c64, %c0_62] : memref<512x6xf32, #tpu.memory_space<vmem>>, vector<392x6xf32>
    %c84 = arith.constant 84 : index
    %c0_63 = arith.constant 0 : index
    %82 = vector.load %arg4[%c84, %c0_63] : memref<150x16xf32, #tpu.memory_space<vmem>>, vector<6x16xf32>
    %cst_64 = arith.constant dense<0.000000e+00> : vector<392x16xf32>
    %83 = tpu.matmul %81, %82, %cst_64 {dimension_numbers = #tpu.dot_dimension_numbers<[1], [0], [0], [1], [0, 0, 1, 1], [], []>} : vector<392x6xf32>, vector<6x16xf32>, vector<392x16xf32> -> vector<392x16xf32>
    %84 = arith.addf %80, %83 : vector<392x16xf32>
    %c84_65 = arith.constant 84 : index
    %c0_66 = arith.constant 0 : index
    %85 = vector.load %arg13[%c84_65, %c0_66] : memref<512x6xf32, #tpu.memory_space<vmem>>, vector<392x6xf32>
    %c90 = arith.constant 90 : index
    %c0_67 = arith.constant 0 : index
    %86 = vector.load %arg4[%c90, %c0_67] : memref<150x16xf32, #tpu.memory_space<vmem>>, vector<6x16xf32>
    %cst_68 = arith.constant dense<0.000000e+00> : vector<392x16xf32>
    %87 = tpu.matmul %85, %86, %cst_68 {dimension_numbers = #tpu.dot_dimension_numbers<[1], [0], [0], [1], [0, 0, 1, 1], [], []>} : vector<392x6xf32>, vector<6x16xf32>, vector<392x16xf32> -> vector<392x16xf32>
    %88 = arith.addf %84, %87 : vector<392x16xf32>
    %c86 = arith.constant 86 : index
    %c0_69 = arith.constant 0 : index
    %89 = vector.load %arg13[%c86, %c0_69] : memref<512x6xf32, #tpu.memory_space<vmem>>, vector<392x6xf32>
    %c96 = arith.constant 96 : index
    %c0_70 = arith.constant 0 : index
    %90 = vector.load %arg4[%c96, %c0_70] : memref<150x16xf32, #tpu.memory_space<vmem>>, vector<6x16xf32>
    %cst_71 = arith.constant dense<0.000000e+00> : vector<392x16xf32>
    %91 = tpu.matmul %89, %90, %cst_71 {dimension_numbers = #tpu.dot_dimension_numbers<[1], [0], [0], [1], [0, 0, 1, 1], [], []>} : vector<392x6xf32>, vector<6x16xf32>, vector<392x16xf32> -> vector<392x16xf32>
    %92 = arith.addf %88, %91 : vector<392x16xf32>
    %c88 = arith.constant 88 : index
    %c0_72 = arith.constant 0 : index
    %93 = vector.load %arg13[%c88, %c0_72] : memref<512x6xf32, #tpu.memory_space<vmem>>, vector<392x6xf32>
    %c102 = arith.constant 102 : index
    %c0_73 = arith.constant 0 : index
    %94 = vector.load %arg4[%c102, %c0_73] : memref<150x16xf32, #tpu.memory_space<vmem>>, vector<6x16xf32>
    %cst_74 = arith.constant dense<0.000000e+00> : vector<392x16xf32>
    %95 = tpu.matmul %93, %94, %cst_74 {dimension_numbers = #tpu.dot_dimension_numbers<[1], [0], [0], [1], [0, 0, 1, 1], [], []>} : vector<392x6xf32>, vector<6x16xf32>, vector<392x16xf32> -> vector<392x16xf32>
    %96 = arith.addf %92, %95 : vector<392x16xf32>
    %c90_75 = arith.constant 90 : index
    %c0_76 = arith.constant 0 : index
    %97 = vector.load %arg13[%c90_75, %c0_76] : memref<512x6xf32, #tpu.memory_space<vmem>>, vector<392x6xf32>
    %c108 = arith.constant 108 : index
    %c0_77 = arith.constant 0 : index
    %98 = vector.load %arg4[%c108, %c0_77] : memref<150x16xf32, #tpu.memory_space<vmem>>, vector<6x16xf32>
    %cst_78 = arith.constant dense<0.000000e+00> : vector<392x16xf32>
    %99 = tpu.matmul %97, %98, %cst_78 {dimension_numbers = #tpu.dot_dimension_numbers<[1], [0], [0], [1], [0, 0, 1, 1], [], []>} : vector<392x6xf32>, vector<6x16xf32>, vector<392x16xf32> -> vector<392x16xf32>
    %100 = arith.addf %96, %99 : vector<392x16xf32>
    %c92 = arith.constant 92 : index
    %c0_79 = arith.constant 0 : index
    %101 = vector.load %arg13[%c92, %c0_79] : memref<512x6xf32, #tpu.memory_space<vmem>>, vector<392x6xf32>
    %c114 = arith.constant 114 : index
    %c0_80 = arith.constant 0 : index
    %102 = vector.load %arg4[%c114, %c0_80] : memref<150x16xf32, #tpu.memory_space<vmem>>, vector<6x16xf32>
    %cst_81 = arith.constant dense<0.000000e+00> : vector<392x16xf32>
    %103 = tpu.matmul %101, %102, %cst_81 {dimension_numbers = #tpu.dot_dimension_numbers<[1], [0], [0], [1], [0, 0, 1, 1], [], []>} : vector<392x6xf32>, vector<6x16xf32>, vector<392x16xf32> -> vector<392x16xf32>
    %104 = arith.addf %100, %103 : vector<392x16xf32>
    %c112 = arith.constant 112 : index
    %c0_82 = arith.constant 0 : index
    %105 = vector.load %arg13[%c112, %c0_82] : memref<512x6xf32, #tpu.memory_space<vmem>>, vector<392x6xf32>
    %c120 = arith.constant 120 : index
    %c0_83 = arith.constant 0 : index
    %106 = vector.load %arg4[%c120, %c0_83] : memref<150x16xf32, #tpu.memory_space<vmem>>, vector<6x16xf32>
    %cst_84 = arith.constant dense<0.000000e+00> : vector<392x16xf32>
    %107 = tpu.matmul %105, %106, %cst_84 {dimension_numbers = #tpu.dot_dimension_numbers<[1], [0], [0], [1], [0, 0, 1, 1], [], []>} : vector<392x6xf32>, vector<6x16xf32>, vector<392x16xf32> -> vector<392x16xf32>
    %108 = arith.addf %104, %107 : vector<392x16xf32>
    %c114_85 = arith.constant 114 : index
    %c0_86 = arith.constant 0 : index
    %109 = vector.load %arg13[%c114_85, %c0_86] : memref<512x6xf32, #tpu.memory_space<vmem>>, vector<392x6xf32>
    %c126 = arith.constant 126 : index
    %c0_87 = arith.constant 0 : index
    %110 = vector.load %arg4[%c126, %c0_87] : memref<150x16xf32, #tpu.memory_space<vmem>>, vector<6x16xf32>
    %cst_88 = arith.constant dense<0.000000e+00> : vector<392x16xf32>
    %111 = tpu.matmul %109, %110, %cst_88 {dimension_numbers = #tpu.dot_dimension_numbers<[1], [0], [0], [1], [0, 0, 1, 1], [], []>} : vector<392x6xf32>, vector<6x16xf32>, vector<392x16xf32> -> vector<392x16xf32>
    %112 = arith.addf %108, %111 : vector<392x16xf32>
    %c116 = arith.constant 116 : index
    %c0_89 = arith.constant 0 : index
    %113 = vector.load %arg13[%c116, %c0_89] : memref<512x6xf32, #tpu.memory_space<vmem>>, vector<392x6xf32>
    %c132 = arith.constant 132 : index
    %c0_90 = arith.constant 0 : index
    %114 = vector.load %arg4[%c132, %c0_90] : memref<150x16xf32, #tpu.memory_space<vmem>>, vector<6x16xf32>
    %cst_91 = arith.constant dense<0.000000e+00> : vector<392x16xf32>
    %115 = tpu.matmul %113, %114, %cst_91 {dimension_numbers = #tpu.dot_dimension_numbers<[1], [0], [0], [1], [0, 0, 1, 1], [], []>} : vector<392x6xf32>, vector<6x16xf32>, vector<392x16xf32> -> vector<392x16xf32>
    %116 = arith.addf %112, %115 : vector<392x16xf32>
    %c118 = arith.constant 118 : index
    %c0_92 = arith.constant 0 : index
    %117 = vector.load %arg13[%c118, %c0_92] : memref<512x6xf32, #tpu.memory_space<vmem>>, vector<392x6xf32>
    %c138 = arith.constant 138 : index
    %c0_93 = arith.constant 0 : index
    %118 = vector.load %arg4[%c138, %c0_93] : memref<150x16xf32, #tpu.memory_space<vmem>>, vector<6x16xf32>
    %cst_94 = arith.constant dense<0.000000e+00> : vector<392x16xf32>
    %119 = tpu.matmul %117, %118, %cst_94 {dimension_numbers = #tpu.dot_dimension_numbers<[1], [0], [0], [1], [0, 0, 1, 1], [], []>} : vector<392x6xf32>, vector<6x16xf32>, vector<392x16xf32> -> vector<392x16xf32>
    %120 = arith.addf %116, %119 : vector<392x16xf32>
    %c120_95 = arith.constant 120 : index
    %c0_96 = arith.constant 0 : index
    %121 = vector.load %arg13[%c120_95, %c0_96] : memref<512x6xf32, #tpu.memory_space<vmem>>, vector<392x6xf32>
    %c144 = arith.constant 144 : index
    %c0_97 = arith.constant 0 : index
    %122 = vector.load %arg4[%c144, %c0_97] : memref<150x16xf32, #tpu.memory_space<vmem>>, vector<6x16xf32>
    %cst_98 = arith.constant dense<0.000000e+00> : vector<392x16xf32>
    %123 = tpu.matmul %121, %122, %cst_98 {dimension_numbers = #tpu.dot_dimension_numbers<[1], [0], [0], [1], [0, 0, 1, 1], [], []>} : vector<392x6xf32>, vector<6x16xf32>, vector<392x16xf32> -> vector<392x16xf32>
    %124 = arith.addf %120, %123 : vector<392x16xf32>
    %cst_99 = arith.constant 5.000000e-01 : f32
    %125 = vector.broadcast %cst_99 : f32 to vector<392x16xf32>
    %126 = arith.mulf %125, %124 : vector<392x16xf32>
    %127 = math.tanh %126 : vector<392x16xf32>
    %cst_100 = arith.constant 5.000000e-01 : f32
    %128 = vector.broadcast %cst_100 : f32 to vector<392x16xf32>
    %129 = arith.mulf %128, %127 : vector<392x16xf32>
    %cst_101 = arith.constant 5.000000e-01 : f32
    %130 = vector.broadcast %cst_101 : f32 to vector<392x16xf32>
    %131 = arith.addf %129, %130 : vector<392x16xf32>
    %132 = vector.extract_strided_slice %131 {offsets = [0, 0], sizes = [2, 16], strides = [1, 1]} : vector<392x16xf32> to vector<2x16xf32>
    %133 = vector.extract_strided_slice %131 {offsets = [2, 0], sizes = [2, 16], strides = [1, 1]} : vector<392x16xf32> to vector<2x16xf32>
    %134 = arith.addf %132, %133 : vector<2x16xf32>
    %135 = vector.extract_strided_slice %131 {offsets = [28, 0], sizes = [2, 16], strides = [1, 1]} : vector<392x16xf32> to vector<2x16xf32>
    %136 = arith.addf %134, %135 : vector<2x16xf32>
    %137 = vector.extract_strided_slice %131 {offsets = [30, 0], sizes = [2, 16], strides = [1, 1]} : vector<392x16xf32> to vector<2x16xf32>
    %138 = arith.addf %136, %137 : vector<2x16xf32>
    %c0_102 = arith.constant 0 : index
    %c0_103 = arith.constant 0 : index
    %139 = vector.load %arg14[%c0_102, %c0_103] : memref<2x400xf32, #tpu.memory_space<vmem>>, vector<2x16xf32>
    tpu.vector_store %arg14[%c0_102, %c0_103], %138 {strides = array<i32>} : memref<2x400xf32, #tpu.memory_space<vmem>>, vector<2x16xf32>,
    %140 = vector.extract_strided_slice %131 {offsets = [4, 0], sizes = [2, 16], strides = [1, 1]} : vector<392x16xf32> to vector<2x16xf32>
    %141 = vector.extract_strided_slice %131 {offsets = [6, 0], sizes = [2, 16], strides = [1, 1]} : vector<392x16xf32> to vector<2x16xf32>
    %142 = arith.addf %140, %141 : vector<2x16xf32>
    %143 = vector.extract_strided_slice %131 {offsets = [32, 0], sizes = [2, 16], strides = [1, 1]} : vector<392x16xf32> to vector<2x16xf32>
    %144 = arith.addf %142, %143 : vector<2x16xf32>
    %145 = vector.extract_strided_slice %131 {offsets = [34, 0], sizes = [2, 16], strides = [1, 1]} : vector<392x16xf32> to vector<2x16xf32>
    %146 = arith.addf %144, %145 : vector<2x16xf32>
    %c0_104 = arith.constant 0 : index
    %c16 = arith.constant 16 : index
    %147 = vector.load %arg14[%c0_104, %c16] : memref<2x400xf32, #tpu.memory_space<vmem>>, vector<2x16xf32>
    tpu.vector_store %arg14[%c0_104, %c16], %146 {strides = array<i32>} : memref<2x400xf32, #tpu.memory_space<vmem>>, vector<2x16xf32>,
    %148 = vector.extract_strided_slice %131 {offsets = [8, 0], sizes = [2, 16], strides = [1, 1]} : vector<392x16xf32> to vector<2x16xf32>
    %149 = vector.extract_strided_slice %131 {offsets = [10, 0], sizes = [2, 16], strides = [1, 1]} : vector<392x16xf32> to vector<2x16xf32>
    %150 = arith.addf %148, %149 : vector<2x16xf32>
    %151 = vector.extract_strided_slice %131 {offsets = [36, 0], sizes = [2, 16], strides = [1, 1]} : vector<392x16xf32> to vector<2x16xf32>
    %152 = arith.addf %150, %151 : vector<2x16xf32>
    %153 = vector.extract_strided_slice %131 {offsets = [38, 0], sizes = [2, 16], strides = [1, 1]} : vector<392x16xf32> to vector<2x16xf32>
    %154 = arith.addf %152, %153 : vector<2x16xf32>
    %c0_105 = arith.constant 0 : index
    %c32_106 = arith.constant 32 : index
    %155 = vector.load %arg14[%c0_105, %c32_106] : memref<2x400xf32, #tpu.memory_space<vmem>>, vector<2x16xf32>
    tpu.vector_store %arg14[%c0_105, %c32_106], %154 {strides = array<i32>} : memref<2x400xf32, #tpu.memory_space<vmem>>, vector<2x16xf32>,
    %156 = vector.extract_strided_slice %131 {offsets = [12, 0], sizes = [2, 16], strides = [1, 1]} : vector<392x16xf32> to vector<2x16xf32>
    %157 = vector.extract_strided_slice %131 {offsets = [14, 0], sizes = [2, 16], strides = [1, 1]} : vector<392x16xf32> to vector<2x16xf32>
    %158 = arith.addf %156, %157 : vector<2x16xf32>
    %159 = vector.extract_strided_slice %131 {offsets = [40, 0], sizes = [2, 16], strides = [1, 1]} : vector<392x16xf32> to vector<2x16xf32>
    %160 = arith.addf %158, %159 : vector<2x16xf32>
    %161 = vector.extract_strided_slice %131 {offsets = [42, 0], sizes = [2, 16], strides = [1, 1]} : vector<392x16xf32> to vector<2x16xf32>
    %162 = arith.addf %160, %161 : vector<2x16xf32>
    %c0_107 = arith.constant 0 : index
    %c48_108 = arith.constant 48 : index
    %163 = vector.load %arg14[%c0_107, %c48_108] : memref<2x400xf32, #tpu.memory_space<vmem>>, vector<2x16xf32>
    tpu.vector_store %arg14[%c0_107, %c48_108], %162 {strides = array<i32>} : memref<2x400xf32, #tpu.memory_space<vmem>>, vector<2x16xf32>,
    %164 = vector.extract_strided_slice %131 {offsets = [16, 0], sizes = [2, 16], strides = [1, 1]} : vector<392x16xf32> to vector<2x16xf32>
    %165 = vector.extract_strided_slice %131 {offsets = [18, 0], sizes = [2, 16], strides = [1, 1]} : vector<392x16xf32> to vector<2x16xf32>
    %166 = arith.addf %164, %165 : vector<2x16xf32>
    %167 = vector.extract_strided_slice %131 {offsets = [44, 0], sizes = [2, 16], strides = [1, 1]} : vector<392x16xf32> to vector<2x16xf32>
    %168 = arith.addf %166, %167 : vector<2x16xf32>
    %169 = vector.extract_strided_slice %131 {offsets = [46, 0], sizes = [2, 16], strides = [1, 1]} : vector<392x16xf32> to vector<2x16xf32>
    %170 = arith.addf %168, %169 : vector<2x16xf32>
    %c0_109 = arith.constant 0 : index
    %c64_110 = arith.constant 64 : index
    %171 = vector.load %arg14[%c0_109, %c64_110] : memref<2x400xf32, #tpu.memory_space<vmem>>, vector<2x16xf32>
    tpu.vector_store %arg14[%c0_109, %c64_110], %170 {strides = array<i32>} : memref<2x400xf32, #tpu.memory_space<vmem>>, vector<2x16xf32>,
    %172 = vector.extract_strided_slice %131 {offsets = [56, 0], sizes = [2, 16], strides = [1, 1]} : vector<392x16xf32> to vector<2x16xf32>
    %173 = vector.extract_strided_slice %131 {offsets = [58, 0], sizes = [2, 16], strides = [1, 1]} : vector<392x16xf32> to vector<2x16xf32>
    %174 = arith.addf %172, %173 : vector<2x16xf32>
    %175 = vector.extract_strided_slice %131 {offsets = [84, 0], sizes = [2, 16], strides = [1, 1]} : vector<392x16xf32> to vector<2x16xf32>
    %176 = arith.addf %174, %175 : vector<2x16xf32>
    %177 = vector.extract_strided_slice %131 {offsets = [86, 0], sizes = [2, 16], strides = [1, 1]} : vector<392x16xf32> to vector<2x16xf32>
    %178 = arith.addf %176, %177 : vector<2x16xf32>
    %c0_111 = arith.constant 0 : index
    %c80 = arith.constant 80 : index
    %179 = vector.load %arg14[%c0_111, %c80] : memref<2x400xf32, #tpu.memory_space<vmem>>, vector<2x16xf32>
    tpu.vector_store %arg14[%c0_111, %c80], %178 {strides = array<i32>} : memref<2x400xf32, #tpu.memory_space<vmem>>, vector<2x16xf32>,
    %180 = vector.extract_strided_slice %131 {offsets = [60, 0], sizes = [2, 16], strides = [1, 1]} : vector<392x16xf32> to vector<2x16xf32>
    %181 = vector.extract_strided_slice %131 {offsets = [62, 0], sizes = [2, 16], strides = [1, 1]} : vector<392x16xf32> to vector<2x16xf32>
    %182 = arith.addf %180, %181 : vector<2x16xf32>
    %183 = vector.extract_strided_slice %131 {offsets = [88, 0], sizes = [2, 16], strides = [1, 1]} : vector<392x16xf32> to vector<2x16xf32>
    %184 = arith.addf %182, %183 : vector<2x16xf32>
    %185 = vector.extract_strided_slice %131 {offsets = [90, 0], sizes = [2, 16], strides = [1, 1]} : vector<392x16xf32> to vector<2x16xf32>
    %186 = arith.addf %184, %185 : vector<2x16xf32>
    %c0_112 = arith.constant 0 : index
    %c96_113 = arith.constant 96 : index
    %187 = vector.load %arg14[%c0_112, %c96_113] : memref<2x400xf32, #tpu.memory_space<vmem>>, vector<2x16xf32>
    tpu.vector_store %arg14[%c0_112, %c96_113], %186 {strides = array<i32>} : memref<2x400xf32, #tpu.memory_space<vmem>>, vector<2x16xf32>,
    %188 = vector.extract_strided_slice %131 {offsets = [64, 0], sizes = [2, 16], strides = [1, 1]} : vector<392x16xf32> to vector<2x16xf32>
    %189 = vector.extract_strided_slice %131 {offsets = [66, 0], sizes = [2, 16], strides = [1, 1]} : vector<392x16xf32> to vector<2x16xf32>
    %190 = arith.addf %188, %189 : vector<2x16xf32>
    %191 = vector.extract_strided_slice %131 {offsets = [92, 0], sizes = [2, 16], strides = [1, 1]} : vector<392x16xf32> to vector<2x16xf32>
    %192 = arith.addf %190, %191 : vector<2x16xf32>
    %193 = vector.extract_strided_slice %131 {offsets = [94, 0], sizes = [2, 16], strides = [1, 1]} : vector<392x16xf32> to vector<2x16xf32>
    %194 = arith.addf %192, %193 : vector<2x16xf32>
    %c0_114 = arith.constant 0 : index
    %c112_115 = arith.constant 112 : index
    %195 = vector.load %arg14[%c0_114, %c112_115] : memref<2x400xf32, #tpu.memory_space<vmem>>, vector<2x16xf32>
    tpu.vector_store %arg14[%c0_114, %c112_115], %194 {strides = array<i32>} : memref<2x400xf32, #tpu.memory_space<vmem>>, vector<2x16xf32>,
    %196 = vector.extract_strided_slice %131 {offsets = [68, 0], sizes = [2, 16], strides = [1, 1]} : vector<392x16xf32> to vector<2x16xf32>
    %197 = vector.extract_strided_slice %131 {offsets = [70, 0], sizes = [2, 16], strides = [1, 1]} : vector<392x16xf32> to vector<2x16xf32>
    %198 = arith.addf %196, %197 : vector<2x16xf32>
    %199 = vector.extract_strided_slice %131 {offsets = [96, 0], sizes = [2, 16], strides = [1, 1]} : vector<392x16xf32> to vector<2x16xf32>
    %200 = arith.addf %198, %199 : vector<2x16xf32>
    %201 = vector.extract_strided_slice %131 {offsets = [98, 0], sizes = [2, 16], strides = [1, 1]} : vector<392x16xf32> to vector<2x16xf32>
    %202 = arith.addf %200, %201 : vector<2x16xf32>
    %c0_116 = arith.constant 0 : index
    %c128 = arith.constant 128 : index
    %203 = vector.load %arg14[%c0_116, %c128] : memref<2x400xf32, #tpu.memory_space<vmem>>, vector<2x16xf32>
    tpu.vector_store %arg14[%c0_116, %c128], %202 {strides = array<i32>} : memref<2x400xf32, #tpu.memory_space<vmem>>, vector<2x16xf32>,
    %204 = vector.extract_strided_slice %131 {offsets = [72, 0], sizes = [2, 16], strides = [1, 1]} : vector<392x16xf32> to vector<2x16xf32>
    %205 = vector.extract_strided_slice %131 {offsets = [74, 0], sizes = [2, 16], strides = [1, 1]} : vector<392x16xf32> to vector<2x16xf32>
    %206 = arith.addf %204, %205 : vector<2x16xf32>
    %207 = vector.extract_strided_slice %131 {offsets = [100, 0], sizes = [2, 16], strides = [1, 1]} : vector<392x16xf32> to vector<2x16xf32>
    %208 = arith.addf %206, %207 : vector<2x16xf32>
    %209 = vector.extract_strided_slice %131 {offsets = [102, 0], sizes = [2, 16], strides = [1, 1]} : vector<392x16xf32> to vector<2x16xf32>
    %210 = arith.addf %208, %209 : vector<2x16xf32>
    %c0_117 = arith.constant 0 : index
    %c144_118 = arith.constant 144 : index
    %211 = vector.load %arg14[%c0_117, %c144_118] : memref<2x400xf32, #tpu.memory_space<vmem>>, vector<2x16xf32>
    tpu.vector_store %arg14[%c0_117, %c144_118], %210 {strides = array<i32>} : memref<2x400xf32, #tpu.memory_space<vmem>>, vector<2x16xf32>,
    %212 = vector.extract_strided_slice %131 {offsets = [112, 0], sizes = [2, 16], strides = [1, 1]} : vector<392x16xf32> to vector<2x16xf32>
    %213 = vector.extract_strided_slice %131 {offsets = [114, 0], sizes = [2, 16], strides = [1, 1]} : vector<392x16xf32> to vector<2x16xf32>
    %214 = arith.addf %212, %213 : vector<2x16xf32>
    %215 = vector.extract_strided_slice %131 {offsets = [140, 0], sizes = [2, 16], strides = [1, 1]} : vector<392x16xf32> to vector<2x16xf32>
    %216 = arith.addf %214, %215 : vector<2x16xf32>
    %217 = vector.extract_strided_slice %131 {offsets = [142, 0], sizes = [2, 16], strides = [1, 1]} : vector<392x16xf32> to vector<2x16xf32>
    %218 = arith.addf %216, %217 : vector<2x16xf32>
    %c0_119 = arith.constant 0 : index
    %c160 = arith.constant 160 : index
    %219 = vector.load %arg14[%c0_119, %c160] : memref<2x400xf32, #tpu.memory_space<vmem>>, vector<2x16xf32>
    tpu.vector_store %arg14[%c0_119, %c160], %218 {strides = array<i32>} : memref<2x400xf32, #tpu.memory_space<vmem>>, vector<2x16xf32>,
    %220 = vector.extract_strided_slice %131 {offsets = [116, 0], sizes = [2, 16], strides = [1, 1]} : vector<392x16xf32> to vector<2x16xf32>
    %221 = vector.extract_strided_slice %131 {offsets = [118, 0], sizes = [2, 16], strides = [1, 1]} : vector<392x16xf32> to vector<2x16xf32>
    %222 = arith.addf %220, %221 : vector<2x16xf32>
    %223 = vector.extract_strided_slice %131 {offsets = [144, 0], sizes = [2, 16], strides = [1, 1]} : vector<392x16xf32> to vector<2x16xf32>
    %224 = arith.addf %222, %223 : vector<2x16xf32>
    %225 = vector.extract_strided_slice %131 {offsets = [146, 0], sizes = [2, 16], strides = [1, 1]} : vector<392x16xf32> to vector<2x16xf32>
    %226 = arith.addf %224, %225 : vector<2x16xf32>
    %c0_120 = arith.constant 0 : index
    %c176 = arith.constant 176 : index
    %227 = vector.load %arg14[%c0_120, %c176] : memref<2x400xf32, #tpu.memory_space<vmem>>, vector<2x16xf32>
    tpu.vector_store %arg14[%c0_120, %c176], %226 {strides = array<i32>} : memref<2x400xf32, #tpu.memory_space<vmem>>, vector<2x16xf32>,
    %228 = vector.extract_strided_slice %131 {offsets = [120, 0], sizes = [2, 16], strides = [1, 1]} : vector<392x16xf32> to vector<2x16xf32>
    %229 = vector.extract_strided_slice %131 {offsets = [122, 0], sizes = [2, 16], strides = [1, 1]} : vector<392x16xf32> to vector<2x16xf32>
    %230 = arith.addf %228, %229 : vector<2x16xf32>
    %231 = vector.extract_strided_slice %131 {offsets = [148, 0], sizes = [2, 16], strides = [1, 1]} : vector<392x16xf32> to vector<2x16xf32>
    %232 = arith.addf %230, %231 : vector<2x16xf32>
    %233 = vector.extract_strided_slice %131 {offsets = [150, 0], sizes = [2, 16], strides = [1, 1]} : vector<392x16xf32> to vector<2x16xf32>
    %234 = arith.addf %232, %233 : vector<2x16xf32>
    %c0_121 = arith.constant 0 : index
    %c192 = arith.constant 192 : index
    %235 = vector.load %arg14[%c0_121, %c192] : memref<2x400xf32, #tpu.memory_space<vmem>>, vector<2x16xf32>
    tpu.vector_store %arg14[%c0_121, %c192], %234 {strides = array<i32>} : memref<2x400xf32, #tpu.memory_space<vmem>>, vector<2x16xf32>,
    %236 = vector.extract_strided_slice %131 {offsets = [124, 0], sizes = [2, 16], strides = [1, 1]} : vector<392x16xf32> to vector<2x16xf32>
    %237 = vector.extract_strided_slice %131 {offsets = [126, 0], sizes = [2, 16], strides = [1, 1]} : vector<392x16xf32> to vector<2x16xf32>
    %238 = arith.addf %236, %237 : vector<2x16xf32>
    %239 = vector.extract_strided_slice %131 {offsets = [152, 0], sizes = [2, 16], strides = [1, 1]} : vector<392x16xf32> to vector<2x16xf32>
    %240 = arith.addf %238, %239 : vector<2x16xf32>
    %241 = vector.extract_strided_slice %131 {offsets = [154, 0], sizes = [2, 16], strides = [1, 1]} : vector<392x16xf32> to vector<2x16xf32>
    %242 = arith.addf %240, %241 : vector<2x16xf32>
    %c0_122 = arith.constant 0 : index
    %c208 = arith.constant 208 : index
    %243 = vector.load %arg14[%c0_122, %c208] : memref<2x400xf32, #tpu.memory_space<vmem>>, vector<2x16xf32>
    tpu.vector_store %arg14[%c0_122, %c208], %242 {strides = array<i32>} : memref<2x400xf32, #tpu.memory_space<vmem>>, vector<2x16xf32>,
    %244 = vector.extract_strided_slice %131 {offsets = [128, 0], sizes = [2, 16], strides = [1, 1]} : vector<392x16xf32> to vector<2x16xf32>
    %245 = vector.extract_strided_slice %131 {offsets = [130, 0], sizes = [2, 16], strides = [1, 1]} : vector<392x16xf32> to vector<2x16xf32>
    %246 = arith.addf %244, %245 : vector<2x16xf32>
    %247 = vector.extract_strided_slice %131 {offsets = [156, 0], sizes = [2, 16], strides = [1, 1]} : vector<392x16xf32> to vector<2x16xf32>
    %248 = arith.addf %246, %247 : vector<2x16xf32>
    %249 = vector.extract_strided_slice %131 {offsets = [158, 0], sizes = [2, 16], strides = [1, 1]} : vector<392x16xf32> to vector<2x16xf32>
    %250 = arith.addf %248, %249 : vector<2x16xf32>
    %c0_123 = arith.constant 0 : index
    %c224 = arith.constant 224 : index
    %251 = vector.load %arg14[%c0_123, %c224] : memref<2x400xf32, #tpu.memory_space<vmem>>, vector<2x16xf32>
    tpu.vector_store %arg14[%c0_123, %c224], %250 {strides = array<i32>} : memref<2x400xf32, #tpu.memory_space<vmem>>, vector<2x16xf32>,
    %252 = vector.extract_strided_slice %131 {offsets = [168, 0], sizes = [2, 16], strides = [1, 1]} : vector<392x16xf32> to vector<2x16xf32>
    %253 = vector.extract_strided_slice %131 {offsets = [170, 0], sizes = [2, 16], strides = [1, 1]} : vector<392x16xf32> to vector<2x16xf32>
    %254 = arith.addf %252, %253 : vector<2x16xf32>
    %255 = vector.extract_strided_slice %131 {offsets = [196, 0], sizes = [2, 16], strides = [1, 1]} : vector<392x16xf32> to vector<2x16xf32>
    %256 = arith.addf %254, %255 : vector<2x16xf32>
    %257 = vector.extract_strided_slice %131 {offsets = [198, 0], sizes = [2, 16], strides = [1, 1]} : vector<392x16xf32> to vector<2x16xf32>
    %258 = arith.addf %256, %257 : vector<2x16xf32>
    %c0_124 = arith.constant 0 : index
    %c240 = arith.constant 240 : index
    %259 = vector.load %arg14[%c0_124, %c240] : memref<2x400xf32, #tpu.memory_space<vmem>>, vector<2x16xf32>
    tpu.vector_store %arg14[%c0_124, %c240], %258 {strides = array<i32>} : memref<2x400xf32, #tpu.memory_space<vmem>>, vector<2x16xf32>,
    %260 = vector.extract_strided_slice %131 {offsets = [172, 0], sizes = [2, 16], strides = [1, 1]} : vector<392x16xf32> to vector<2x16xf32>
    %261 = vector.extract_strided_slice %131 {offsets = [174, 0], sizes = [2, 16], strides = [1, 1]} : vector<392x16xf32> to vector<2x16xf32>
    %262 = arith.addf %260, %261 : vector<2x16xf32>
    %263 = vector.extract_strided_slice %131 {offsets = [200, 0], sizes = [2, 16], strides = [1, 1]} : vector<392x16xf32> to vector<2x16xf32>
    %264 = arith.addf %262, %263 : vector<2x16xf32>
    %265 = vector.extract_strided_slice %131 {offsets = [202, 0], sizes = [2, 16], strides = [1, 1]} : vector<392x16xf32> to vector<2x16xf32>
    %266 = arith.addf %264, %265 : vector<2x16xf32>
    %c0_125 = arith.constant 0 : index
    %c256 = arith.constant 256 : index
    %267 = vector.load %arg14[%c0_125, %c256] : memref<2x400xf32, #tpu.memory_space<vmem>>, vector<2x16xf32>
    tpu.vector_store %arg14[%c0_125, %c256], %266 {strides = array<i32>} : memref<2x400xf32, #tpu.memory_space<vmem>>, vector<2x16xf32>,
    %268 = vector.extract_strided_slice %131 {offsets = [176, 0], sizes = [2, 16], strides = [1, 1]} : vector<392x16xf32> to vector<2x16xf32>
    %269 = vector.extract_strided_slice %131 {offsets = [178, 0], sizes = [2, 16], strides = [1, 1]} : vector<392x16xf32> to vector<2x16xf32>
    %270 = arith.addf %268, %269 : vector<2x16xf32>
    %271 = vector.extract_strided_slice %131 {offsets = [204, 0], sizes = [2, 16], strides = [1, 1]} : vector<392x16xf32> to vector<2x16xf32>
    %272 = arith.addf %270, %271 : vector<2x16xf32>
    %273 = vector.extract_strided_slice %131 {offsets = [206, 0], sizes = [2, 16], strides = [1, 1]} : vector<392x16xf32> to vector<2x16xf32>
    %274 = arith.addf %272, %273 : vector<2x16xf32>
    %c0_126 = arith.constant 0 : index
    %c272 = arith.constant 272 : index
    %275 = vector.load %arg14[%c0_126, %c272] : memref<2x400xf32, #tpu.memory_space<vmem>>, vector<2x16xf32>
    tpu.vector_store %arg14[%c0_126, %c272], %274 {strides = array<i32>} : memref<2x400xf32, #tpu.memory_space<vmem>>, vector<2x16xf32>,
    %276 = vector.extract_strided_slice %131 {offsets = [180, 0], sizes = [2, 16], strides = [1, 1]} : vector<392x16xf32> to vector<2x16xf32>
    %277 = vector.extract_strided_slice %131 {offsets = [182, 0], sizes = [2, 16], strides = [1, 1]} : vector<392x16xf32> to vector<2x16xf32>
    %278 = arith.addf %276, %277 : vector<2x16xf32>
    %279 = vector.extract_strided_slice %131 {offsets = [208, 0], sizes = [2, 16], strides = [1, 1]} : vector<392x16xf32> to vector<2x16xf32>
    %280 = arith.addf %278, %279 : vector<2x16xf32>
    %281 = vector.extract_strided_slice %131 {offsets = [210, 0], sizes = [2, 16], strides = [1, 1]} : vector<392x16xf32> to vector<2x16xf32>
    %282 = arith.addf %280, %281 : vector<2x16xf32>
    %c0_127 = arith.constant 0 : index
    %c288 = arith.constant 288 : index
    %283 = vector.load %arg14[%c0_127, %c288] : memref<2x400xf32, #tpu.memory_space<vmem>>, vector<2x16xf32>
    tpu.vector_store %arg14[%c0_127, %c288], %282 {strides = array<i32>} : memref<2x400xf32, #tpu.memory_space<vmem>>, vector<2x16xf32>,
    %284 = vector.extract_strided_slice %131 {offsets = [184, 0], sizes = [2, 16], strides = [1, 1]} : vector<392x16xf32> to vector<2x16xf32>
    %285 = vector.extract_strided_slice %131 {offsets = [186, 0], sizes = [2, 16], strides = [1, 1]} : vector<392x16xf32> to vector<2x16xf32>
    %286 = arith.addf %284, %285 : vector<2x16xf32>
    %287 = vector.extract_strided_slice %131 {offsets = [212, 0], sizes = [2, 16], strides = [1, 1]} : vector<392x16xf32> to vector<2x16xf32>
    %288 = arith.addf %286, %287 : vector<2x16xf32>
    %289 = vector.extract_strided_slice %131 {offsets = [214, 0], sizes = [2, 16], strides = [1, 1]} : vector<392x16xf32> to vector<2x16xf32>
    %290 = arith.addf %288, %289 : vector<2x16xf32>
    %c0_128 = arith.constant 0 : index
    %c304 = arith.constant 304 : index
    %291 = vector.load %arg14[%c0_128, %c304] : memref<2x400xf32, #tpu.memory_space<vmem>>, vector<2x16xf32>
    tpu.vector_store %arg14[%c0_128, %c304], %290 {strides = array<i32>} : memref<2x400xf32, #tpu.memory_space<vmem>>, vector<2x16xf32>,
    %292 = vector.extract_strided_slice %131 {offsets = [224, 0], sizes = [2, 16], strides = [1, 1]} : vector<392x16xf32> to vector<2x16xf32>
    %293 = vector.extract_strided_slice %131 {offsets = [226, 0], sizes = [2, 16], strides = [1, 1]} : vector<392x16xf32> to vector<2x16xf32>
    %294 = arith.addf %292, %293 : vector<2x16xf32>
    %295 = vector.extract_strided_slice %131 {offsets = [252, 0], sizes = [2, 16], strides = [1, 1]} : vector<392x16xf32> to vector<2x16xf32>
    %296 = arith.addf %294, %295 : vector<2x16xf32>
    %297 = vector.extract_strided_slice %131 {offsets = [254, 0], sizes = [2, 16], strides = [1, 1]} : vector<392x16xf32> to vector<2x16xf32>
    %298 = arith.addf %296, %297 : vector<2x16xf32>
    %c0_129 = arith.constant 0 : index
    %c320 = arith.constant 320 : index
    %299 = vector.load %arg14[%c0_129, %c320] : memref<2x400xf32, #tpu.memory_space<vmem>>, vector<2x16xf32>
    tpu.vector_store %arg14[%c0_129, %c320], %298 {strides = array<i32>} : memref<2x400xf32, #tpu.memory_space<vmem>>, vector<2x16xf32>,
    %300 = vector.extract_strided_slice %131 {offsets = [228, 0], sizes = [2, 16], strides = [1, 1]} : vector<392x16xf32> to vector<2x16xf32>
    %301 = vector.extract_strided_slice %131 {offsets = [230, 0], sizes = [2, 16], strides = [1, 1]} : vector<392x16xf32> to vector<2x16xf32>
    %302 = arith.addf %300, %301 : vector<2x16xf32>
    %303 = vector.extract_strided_slice %131 {offsets = [256, 0], sizes = [2, 16], strides = [1, 1]} : vector<392x16xf32> to vector<2x16xf32>
    %304 = arith.addf %302, %303 : vector<2x16xf32>
    %305 = vector.extract_strided_slice %131 {offsets = [258, 0], sizes = [2, 16], strides = [1, 1]} : vector<392x16xf32> to vector<2x16xf32>
    %306 = arith.addf %304, %305 : vector<2x16xf32>
    %c0_130 = arith.constant 0 : index
    %c336 = arith.constant 336 : index
    %307 = vector.load %arg14[%c0_130, %c336] : memref<2x400xf32, #tpu.memory_space<vmem>>, vector<2x16xf32>
    tpu.vector_store %arg14[%c0_130, %c336], %306 {strides = array<i32>} : memref<2x400xf32, #tpu.memory_space<vmem>>, vector<2x16xf32>,
    %308 = vector.extract_strided_slice %131 {offsets = [232, 0], sizes = [2, 16], strides = [1, 1]} : vector<392x16xf32> to vector<2x16xf32>
    %309 = vector.extract_strided_slice %131 {offsets = [234, 0], sizes = [2, 16], strides = [1, 1]} : vector<392x16xf32> to vector<2x16xf32>
    %310 = arith.addf %308, %309 : vector<2x16xf32>
    %311 = vector.extract_strided_slice %131 {offsets = [260, 0], sizes = [2, 16], strides = [1, 1]} : vector<392x16xf32> to vector<2x16xf32>
    %312 = arith.addf %310, %311 : vector<2x16xf32>
    %313 = vector.extract_strided_slice %131 {offsets = [262, 0], sizes = [2, 16], strides = [1, 1]} : vector<392x16xf32> to vector<2x16xf32>
    %314 = arith.addf %312, %313 : vector<2x16xf32>
    %c0_131 = arith.constant 0 : index
    %c352 = arith.constant 352 : index
    %315 = vector.load %arg14[%c0_131, %c352] : memref<2x400xf32, #tpu.memory_space<vmem>>, vector<2x16xf32>
    tpu.vector_store %arg14[%c0_131, %c352], %314 {strides = array<i32>} : memref<2x400xf32, #tpu.memory_space<vmem>>, vector<2x16xf32>,
    %316 = vector.extract_strided_slice %131 {offsets = [236, 0], sizes = [2, 16], strides = [1, 1]} : vector<392x16xf32> to vector<2x16xf32>
    %317 = vector.extract_strided_slice %131 {offsets = [238, 0], sizes = [2, 16], strides = [1, 1]} : vector<392x16xf32> to vector<2x16xf32>
    %318 = arith.addf %316, %317 : vector<2x16xf32>
    %319 = vector.extract_strided_slice %131 {offsets = [264, 0], sizes = [2, 16], strides = [1, 1]} : vector<392x16xf32> to vector<2x16xf32>
    %320 = arith.addf %318, %319 : vector<2x16xf32>
    %321 = vector.extract_strided_slice %131 {offsets = [266, 0], sizes = [2, 16], strides = [1, 1]} : vector<392x16xf32> to vector<2x16xf32>
    %322 = arith.addf %320, %321 : vector<2x16xf32>
    %c0_132 = arith.constant 0 : index
    %c368 = arith.constant 368 : index
    %323 = vector.load %arg14[%c0_132, %c368] : memref<2x400xf32, #tpu.memory_space<vmem>>, vector<2x16xf32>
    tpu.vector_store %arg14[%c0_132, %c368], %322 {strides = array<i32>} : memref<2x400xf32, #tpu.memory_space<vmem>>, vector<2x16xf32>,
    %324 = vector.extract_strided_slice %131 {offsets = [240, 0], sizes = [2, 16], strides = [1, 1]} : vector<392x16xf32> to vector<2x16xf32>
    %325 = vector.extract_strided_slice %131 {offsets = [242, 0], sizes = [2, 16], strides = [1, 1]} : vector<392x16xf32> to vector<2x16xf32>
    %326 = arith.addf %324, %325 : vector<2x16xf32>
    %327 = vector.extract_strided_slice %131 {offsets = [268, 0], sizes = [2, 16], strides = [1, 1]} : vector<392x16xf32> to vector<2x16xf32>
    %328 = arith.addf %326, %327 : vector<2x16xf32>
    %329 = vector.extract_strided_slice %131 {offsets = [270, 0], sizes = [2, 16], strides = [1, 1]} : vector<392x16xf32> to vector<2x16xf32>
    %330 = arith.addf %328, %329 : vector<2x16xf32>
    %c0_133 = arith.constant 0 : index
    %c384 = arith.constant 384 : index
    %331 = vector.load %arg14[%c0_133, %c384] : memref<2x400xf32, #tpu.memory_space<vmem>>, vector<2x16xf32>
    tpu.vector_store %arg14[%c0_133, %c384], %330 {strides = array<i32>} : memref<2x400xf32, #tpu.memory_space<vmem>>, vector<2x16xf32>,
    %c0_134 = arith.constant 0 : index
    %c0_135 = arith.constant 0 : index
    %332 = vector.load %arg14[%c0_134, %c0_135] : memref<2x400xf32, #tpu.memory_space<vmem>>, vector<2x400xf32>
    %c0_136 = arith.constant 0 : index
    %c0_137 = arith.constant 0 : index
    %333 = vector.load %arg6[%c0_136, %c0_137] : memref<400x120xf32, #tpu.memory_space<vmem>>, vector<400x120xf32>
    %cst_138 = arith.constant dense<0.000000e+00> : vector<2x120xf32>
    %334 = tpu.matmul %332, %333, %cst_138 {dimension_numbers = #tpu.dot_dimension_numbers<[1], [0], [0], [1], [0, 0, 1, 1], [], []>} : vector<2x400xf32>, vector<400x120xf32>, vector<2x120xf32> -> vector<2x120xf32>
    %c0_139 = arith.constant 0 : index
    %c0_140 = arith.constant 0 : index
    %335 = vector.load %arg7[%c0_139, %c0_140] : memref<1x120xf32, #tpu.memory_space<vmem>>, vector<1x120xf32>
    %336 = vector.broadcast %335 : vector<1x120xf32> to vector<2x120xf32>
    %337 = arith.addf %334, %336 : vector<2x120xf32>
    %cst_141 = arith.constant 5.000000e-01 : f32
    %338 = vector.broadcast %cst_141 : f32 to vector<2x120xf32>
    %339 = arith.mulf %338, %337 : vector<2x120xf32>
    %340 = math.tanh %339 : vector<2x120xf32>
    %cst_142 = arith.constant 5.000000e-01 : f32
    %341 = vector.broadcast %cst_142 : f32 to vector<2x120xf32>
    %342 = arith.mulf %341, %340 : vector<2x120xf32>
    %cst_143 = arith.constant 5.000000e-01 : f32
    %343 = vector.broadcast %cst_143 : f32 to vector<2x120xf32>
    %344 = arith.addf %342, %343 : vector<2x120xf32>
    %c0_144 = arith.constant 0 : index
    %c0_145 = arith.constant 0 : index
    %345 = vector.load %arg8[%c0_144, %c0_145] : memref<120x84xf32, #tpu.memory_space<vmem>>, vector<120x84xf32>
    %cst_146 = arith.constant dense<0.000000e+00> : vector<2x84xf32>
    %346 = tpu.matmul %344, %345, %cst_146 {dimension_numbers = #tpu.dot_dimension_numbers<[1], [0], [0], [1], [0, 0, 1, 1], [], []>} : vector<2x120xf32>, vector<120x84xf32>, vector<2x84xf32> -> vector<2x84xf32>
    %c0_147 = arith.constant 0 : index
    %c0_148 = arith.constant 0 : index
    %347 = vector.load %arg9[%c0_147, %c0_148] : memref<1x84xf32, #tpu.memory_space<vmem>>, vector<1x84xf32>
    %348 = vector.broadcast %347 : vector<1x84xf32> to vector<2x84xf32>
    %349 = arith.addf %346, %348 : vector<2x84xf32>
    %cst_149 = arith.constant 5.000000e-01 : f32
    %350 = vector.broadcast %cst_149 : f32 to vector<2x84xf32>
    %351 = arith.mulf %350, %349 : vector<2x84xf32>
    %352 = math.tanh %351 : vector<2x84xf32>
    %cst_150 = arith.constant 5.000000e-01 : f32
    %353 = vector.broadcast %cst_150 : f32 to vector<2x84xf32>
    %354 = arith.mulf %353, %352 : vector<2x84xf32>
    %cst_151 = arith.constant 5.000000e-01 : f32
    %355 = vector.broadcast %cst_151 : f32 to vector<2x84xf32>
    %356 = arith.addf %354, %355 : vector<2x84xf32>
    %c0_152 = arith.constant 0 : index
    %c0_153 = arith.constant 0 : index
    %357 = vector.load %arg10[%c0_152, %c0_153] : memref<84x10xf32, #tpu.memory_space<vmem>>, vector<84x10xf32>
    %cst_154 = arith.constant dense<0.000000e+00> : vector<2x10xf32>
    %358 = tpu.matmul %356, %357, %cst_154 {dimension_numbers = #tpu.dot_dimension_numbers<[1], [0], [0], [1], [0, 0, 1, 1], [], []>} : vector<2x84xf32>, vector<84x10xf32>, vector<2x10xf32> -> vector<2x10xf32>
    %c0_155 = arith.constant 0 : index
    %c0_156 = arith.constant 0 : index
    %359 = vector.load %arg11[%c0_155, %c0_156] : memref<1x10xf32, #tpu.memory_space<vmem>>, vector<1x10xf32>
    %360 = vector.broadcast %359 : vector<1x10xf32> to vector<2x10xf32>
    %361 = arith.addf %358, %360 : vector<2x10xf32>
    %c0_157 = arith.constant 0 : index
    %c0_158 = arith.constant 0 : index
    %362 = vector.load %arg12[%c0_157, %c0_158] : memref<2x10xf32, #tpu.memory_space<vmem>>, vector<2x10xf32>
    tpu.vector_store %arg12[%c0_157, %c0_158], %361 {strides = array<i32>} : memref<2x10xf32, #tpu.memory_space<vmem>>, vector<2x10xf32>,
    return
  }
  func.func @transform_0(%arg0: i32) -> (i32, i32) {
    %c0_i32 = arith.constant 0 : i32
    %c0_i32_0 = arith.constant 0 : i32
    return %arg0, %c0_i32 : i32, i32
  }
  func.func @transform_1(%arg0: i32) -> (i32, i32) {
    %c0_i32 = arith.constant 0 : i32
    %c0_i32_0 = arith.constant 0 : i32
    %c0_i32_1 = arith.constant 0 : i32
    return %c0_i32, %c0_i32_0 : i32, i32
  }
  func.func @transform_2(%arg0: i32) -> (i32, i32) {
    %c0_i32 = arith.constant 0 : i32
    %c0_i32_0 = arith.constant 0 : i32
    %c0_i32_1 = arith.constant 0 : i32
    return %c0_i32, %c0_i32_0 : i32, i32
  }
  func.func @transform_3(%arg0: i32) -> (i32, i32) {
    %c0_i32 = arith.constant 0 : i32
    %c0_i32_0 = arith.constant 0 : i32
    %c0_i32_1 = arith.constant 0 : i32
    return %c0_i32, %c0_i32_0 : i32, i32
  }
  func.func @transform_4(%arg0: i32) -> (i32, i32) {
    %c0_i32 = arith.constant 0 : i32
    %c0_i32_0 = arith.constant 0 : i32
    %c0_i32_1 = arith.constant 0 : i32
    return %c0_i32, %c0_i32_0 : i32, i32
  }
  func.func @transform_5(%arg0: i32) -> (i32, i32) {
    %c0_i32 = arith.constant 0 : i32
    %c0_i32_0 = arith.constant 0 : i32
    %c0_i32_1 = arith.constant 0 : i32
    return %c0_i32, %c0_i32_0 : i32, i32
  }
  func.func @transform_6(%arg0: i32) -> (i32, i32) {
    %c0_i32 = arith.constant 0 : i32
    %c0_i32_0 = arith.constant 0 : i32
    %c0_i32_1 = arith.constant 0 : i32
    return %c0_i32, %c0_i32_0 : i32, i32
  }
  func.func @transform_7(%arg0: i32) -> (i32, i32) {
    %c0_i32 = arith.constant 0 : i32
    %c0_i32_0 = arith.constant 0 : i32
    %c0_i32_1 = arith.constant 0 : i32
    return %c0_i32, %c0_i32_0 : i32, i32
  }
  func.func @transform_8(%arg0: i32) -> (i32, i32) {
    %c0_i32 = arith.constant 0 : i32
    %c0_i32_0 = arith.constant 0 : i32
    %c0_i32_1 = arith.constant 0 : i32
    return %c0_i32, %c0_i32_0 : i32, i32
  }
  func.func @transform_9(%arg0: i32) -> (i32, i32) {
    %c0_i32 = arith.constant 0 : i32
    %c0_i32_0 = arith.constant 0 : i32
    %c0_i32_1 = arith.constant 0 : i32
    return %c0_i32, %c0_i32_0 : i32, i32
  }
  func.func @transform_10(%arg0: i32) -> (i32, i32) {
    %c0_i32 = arith.constant 0 : i32
    %c0_i32_0 = arith.constant 0 : i32
    %c0_i32_1 = arith.constant 0 : i32
    return %c0_i32, %c0_i32_0 : i32, i32
  }
  func.func @transform_11(%arg0: i32) -> (i32, i32) {
    %c0_i32 = arith.constant 0 : i32
    %c0_i32_0 = arith.constant 0 : i32
    return %arg0, %c0_i32 : i32, i32
  }
}

</mosaic_0001>

<llo_original>
// kernel: tile.8
$region0: #{tile.8}
  #allocation0 [shape = 's32[1]{0}', space=sflag, size = 0x4, scoped, tag = 'scoped memory for tile.8']
  %s0 = inlined_call_operand.vmem [shape: f32[6], index: 0, kind: input, shape index: {}]
  %s1 = inlined_call_operand.vmem [shape: f32[4,6], index: 1, kind: output, shape index: {}]
  // Predicated region
  $region2: #{tile.8} parent=0 // pred_check
    _
  $region3: #{tile.8} parent=0 // pred_check_branch
    %3 = sbr.rel (0) target = $region5
  $region4: #{tile.8} parent=0 // pred_region
    _
  $region5: #{tile.8} parent=0 // pred_fallthru
    _
  %v4 = vld [vmem:[%s0] ss:$0 sm:$0xff]
  %5 = vst [vmem:[%s1] sm:$0xf] %v4

// kernel: tile.9
$region0: #{tile.9}
  %s0 = inlined_call_operand.vmem [shape: f32[4,6], index: 0, kind: input, shape index: {}]
  %s1 = inlined_call_operand.vmem [shape: f32[1,24], index: 1, kind: output, shape index: {}]
  $region1: #{tile.9} parent=0
    #allocation0 [shape = 'u8[4096]{0}', space=vmem, size = 0x1000, scoped, tag = 'scoped mem for output reshape']
    #allocation1 [shape = 'u8[4096]{0}', space=vmem, size = 0x1000, scoped, tag = 'scoped mem for input reshape']
    %s3 = ssub.s32 16, 1
    %v4 = vld [vmem:[%s0] sm:%s3]
    %5 = vst [vmem:[#allocation1] sm:%s3] %v4
    %v6 = vld [vmem:[#allocation1] sm:$0x1]
    %vm7 = vcmask 48128
    %8 = vst.msk [vmem:[#allocation0] sm:$0x1] %vm7, %v6
    %s9 = scalar_lea.vmem [#allocation1], 3
    %v10 = vld [vmem:[%s9] sm:$0x1]
    %11 = vrot.lane.b32.xlu0 %v10, 18
    %v12 = vpop.permute.xlu0 %11
    %vm13 = vcmask 195728
    %14 = vst.msk [vmem:[#allocation0] sm:$0x1] %vm13, %v12
    %s15 = scalar_lea.vmem [#allocation1], 2
    %v16 = vld [vmem:[%s15] sm:$0x1]
    %17 = vrot.lane.b32.xlu0 %v16, 12
    %v18 = vpop.permute.xlu0 %17
    %vm19 = vcmask 146528
    %20 = vst.msk [vmem:[#allocation0] sm:$0x1] %vm19, %v18
    %s21 = scalar_lea.vmem [#allocation1], 1
    %v22 = vld [vmem:[%s21] sm:$0x1]
    %23 = vrot.lane.b32.xlu0 %v22, 6
    %v24 = vpop.permute.xlu0 %23
    %vm25 = vcmask 97328
    %26 = vst.msk [vmem:[#allocation0] sm:$0x1] %vm25, %v24
    %s28 = ssub.s32 2, 1
    %v29 = vld [vmem:[#allocation0] sm:%s28]
    %s31 = ssub.s32 2, 1
    %32 = vst [vmem:[%s1] sm:%s31] %v29

// kernel: lenet_forward.1
$region0: #{lenet_forward.1}
  #allocation0 [shape = 'u32[]', space=smem, size = 0x4, offset = 0x4, fixed_abs, tag = 'smem constant byte address 0x4 - core index']
  #allocation1 [shape = 'u32[72,128]{1,0:T(1,128)}', space=vmem, size = 0x9000, scoped, tag = 'internal scratch']
  #allocation2 [shape = 'f32[512,6]{1,0:T(8,128)}', space=vmem, size = 0x40000, scoped, tag = 'scratch operand']
  #allocation3 [shape = 'f32[2,400]{1,0:T(2,128)}', space=vmem, size = 0x1000, scoped, tag = 'scratch operand']
  %s0 = inlined_call_operand.vmem [shape: f32[392,100], index: 0, kind: input, shape index: {}]
  %s1 = inlined_call_operand.vmem [shape: f32[100,24], index: 1, kind: input, shape index: {}]
  %s2 = inlined_call_operand.vmem [shape: f32[1,24], index: 2, kind: input, shape index: {}]
  %s3 = inlined_call_operand.vmem [shape: f32[150,16], index: 3, kind: input, shape index: {}]
  %s4 = inlined_call_operand.vmem [shape: f32[1,16], index: 4, kind: input, shape index: {}]
  %s5 = inlined_call_operand.vmem [shape: f32[400,120], index: 5, kind: input, shape index: {}]
  %s6 = inlined_call_operand.vmem [shape: f32[1,120], index: 6, kind: input, shape index: {}]
  %s7 = inlined_call_operand.vmem [shape: f32[120,84], index: 7, kind: input, shape index: {}]
  %s8 = inlined_call_operand.vmem [shape: f32[1,84], index: 8, kind: input, shape index: {}]
  %s9 = inlined_call_operand.vmem [shape: f32[84,10], index: 9, kind: input, shape index: {}]
  %s10 = inlined_call_operand.vmem [shape: f32[1,10], index: 10, kind: input, shape index: {}]
  %s11 = inlined_call_operand.hbm [shape: f32[2,10], index: 11, kind: output, shape index: {}]
  %s12 = sld [smem:[#allocation0]]
  $region54: #{lenet_forward.1} parent=0
    _
  %s14 = ssub.s32 1, %s12
  %s15 = scalar_select 0, %s14, %s12
  $region1: #{lenet_forward.1} parent=0
    #allocation4 [shape = 'u8[1024]{0}', space=vmem, size = 0x400, scoped, tag = 'output window, operand 0, single buffered']
    #allocation5 [shape = 's32[1]{0}', space=sflag, size = 0x4, scoped, tag = 'scoped memory for lenet_forward.1']
    %16 = vsyncpa [#allocation5], 0
    // Predicated region
    $region2: #{lenet_forward.1} parent=1 // pred_check
      _
    $region3: #{lenet_forward.1} parent=1 // pred_check_branch
      %18 = sbr.rel (0) target = $region5
    $region4: #{lenet_forward.1} parent=1 // pred_region
      _
    $region5: #{lenet_forward.1} parent=1 // pred_fallthru
      _
    // Predicated region
    $region6: #{lenet_forward.1} parent=1 // pred_check
      _
    $region7: #{lenet_forward.1} parent=1 // pred_check_branch
      %20 = sbr.rel (0) target = $region9
    $region8: #{lenet_forward.1} parent=1 // pred_region
      _
    $region9: #{lenet_forward.1} parent=1 // pred_fallthru
      _
    // Predicated region
    $region10: #{lenet_forward.1} parent=1 // pred_check
      _
    $region11: #{lenet_forward.1} parent=1 // pred_check_branch
      %22 = sbr.rel (0) target = $region13
    $region12: #{lenet_forward.1} parent=1 // pred_region
      _
    $region13: #{lenet_forward.1} parent=1 // pred_fallthru
      _
    // Predicated region
    $region14: #{lenet_forward.1} parent=1 // pred_check
      _
    $region15: #{lenet_forward.1} parent=1 // pred_check_branch
      %24 = sbr.rel (0) target = $region17
    $region16: #{lenet_forward.1} parent=1 // pred_region
      _
    $region17: #{lenet_forward.1} parent=1 // pred_fallthru
      _
    // Predicated region
    $region18: #{lenet_forward.1} parent=1 // pred_check
      _
    $region19: #{lenet_forward.1} parent=1 // pred_check_branch
      %26 = sbr.rel (0) target = $region21
    $region20: #{lenet_forward.1} parent=1 // pred_region
      _
    $region21: #{lenet_forward.1} parent=1 // pred_fallthru
      _
    // Predicated region
    $region22: #{lenet_forward.1} parent=1 // pred_check
      _
    $region23: #{lenet_forward.1} parent=1 // pred_check_branch
      %28 = sbr.rel (0) target = $region25
    $region24: #{lenet_forward.1} parent=1 // pred_region
      _
    $region25: #{lenet_forward.1} parent=1 // pred_fallthru
      _
    // Predicated region
    $region26: #{lenet_forward.1} parent=1 // pred_check
      _
    $region27: #{lenet_forward.1} parent=1 // pred_check_branch
      %30 = sbr.rel (0) target = $region29
    $region28: #{lenet_forward.1} parent=1 // pred_region
      _
    $region29: #{lenet_forward.1} parent=1 // pred_fallthru
      _
    // Predicated region
    $region30: #{lenet_forward.1} parent=1 // pred_check
      _
    $region31: #{lenet_forward.1} parent=1 // pred_check_branch
      %32 = sbr.rel (0) target = $region33
    $region32: #{lenet_forward.1} parent=1 // pred_region
      _
    $region33: #{lenet_forward.1} parent=1 // pred_fallthru
      _
    // Predicated region
    $region34: #{lenet_forward.1} parent=1 // pred_check
      _
    $region35: #{lenet_forward.1} parent=1 // pred_check_branch
      %34 = sbr.rel (0) target = $region37
    $region36: #{lenet_forward.1} parent=1 // pred_region
      _
    $region37: #{lenet_forward.1} parent=1 // pred_fallthru
      _
    // Predicated region
    $region38: #{lenet_forward.1} parent=1 // pred_check
      _
    $region39: #{lenet_forward.1} parent=1 // pred_check_branch
      %36 = sbr.rel (0) target = $region41
    $region40: #{lenet_forward.1} parent=1 // pred_region
      _
    $region41: #{lenet_forward.1} parent=1 // pred_fallthru
      _
    // Predicated region
    $region42: #{lenet_forward.1} parent=1 // pred_check
      _
    $region43: #{lenet_forward.1} parent=1 // pred_check_branch
      %38 = sbr.rel (0) target = $region45
    $region44: #{lenet_forward.1} parent=1 // pred_region
      _
    $region45: #{lenet_forward.1} parent=1 // pred_fallthru
      _
    %v39 = vld [vmem:[%s0] sm:$0xff]
    %v40 = vld [vmem:[%s0 + $0x8] sm:$0xff]
    %v41 = vld [vmem:[%s0 + $0x10] sm:$0xff]
    %v42 = vld [vmem:[%s0 + $0x18] sm:$0xff]
    %v43 = vld [vmem:[%s0 + $0x20] sm:$0xff]
    %v44 = vld [vmem:[%s0 + $0x28] sm:$0xff]
    %v45 = vld [vmem:[%s0 + $0x30] sm:$0xff]
    %v46 = vld [vmem:[%s0 + $0x38] sm:$0xff]
    %v47 = vld [vmem:[%s0 + $0x40] sm:$0xff]
    %v48 = vld [vmem:[%s0 + $0x48] sm:$0xff]
    %v49 = vld [vmem:[%s0 + $0x50] sm:$0xff]
    %v50 = vld [vmem:[%s0 + $0x58] sm:$0xff]
    %v51 = vld [vmem:[%s0 + $0x60] sm:$0xff]
    %v52 = vld [vmem:[%s0 + $0x68] sm:$0xff]
    %v53 = vld [vmem:[%s0 + $0x70] sm:$0xff]
    %v54 = vld [vmem:[%s0 + $0x78] sm:$0xff]
    %v55 = vld [vmem:[%s0 + $0x80] sm:$0xff]
    %v56 = vld [vmem:[%s0 + $0x88] sm:$0xff]
    %v57 = vld [vmem:[%s0 + $0x90] sm:$0xff]
    %v58 = vld [vmem:[%s0 + $0x98] sm:$0xff]
    %v59 = vld [vmem:[%s0 + $0xa0] sm:$0xff]
    %v60 = vld [vmem:[%s0 + $0xa8] sm:$0xff]
    %v61 = vld [vmem:[%s0 + $0xb0] sm:$0xff]
    %v62 = vld [vmem:[%s0 + $0xb8] sm:$0xff]
    %v63 = vld [vmem:[%s0 + $0xc0] sm:$0xff]
    %v64 = vld [vmem:[%s0 + $0xc8] sm:$0xff]
    %v65 = vld [vmem:[%s0 + $0xd0] sm:$0xff]
    %v66 = vld [vmem:[%s0 + $0xd8] sm:$0xff]
    %v67 = vld [vmem:[%s0 + $0xe0] sm:$0xff]
    %v68 = vld [vmem:[%s0 + $0xe8] sm:$0xff]
    %v69 = vld [vmem:[%s0 + $0xf0] sm:$0xff]
    %v70 = vld [vmem:[%s0 + $0xf8] sm:$0xff]
    %v71 = vld [vmem:[%s0 + $0x100] sm:$0xff]
    %v72 = vld [vmem:[%s0 + $0x108] sm:$0xff]
    %v73 = vld [vmem:[%s0 + $0x110] sm:$0xff]
    %v74 = vld [vmem:[%s0 + $0x118] sm:$0xff]
    %v75 = vld [vmem:[%s0 + $0x120] sm:$0xff]
    %v76 = vld [vmem:[%s0 + $0x128] sm:$0xff]
    %v77 = vld [vmem:[%s0 + $0x130] sm:$0xff]
    %v78 = vld [vmem:[%s0 + $0x138] sm:$0xff]
    %v79 = vld [vmem:[%s0 + $0x140] sm:$0xff]
    %v80 = vld [vmem:[%s0 + $0x148] sm:$0xff]
    %v81 = vld [vmem:[%s0 + $0x150] sm:$0xff]
    %v82 = vld [vmem:[%s0 + $0x158] sm:$0xff]
    %v83 = vld [vmem:[%s0 + $0x160] sm:$0xff]
    %v84 = vld [vmem:[%s0 + $0x168] sm:$0xff]
    %v85 = vld [vmem:[%s0 + $0x170] sm:$0xff]
    %v86 = vld [vmem:[%s0 + $0x178] sm:$0xff]
    %v87 = vld [vmem:[%s0 + $0x180] sm:$0xff]
    %v88 = vld [vmem:[%s1] sm:$0xff]
    %v89 = vld [vmem:[%s1 + $0x8] sm:$0xff]
    %v90 = vld [vmem:[%s1 + $0x10] sm:$0xff]
    %v91 = vld [vmem:[%s1 + $0x18] sm:$0xff]
    %v92 = vld [vmem:[%s1 + $0x20] sm:$0xff]
    %v93 = vld [vmem:[%s1 + $0x28] sm:$0xff]
    %v94 = vld [vmem:[%s1 + $0x30] sm:$0xff]
    %v95 = vld [vmem:[%s1 + $0x38] sm:$0xff]
    %v96 = vld [vmem:[%s1 + $0x40] sm:$0xff]
    %v97 = vld [vmem:[%s1 + $0x48] sm:$0xff]
    %v98 = vld [vmem:[%s1 + $0x50] sm:$0xff]
    %v99 = vld [vmem:[%s1 + $0x58] sm:$0xff]
    %v100 = vld [vmem:[%s1 + $0x60] sm:$0xf]
    %v101 = vld [vmem:[%s2] sm:$0x1]
    %v103 = vperm.slane %v101, 0
    %vm105 = vcmask 818176
    %v107 = vsel %vm105, %v39, 0
    %v110 = vsel %vm105, %v40, 0
    %v113 = vsel %vm105, %v41, 0
    %v116 = vsel %vm105, %v42, 0
    %v119 = vsel %vm105, %v43, 0
    %v122 = vsel %vm105, %v44, 0
    %v125 = vsel %vm105, %v45, 0
    %v128 = vsel %vm105, %v46, 0
    %v131 = vsel %vm105, %v47, 0
    %v134 = vsel %vm105, %v48, 0
    %v137 = vsel %vm105, %v49, 0
    %v140 = vsel %vm105, %v50, 0
    %v143 = vsel %vm105, %v51, 0
    %v146 = vsel %vm105, %v52, 0
    %v149 = vsel %vm105, %v53, 0
    %v152 = vsel %vm105, %v54, 0
    %v155 = vsel %vm105, %v55, 0
    %v158 = vsel %vm105, %v56, 0
    %v161 = vsel %vm105, %v57, 0
    %v164 = vsel %vm105, %v58, 0
    %v167 = vsel %vm105, %v59, 0
    %v170 = vsel %vm105, %v60, 0
    %v173 = vsel %vm105, %v61, 0
    %v176 = vsel %vm105, %v62, 0
    %v179 = vsel %vm105, %v63, 0
    %v182 = vsel %vm105, %v64, 0
    %v185 = vsel %vm105, %v65, 0
    %v188 = vsel %vm105, %v66, 0
    %v191 = vsel %vm105, %v67, 0
    %v194 = vsel %vm105, %v68, 0
    %v197 = vsel %vm105, %v69, 0
    %v200 = vsel %vm105, %v70, 0
    %v203 = vsel %vm105, %v71, 0
    %v206 = vsel %vm105, %v72, 0
    %v209 = vsel %vm105, %v73, 0
    %v212 = vsel %vm105, %v74, 0
    %v215 = vsel %vm105, %v75, 0
    %v218 = vsel %vm105, %v76, 0
    %v221 = vsel %vm105, %v77, 0
    %v224 = vsel %vm105, %v78, 0
    %v227 = vsel %vm105, %v79, 0
    %v230 = vsel %vm105, %v80, 0
    %v233 = vsel %vm105, %v81, 0
    %v236 = vsel %vm105, %v82, 0
    %v239 = vsel %vm105, %v83, 0
    %v242 = vsel %vm105, %v84, 0
    %v245 = vsel %vm105, %v85, 0
    %v248 = vsel %vm105, %v86, 0
    %v251 = vsel %vm105, %v87, 0
    %vm253 = vcmask 1043456
    %v255 = vsel %vm253, %v100, 0
    %257 = vmatpush.msra.mxu0 0.0
    %258 = vmatpush.msra.mxu0 0.0
    %259 = vmatpush.msra.mxu0 0.0
    %260 = vmatpush.msra.mxu0 %v255
    %261 = vmatpush.msra.mxu0 %v99
    %262 = vmatpush.msra.mxu0 %v98
    %263 = vmatpush.msra.mxu0 %v97
    %264 = vmatpush.msra.mxu0 %v96
    %265 = vmatpush.msra.mxu0 %v95
    %266 = vmatpush.msra.mxu0 %v94
    %267 = vmatpush.msra.mxu0 %v93
    %268 = vmatpush.msra.mxu0 %v92
    %269 = vmatpush.msra.mxu0 %v91
    %270 = vmatpush.msra.mxu0 %v90
    %271 = vmatpush.msra.mxu0 %v89
    %272 = vmatpush.msra.mxu0 %v88
    %273 = vmatmul.f32.gmra.mxu0 %v107
    %v274 = vpop.f32.mrf.mxu0
    %v275 = vadd.f32 %v103, %v274
    %276 = vmatmul.f32.gmra.mxu0 %v110
    %v277 = vpop.f32.mrf.mxu0
    %v278 = vadd.f32 %v103, %v277
    %279 = vmatmul.f32.gmra.mxu0 %v113
    %v280 = vpop.f32.mrf.mxu0
    %v281 = vadd.f32 %v103, %v280
    %282 = vmatmul.f32.gmra.mxu0 %v116
    %v283 = vpop.f32.mrf.mxu0
    %v284 = vadd.f32 %v103, %v283
    %285 = vmatmul.f32.gmra.mxu0 %v119
    %v286 = vpop.f32.mrf.mxu0
    %v287 = vadd.f32 %v103, %v286
    %288 = vmatmul.f32.gmra.mxu0 %v122
    %v289 = vpop.f32.mrf.mxu0
    %v290 = vadd.f32 %v103, %v289
    %291 = vmatmul.f32.gmra.mxu0 %v125
    %v292 = vpop.f32.mrf.mxu0
    %v293 = vadd.f32 %v103, %v292
    %294 = vmatmul.f32.gmra.mxu0 %v128
    %v295 = vpop.f32.mrf.mxu0
    %v296 = vadd.f32 %v103, %v295
    %297 = vmatmul.f32.gmra.mxu0 %v131
    %v298 = vpop.f32.mrf.mxu0
    %v299 = vadd.f32 %v103, %v298
    %300 = vmatmul.f32.gmra.mxu0 %v134
    %v301 = vpop.f32.mrf.mxu0
    %v302 = vadd.f32 %v103, %v301
    %303 = vmatmul.f32.gmra.mxu0 %v137
    %v304 = vpop.f32.mrf.mxu0
    %v305 = vadd.f32 %v103, %v304
    %306 = vmatmul.f32.gmra.mxu0 %v140
    %v307 = vpop.f32.mrf.mxu0
    %v308 = vadd.f32 %v103, %v307
    %309 = vmatmul.f32.gmra.mxu0 %v143
    %v310 = vpop.f32.mrf.mxu0
    %v311 = vadd.f32 %v103, %v310
    %312 = vmatmul.f32.gmra.mxu0 %v146
    %v313 = vpop.f32.mrf.mxu0
    %v314 = vadd.f32 %v103, %v313
    %315 = vmatmul.f32.gmra.mxu0 %v149
    %v316 = vpop.f32.mrf.mxu0
    %v317 = vadd.f32 %v103, %v316
    %318 = vmatmul.f32.gmra.mxu0 %v152
    %v319 = vpop.f32.mrf.mxu0
    %v320 = vadd.f32 %v103, %v319
    %321 = vmatmul.f32.gmra.mxu0 %v155
    %v322 = vpop.f32.mrf.mxu0
    %v323 = vadd.f32 %v103, %v322
    %324 = vmatmul.f32.gmra.mxu0 %v158
    %v325 = vpop.f32.mrf.mxu0
    %v326 = vadd.f32 %v103, %v325
    %327 = vmatmul.f32.gmra.mxu0 %v161
    %v328 = vpop.f32.mrf.mxu0
    %v329 = vadd.f32 %v103, %v328
    %330 = vmatmul.f32.gmra.mxu0 %v164
    %v331 = vpop.f32.mrf.mxu0
    %v332 = vadd.f32 %v103, %v331
    %333 = vmatmul.f32.gmra.mxu0 %v167
    %v334 = vpop.f32.mrf.mxu0
    %v335 = vadd.f32 %v103, %v334
    %336 = vmatmul.f32.gmra.mxu0 %v170
    %v337 = vpop.f32.mrf.mxu0
    %v338 = vadd.f32 %v103, %v337
    %339 = vmatmul.f32.gmra.mxu0 %v173
    %v340 = vpop.f32.mrf.mxu0
    %v341 = vadd.f32 %v103, %v340
    %342 = vmatmul.f32.gmra.mxu0 %v176
    %v343 = vpop.f32.mrf.mxu0
    %v344 = vadd.f32 %v103, %v343
    %345 = vmatmul.f32.gmra.mxu0 %v179
    %v346 = vpop.f32.mrf.mxu0
    %v347 = vadd.f32 %v103, %v346
    %348 = vmatmul.f32.gmra.mxu0 %v182
    %v349 = vpop.f32.mrf.mxu0
    %v350 = vadd.f32 %v103, %v349
    %351 = vmatmul.f32.gmra.mxu0 %v185
    %v352 = vpop.f32.mrf.mxu0
    %v353 = vadd.f32 %v103, %v352
    %354 = vmatmul.f32.gmra.mxu0 %v188
    %v355 = vpop.f32.mrf.mxu0
    %v356 = vadd.f32 %v103, %v355
    %357 = vmatmul.f32.gmra.mxu0 %v191
    %v358 = vpop.f32.mrf.mxu0
    %v359 = vadd.f32 %v103, %v358
    %360 = vmatmul.f32.gmra.mxu0 %v194
    %v361 = vpop.f32.mrf.mxu0
    %v362 = vadd.f32 %v103, %v361
    %363 = vmatmul.f32.gmra.mxu0 %v197
    %v364 = vpop.f32.mrf.mxu0
    %v365 = vadd.f32 %v103, %v364
    %366 = vmatmul.f32.gmra.mxu0 %v200
    %v367 = vpop.f32.mrf.mxu0
    %v368 = vadd.f32 %v103, %v367
    %369 = vmatmul.f32.gmra.mxu0 %v203
    %v370 = vpop.f32.mrf.mxu0
    %v371 = vadd.f32 %v103, %v370
    %372 = vmatmul.f32.gmra.mxu0 %v206
    %v373 = vpop.f32.mrf.mxu0
    %v374 = vadd.f32 %v103, %v373
    %375 = vmatmul.f32.gmra.mxu0 %v209
    %v376 = vpop.f32.mrf.mxu0
    %v377 = vadd.f32 %v103, %v376
    %378 = vmatmul.f32.gmra.mxu0 %v212
    %v379 = vpop.f32.mrf.mxu0
    %v380 = vadd.f32 %v103, %v379
    %381 = vmatmul.f32.gmra.mxu0 %v215
    %v382 = vpop.f32.mrf.mxu0
    %v383 = vadd.f32 %v103, %v382
    %384 = vmatmul.f32.gmra.mxu0 %v218
    %v385 = vpop.f32.mrf.mxu0
    %v386 = vadd.f32 %v103, %v385
    %387 = vmatmul.f32.gmra.mxu0 %v221
    %v388 = vpop.f32.mrf.mxu0
    %v389 = vadd.f32 %v103, %v388
    %390 = vmatmul.f32.gmra.mxu0 %v224
    %v391 = vpop.f32.mrf.mxu0
    %v392 = vadd.f32 %v103, %v391
    %393 = vmatmul.f32.gmra.mxu0 %v227
    %v394 = vpop.f32.mrf.mxu0
    %v395 = vadd.f32 %v103, %v394
    %396 = vmatmul.f32.gmra.mxu0 %v230
    %v397 = vpop.f32.mrf.mxu0
    %v398 = vadd.f32 %v103, %v397
    %399 = vmatmul.f32.gmra.mxu0 %v233
    %v400 = vpop.f32.mrf.mxu0
    %v401 = vadd.f32 %v103, %v400
    %402 = vmatmul.f32.gmra.mxu0 %v236
    %v403 = vpop.f32.mrf.mxu0
    %v404 = vadd.f32 %v103, %v403
    %405 = vmatmul.f32.gmra.mxu0 %v239
    %v406 = vpop.f32.mrf.mxu0
    %v407 = vadd.f32 %v103, %v406
    %408 = vmatmul.f32.gmra.mxu0 %v242
    %v409 = vpop.f32.mrf.mxu0
    %v410 = vadd.f32 %v103, %v409
    %411 = vmatmul.f32.gmra.mxu0 %v245
    %v412 = vpop.f32.mrf.mxu0
    %v413 = vadd.f32 %v103, %v412
    %414 = vmatmul.f32.gmra.mxu0 %v248
    %v415 = vpop.f32.mrf.mxu0
    %v416 = vadd.f32 %v103, %v415
    %417 = vmatmul.f32.gmra.mxu0 %v251
    %v418 = vpop.f32.mrf.mxu0
    %v419 = vadd.f32 %v103, %v418
    %420 = vdwg.mxu0
    %v421 = vmul.f32 %v275, 0.5
    %v422 = vmul.f32 %v278, 0.5
    %v423 = vmul.f32 %v281, 0.5
    %v424 = vmul.f32 %v284, 0.5
    %v425 = vmul.f32 %v287, 0.5
    %v426 = vmul.f32 %v290, 0.5
    %v427 = vmul.f32 %v293, 0.5
    %v428 = vmul.f32 %v296, 0.5
    %v429 = vmul.f32 %v299, 0.5
    %v430 = vmul.f32 %v302, 0.5
    %v431 = vmul.f32 %v305, 0.5
    %v432 = vmul.f32 %v308, 0.5
    %v433 = vmul.f32 %v311, 0.5
    %v434 = vmul.f32 %v314, 0.5
    %v435 = vmul.f32 %v317, 0.5
    %v436 = vmul.f32 %v320, 0.5
    %v437 = vmul.f32 %v323, 0.5
    %v438 = vmul.f32 %v326, 0.5
    %v439 = vmul.f32 %v329, 0.5
    %v440 = vmul.f32 %v332, 0.5
    %v441 = vmul.f32 %v335, 0.5
    %v442 = vmul.f32 %v338, 0.5
    %v443 = vmul.f32 %v341, 0.5
    %v444 = vmul.f32 %v344, 0.5
    %v445 = vmul.f32 %v347, 0.5
    %v446 = vmul.f32 %v350, 0.5
    %v447 = vmul.f32 %v353, 0.5
    %v448 = vmul.f32 %v356, 0.5
    %v449 = vmul.f32 %v359, 0.5
    %v450 = vmul.f32 %v362, 0.5
    %v451 = vmul.f32 %v365, 0.5
    %v452 = vmul.f32 %v368, 0.5
    %v453 = vmul.f32 %v371, 0.5
    %v454 = vmul.f32 %v374, 0.5
    %v455 = vmul.f32 %v377, 0.5
    %v456 = vmul.f32 %v380, 0.5
    %v457 = vmul.f32 %v383, 0.5
    %v458 = vmul.f32 %v386, 0.5
    %v459 = vmul.f32 %v389, 0.5
    %v460 = vmul.f32 %v392, 0.5
    %v461 = vmul.f32 %v395, 0.5
    %v462 = vmul.f32 %v398, 0.5
    %v463 = vmul.f32 %v401, 0.5
    %v464 = vmul.f32 %v404, 0.5
    %v465 = vmul.f32 %v407, 0.5
    %v466 = vmul.f32 %v410, 0.5
    %v467 = vmul.f32 %v413, 0.5
    %v468 = vmul.f32 %v416, 0.5
    %v469 = vmul.f32 %v419, 0.5
    %v470 = vtanh.pop %v421
    %v471 = vtanh.pop %v422
    %v472 = vtanh.pop %v423
    %v473 = vtanh.pop %v424
    %v474 = vtanh.pop %v425
    %v475 = vtanh.pop %v426
    %v476 = vtanh.pop %v427
    %v477 = vtanh.pop %v428
    %v478 = vtanh.pop %v429
    %v479 = vtanh.pop %v430
    %v480 = vtanh.pop %v431
    %v481 = vtanh.pop %v432
    %v482 = vtanh.pop %v433
    %v483 = vtanh.pop %v434
    %v484 = vtanh.pop %v435
    %v485 = vtanh.pop %v436
    %v486 = vtanh.pop %v437
    %v487 = vtanh.pop %v438
    %v488 = vtanh.pop %v439
    %v489 = vtanh.pop %v440
    %v490 = vtanh.pop %v441
    %v491 = vtanh.pop %v442
    %v492 = vtanh.pop %v443
    %v493 = vtanh.pop %v444
    %v494 = vtanh.pop %v445
    %v495 = vtanh.pop %v446
    %v496 = vtanh.pop %v447
    %v497 = vtanh.pop %v448
    %v498 = vtanh.pop %v449
    %v499 = vtanh.pop %v450
    %v500 = vtanh.pop %v451
    %v501 = vtanh.pop %v452
    %v502 = vtanh.pop %v453
    %v503 = vtanh.pop %v454
    %v504 = vtanh.pop %v455
    %v505 = vtanh.pop %v456
    %v506 = vtanh.pop %v457
    %v507 = vtanh.pop %v458
    %v508 = vtanh.pop %v459
    %v509 = vtanh.pop %v460
    %v510 = vtanh.pop %v461
    %v511 = vtanh.pop %v462
    %v512 = vtanh.pop %v463
    %v513 = vtanh.pop %v464
    %v514 = vtanh.pop %v465
    %v515 = vtanh.pop %v466
    %v516 = vtanh.pop %v467
    %v517 = vtanh.pop %v468
    %v518 = vtanh.pop %v469
    %v519 = vmul.f32 %v470, 0.5
    %v520 = vmul.f32 %v471, 0.5
    %v521 = vmul.f32 %v472, 0.5
    %v522 = vmul.f32 %v473, 0.5
    %v523 = vmul.f32 %v474, 0.5
    %v524 = vmul.f32 %v475, 0.5
    %v525 = vmul.f32 %v476, 0.5
    %v526 = vmul.f32 %v477, 0.5
    %v527 = vmul.f32 %v478, 0.5
    %v528 = vmul.f32 %v479, 0.5
    %v529 = vmul.f32 %v480, 0.5
    %v530 = vmul.f32 %v481, 0.5
    %v531 = vmul.f32 %v482, 0.5
    %v532 = vmul.f32 %v483, 0.5
    %v533 = vmul.f32 %v484, 0.5
    %v534 = vmul.f32 %v485, 0.5
    %v535 = vmul.f32 %v486, 0.5
    %v536 = vmul.f32 %v487, 0.5
    %v537 = vmul.f32 %v488, 0.5
    %v538 = vmul.f32 %v489, 0.5
    %v539 = vmul.f32 %v490, 0.5
    %v540 = vmul.f32 %v491, 0.5
    %v541 = vmul.f32 %v492, 0.5
    %v542 = vmul.f32 %v493, 0.5
    %v543 = vmul.f32 %v494, 0.5
    %v544 = vmul.f32 %v495, 0.5
    %v545 = vmul.f32 %v496, 0.5
    %v546 = vmul.f32 %v497, 0.5
    %v547 = vmul.f32 %v498, 0.5
    %v548 = vmul.f32 %v499, 0.5
    %v549 = vmul.f32 %v500, 0.5
    %v550 = vmul.f32 %v501, 0.5
    %v551 = vmul.f32 %v502, 0.5
    %v552 = vmul.f32 %v503, 0.5
    %v553 = vmul.f32 %v504, 0.5
    %v554 = vmul.f32 %v505, 0.5
    %v555 = vmul.f32 %v506, 0.5
    %v556 = vmul.f32 %v507, 0.5
    %v557 = vmul.f32 %v508, 0.5
    %v558 = vmul.f32 %v509, 0.5
    %v559 = vmul.f32 %v510, 0.5
    %v560 = vmul.f32 %v511, 0.5
    %v561 = vmul.f32 %v512, 0.5
    %v562 = vmul.f32 %v513, 0.5
    %v563 = vmul.f32 %v514, 0.5
    %v564 = vmul.f32 %v515, 0.5
    %v565 = vmul.f32 %v516, 0.5
    %v566 = vmul.f32 %v517, 0.5
    %v567 = vmul.f32 %v518, 0.5
    %v568 = vadd.f32 %v519, 0.5
    %v569 = vadd.f32 %v520, 0.5
    %v570 = vadd.f32 %v521, 0.5
    %v571 = vadd.f32 %v522, 0.5
    %v572 = vadd.f32 %v523, 0.5
    %v573 = vadd.f32 %v524, 0.5
    %v574 = vadd.f32 %v525, 0.5
    %v575 = vadd.f32 %v526, 0.5
    %v576 = vadd.f32 %v527, 0.5
    %v577 = vadd.f32 %v528, 0.5
    %v578 = vadd.f32 %v529, 0.5
    %v579 = vadd.f32 %v530, 0.5
    %v580 = vadd.f32 %v531, 0.5
    %v581 = vadd.f32 %v532, 0.5
    %v582 = vadd.f32 %v533, 0.5
    %v583 = vadd.f32 %v534, 0.5
    %v584 = vadd.f32 %v535, 0.5
    %v585 = vadd.f32 %v536, 0.5
    %v586 = vadd.f32 %v537, 0.5
    %v587 = vadd.f32 %v538, 0.5
    %v588 = vadd.f32 %v539, 0.5
    %v589 = vadd.f32 %v540, 0.5
    %v590 = vadd.f32 %v541, 0.5
    %v591 = vadd.f32 %v542, 0.5
    %v592 = vadd.f32 %v543, 0.5
    %v593 = vadd.f32 %v544, 0.5
    %v594 = vadd.f32 %v545, 0.5
    %v595 = vadd.f32 %v546, 0.5
    %v596 = vadd.f32 %v547, 0.5
    %v597 = vadd.f32 %v548, 0.5
    %v598 = vadd.f32 %v549, 0.5
    %v599 = vadd.f32 %v550, 0.5
    %v600 = vadd.f32 %v551, 0.5
    %v601 = vadd.f32 %v552, 0.5
    %v602 = vadd.f32 %v553, 0.5
    %v603 = vadd.f32 %v554, 0.5
    %v604 = vadd.f32 %v555, 0.5
    %v605 = vadd.f32 %v556, 0.5
    %v606 = vadd.f32 %v557, 0.5
    %v607 = vadd.f32 %v558, 0.5
    %v608 = vadd.f32 %v559, 0.5
    %v609 = vadd.f32 %v560, 0.5
    %v610 = vadd.f32 %v561, 0.5
    %v611 = vadd.f32 %v562, 0.5
    %v612 = vadd.f32 %v563, 0.5
    %v613 = vadd.f32 %v564, 0.5
    %v614 = vadd.f32 %v565, 0.5
    %v615 = vadd.f32 %v566, 0.5
    %v616 = vadd.f32 %v567, 0.5
    %666 = vrot.lane.b32.xlu0 %v568, 122
    %v667 = vpop.permute.xlu0 %666
    %668 = vrot.lane.b32.xlu0 %v569, 122
    %v669 = vpop.permute.xlu0 %668
    %670 = vrot.lane.b32.xlu0 %v570, 122
    %v671 = vpop.permute.xlu0 %670
    %672 = vrot.lane.b32.xlu0 %v571, 122
    %v673 = vpop.permute.xlu0 %672
    %674 = vrot.lane.b32.xlu0 %v572, 122
    %v675 = vpop.permute.xlu0 %674
    %676 = vrot.lane.b32.xlu0 %v573, 122
    %v677 = vpop.permute.xlu0 %676
    %678 = vrot.lane.b32.xlu0 %v574, 122
    %v679 = vpop.permute.xlu0 %678
    %680 = vrot.lane.b32.xlu0 %v575, 122
    %v681 = vpop.permute.xlu0 %680
    %682 = vrot.lane.b32.xlu0 %v576, 122
    %v683 = vpop.permute.xlu0 %682
    %684 = vrot.lane.b32.xlu0 %v577, 122
    %v685 = vpop.permute.xlu0 %684
    %686 = vrot.lane.b32.xlu0 %v578, 122
    %v687 = vpop.permute.xlu0 %686
    %688 = vrot.lane.b32.xlu0 %v579, 122
    %v689 = vpop.permute.xlu0 %688
    %690 = vrot.lane.b32.xlu0 %v580, 122
    %v691 = vpop.permute.xlu0 %690
    %692 = vrot.lane.b32.xlu0 %v581, 122
    %v693 = vpop.permute.xlu0 %692
    %694 = vrot.lane.b32.xlu0 %v582, 122
    %v695 = vpop.permute.xlu0 %694
    %696 = vrot.lane.b32.xlu0 %v583, 122
    %v697 = vpop.permute.xlu0 %696
    %698 = vrot.lane.b32.xlu0 %v584, 122
    %v699 = vpop.permute.xlu0 %698
    %700 = vrot.lane.b32.xlu0 %v585, 122
    %v701 = vpop.permute.xlu0 %700
    %702 = vrot.lane.b32.xlu0 %v586, 122
    %v703 = vpop.permute.xlu0 %702
    %704 = vrot.lane.b32.xlu0 %v587, 122
    %v705 = vpop.permute.xlu0 %704
    %706 = vrot.lane.b32.xlu0 %v588, 122
    %v707 = vpop.permute.xlu0 %706
    %708 = vrot.lane.b32.xlu0 %v589, 122
    %v709 = vpop.permute.xlu0 %708
    %710 = vrot.lane.b32.xlu0 %v590, 122
    %v711 = vpop.permute.xlu0 %710
    %712 = vrot.lane.b32.xlu0 %v591, 122
    %v713 = vpop.permute.xlu0 %712
    %714 = vrot.lane.b32.xlu0 %v592, 122
    %v715 = vpop.permute.xlu0 %714
    %716 = vrot.lane.b32.xlu0 %v593, 122
    %v717 = vpop.permute.xlu0 %716
    %718 = vrot.lane.b32.xlu0 %v594, 122
    %v719 = vpop.permute.xlu0 %718
    %720 = vrot.lane.b32.xlu0 %v595, 122
    %v721 = vpop.permute.xlu0 %720
    %722 = vrot.lane.b32.xlu0 %v596, 122
    %v723 = vpop.permute.xlu0 %722
    %724 = vrot.lane.b32.xlu0 %v597, 122
    %v725 = vpop.permute.xlu0 %724
    %726 = vrot.lane.b32.xlu0 %v598, 122
    %v727 = vpop.permute.xlu0 %726
    %728 = vrot.lane.b32.xlu0 %v599, 122
    %v729 = vpop.permute.xlu0 %728
    %730 = vrot.lane.b32.xlu0 %v600, 122
    %v731 = vpop.permute.xlu0 %730
    %732 = vrot.lane.b32.xlu0 %v601, 122
    %v733 = vpop.permute.xlu0 %732
    %734 = vrot.lane.b32.xlu0 %v602, 122
    %v735 = vpop.permute.xlu0 %734
    %736 = vrot.lane.b32.xlu0 %v603, 122
    %v737 = vpop.permute.xlu0 %736
    %738 = vrot.lane.b32.xlu0 %v604, 122
    %v739 = vpop.permute.xlu0 %738
    %740 = vrot.lane.b32.xlu0 %v605, 122
    %v741 = vpop.permute.xlu0 %740
    %742 = vrot.lane.b32.xlu0 %v606, 122
    %v743 = vpop.permute.xlu0 %742
    %744 = vrot.lane.b32.xlu0 %v607, 122
    %v745 = vpop.permute.xlu0 %744
    %746 = vrot.lane.b32.xlu0 %v608, 122
    %v747 = vpop.permute.xlu0 %746
    %748 = vrot.lane.b32.xlu0 %v609, 122
    %v749 = vpop.permute.xlu0 %748
    %750 = vrot.lane.b32.xlu0 %v610, 122
    %v751 = vpop.permute.xlu0 %750
    %752 = vrot.lane.b32.xlu0 %v611, 122
    %v753 = vpop.permute.xlu0 %752
    %754 = vrot.lane.b32.xlu0 %v612, 122
    %v755 = vpop.permute.xlu0 %754
    %756 = vrot.lane.b32.xlu0 %v613, 122
    %v757 = vpop.permute.xlu0 %756
    %758 = vrot.lane.b32.xlu0 %v614, 122
    %v759 = vpop.permute.xlu0 %758
    %760 = vrot.lane.b32.xlu0 %v615, 122
    %v761 = vpop.permute.xlu0 %760
    %762 = vrot.lane.b32.xlu0 %v616, 122
    %v763 = vpop.permute.xlu0 %762
    %v813 = vadd.f32 %v568, %v667
    %v814 = vadd.f32 %v569, %v669
    %v815 = vadd.f32 %v570, %v671
    %v816 = vadd.f32 %v571, %v673
    %v817 = vadd.f32 %v572, %v675
    %v818 = vadd.f32 %v573, %v677
    %v819 = vadd.f32 %v574, %v679
    %v820 = vadd.f32 %v575, %v681
    %v821 = vadd.f32 %v576, %v683
    %v822 = vadd.f32 %v577, %v685
    %v823 = vadd.f32 %v578, %v687
    %v824 = vadd.f32 %v579, %v689
    %v825 = vadd.f32 %v580, %v691
    %v826 = vadd.f32 %v581, %v693
    %v827 = vadd.f32 %v582, %v695
    %v828 = vadd.f32 %v583, %v697
    %v829 = vadd.f32 %v584, %v699
    %v830 = vadd.f32 %v585, %v701
    %v831 = vadd.f32 %v586, %v703
    %v832 = vadd.f32 %v587, %v705
    %v833 = vadd.f32 %v588, %v707
    %v834 = vadd.f32 %v589, %v709
    %v835 = vadd.f32 %v590, %v711
    %v836 = vadd.f32 %v591, %v713
    %v837 = vadd.f32 %v592, %v715
    %v838 = vadd.f32 %v593, %v717
    %v839 = vadd.f32 %v594, %v719
    %v840 = vadd.f32 %v595, %v721
    %v841 = vadd.f32 %v596, %v723
    %v842 = vadd.f32 %v597, %v725
    %v843 = vadd.f32 %v598, %v727
    %v844 = vadd.f32 %v599, %v729
    %v845 = vadd.f32 %v600, %v731
    %v846 = vadd.f32 %v601, %v733
    %v847 = vadd.f32 %v602, %v735
    %v848 = vadd.f32 %v603, %v737
    %v849 = vadd.f32 %v604, %v739
    %v850 = vadd.f32 %v605, %v741
    %v851 = vadd.f32 %v606, %v743
    %v852 = vadd.f32 %v607, %v745
    %v853 = vadd.f32 %v608, %v747
    %v854 = vadd.f32 %v609, %v749
    %v855 = vadd.f32 %v610, %v751
    %v856 = vadd.f32 %v611, %v753
    %v857 = vadd.f32 %v612, %v755
    %v858 = vadd.f32 %v613, %v757
    %v859 = vadd.f32 %v614, %v759
    %v860 = vadd.f32 %v615, %v761
    %v861 = vadd.f32 %v616, %v763
    %862 = vrot.lane.b32.xlu0 %v568, 116
    %v863 = vpop.permute.xlu0 %862
    %864 = vrot.lane.b32.xlu0 %v569, 116
    %v865 = vpop.permute.xlu0 %864
    %866 = vrot.lane.b32.xlu0 %v570, 116
    %v867 = vpop.permute.xlu0 %866
    %868 = vrot.lane.b32.xlu0 %v571, 116
    %v869 = vpop.permute.xlu0 %868
    %870 = vrot.lane.b32.xlu0 %v572, 116
    %v871 = vpop.permute.xlu0 %870
    %872 = vrot.lane.b32.xlu0 %v573, 116
    %v873 = vpop.permute.xlu0 %872
    %874 = vrot.lane.b32.xlu0 %v574, 116
    %v875 = vpop.permute.xlu0 %874
    %876 = vrot.lane.b32.xlu0 %v575, 116
    %v877 = vpop.permute.xlu0 %876
    %878 = vrot.lane.b32.xlu0 %v576, 116
    %v879 = vpop.permute.xlu0 %878
    %880 = vrot.lane.b32.xlu0 %v577, 116
    %v881 = vpop.permute.xlu0 %880
    %882 = vrot.lane.b32.xlu0 %v578, 116
    %v883 = vpop.permute.xlu0 %882
    %884 = vrot.lane.b32.xlu0 %v579, 116
    %v885 = vpop.permute.xlu0 %884
    %886 = vrot.lane.b32.xlu0 %v580, 116
    %v887 = vpop.permute.xlu0 %886
    %888 = vrot.lane.b32.xlu0 %v581, 116
    %v889 = vpop.permute.xlu0 %888
    %890 = vrot.lane.b32.xlu0 %v582, 116
    %v891 = vpop.permute.xlu0 %890
    %892 = vrot.lane.b32.xlu0 %v583, 116
    %v893 = vpop.permute.xlu0 %892
    %894 = vrot.lane.b32.xlu0 %v584, 116
    %v895 = vpop.permute.xlu0 %894
    %896 = vrot.lane.b32.xlu0 %v585, 116
    %v897 = vpop.permute.xlu0 %896
    %898 = vrot.lane.b32.xlu0 %v586, 116
    %v899 = vpop.permute.xlu0 %898
    %900 = vrot.lane.b32.xlu0 %v587, 116
    %v901 = vpop.permute.xlu0 %900
    %902 = vrot.lane.b32.xlu0 %v588, 116
    %v903 = vpop.permute.xlu0 %902
    %904 = vrot.lane.b32.xlu0 %v589, 116
    %v905 = vpop.permute.xlu0 %904
    %906 = vrot.lane.b32.xlu0 %v590, 116
    %v907 = vpop.permute.xlu0 %906
    %908 = vrot.lane.b32.xlu0 %v591, 116
    %v909 = vpop.permute.xlu0 %908
    %910 = vrot.lane.b32.xlu0 %v592, 116
    %v911 = vpop.permute.xlu0 %910
    %912 = vrot.lane.b32.xlu0 %v593, 116
    %v913 = vpop.permute.xlu0 %912
    %914 = vrot.lane.b32.xlu0 %v594, 116
    %v915 = vpop.permute.xlu0 %914
    %916 = vrot.lane.b32.xlu0 %v595, 116
    %v917 = vpop.permute.xlu0 %916
    %918 = vrot.lane.b32.xlu0 %v596, 116
    %v919 = vpop.permute.xlu0 %918
    %920 = vrot.lane.b32.xlu0 %v597, 116
    %v921 = vpop.permute.xlu0 %920
    %922 = vrot.lane.b32.xlu0 %v598, 116
    %v923 = vpop.permute.xlu0 %922
    %924 = vrot.lane.b32.xlu0 %v599, 116
    %v925 = vpop.permute.xlu0 %924
    %926 = vrot.lane.b32.xlu0 %v600, 116
    %v927 = vpop.permute.xlu0 %926
    %928 = vrot.lane.b32.xlu0 %v601, 116
    %v929 = vpop.permute.xlu0 %928
    %930 = vrot.lane.b32.xlu0 %v602, 116
    %v931 = vpop.permute.xlu0 %930
    %932 = vrot.lane.b32.xlu0 %v603, 116
    %v933 = vpop.permute.xlu0 %932
    %934 = vrot.lane.b32.xlu0 %v604, 116
    %v935 = vpop.permute.xlu0 %934
    %936 = vrot.lane.b32.xlu0 %v605, 116
    %v937 = vpop.permute.xlu0 %936
    %938 = vrot.lane.b32.xlu0 %v606, 116
    %v939 = vpop.permute.xlu0 %938
    %940 = vrot.lane.b32.xlu0 %v607, 116
    %v941 = vpop.permute.xlu0 %940
    %942 = vrot.lane.b32.xlu0 %v608, 116
    %v943 = vpop.permute.xlu0 %942
    %944 = vrot.lane.b32.xlu0 %v609, 116
    %v945 = vpop.permute.xlu0 %944
    %946 = vrot.lane.b32.xlu0 %v610, 116
    %v947 = vpop.permute.xlu0 %946
    %948 = vrot.lane.b32.xlu0 %v611, 116
    %v949 = vpop.permute.xlu0 %948
    %950 = vrot.lane.b32.xlu0 %v612, 116
    %v951 = vpop.permute.xlu0 %950
    %952 = vrot.lane.b32.xlu0 %v613, 116
    %v953 = vpop.permute.xlu0 %952
    %954 = vrot.lane.b32.xlu0 %v614, 116
    %v955 = vpop.permute.xlu0 %954
    %956 = vrot.lane.b32.xlu0 %v615, 116
    %v957 = vpop.permute.xlu0 %956
    %958 = vrot.lane.b32.xlu0 %v616, 116
    %v959 = vpop.permute.xlu0 %958
    %v1009 = vadd.f32 %v813, %v863
    %v1010 = vadd.f32 %v814, %v865
    %v1011 = vadd.f32 %v815, %v867
    %v1012 = vadd.f32 %v816, %v869
    %v1013 = vadd.f32 %v817, %v871
    %v1014 = vadd.f32 %v818, %v873
    %v1015 = vadd.f32 %v819, %v875
    %v1016 = vadd.f32 %v820, %v877
    %v1017 = vadd.f32 %v821, %v879
    %v1018 = vadd.f32 %v822, %v881
    %v1019 = vadd.f32 %v823, %v883
    %v1020 = vadd.f32 %v824, %v885
    %v1021 = vadd.f32 %v825, %v887
    %v1022 = vadd.f32 %v826, %v889
    %v1023 = vadd.f32 %v827, %v891
    %v1024 = vadd.f32 %v828, %v893
    %v1025 = vadd.f32 %v829, %v895
    %v1026 = vadd.f32 %v830, %v897
    %v1027 = vadd.f32 %v831, %v899
    %v1028 = vadd.f32 %v832, %v901
    %v1029 = vadd.f32 %v833, %v903
    %v1030 = vadd.f32 %v834, %v905
    %v1031 = vadd.f32 %v835, %v907
    %v1032 = vadd.f32 %v836, %v909
    %v1033 = vadd.f32 %v837, %v911
    %v1034 = vadd.f32 %v838, %v913
    %v1035 = vadd.f32 %v839, %v915
    %v1036 = vadd.f32 %v840, %v917
    %v1037 = vadd.f32 %v841, %v919
    %v1038 = vadd.f32 %v842, %v921
    %v1039 = vadd.f32 %v843, %v923
    %v1040 = vadd.f32 %v844, %v925
    %v1041 = vadd.f32 %v845, %v927
    %v1042 = vadd.f32 %v846, %v929
    %v1043 = vadd.f32 %v847, %v931
    %v1044 = vadd.f32 %v848, %v933
    %v1045 = vadd.f32 %v849, %v935
    %v1046 = vadd.f32 %v850, %v937
    %v1047 = vadd.f32 %v851, %v939
    %v1048 = vadd.f32 %v852, %v941
    %v1049 = vadd.f32 %v853, %v943
    %v1050 = vadd.f32 %v854, %v945
    %v1051 = vadd.f32 %v855, %v947
    %v1052 = vadd.f32 %v856, %v949
    %v1053 = vadd.f32 %v857, %v951
    %v1054 = vadd.f32 %v858, %v953
    %v1055 = vadd.f32 %v859, %v955
    %v1056 = vadd.f32 %v860, %v957
    %v1057 = vadd.f32 %v861, %v959
    %1058 = vrot.lane.b32.xlu0 %v568, 110
    %v1059 = vpop.permute.xlu0 %1058
    %1060 = vrot.lane.b32.xlu0 %v569, 110
    %v1061 = vpop.permute.xlu0 %1060
    %1062 = vrot.lane.b32.xlu0 %v570, 110
    %v1063 = vpop.permute.xlu0 %1062
    %1064 = vrot.lane.b32.xlu0 %v571, 110
    %v1065 = vpop.permute.xlu0 %1064
    %1066 = vrot.lane.b32.xlu0 %v572, 110
    %v1067 = vpop.permute.xlu0 %1066
    %1068 = vrot.lane.b32.xlu0 %v573, 110
    %v1069 = vpop.permute.xlu0 %1068
    %1070 = vrot.lane.b32.xlu0 %v574, 110
    %v1071 = vpop.permute.xlu0 %1070
    %1072 = vrot.lane.b32.xlu0 %v575, 110
    %v1073 = vpop.permute.xlu0 %1072
    %1074 = vrot.lane.b32.xlu0 %v576, 110
    %v1075 = vpop.permute.xlu0 %1074
    %1076 = vrot.lane.b32.xlu0 %v577, 110
    %v1077 = vpop.permute.xlu0 %1076
    %1078 = vrot.lane.b32.xlu0 %v578, 110
    %v1079 = vpop.permute.xlu0 %1078
    %1080 = vrot.lane.b32.xlu0 %v579, 110
    %v1081 = vpop.permute.xlu0 %1080
    %1082 = vrot.lane.b32.xlu0 %v580, 110
    %v1083 = vpop.permute.xlu0 %1082
    %1084 = vrot.lane.b32.xlu0 %v581, 110
    %v1085 = vpop.permute.xlu0 %1084
    %1086 = vrot.lane.b32.xlu0 %v582, 110
    %v1087 = vpop.permute.xlu0 %1086
    %1088 = vrot.lane.b32.xlu0 %v583, 110
    %v1089 = vpop.permute.xlu0 %1088
    %1090 = vrot.lane.b32.xlu0 %v584, 110
    %v1091 = vpop.permute.xlu0 %1090
    %1092 = vrot.lane.b32.xlu0 %v585, 110
    %v1093 = vpop.permute.xlu0 %1092
    %1094 = vrot.lane.b32.xlu0 %v586, 110
    %v1095 = vpop.permute.xlu0 %1094
    %1096 = vrot.lane.b32.xlu0 %v587, 110
    %v1097 = vpop.permute.xlu0 %1096
    %1098 = vrot.lane.b32.xlu0 %v588, 110
    %v1099 = vpop.permute.xlu0 %1098
    %1100 = vrot.lane.b32.xlu0 %v589, 110
    %v1101 = vpop.permute.xlu0 %1100
    %1102 = vrot.lane.b32.xlu0 %v590, 110
    %v1103 = vpop.permute.xlu0 %1102
    %1104 = vrot.lane.b32.xlu0 %v591, 110
    %v1105 = vpop.permute.xlu0 %1104
    %1106 = vrot.lane.b32.xlu0 %v592, 110
    %v1107 = vpop.permute.xlu0 %1106
    %1108 = vrot.lane.b32.xlu0 %v593, 110
    %v1109 = vpop.permute.xlu0 %1108
    %1110 = vrot.lane.b32.xlu0 %v594, 110
    %v1111 = vpop.permute.xlu0 %1110
    %1112 = vrot.lane.b32.xlu0 %v595, 110
    %v1113 = vpop.permute.xlu0 %1112
    %1114 = vrot.lane.b32.xlu0 %v596, 110
    %v1115 = vpop.permute.xlu0 %1114
    %1116 = vrot.lane.b32.xlu0 %v597, 110
    %v1117 = vpop.permute.xlu0 %1116
    %1118 = vrot.lane.b32.xlu0 %v598, 110
    %v1119 = vpop.permute.xlu0 %1118
    %1120 = vrot.lane.b32.xlu0 %v599, 110
    %v1121 = vpop.permute.xlu0 %1120
    %1122 = vrot.lane.b32.xlu0 %v600, 110
    %v1123 = vpop.permute.xlu0 %1122
    %1124 = vrot.lane.b32.xlu0 %v601, 110
    %v1125 = vpop.permute.xlu0 %1124
    %1126 = vrot.lane.b32.xlu0 %v602, 110
    %v1127 = vpop.permute.xlu0 %1126
    %1128 = vrot.lane.b32.xlu0 %v603, 110
    %v1129 = vpop.permute.xlu0 %1128
    %1130 = vrot.lane.b32.xlu0 %v604, 110
    %v1131 = vpop.permute.xlu0 %1130
    %1132 = vrot.lane.b32.xlu0 %v605, 110
    %v1133 = vpop.permute.xlu0 %1132
    %1134 = vrot.lane.b32.xlu0 %v606, 110
    %v1135 = vpop.permute.xlu0 %1134
    %1136 = vrot.lane.b32.xlu0 %v607, 110
    %v1137 = vpop.permute.xlu0 %1136
    %1138 = vrot.lane.b32.xlu0 %v608, 110
    %v1139 = vpop.permute.xlu0 %1138
    %1140 = vrot.lane.b32.xlu0 %v609, 110
    %v1141 = vpop.permute.xlu0 %1140
    %1142 = vrot.lane.b32.xlu0 %v610, 110
    %v1143 = vpop.permute.xlu0 %1142
    %1144 = vrot.lane.b32.xlu0 %v611, 110
    %v1145 = vpop.permute.xlu0 %1144
    %1146 = vrot.lane.b32.xlu0 %v612, 110
    %v1147 = vpop.permute.xlu0 %1146
    %1148 = vrot.lane.b32.xlu0 %v613, 110
    %v1149 = vpop.permute.xlu0 %1148
    %1150 = vrot.lane.b32.xlu0 %v614, 110
    %v1151 = vpop.permute.xlu0 %1150
    %1152 = vrot.lane.b32.xlu0 %v615, 110
    %v1153 = vpop.permute.xlu0 %1152
    %1154 = vrot.lane.b32.xlu0 %v616, 110
    %v1155 = vpop.permute.xlu0 %1154
    %v1205 = vadd.f32 %v1009, %v1059
    %v1206 = vadd.f32 %v1010, %v1061
    %v1207 = vadd.f32 %v1011, %v1063
    %v1208 = vadd.f32 %v1012, %v1065
    %v1209 = vadd.f32 %v1013, %v1067
    %v1210 = vadd.f32 %v1014, %v1069
    %v1211 = vadd.f32 %v1015, %v1071
    %v1212 = vadd.f32 %v1016, %v1073
    %v1213 = vadd.f32 %v1017, %v1075
    %v1214 = vadd.f32 %v1018, %v1077
    %v1215 = vadd.f32 %v1019, %v1079
    %v1216 = vadd.f32 %v1020, %v1081
    %v1217 = vadd.f32 %v1021, %v1083
    %v1218 = vadd.f32 %v1022, %v1085
    %v1219 = vadd.f32 %v1023, %v1087
    %v1220 = vadd.f32 %v1024, %v1089
    %v1221 = vadd.f32 %v1025, %v1091
    %v1222 = vadd.f32 %v1026, %v1093
    %v1223 = vadd.f32 %v1027, %v1095
    %v1224 = vadd.f32 %v1028, %v1097
    %v1225 = vadd.f32 %v1029, %v1099
    %v1226 = vadd.f32 %v1030, %v1101
    %v1227 = vadd.f32 %v1031, %v1103
    %v1228 = vadd.f32 %v1032, %v1105
    %v1229 = vadd.f32 %v1033, %v1107
    %v1230 = vadd.f32 %v1034, %v1109
    %v1231 = vadd.f32 %v1035, %v1111
    %v1232 = vadd.f32 %v1036, %v1113
    %v1233 = vadd.f32 %v1037, %v1115
    %v1234 = vadd.f32 %v1038, %v1117
    %v1235 = vadd.f32 %v1039, %v1119
    %v1236 = vadd.f32 %v1040, %v1121
    %v1237 = vadd.f32 %v1041, %v1123
    %v1238 = vadd.f32 %v1042, %v1125
    %v1239 = vadd.f32 %v1043, %v1127
    %v1240 = vadd.f32 %v1044, %v1129
    %v1241 = vadd.f32 %v1045, %v1131
    %v1242 = vadd.f32 %v1046, %v1133
    %v1243 = vadd.f32 %v1047, %v1135
    %v1244 = vadd.f32 %v1048, %v1137
    %v1245 = vadd.f32 %v1049, %v1139
    %v1246 = vadd.f32 %v1050, %v1141
    %v1247 = vadd.f32 %v1051, %v1143
    %v1248 = vadd.f32 %v1052, %v1145
    %v1249 = vadd.f32 %v1053, %v1147
    %v1250 = vadd.f32 %v1054, %v1149
    %v1251 = vadd.f32 %v1055, %v1151
    %v1252 = vadd.f32 %v1056, %v1153
    %v1253 = vadd.f32 %v1057, %v1155
    %vm1254 = vcmask 48128
    %1255 = vst.msk [vmem:[#allocation2] sm:$0xff] %vm1254, %v1205
    %1256 = vst.msk [vmem:[#allocation2 + $0x8] sm:$0xff] %vm1254, %v1206
    %1257 = vst.msk [vmem:[#allocation2 + $0x10] sm:$0xff] %vm1254, %v1207
    %1258 = vst.msk [vmem:[#allocation2 + $0x18] sm:$0xff] %vm1254, %v1208
    %1259 = vst.msk [vmem:[#allocation2 + $0x20] sm:$0xff] %vm1254, %v1209
    %1260 = vst.msk [vmem:[#allocation2 + $0x28] sm:$0xff] %vm1254, %v1210
    %1261 = vst.msk [vmem:[#allocation2 + $0x30] sm:$0xff] %vm1254, %v1211
    %1262 = vst.msk [vmem:[#allocation2 + $0x38] sm:$0xff] %vm1254, %v1212
    %1263 = vst.msk [vmem:[#allocation2 + $0x40] sm:$0xff] %vm1254, %v1213
    %1264 = vst.msk [vmem:[#allocation2 + $0x48] sm:$0xff] %vm1254, %v1214
    %1265 = vst.msk [vmem:[#allocation2 + $0x50] sm:$0xff] %vm1254, %v1215
    %1266 = vst.msk [vmem:[#allocation2 + $0x58] sm:$0xff] %vm1254, %v1216
    %1267 = vst.msk [vmem:[#allocation2 + $0x60] sm:$0xff] %vm1254, %v1217
    %1268 = vst.msk [vmem:[#allocation2 + $0x68] sm:$0xff] %vm1254, %v1218
    %1269 = vst.msk [vmem:[#allocation2 + $0x70] sm:$0xff] %vm1254, %v1219
    %1270 = vst.msk [vmem:[#allocation2 + $0x78] sm:$0xff] %vm1254, %v1220
    %1271 = vst.msk [vmem:[#allocation2 + $0x80] sm:$0xff] %vm1254, %v1221
    %1272 = vst.msk [vmem:[#allocation2 + $0x88] sm:$0xff] %vm1254, %v1222
    %1273 = vst.msk [vmem:[#allocation2 + $0x90] sm:$0xff] %vm1254, %v1223
    %1274 = vst.msk [vmem:[#allocation2 + $0x98] sm:$0xff] %vm1254, %v1224
    %1275 = vst.msk [vmem:[#allocation2 + $0xa0] sm:$0xff] %vm1254, %v1225
    %1276 = vst.msk [vmem:[#allocation2 + $0xa8] sm:$0xff] %vm1254, %v1226
    %1277 = vst.msk [vmem:[#allocation2 + $0xb0] sm:$0xff] %vm1254, %v1227
    %1278 = vst.msk [vmem:[#allocation2 + $0xb8] sm:$0xff] %vm1254, %v1228
    %1279 = vst.msk [vmem:[#allocation2 + $0xc0] sm:$0xff] %vm1254, %v1229
    %1280 = vst.msk [vmem:[#allocation2 + $0xc8] sm:$0xff] %vm1254, %v1230
    %1281 = vst.msk [vmem:[#allocation2 + $0xd0] sm:$0xff] %vm1254, %v1231
    %1282 = vst.msk [vmem:[#allocation2 + $0xd8] sm:$0xff] %vm1254, %v1232
    %1283 = vst.msk [vmem:[#allocation2 + $0xe0] sm:$0xff] %vm1254, %v1233
    %1284 = vst.msk [vmem:[#allocation2 + $0xe8] sm:$0xff] %vm1254, %v1234
    %1285 = vst.msk [vmem:[#allocation2 + $0xf0] sm:$0xff] %vm1254, %v1235
    %1286 = vst.msk [vmem:[#allocation2 + $0xf8] sm:$0xff] %vm1254, %v1236
    %1287 = vst.msk [vmem:[#allocation2 + $0x100] sm:$0xff] %vm1254, %v1237
    %1288 = vst.msk [vmem:[#allocation2 + $0x108] sm:$0xff] %vm1254, %v1238
    %1289 = vst.msk [vmem:[#allocation2 + $0x110] sm:$0xff] %vm1254, %v1239
    %1290 = vst.msk [vmem:[#allocation2 + $0x118] sm:$0xff] %vm1254, %v1240
    %1291 = vst.msk [vmem:[#allocation2 + $0x120] sm:$0xff] %vm1254, %v1241
    %1292 = vst.msk [vmem:[#allocation2 + $0x128] sm:$0xff] %vm1254, %v1242
    %1293 = vst.msk [vmem:[#allocation2 + $0x130] sm:$0xff] %vm1254, %v1243
    %1294 = vst.msk [vmem:[#allocation2 + $0x138] sm:$0xff] %vm1254, %v1244
    %1295 = vst.msk [vmem:[#allocation2 + $0x140] sm:$0xff] %vm1254, %v1245
    %1296 = vst.msk [vmem:[#allocation2 + $0x148] sm:$0xff] %vm1254, %v1246
    %1297 = vst.msk [vmem:[#allocation2 + $0x150] sm:$0xff] %vm1254, %v1247
    %1298 = vst.msk [vmem:[#allocation2 + $0x158] sm:$0xff] %vm1254, %v1248
    %1299 = vst.msk [vmem:[#allocation2 + $0x160] sm:$0xff] %vm1254, %v1249
    %1300 = vst.msk [vmem:[#allocation2 + $0x168] sm:$0xff] %vm1254, %v1250
    %1301 = vst.msk [vmem:[#allocation2 + $0x170] sm:$0xff] %vm1254, %v1251
    %1302 = vst.msk [vmem:[#allocation2 + $0x178] sm:$0xff] %vm1254, %v1252
    %1303 = vst.msk [vmem:[#allocation2 + $0x180] sm:$0xff] %vm1254, %v1253
    %1304 = vst.msk [vmem:[#allocation2 + $0x188] sm:$0xff] %vm1254, 0.0
    %1305 = vst.msk [vmem:[#allocation2 + $0x190] sm:$0xff] %vm1254, 0.0
    %1306 = vst.msk [vmem:[#allocation2 + $0x198] sm:$0xff] %vm1254, 0.0
    %1307 = vst.msk [vmem:[#allocation2 + $0x1a0] sm:$0xff] %vm1254, 0.0
    %1308 = vst.msk [vmem:[#allocation2 + $0x1a8] sm:$0xff] %vm1254, 0.0
    %1309 = vst.msk [vmem:[#allocation2 + $0x1b0] sm:$0xff] %vm1254, 0.0
    %1310 = vst.msk [vmem:[#allocation2 + $0x1b8] sm:$0xff] %vm1254, 0.0
    %1311 = vst.msk [vmem:[#allocation2 + $0x1c0] sm:$0xff] %vm1254, 0.0
    %1312 = vst.msk [vmem:[#allocation2 + $0x1c8] sm:$0xff] %vm1254, 0.0
    %1313 = vst.msk [vmem:[#allocation2 + $0x1d0] sm:$0xff] %vm1254, 0.0
    %1314 = vst.msk [vmem:[#allocation2 + $0x1d8] sm:$0xff] %vm1254, 0.0
    %1315 = vst.msk [vmem:[#allocation2 + $0x1e0] sm:$0xff] %vm1254, 0.0
    %1316 = vst.msk [vmem:[#allocation2 + $0x1e8] sm:$0xff] %vm1254, 0.0
    %1317 = vst.msk [vmem:[#allocation2 + $0x1f0] sm:$0xff] %vm1254, 0.0
    %1318 = vst.msk [vmem:[#allocation2 + $0x1f8] sm:$0xff] %vm1254, 0.0
    %v1319 = vld [vmem:[#allocation2] sm:$0xff]
    %v1320 = vld [vmem:[#allocation2 + $0x8] sm:$0xff]
    %v1321 = vld [vmem:[#allocation2 + $0x10] sm:$0xff]
    %v1322 = vld [vmem:[#allocation2 + $0x18] sm:$0xff]
    %v1323 = vld [vmem:[#allocation2 + $0x20] sm:$0xff]
    %v1324 = vld [vmem:[#allocation2 + $0x28] sm:$0xff]
    %v1325 = vld [vmem:[#allocation2 + $0x30] sm:$0xff]
    %v1326 = vld [vmem:[#allocation2 + $0x38] sm:$0xff]
    %v1327 = vld [vmem:[#allocation2 + $0x40] sm:$0xff]
    %v1328 = vld [vmem:[#allocation2 + $0x48] sm:$0xff]
    %v1329 = vld [vmem:[#allocation2 + $0x50] sm:$0xff]
    %v1330 = vld [vmem:[#allocation2 + $0x58] sm:$0xff]
    %v1331 = vld [vmem:[#allocation2 + $0x60] sm:$0xff]
    %v1332 = vld [vmem:[#allocation2 + $0x68] sm:$0xff]
    %v1333 = vld [vmem:[#allocation2 + $0x70] sm:$0xff]
    %v1334 = vld [vmem:[#allocation2 + $0x78] sm:$0xff]
    %v1335 = vld [vmem:[#allocation2 + $0x80] sm:$0xff]
    %v1336 = vld [vmem:[#allocation2 + $0x88] sm:$0xff]
    %v1337 = vld [vmem:[#allocation2 + $0x90] sm:$0xff]
    %v1338 = vld [vmem:[#allocation2 + $0x98] sm:$0xff]
    %v1339 = vld [vmem:[#allocation2 + $0xa0] sm:$0xff]
    %v1340 = vld [vmem:[#allocation2 + $0xa8] sm:$0xff]
    %v1341 = vld [vmem:[#allocation2 + $0xb0] sm:$0xff]
    %v1342 = vld [vmem:[#allocation2 + $0xb8] sm:$0xff]
    %v1343 = vld [vmem:[#allocation2 + $0xc0] sm:$0xff]
    %v1344 = vld [vmem:[#allocation2 + $0xc8] sm:$0xff]
    %v1345 = vld [vmem:[#allocation2 + $0xd0] sm:$0xff]
    %v1346 = vld [vmem:[#allocation2 + $0xd8] sm:$0xff]
    %v1347 = vld [vmem:[#allocation2 + $0xe0] sm:$0xff]
    %v1348 = vld [vmem:[#allocation2 + $0xe8] sm:$0xff]
    %v1349 = vld [vmem:[#allocation2 + $0xf0] sm:$0xff]
    %v1350 = vld [vmem:[#allocation2 + $0xf8] sm:$0xff]
    %v1351 = vld [vmem:[#allocation2 + $0x100] sm:$0xff]
    %v1352 = vld [vmem:[#allocation2 + $0x108] sm:$0xff]
    %v1353 = vld [vmem:[#allocation2 + $0x110] sm:$0xff]
    %v1354 = vld [vmem:[#allocation2 + $0x118] sm:$0xff]
    %v1355 = vld [vmem:[#allocation2 + $0x120] sm:$0xff]
    %v1356 = vld [vmem:[#allocation2 + $0x128] sm:$0xff]
    %v1357 = vld [vmem:[#allocation2 + $0x130] sm:$0xff]
    %v1358 = vld [vmem:[#allocation2 + $0x138] sm:$0xff]
    %v1359 = vld [vmem:[#allocation2 + $0x140] sm:$0xff]
    %v1360 = vld [vmem:[#allocation2 + $0x148] sm:$0xff]
    %v1361 = vld [vmem:[#allocation2 + $0x150] sm:$0xff]
    %v1362 = vld [vmem:[#allocation2 + $0x158] sm:$0xff]
    %v1363 = vld [vmem:[#allocation2 + $0x160] sm:$0xff]
    %v1364 = vld [vmem:[#allocation2 + $0x168] sm:$0xff]
    %v1365 = vld [vmem:[#allocation2 + $0x170] sm:$0xff]
    %v1366 = vld [vmem:[#allocation2 + $0x178] sm:$0xff]
    %v1367 = vld [vmem:[#allocation2 + $0x180] sm:$0xff]
    %v1368 = vld [vmem:[%s3] sm:$0x3f]
    %v1369 = vld [vmem:[%s4] sm:$0x1]
    %v1371 = vperm.slane %v1369, 0
    %v1374 = vsel %vm1254, %v1319, 0
    %v1377 = vsel %vm1254, %v1320, 0
    %v1380 = vsel %vm1254, %v1321, 0
    %v1383 = vsel %vm1254, %v1322, 0
    %v1386 = vsel %vm1254, %v1323, 0
    %v1389 = vsel %vm1254, %v1324, 0
    %v1392 = vsel %vm1254, %v1325, 0
    %v1395 = vsel %vm1254, %v1326, 0
    %v1398 = vsel %vm1254, %v1327, 0
    %v1401 = vsel %vm1254, %v1328, 0
    %v1404 = vsel %vm1254, %v1329, 0
    %v1407 = vsel %vm1254, %v1330, 0
    %v1410 = vsel %vm1254, %v1331, 0
    %v1413 = vsel %vm1254, %v1332, 0
    %v1416 = vsel %vm1254, %v1333, 0
    %v1419 = vsel %vm1254, %v1334, 0
    %v1422 = vsel %vm1254, %v1335, 0
    %v1425 = vsel %vm1254, %v1336, 0
    %v1428 = vsel %vm1254, %v1337, 0
    %v1431 = vsel %vm1254, %v1338, 0
    %v1434 = vsel %vm1254, %v1339, 0
    %v1437 = vsel %vm1254, %v1340, 0
    %v1440 = vsel %vm1254, %v1341, 0
    %v1443 = vsel %vm1254, %v1342, 0
    %v1446 = vsel %vm1254, %v1343, 0
    %v1449 = vsel %vm1254, %v1344, 0
    %v1452 = vsel %vm1254, %v1345, 0
    %v1455 = vsel %vm1254, %v1346, 0
    %v1458 = vsel %vm1254, %v1347, 0
    %v1461 = vsel %vm1254, %v1348, 0
    %v1464 = vsel %vm1254, %v1349, 0
    %v1467 = vsel %vm1254, %v1350, 0
    %v1470 = vsel %vm1254, %v1351, 0
    %v1473 = vsel %vm1254, %v1352, 0
    %v1476 = vsel %vm1254, %v1353, 0
    %v1479 = vsel %vm1254, %v1354, 0
    %v1482 = vsel %vm1254, %v1355, 0
    %v1485 = vsel %vm1254, %v1356, 0
    %v1488 = vsel %vm1254, %v1357, 0
    %v1491 = vsel %vm1254, %v1358, 0
    %v1494 = vsel %vm1254, %v1359, 0
    %v1497 = vsel %vm1254, %v1360, 0
    %v1500 = vsel %vm1254, %v1361, 0
    %v1503 = vsel %vm1254, %v1362, 0
    %v1506 = vsel %vm1254, %v1363, 0
    %v1509 = vsel %vm1254, %v1364, 0
    %v1512 = vsel %vm1254, %v1365, 0
    %v1515 = vsel %vm1254, %v1366, 0
    %v1518 = vsel %vm1254, %v1367, 0
    %vm1520 = vcmask 1045504
    %v1522 = vsel %vm1520, %v1368, 0
    %1524 = vmatpush.msra.mxu0 0.0
    %1525 = vmatpush.msra.mxu0 0.0
    %1526 = vmatpush.msra.mxu0 0.0
    %1527 = vmatpush.msra.mxu0 0.0
    %1528 = vmatpush.msra.mxu0 0.0
    %1529 = vmatpush.msra.mxu0 0.0
    %1530 = vmatpush.msra.mxu0 0.0
    %1531 = vmatpush.msra.mxu0 0.0
    %1532 = vmatpush.msra.mxu0 0.0
    %1533 = vmatpush.msra.mxu0 0.0
    %1534 = vmatpush.msra.mxu0 0.0
    %1535 = vmatpush.msra.mxu0 0.0
    %1536 = vmatpush.msra.mxu0 0.0
    %1537 = vmatpush.msra.mxu0 0.0
    %1538 = vmatpush.msra.mxu0 0.0
    %1539 = vmatpush.msra.mxu0 %v1522
    %1540 = vmatmul.f32.gmra.mxu0 %v1374
    %v1541 = vpop.f32.mrf.mxu0
    %v1542 = vadd.f32 %v1371, %v1541
    %1543 = vmatmul.f32.gmra.mxu0 %v1377
    %v1544 = vpop.f32.mrf.mxu0
    %v1545 = vadd.f32 %v1371, %v1544
    %1546 = vmatmul.f32.gmra.mxu0 %v1380
    %v1547 = vpop.f32.mrf.mxu0
    %v1548 = vadd.f32 %v1371, %v1547
    %1549 = vmatmul.f32.gmra.mxu0 %v1383
    %v1550 = vpop.f32.mrf.mxu0
    %v1551 = vadd.f32 %v1371, %v1550
    %1552 = vmatmul.f32.gmra.mxu0 %v1386
    %v1553 = vpop.f32.mrf.mxu0
    %v1554 = vadd.f32 %v1371, %v1553
    %1555 = vmatmul.f32.gmra.mxu0 %v1389
    %v1556 = vpop.f32.mrf.mxu0
    %v1557 = vadd.f32 %v1371, %v1556
    %1558 = vmatmul.f32.gmra.mxu0 %v1392
    %v1559 = vpop.f32.mrf.mxu0
    %1560 = vmatmul.f32.gmra.mxu0 %v1395
    %v1561 = vpop.f32.mrf.mxu0
    %v1562 = vadd.f32 %v1371, %v1561
    %1563 = vmatmul.f32.gmra.mxu0 %v1398
    %v1564 = vpop.f32.mrf.mxu0
    %v1565 = vadd.f32 %v1371, %v1564
    %1566 = vmatmul.f32.gmra.mxu0 %v1401
    %v1567 = vpop.f32.mrf.mxu0
    %v1568 = vadd.f32 %v1371, %v1567
    %1569 = vmatmul.f32.gmra.mxu0 %v1404
    %v1570 = vpop.f32.mrf.mxu0
    %v1571 = vadd.f32 %v1371, %v1570
    %1572 = vmatmul.f32.gmra.mxu0 %v1407
    %v1573 = vpop.f32.mrf.mxu0
    %v1574 = vadd.f32 %v1371, %v1573
    %1575 = vmatmul.f32.gmra.mxu0 %v1410
    %v1576 = vpop.f32.mrf.mxu0
    %v1577 = vadd.f32 %v1371, %v1576
    %1578 = vmatmul.f32.gmra.mxu0 %v1413
    %v1579 = vpop.f32.mrf.mxu0
    %1580 = vmatmul.f32.gmra.mxu0 %v1416
    %v1581 = vpop.f32.mrf.mxu0
    %v1582 = vadd.f32 %v1371, %v1581
    %1583 = vmatmul.f32.gmra.mxu0 %v1419
    %v1584 = vpop.f32.mrf.mxu0
    %v1585 = vadd.f32 %v1371, %v1584
    %1586 = vmatmul.f32.gmra.mxu0 %v1422
    %v1587 = vpop.f32.mrf.mxu0
    %v1588 = vadd.f32 %v1371, %v1587
    %1589 = vmatmul.f32.gmra.mxu0 %v1425
    %v1590 = vpop.f32.mrf.mxu0
    %v1591 = vadd.f32 %v1371, %v1590
    %1592 = vmatmul.f32.gmra.mxu0 %v1428
    %v1593 = vpop.f32.mrf.mxu0
    %v1594 = vadd.f32 %v1371, %v1593
    %1595 = vmatmul.f32.gmra.mxu0 %v1431
    %v1596 = vpop.f32.mrf.mxu0
    %v1597 = vadd.f32 %v1371, %v1596
    %1598 = vmatmul.f32.gmra.mxu0 %v1434
    %v1599 = vpop.f32.mrf.mxu0
    %1600 = vmatmul.f32.gmra.mxu0 %v1437
    %v1601 = vpop.f32.mrf.mxu0
    %v1602 = vadd.f32 %v1371, %v1601
    %1603 = vmatmul.f32.gmra.mxu0 %v1440
    %v1604 = vpop.f32.mrf.mxu0
    %v1605 = vadd.f32 %v1371, %v1604
    %1606 = vmatmul.f32.gmra.mxu0 %v1443
    %v1607 = vpop.f32.mrf.mxu0
    %v1608 = vadd.f32 %v1371, %v1607
    %1609 = vmatmul.f32.gmra.mxu0 %v1446
    %v1610 = vpop.f32.mrf.mxu0
    %v1611 = vadd.f32 %v1371, %v1610
    %1612 = vmatmul.f32.gmra.mxu0 %v1449
    %v1613 = vpop.f32.mrf.mxu0
    %v1614 = vadd.f32 %v1371, %v1613
    %1615 = vmatmul.f32.gmra.mxu0 %v1452
    %v1616 = vpop.f32.mrf.mxu0
    %v1617 = vadd.f32 %v1371, %v1616
    %1618 = vmatmul.f32.gmra.mxu0 %v1455
    %v1619 = vpop.f32.mrf.mxu0
    %1620 = vmatmul.f32.gmra.mxu0 %v1458
    %v1621 = vpop.f32.mrf.mxu0
    %v1622 = vadd.f32 %v1371, %v1621
    %1623 = vmatmul.f32.gmra.mxu0 %v1461
    %v1624 = vpop.f32.mrf.mxu0
    %v1625 = vadd.f32 %v1371, %v1624
    %1626 = vmatmul.f32.gmra.mxu0 %v1464
    %v1627 = vpop.f32.mrf.mxu0
    %v1628 = vadd.f32 %v1371, %v1627
    %1629 = vmatmul.f32.gmra.mxu0 %v1467
    %v1630 = vpop.f32.mrf.mxu0
    %v1631 = vadd.f32 %v1371, %v1630
    %1632 = vmatmul.f32.gmra.mxu0 %v1470
    %v1633 = vpop.f32.mrf.mxu0
    %v1634 = vadd.f32 %v1371, %v1633
    %1635 = vmatmul.f32.gmra.mxu0 %v1473
    %v1636 = vpop.f32.mrf.mxu0
    %v1637 = vadd.f32 %v1371, %v1636
    %1638 = vmatmul.f32.gmra.mxu0 %v1476
    %v1639 = vpop.f32.mrf.mxu0
    %1640 = vmatmul.f32.gmra.mxu0 %v1479
    %v1641 = vpop.f32.mrf.mxu0
    %1642 = vmatmul.f32.gmra.mxu0 %v1482
    %v1643 = vpop.f32.mrf.mxu0
    %1644 = vmatmul.f32.gmra.mxu0 %v1485
    %v1645 = vpop.f32.mrf.mxu0
    %1646 = vmatmul.f32.gmra.mxu0 %v1488
    %v1647 = vpop.f32.mrf.mxu0
    %1648 = vmatmul.f32.gmra.mxu0 %v1491
    %v1649 = vpop.f32.mrf.mxu0
    %1650 = vmatmul.f32.gmra.mxu0 %v1494
    %v1651 = vpop.f32.mrf.mxu0
    %1652 = vmatmul.f32.gmra.mxu0 %v1497
    %v1653 = vpop.f32.mrf.mxu0
    %1654 = vmatmul.f32.gmra.mxu0 %v1500
    %v1655 = vpop.f32.mrf.mxu0
    %1656 = vmatmul.f32.gmra.mxu0 %v1503
    %v1657 = vpop.f32.mrf.mxu0
    %1658 = vmatmul.f32.gmra.mxu0 %v1506
    %v1659 = vpop.f32.mrf.mxu0
    %1660 = vmatmul.f32.gmra.mxu0 %v1509
    %v1661 = vpop.f32.mrf.mxu0
    %1662 = vmatmul.f32.gmra.mxu0 %v1512
    %v1663 = vpop.f32.mrf.mxu0
    %1664 = vmatmul.f32.gmra.mxu0 %v1515
    %v1665 = vpop.f32.mrf.mxu0
    %1666 = vmatmul.f32.gmra.mxu0 %v1518
    %v1667 = vpop.f32.mrf.mxu0
    %1668 = vdwg.mxu0
    %v1669 = vld [vmem:[#allocation2 + $0x2] sm:$0xff]
    %v1670 = vld [vmem:[#allocation2 + $0xa] sm:$0xff]
    %v1671 = vld [vmem:[#allocation2 + $0x12] sm:$0xff]
    %v1672 = vld [vmem:[#allocation2 + $0x1a] sm:$0xff]
    %v1673 = vld [vmem:[#allocation2 + $0x22] sm:$0xff]
    %v1674 = vld [vmem:[#allocation2 + $0x2a] sm:$0xff]
    %v1675 = vld [vmem:[#allocation2 + $0x32] sm:$0xff]
    %v1676 = vld [vmem:[#allocation2 + $0x3a] sm:$0xff]
    %v1677 = vld [vmem:[#allocation2 + $0x42] sm:$0xff]
    %v1678 = vld [vmem:[#allocation2 + $0x4a] sm:$0xff]
    %v1679 = vld [vmem:[#allocation2 + $0x52] sm:$0xff]
    %v1680 = vld [vmem:[#allocation2 + $0x5a] sm:$0xff]
    %v1681 = vld [vmem:[#allocation2 + $0x62] sm:$0xff]
    %v1682 = vld [vmem:[#allocation2 + $0x6a] sm:$0xff]
    %v1683 = vld [vmem:[#allocation2 + $0x72] sm:$0xff]
    %v1684 = vld [vmem:[#allocation2 + $0x7a] sm:$0xff]
    %v1685 = vld [vmem:[#allocation2 + $0x82] sm:$0xff]
    %v1686 = vld [vmem:[#allocation2 + $0x8a] sm:$0xff]
    %v1687 = vld [vmem:[#allocation2 + $0x92] sm:$0xff]
    %v1688 = vld [vmem:[#allocation2 + $0x9a] sm:$0xff]
    %v1689 = vld [vmem:[#allocation2 + $0xa2] sm:$0xff]
    %v1690 = vld [vmem:[#allocation2 + $0xaa] sm:$0xff]
    %v1691 = vld [vmem:[#allocation2 + $0xb2] sm:$0xff]
    %v1692 = vld [vmem:[#allocation2 + $0xba] sm:$0xff]
    %v1693 = vld [vmem:[#allocation2 + $0xc2] sm:$0xff]
    %v1694 = vld [vmem:[#allocation2 + $0xca] sm:$0xff]
    %v1695 = vld [vmem:[#allocation2 + $0xd2] sm:$0xff]
    %v1696 = vld [vmem:[#allocation2 + $0xda] sm:$0xff]
    %v1697 = vld [vmem:[#allocation2 + $0xe2] sm:$0xff]
    %v1698 = vld [vmem:[#allocation2 + $0xea] sm:$0xff]
    %v1699 = vld [vmem:[#allocation2 + $0xf2] sm:$0xff]
    %v1700 = vld [vmem:[#allocation2 + $0xfa] sm:$0xff]
    %v1701 = vld [vmem:[#allocation2 + $0x102] sm:$0xff]
    %v1702 = vld [vmem:[#allocation2 + $0x10a] sm:$0xff]
    %v1703 = vld [vmem:[#allocation2 + $0x112] sm:$0xff]
    %v1704 = vld [vmem:[#allocation2 + $0x11a] sm:$0xff]
    %v1705 = vld [vmem:[#allocation2 + $0x122] sm:$0xff]
    %v1706 = vld [vmem:[#allocation2 + $0x12a] sm:$0xff]
    %v1707 = vld [vmem:[#allocation2 + $0x132] sm:$0xff]
    %v1708 = vld [vmem:[#allocation2 + $0x13a] sm:$0xff]
    %v1709 = vld [vmem:[#allocation2 + $0x142] sm:$0xff]
    %v1710 = vld [vmem:[#allocation2 + $0x14a] sm:$0xff]
    %v1711 = vld [vmem:[#allocation2 + $0x152] sm:$0xff]
    %v1712 = vld [vmem:[#allocation2 + $0x15a] sm:$0xff]
    %v1713 = vld [vmem:[#allocation2 + $0x162] sm:$0xff]
    %v1714 = vld [vmem:[#allocation2 + $0x16a] sm:$0xff]
    %v1715 = vld [vmem:[#allocation2 + $0x172] sm:$0xff]
    %v1716 = vld [vmem:[#allocation2 + $0x17a] sm:$0xff]
    %v1717 = vld [vmem:[#allocation2 + $0x182] sm:$0xff]
    %v1718 = vld [vmem:[%s3 + $0x6] sm:$0x3f]
    %v1720 = vsel %vm1254, %v1669, 0
    %v1723 = vsel %vm1254, %v1670, 0
    %v1726 = vsel %vm1254, %v1671, 0
    %v1729 = vsel %vm1254, %v1672, 0
    %v1732 = vsel %vm1254, %v1673, 0
    %v1735 = vsel %vm1254, %v1674, 0
    %v1738 = vsel %vm1254, %v1675, 0
    %v1741 = vsel %vm1254, %v1676, 0
    %v1744 = vsel %vm1254, %v1677, 0
    %v1747 = vsel %vm1254, %v1678, 0
    %v1750 = vsel %vm1254, %v1679, 0
    %v1753 = vsel %vm1254, %v1680, 0
    %v1756 = vsel %vm1254, %v1681, 0
    %v1759 = vsel %vm1254, %v1682, 0
    %v1762 = vsel %vm1254, %v1683, 0
    %v1765 = vsel %vm1254, %v1684, 0
    %v1768 = vsel %vm1254, %v1685, 0
    %v1771 = vsel %vm1254, %v1686, 0
    %v1774 = vsel %vm1254, %v1687, 0
    %v1777 = vsel %vm1254, %v1688, 0
    %v1780 = vsel %vm1254, %v1689, 0
    %v1783 = vsel %vm1254, %v1690, 0
    %v1786 = vsel %vm1254, %v1691, 0
    %v1789 = vsel %vm1254, %v1692, 0
    %v1792 = vsel %vm1254, %v1693, 0
    %v1795 = vsel %vm1254, %v1694, 0
    %v1798 = vsel %vm1254, %v1695, 0
    %v1801 = vsel %vm1254, %v1696, 0
    %v1804 = vsel %vm1254, %v1697, 0
    %v1807 = vsel %vm1254, %v1698, 0
    %v1810 = vsel %vm1254, %v1699, 0
    %v1813 = vsel %vm1254, %v1700, 0
    %v1816 = vsel %vm1254, %v1701, 0
    %v1819 = vsel %vm1254, %v1702, 0
    %v1822 = vsel %vm1254, %v1703, 0
    %v1825 = vsel %vm1254, %v1704, 0
    %v1828 = vsel %vm1254, %v1705, 0
    %v1831 = vsel %vm1254, %v1706, 0
    %v1834 = vsel %vm1254, %v1707, 0
    %v1837 = vsel %vm1254, %v1708, 0
    %v1840 = vsel %vm1254, %v1709, 0
    %v1843 = vsel %vm1254, %v1710, 0
    %v1846 = vsel %vm1254, %v1711, 0
    %v1849 = vsel %vm1254, %v1712, 0
    %v1852 = vsel %vm1254, %v1713, 0
    %v1855 = vsel %vm1254, %v1714, 0
    %v1858 = vsel %vm1254, %v1715, 0
    %v1861 = vsel %vm1254, %v1716, 0
    %v1864 = vsel %vm1254, %v1717, 0
    %v1867 = vsel %vm1520, %v1718, 0
    %1869 = vmatpush.msra.mxu0 0.0
    %1870 = vmatpush.msra.mxu0 0.0
    %1871 = vmatpush.msra.mxu0 0.0
    %1872 = vmatpush.msra.mxu0 0.0
    %1873 = vmatpush.msra.mxu0 0.0
    %1874 = vmatpush.msra.mxu0 0.0
    %1875 = vmatpush.msra.mxu0 0.0
    %1876 = vmatpush.msra.mxu0 0.0
    %1877 = vmatpush.msra.mxu0 0.0
    %1878 = vmatpush.msra.mxu0 0.0
    %1879 = vmatpush.msra.mxu0 0.0
    %1880 = vmatpush.msra.mxu0 0.0
    %1881 = vmatpush.msra.mxu0 0.0
    %1882 = vmatpush.msra.mxu0 0.0
    %1883 = vmatpush.msra.mxu0 0.0
    %1884 = vmatpush.msra.mxu0 %v1867
    %1885 = vmatmul.f32.gmra.mxu0 %v1720
    %v1886 = vpop.f32.mrf.mxu0
    %v1887 = vadd.f32 0.0, %v1886
    %1888 = vmatmul.f32.gmra.mxu0 %v1723
    %v1889 = vpop.f32.mrf.mxu0
    %v1890 = vadd.f32 0.0, %v1889
    %1891 = vmatmul.f32.gmra.mxu0 %v1726
    %v1892 = vpop.f32.mrf.mxu0
    %v1893 = vadd.f32 0.0, %v1892
    %1894 = vmatmul.f32.gmra.mxu0 %v1729
    %v1895 = vpop.f32.mrf.mxu0
    %v1896 = vadd.f32 0.0, %v1895
    %1897 = vmatmul.f32.gmra.mxu0 %v1732
    %v1898 = vpop.f32.mrf.mxu0
    %v1899 = vadd.f32 0.0, %v1898
    %1900 = vmatmul.f32.gmra.mxu0 %v1735
    %v1901 = vpop.f32.mrf.mxu0
    %v1902 = vadd.f32 0.0, %v1901
    %1903 = vmatmul.f32.gmra.mxu0 %v1738
    %v1904 = vpop.f32.mrf.mxu0
    %1905 = vmatmul.f32.gmra.mxu0 %v1741
    %v1906 = vpop.f32.mrf.mxu0
    %v1907 = vadd.f32 0.0, %v1906
    %1908 = vmatmul.f32.gmra.mxu0 %v1744
    %v1909 = vpop.f32.mrf.mxu0
    %v1910 = vadd.f32 0.0, %v1909
    %1911 = vmatmul.f32.gmra.mxu0 %v1747
    %v1912 = vpop.f32.mrf.mxu0
    %v1913 = vadd.f32 0.0, %v1912
    %1914 = vmatmul.f32.gmra.mxu0 %v1750
    %v1915 = vpop.f32.mrf.mxu0
    %v1916 = vadd.f32 0.0, %v1915
    %1917 = vmatmul.f32.gmra.mxu0 %v1753
    %v1918 = vpop.f32.mrf.mxu0
    %v1919 = vadd.f32 0.0, %v1918
    %1920 = vmatmul.f32.gmra.mxu0 %v1756
    %v1921 = vpop.f32.mrf.mxu0
    %v1922 = vadd.f32 0.0, %v1921
    %1923 = vmatmul.f32.gmra.mxu0 %v1759
    %v1924 = vpop.f32.mrf.mxu0
    %1925 = vmatmul.f32.gmra.mxu0 %v1762
    %v1926 = vpop.f32.mrf.mxu0
    %v1927 = vadd.f32 0.0, %v1926
    %1928 = vmatmul.f32.gmra.mxu0 %v1765
    %v1929 = vpop.f32.mrf.mxu0
    %v1930 = vadd.f32 0.0, %v1929
    %1931 = vmatmul.f32.gmra.mxu0 %v1768
    %v1932 = vpop.f32.mrf.mxu0
    %v1933 = vadd.f32 0.0, %v1932
    %1934 = vmatmul.f32.gmra.mxu0 %v1771
    %v1935 = vpop.f32.mrf.mxu0
    %v1936 = vadd.f32 0.0, %v1935
    %1937 = vmatmul.f32.gmra.mxu0 %v1774
    %v1938 = vpop.f32.mrf.mxu0
    %v1939 = vadd.f32 0.0, %v1938
    %1940 = vmatmul.f32.gmra.mxu0 %v1777
    %v1941 = vpop.f32.mrf.mxu0
    %v1942 = vadd.f32 0.0, %v1941
    %1943 = vmatmul.f32.gmra.mxu0 %v1780
    %v1944 = vpop.f32.mrf.mxu0
    %1945 = vmatmul.f32.gmra.mxu0 %v1783
    %v1946 = vpop.f32.mrf.mxu0
    %v1947 = vadd.f32 0.0, %v1946
    %1948 = vmatmul.f32.gmra.mxu0 %v1786
    %v1949 = vpop.f32.mrf.mxu0
    %v1950 = vadd.f32 0.0, %v1949
    %1951 = vmatmul.f32.gmra.mxu0 %v1789
    %v1952 = vpop.f32.mrf.mxu0
    %v1953 = vadd.f32 0.0, %v1952
    %1954 = vmatmul.f32.gmra.mxu0 %v1792
    %v1955 = vpop.f32.mrf.mxu0
    %v1956 = vadd.f32 0.0, %v1955
    %1957 = vmatmul.f32.gmra.mxu0 %v1795
    %v1958 = vpop.f32.mrf.mxu0
    %v1959 = vadd.f32 0.0, %v1958
    %1960 = vmatmul.f32.gmra.mxu0 %v1798
    %v1961 = vpop.f32.mrf.mxu0
    %v1962 = vadd.f32 0.0, %v1961
    %1963 = vmatmul.f32.gmra.mxu0 %v1801
    %v1964 = vpop.f32.mrf.mxu0
    %1965 = vmatmul.f32.gmra.mxu0 %v1804
    %v1966 = vpop.f32.mrf.mxu0
    %v1967 = vadd.f32 0.0, %v1966
    %1968 = vmatmul.f32.gmra.mxu0 %v1807
    %v1969 = vpop.f32.mrf.mxu0
    %v1970 = vadd.f32 0.0, %v1969
    %1971 = vmatmul.f32.gmra.mxu0 %v1810
    %v1972 = vpop.f32.mrf.mxu0
    %v1973 = vadd.f32 0.0, %v1972
    %1974 = vmatmul.f32.gmra.mxu0 %v1813
    %v1975 = vpop.f32.mrf.mxu0
    %v1976 = vadd.f32 0.0, %v1975
    %1977 = vmatmul.f32.gmra.mxu0 %v1816
    %v1978 = vpop.f32.mrf.mxu0
    %v1979 = vadd.f32 0.0, %v1978
    %1980 = vmatmul.f32.gmra.mxu0 %v1819
    %v1981 = vpop.f32.mrf.mxu0
    %v1982 = vadd.f32 0.0, %v1981
    %1983 = vmatmul.f32.gmra.mxu0 %v1822
    %v1984 = vpop.f32.mrf.mxu0
    %1985 = vmatmul.f32.gmra.mxu0 %v1825
    %v1986 = vpop.f32.mrf.mxu0
    %1987 = vmatmul.f32.gmra.mxu0 %v1828
    %v1988 = vpop.f32.mrf.mxu0
    %1989 = vmatmul.f32.gmra.mxu0 %v1831
    %v1990 = vpop.f32.mrf.mxu0
    %1991 = vmatmul.f32.gmra.mxu0 %v1834
    %v1992 = vpop.f32.mrf.mxu0
    %1993 = vmatmul.f32.gmra.mxu0 %v1837
    %v1994 = vpop.f32.mrf.mxu0
    %1995 = vmatmul.f32.gmra.mxu0 %v1840
    %v1996 = vpop.f32.mrf.mxu0
    %1997 = vmatmul.f32.gmra.mxu0 %v1843
    %v1998 = vpop.f32.mrf.mxu0
    %1999 = vmatmul.f32.gmra.mxu0 %v1846
    %v2000 = vpop.f32.mrf.mxu0
    %2001 = vmatmul.f32.gmra.mxu0 %v1849
    %v2002 = vpop.f32.mrf.mxu0
    %2003 = vmatmul.f32.gmra.mxu0 %v1852
    %v2004 = vpop.f32.mrf.mxu0
    %2005 = vmatmul.f32.gmra.mxu0 %v1855
    %v2006 = vpop.f32.mrf.mxu0
    %2007 = vmatmul.f32.gmra.mxu0 %v1858
    %v2008 = vpop.f32.mrf.mxu0
    %2009 = vmatmul.f32.gmra.mxu0 %v1861
    %v2010 = vpop.f32.mrf.mxu0
    %2011 = vmatmul.f32.gmra.mxu0 %v1864
    %v2012 = vpop.f32.mrf.mxu0
    %2013 = vdwg.mxu0
    %v2014 = vadd.f32 %v1542, %v1887
    %v2015 = vadd.f32 %v1545, %v1890
    %v2016 = vadd.f32 %v1548, %v1893
    %v2017 = vadd.f32 %v1551, %v1896
    %v2018 = vadd.f32 %v1554, %v1899
    %v2019 = vadd.f32 %v1557, %v1902
    %v2020 = vadd.f32 %v1562, %v1907
    %v2021 = vadd.f32 %v1565, %v1910
    %v2022 = vadd.f32 %v1568, %v1913
    %v2023 = vadd.f32 %v1571, %v1916
    %v2024 = vadd.f32 %v1574, %v1919
    %v2025 = vadd.f32 %v1577, %v1922
    %v2026 = vadd.f32 %v1582, %v1927
    %v2027 = vadd.f32 %v1585, %v1930
    %v2028 = vadd.f32 %v1588, %v1933
    %v2029 = vadd.f32 %v1591, %v1936
    %v2030 = vadd.f32 %v1594, %v1939
    %v2031 = vadd.f32 %v1597, %v1942
    %v2032 = vadd.f32 %v1602, %v1947
    %v2033 = vadd.f32 %v1605, %v1950
    %v2034 = vadd.f32 %v1608, %v1953
    %v2035 = vadd.f32 %v1611, %v1956
    %v2036 = vadd.f32 %v1614, %v1959
    %v2037 = vadd.f32 %v1617, %v1962
    %v2038 = vadd.f32 %v1622, %v1967
    %v2039 = vadd.f32 %v1625, %v1970
    %v2040 = vadd.f32 %v1628, %v1973
    %v2041 = vadd.f32 %v1631, %v1976
    %v2042 = vadd.f32 %v1634, %v1979
    %v2043 = vadd.f32 %v1637, %v1982
    %v2044 = vld [vmem:[#allocation2 + $0x4] sm:$0xff]
    %v2045 = vld [vmem:[#allocation2 + $0xc] sm:$0xff]
    %v2046 = vld [vmem:[#allocation2 + $0x14] sm:$0xff]
    %v2047 = vld [vmem:[#allocation2 + $0x1c] sm:$0xff]
    %v2048 = vld [vmem:[#allocation2 + $0x24] sm:$0xff]
    %v2049 = vld [vmem:[#allocation2 + $0x2c] sm:$0xff]
    %v2050 = vld [vmem:[#allocation2 + $0x34] sm:$0xff]
    %v2051 = vld [vmem:[#allocation2 + $0x3c] sm:$0xff]
    %v2052 = vld [vmem:[#allocation2 + $0x44] sm:$0xff]
    %v2053 = vld [vmem:[#allocation2 + $0x4c] sm:$0xff]
    %v2054 = vld [vmem:[#allocation2 + $0x54] sm:$0xff]
    %v2055 = vld [vmem:[#allocation2 + $0x5c] sm:$0xff]
    %v2056 = vld [vmem:[#allocation2 + $0x64] sm:$0xff]
    %v2057 = vld [vmem:[#allocation2 + $0x6c] sm:$0xff]
    %v2058 = vld [vmem:[#allocation2 + $0x74] sm:$0xff]
    %v2059 = vld [vmem:[#allocation2 + $0x7c] sm:$0xff]
    %v2060 = vld [vmem:[#allocation2 + $0x84] sm:$0xff]
    %v2061 = vld [vmem:[#allocation2 + $0x8c] sm:$0xff]
    %v2062 = vld [vmem:[#allocation2 + $0x94] sm:$0xff]
    %v2063 = vld [vmem:[#allocation2 + $0x9c] sm:$0xff]
    %v2064 = vld [vmem:[#allocation2 + $0xa4] sm:$0xff]
    %v2065 = vld [vmem:[#allocation2 + $0xac] sm:$0xff]
    %v2066 = vld [vmem:[#allocation2 + $0xb4] sm:$0xff]
    %v2067 = vld [vmem:[#allocation2 + $0xbc] sm:$0xff]
    %v2068 = vld [vmem:[#allocation2 + $0xc4] sm:$0xff]
    %v2069 = vld [vmem:[#allocation2 + $0xcc] sm:$0xff]
    %v2070 = vld [vmem:[#allocation2 + $0xd4] sm:$0xff]
    %v2071 = vld [vmem:[#allocation2 + $0xdc] sm:$0xff]
    %v2072 = vld [vmem:[#allocation2 + $0xe4] sm:$0xff]
    %v2073 = vld [vmem:[#allocation2 + $0xec] sm:$0xff]
    %v2074 = vld [vmem:[#allocation2 + $0xf4] sm:$0xff]
    %v2075 = vld [vmem:[#allocation2 + $0xfc] sm:$0xff]
    %v2076 = vld [vmem:[#allocation2 + $0x104] sm:$0xff]
    %v2077 = vld [vmem:[#allocation2 + $0x10c] sm:$0xff]
    %v2078 = vld [vmem:[#allocation2 + $0x114] sm:$0xff]
    %v2079 = vld [vmem:[#allocation2 + $0x11c] sm:$0xff]
    %v2080 = vld [vmem:[#allocation2 + $0x124] sm:$0xff]
    %v2081 = vld [vmem:[#allocation2 + $0x12c] sm:$0xff]
    %v2082 = vld [vmem:[#allocation2 + $0x134] sm:$0xff]
    %v2083 = vld [vmem:[#allocation2 + $0x13c] sm:$0xff]
    %v2084 = vld [vmem:[#allocation2 + $0x144] sm:$0xff]
    %v2085 = vld [vmem:[#allocation2 + $0x14c] sm:$0xff]
    %v2086 = vld [vmem:[#allocation2 + $0x154] sm:$0xff]
    %v2087 = vld [vmem:[#allocation2 + $0x15c] sm:$0xff]
    %v2088 = vld [vmem:[#allocation2 + $0x164] sm:$0xff]
    %v2089 = vld [vmem:[#allocation2 + $0x16c] sm:$0xff]
    %v2090 = vld [vmem:[#allocation2 + $0x174] sm:$0xff]
    %v2091 = vld [vmem:[#allocation2 + $0x17c] sm:$0xff]
    %v2092 = vld [vmem:[#allocation2 + $0x184] sm:$0xff]
    %v2093 = vld [vmem:[%s3 + $0xc] sm:$0x3f]
    %v2095 = vsel %vm1254, %v2044, 0
    %v2098 = vsel %vm1254, %v2045, 0
    %v2101 = vsel %vm1254, %v2046, 0
    %v2104 = vsel %vm1254, %v2047, 0
    %v2107 = vsel %vm1254, %v2048, 0
    %v2110 = vsel %vm1254, %v2049, 0
    %v2113 = vsel %vm1254, %v2050, 0
    %v2116 = vsel %vm1254, %v2051, 0
    %v2119 = vsel %vm1254, %v2052, 0
    %v2122 = vsel %vm1254, %v2053, 0
    %v2125 = vsel %vm1254, %v2054, 0
    %v2128 = vsel %vm1254, %v2055, 0
    %v2131 = vsel %vm1254, %v2056, 0
    %v2134 = vsel %vm1254, %v2057, 0
    %v2137 = vsel %vm1254, %v2058, 0
    %v2140 = vsel %vm1254, %v2059, 0
    %v2143 = vsel %vm1254, %v2060, 0
    %v2146 = vsel %vm1254, %v2061, 0
    %v2149 = vsel %vm1254, %v2062, 0
    %v2152 = vsel %vm1254, %v2063, 0
    %v2155 = vsel %vm1254, %v2064, 0
    %v2158 = vsel %vm1254, %v2065, 0
    %v2161 = vsel %vm1254, %v2066, 0
    %v2164 = vsel %vm1254, %v2067, 0
    %v2167 = vsel %vm1254, %v2068, 0
    %v2170 = vsel %vm1254, %v2069, 0
    %v2173 = vsel %vm1254, %v2070, 0
    %v2176 = vsel %vm1254, %v2071, 0
    %v2179 = vsel %vm1254, %v2072, 0
    %v2182 = vsel %vm1254, %v2073, 0
    %v2185 = vsel %vm1254, %v2074, 0
    %v2188 = vsel %vm1254, %v2075, 0
    %v2191 = vsel %vm1254, %v2076, 0
    %v2194 = vsel %vm1254, %v2077, 0
    %v2197 = vsel %vm1254, %v2078, 0
    %v2200 = vsel %vm1254, %v2079, 0
    %v2203 = vsel %vm1254, %v2080, 0
    %v2206 = vsel %vm1254, %v2081, 0
    %v2209 = vsel %vm1254, %v2082, 0
    %v2212 = vsel %vm1254, %v2083, 0
    %v2215 = vsel %vm1254, %v2084, 0
    %v2218 = vsel %vm1254, %v2085, 0
    %v2221 = vsel %vm1254, %v2086, 0
    %v2224 = vsel %vm1254, %v2087, 0
    %v2227 = vsel %vm1254, %v2088, 0
    %v2230 = vsel %vm1254, %v2089, 0
    %v2233 = vsel %vm1254, %v2090, 0
    %v2236 = vsel %vm1254, %v2091, 0
    %v2239 = vsel %vm1254, %v2092, 0
    %v2242 = vsel %vm1520, %v2093, 0
    %2244 = vmatpush.msra.mxu0 0.0
    %2245 = vmatpush.msra.mxu0 0.0
    %2246 = vmatpush.msra.mxu0 0.0
    %2247 = vmatpush.msra.mxu0 0.0
    %2248 = vmatpush.msra.mxu0 0.0
    %2249 = vmatpush.msra.mxu0 0.0
    %2250 = vmatpush.msra.mxu0 0.0
    %2251 = vmatpush.msra.mxu0 0.0
    %2252 = vmatpush.msra.mxu0 0.0
    %2253 = vmatpush.msra.mxu0 0.0
    %2254 = vmatpush.msra.mxu0 0.0
    %2255 = vmatpush.msra.mxu0 0.0
    %2256 = vmatpush.msra.mxu0 0.0
    %2257 = vmatpush.msra.mxu0 0.0
    %2258 = vmatpush.msra.mxu0 0.0
    %2259 = vmatpush.msra.mxu0 %v2242
    %2260 = vmatmul.f32.gmra.mxu0 %v2095
    %v2261 = vpop.f32.mrf.mxu0
    %v2262 = vadd.f32 0.0, %v2261
    %2263 = vmatmul.f32.gmra.mxu0 %v2098
    %v2264 = vpop.f32.mrf.mxu0
    %v2265 = vadd.f32 0.0, %v2264
    %2266 = vmatmul.f32.gmra.mxu0 %v2101
    %v2267 = vpop.f32.mrf.mxu0
    %v2268 = vadd.f32 0.0, %v2267
    %2269 = vmatmul.f32.gmra.mxu0 %v2104
    %v2270 = vpop.f32.mrf.mxu0
    %v2271 = vadd.f32 0.0, %v2270
    %2272 = vmatmul.f32.gmra.mxu0 %v2107
    %v2273 = vpop.f32.mrf.mxu0
    %v2274 = vadd.f32 0.0, %v2273
    %2275 = vmatmul.f32.gmra.mxu0 %v2110
    %v2276 = vpop.f32.mrf.mxu0
    %v2277 = vadd.f32 0.0, %v2276
    %2278 = vmatmul.f32.gmra.mxu0 %v2113
    %v2279 = vpop.f32.mrf.mxu0
    %2280 = vmatmul.f32.gmra.mxu0 %v2116
    %v2281 = vpop.f32.mrf.mxu0
    %v2282 = vadd.f32 0.0, %v2281
    %2283 = vmatmul.f32.gmra.mxu0 %v2119
    %v2284 = vpop.f32.mrf.mxu0
    %v2285 = vadd.f32 0.0, %v2284
    %2286 = vmatmul.f32.gmra.mxu0 %v2122
    %v2287 = vpop.f32.mrf.mxu0
    %v2288 = vadd.f32 0.0, %v2287
    %2289 = vmatmul.f32.gmra.mxu0 %v2125
    %v2290 = vpop.f32.mrf.mxu0
    %v2291 = vadd.f32 0.0, %v2290
    %2292 = vmatmul.f32.gmra.mxu0 %v2128
    %v2293 = vpop.f32.mrf.mxu0
    %v2294 = vadd.f32 0.0, %v2293
    %2295 = vmatmul.f32.gmra.mxu0 %v2131
    %v2296 = vpop.f32.mrf.mxu0
    %v2297 = vadd.f32 0.0, %v2296
    %2298 = vmatmul.f32.gmra.mxu0 %v2134
    %v2299 = vpop.f32.mrf.mxu0
    %2300 = vmatmul.f32.gmra.mxu0 %v2137
    %v2301 = vpop.f32.mrf.mxu0
    %v2302 = vadd.f32 0.0, %v2301
    %2303 = vmatmul.f32.gmra.mxu0 %v2140
    %v2304 = vpop.f32.mrf.mxu0
    %v2305 = vadd.f32 0.0, %v2304
    %2306 = vmatmul.f32.gmra.mxu0 %v2143
    %v2307 = vpop.f32.mrf.mxu0
    %v2308 = vadd.f32 0.0, %v2307
    %2309 = vmatmul.f32.gmra.mxu0 %v2146
    %v2310 = vpop.f32.mrf.mxu0
    %v2311 = vadd.f32 0.0, %v2310
    %2312 = vmatmul.f32.gmra.mxu0 %v2149
    %v2313 = vpop.f32.mrf.mxu0
    %v2314 = vadd.f32 0.0, %v2313
    %2315 = vmatmul.f32.gmra.mxu0 %v2152
    %v2316 = vpop.f32.mrf.mxu0
    %v2317 = vadd.f32 0.0, %v2316
    %2318 = vmatmul.f32.gmra.mxu0 %v2155
    %v2319 = vpop.f32.mrf.mxu0
    %2320 = vmatmul.f32.gmra.mxu0 %v2158
    %v2321 = vpop.f32.mrf.mxu0
    %v2322 = vadd.f32 0.0, %v2321
    %2323 = vmatmul.f32.gmra.mxu0 %v2161
    %v2324 = vpop.f32.mrf.mxu0
    %v2325 = vadd.f32 0.0, %v2324
    %2326 = vmatmul.f32.gmra.mxu0 %v2164
    %v2327 = vpop.f32.mrf.mxu0
    %v2328 = vadd.f32 0.0, %v2327
    %2329 = vmatmul.f32.gmra.mxu0 %v2167
    %v2330 = vpop.f32.mrf.mxu0
    %v2331 = vadd.f32 0.0, %v2330
    %2332 = vmatmul.f32.gmra.mxu0 %v2170
    %v2333 = vpop.f32.mrf.mxu0
    %v2334 = vadd.f32 0.0, %v2333
    %2335 = vmatmul.f32.gmra.mxu0 %v2173
    %v2336 = vpop.f32.mrf.mxu0
    %v2337 = vadd.f32 0.0, %v2336
    %2338 = vmatmul.f32.gmra.mxu0 %v2176
    %v2339 = vpop.f32.mrf.mxu0
    %2340 = vmatmul.f32.gmra.mxu0 %v2179
    %v2341 = vpop.f32.mrf.mxu0
    %v2342 = vadd.f32 0.0, %v2341
    %2343 = vmatmul.f32.gmra.mxu0 %v2182
    %v2344 = vpop.f32.mrf.mxu0
    %v2345 = vadd.f32 0.0, %v2344
    %2346 = vmatmul.f32.gmra.mxu0 %v2185
    %v2347 = vpop.f32.mrf.mxu0
    %v2348 = vadd.f32 0.0, %v2347
    %2349 = vmatmul.f32.gmra.mxu0 %v2188
    %v2350 = vpop.f32.mrf.mxu0
    %v2351 = vadd.f32 0.0, %v2350
    %2352 = vmatmul.f32.gmra.mxu0 %v2191
    %v2353 = vpop.f32.mrf.mxu0
    %v2354 = vadd.f32 0.0, %v2353
    %2355 = vmatmul.f32.gmra.mxu0 %v2194
    %v2356 = vpop.f32.mrf.mxu0
    %v2357 = vadd.f32 0.0, %v2356
    %2358 = vmatmul.f32.gmra.mxu0 %v2197
    %v2359 = vpop.f32.mrf.mxu0
    %2360 = vmatmul.f32.gmra.mxu0 %v2200
    %v2361 = vpop.f32.mrf.mxu0
    %2362 = vmatmul.f32.gmra.mxu0 %v2203
    %v2363 = vpop.f32.mrf.mxu0
    %2364 = vmatmul.f32.gmra.mxu0 %v2206
    %v2365 = vpop.f32.mrf.mxu0
    %2366 = vmatmul.f32.gmra.mxu0 %v2209
    %v2367 = vpop.f32.mrf.mxu0
    %2368 = vmatmul.f32.gmra.mxu0 %v2212
    %v2369 = vpop.f32.mrf.mxu0
    %2370 = vmatmul.f32.gmra.mxu0 %v2215
    %v2371 = vpop.f32.mrf.mxu0
    %2372 = vmatmul.f32.gmra.mxu0 %v2218
    %v2373 = vpop.f32.mrf.mxu0
    %2374 = vmatmul.f32.gmra.mxu0 %v2221
    %v2375 = vpop.f32.mrf.mxu0
    %2376 = vmatmul.f32.gmra.mxu0 %v2224
    %v2377 = vpop.f32.mrf.mxu0
    %2378 = vmatmul.f32.gmra.mxu0 %v2227
    %v2379 = vpop.f32.mrf.mxu0
    %2380 = vmatmul.f32.gmra.mxu0 %v2230
    %v2381 = vpop.f32.mrf.mxu0
    %2382 = vmatmul.f32.gmra.mxu0 %v2233
    %v2383 = vpop.f32.mrf.mxu0
    %2384 = vmatmul.f32.gmra.mxu0 %v2236
    %v2385 = vpop.f32.mrf.mxu0
    %2386 = vmatmul.f32.gmra.mxu0 %v2239
    %v2387 = vpop.f32.mrf.mxu0
    %2388 = vdwg.mxu0
    %v2389 = vadd.f32 %v2014, %v2262
    %v2390 = vadd.f32 %v2015, %v2265
    %v2391 = vadd.f32 %v2016, %v2268
    %v2392 = vadd.f32 %v2017, %v2271
    %v2393 = vadd.f32 %v2018, %v2274
    %v2394 = vadd.f32 %v2019, %v2277
    %v2395 = vadd.f32 %v2020, %v2282
    %v2396 = vadd.f32 %v2021, %v2285
    %v2397 = vadd.f32 %v2022, %v2288
    %v2398 = vadd.f32 %v2023, %v2291
    %v2399 = vadd.f32 %v2024, %v2294
    %v2400 = vadd.f32 %v2025, %v2297
    %v2401 = vadd.f32 %v2026, %v2302
    %v2402 = vadd.f32 %v2027, %v2305
    %v2403 = vadd.f32 %v2028, %v2308
    %v2404 = vadd.f32 %v2029, %v2311
    %v2405 = vadd.f32 %v2030, %v2314
    %v2406 = vadd.f32 %v2031, %v2317
    %v2407 = vadd.f32 %v2032, %v2322
    %v2408 = vadd.f32 %v2033, %v2325
    %v2409 = vadd.f32 %v2034, %v2328
    %v2410 = vadd.f32 %v2035, %v2331
    %v2411 = vadd.f32 %v2036, %v2334
    %v2412 = vadd.f32 %v2037, %v2337
    %v2413 = vadd.f32 %v2038, %v2342
    %v2414 = vadd.f32 %v2039, %v2345
    %v2415 = vadd.f32 %v2040, %v2348
    %v2416 = vadd.f32 %v2041, %v2351
    %v2417 = vadd.f32 %v2042, %v2354
    %v2418 = vadd.f32 %v2043, %v2357
    %v2419 = vld [vmem:[#allocation2 + $0x6] sm:$0xff]
    %v2420 = vld [vmem:[#allocation2 + $0xe] sm:$0xff]
    %v2421 = vld [vmem:[#allocation2 + $0x16] sm:$0xff]
    %v2422 = vld [vmem:[#allocation2 + $0x1e] sm:$0xff]
    %v2423 = vld [vmem:[#allocation2 + $0x26] sm:$0xff]
    %v2424 = vld [vmem:[#allocation2 + $0x2e] sm:$0xff]
    %v2425 = vld [vmem:[#allocation2 + $0x36] sm:$0xff]
    %v2426 = vld [vmem:[#allocation2 + $0x3e] sm:$0xff]
    %v2427 = vld [vmem:[#allocation2 + $0x46] sm:$0xff]
    %v2428 = vld [vmem:[#allocation2 + $0x4e] sm:$0xff]
    %v2429 = vld [vmem:[#allocation2 + $0x56] sm:$0xff]
    %v2430 = vld [vmem:[#allocation2 + $0x5e] sm:$0xff]
    %v2431 = vld [vmem:[#allocation2 + $0x66] sm:$0xff]
    %v2432 = vld [vmem:[#allocation2 + $0x6e] sm:$0xff]
    %v2433 = vld [vmem:[#allocation2 + $0x76] sm:$0xff]
    %v2434 = vld [vmem:[#allocation2 + $0x7e] sm:$0xff]
    %v2435 = vld [vmem:[#allocation2 + $0x86] sm:$0xff]
    %v2436 = vld [vmem:[#allocation2 + $0x8e] sm:$0xff]
    %v2437 = vld [vmem:[#allocation2 + $0x96] sm:$0xff]
    %v2438 = vld [vmem:[#allocation2 + $0x9e] sm:$0xff]
    %v2439 = vld [vmem:[#allocation2 + $0xa6] sm:$0xff]
    %v2440 = vld [vmem:[#allocation2 + $0xae] sm:$0xff]
    %v2441 = vld [vmem:[#allocation2 + $0xb6] sm:$0xff]
    %v2442 = vld [vmem:[#allocation2 + $0xbe] sm:$0xff]
    %v2443 = vld [vmem:[#allocation2 + $0xc6] sm:$0xff]
    %v2444 = vld [vmem:[#allocation2 + $0xce] sm:$0xff]
    %v2445 = vld [vmem:[#allocation2 + $0xd6] sm:$0xff]
    %v2446 = vld [vmem:[#allocation2 + $0xde] sm:$0xff]
    %v2447 = vld [vmem:[#allocation2 + $0xe6] sm:$0xff]
    %v2448 = vld [vmem:[#allocation2 + $0xee] sm:$0xff]
    %v2449 = vld [vmem:[#allocation2 + $0xf6] sm:$0xff]
    %v2450 = vld [vmem:[#allocation2 + $0xfe] sm:$0xff]
    %v2451 = vld [vmem:[#allocation2 + $0x106] sm:$0xff]
    %v2452 = vld [vmem:[#allocation2 + $0x10e] sm:$0xff]
    %v2453 = vld [vmem:[#allocation2 + $0x116] sm:$0xff]
    %v2454 = vld [vmem:[#allocation2 + $0x11e] sm:$0xff]
    %v2455 = vld [vmem:[#allocation2 + $0x126] sm:$0xff]
    %v2456 = vld [vmem:[#allocation2 + $0x12e] sm:$0xff]
    %v2457 = vld [vmem:[#allocation2 + $0x136] sm:$0xff]
    %v2458 = vld [vmem:[#allocation2 + $0x13e] sm:$0xff]
    %v2459 = vld [vmem:[#allocation2 + $0x146] sm:$0xff]
    %v2460 = vld [vmem:[#allocation2 + $0x14e] sm:$0xff]
    %v2461 = vld [vmem:[#allocation2 + $0x156] sm:$0xff]
    %v2462 = vld [vmem:[#allocation2 + $0x15e] sm:$0xff]
    %v2463 = vld [vmem:[#allocation2 + $0x166] sm:$0xff]
    %v2464 = vld [vmem:[#allocation2 + $0x16e] sm:$0xff]
    %v2465 = vld [vmem:[#allocation2 + $0x176] sm:$0xff]
    %v2466 = vld [vmem:[#allocation2 + $0x17e] sm:$0xff]
    %v2467 = vld [vmem:[#allocation2 + $0x186] sm:$0xff]
    %v2468 = vld [vmem:[%s3 + $0x12] sm:$0x3f]
    %v2470 = vsel %vm1254, %v2419, 0
    %v2473 = vsel %vm1254, %v2420, 0
    %v2476 = vsel %vm1254, %v2421, 0
    %v2479 = vsel %vm1254, %v2422, 0
    %v2482 = vsel %vm1254, %v2423, 0
    %v2485 = vsel %vm1254, %v2424, 0
    %v2488 = vsel %vm1254, %v2425, 0
    %v2491 = vsel %vm1254, %v2426, 0
    %v2494 = vsel %vm1254, %v2427, 0
    %v2497 = vsel %vm1254, %v2428, 0
    %v2500 = vsel %vm1254, %v2429, 0
    %v2503 = vsel %vm1254, %v2430, 0
    %v2506 = vsel %vm1254, %v2431, 0
    %v2509 = vsel %vm1254, %v2432, 0
    %v2512 = vsel %vm1254, %v2433, 0
    %v2515 = vsel %vm1254, %v2434, 0
    %v2518 = vsel %vm1254, %v2435, 0
    %v2521 = vsel %vm1254, %v2436, 0
    %v2524 = vsel %vm1254, %v2437, 0
    %v2527 = vsel %vm1254, %v2438, 0
    %v2530 = vsel %vm1254, %v2439, 0
    %v2533 = vsel %vm1254, %v2440, 0
    %v2536 = vsel %vm1254, %v2441, 0
    %v2539 = vsel %vm1254, %v2442, 0
    %v2542 = vsel %vm1254, %v2443, 0
    %v2545 = vsel %vm1254, %v2444, 0
    %v2548 = vsel %vm1254, %v2445, 0
    %v2551 = vsel %vm1254, %v2446, 0
    %v2554 = vsel %vm1254, %v2447, 0
    %v2557 = vsel %vm1254, %v2448, 0
    %v2560 = vsel %vm1254, %v2449, 0
    %v2563 = vsel %vm1254, %v2450, 0
    %v2566 = vsel %vm1254, %v2451, 0
    %v2569 = vsel %vm1254, %v2452, 0
    %v2572 = vsel %vm1254, %v2453, 0
    %v2575 = vsel %vm1254, %v2454, 0
    %v2578 = vsel %vm1254, %v2455, 0
    %v2581 = vsel %vm1254, %v2456, 0
    %v2584 = vsel %vm1254, %v2457, 0
    %v2587 = vsel %vm1254, %v2458, 0
    %v2590 = vsel %vm1254, %v2459, 0
    %v2593 = vsel %vm1254, %v2460, 0
    %v2596 = vsel %vm1254, %v2461, 0
    %v2599 = vsel %vm1254, %v2462, 0
    %v2602 = vsel %vm1254, %v2463, 0
    %v2605 = vsel %vm1254, %v2464, 0
    %v2608 = vsel %vm1254, %v2465, 0
    %v2611 = vsel %vm1254, %v2466, 0
    %v2614 = vsel %vm1254, %v2467, 0
    %v2617 = vsel %vm1520, %v2468, 0
    %2619 = vmatpush.msra.mxu0 0.0
    %2620 = vmatpush.msra.mxu0 0.0
    %2621 = vmatpush.msra.mxu0 0.0
    %2622 = vmatpush.msra.mxu0 0.0
    %2623 = vmatpush.msra.mxu0 0.0
    %2624 = vmatpush.msra.mxu0 0.0
    %2625 = vmatpush.msra.mxu0 0.0
    %2626 = vmatpush.msra.mxu0 0.0
    %2627 = vmatpush.msra.mxu0 0.0
    %2628 = vmatpush.msra.mxu0 0.0
    %2629 = vmatpush.msra.mxu0 0.0
    %2630 = vmatpush.msra.mxu0 0.0
    %2631 = vmatpush.msra.mxu0 0.0
    %2632 = vmatpush.msra.mxu0 0.0
    %2633 = vmatpush.msra.mxu0 0.0
    %2634 = vmatpush.msra.mxu0 %v2617
    %2635 = vmatmul.f32.gmra.mxu0 %v2470
    %v2636 = vpop.f32.mrf.mxu0
    %v2637 = vadd.f32 0.0, %v2636
    %2638 = vmatmul.f32.gmra.mxu0 %v2473
    %v2639 = vpop.f32.mrf.mxu0
    %v2640 = vadd.f32 0.0, %v2639
    %2641 = vmatmul.f32.gmra.mxu0 %v2476
    %v2642 = vpop.f32.mrf.mxu0
    %v2643 = vadd.f32 0.0, %v2642
    %2644 = vmatmul.f32.gmra.mxu0 %v2479
    %v2645 = vpop.f32.mrf.mxu0
    %v2646 = vadd.f32 0.0, %v2645
    %2647 = vmatmul.f32.gmra.mxu0 %v2482
    %v2648 = vpop.f32.mrf.mxu0
    %v2649 = vadd.f32 0.0, %v2648
    %2650 = vmatmul.f32.gmra.mxu0 %v2485
    %v2651 = vpop.f32.mrf.mxu0
    %v2652 = vadd.f32 0.0, %v2651
    %2653 = vmatmul.f32.gmra.mxu0 %v2488
    %v2654 = vpop.f32.mrf.mxu0
    %2655 = vmatmul.f32.gmra.mxu0 %v2491
    %v2656 = vpop.f32.mrf.mxu0
    %v2657 = vadd.f32 0.0, %v2656
    %2658 = vmatmul.f32.gmra.mxu0 %v2494
    %v2659 = vpop.f32.mrf.mxu0
    %v2660 = vadd.f32 0.0, %v2659
    %2661 = vmatmul.f32.gmra.mxu0 %v2497
    %v2662 = vpop.f32.mrf.mxu0
    %v2663 = vadd.f32 0.0, %v2662
    %2664 = vmatmul.f32.gmra.mxu0 %v2500
    %v2665 = vpop.f32.mrf.mxu0
    %v2666 = vadd.f32 0.0, %v2665
    %2667 = vmatmul.f32.gmra.mxu0 %v2503
    %v2668 = vpop.f32.mrf.mxu0
    %v2669 = vadd.f32 0.0, %v2668
    %2670 = vmatmul.f32.gmra.mxu0 %v2506
    %v2671 = vpop.f32.mrf.mxu0
    %v2672 = vadd.f32 0.0, %v2671
    %2673 = vmatmul.f32.gmra.mxu0 %v2509
    %v2674 = vpop.f32.mrf.mxu0
    %2675 = vmatmul.f32.gmra.mxu0 %v2512
    %v2676 = vpop.f32.mrf.mxu0
    %v2677 = vadd.f32 0.0, %v2676
    %2678 = vmatmul.f32.gmra.mxu0 %v2515
    %v2679 = vpop.f32.mrf.mxu0
    %v2680 = vadd.f32 0.0, %v2679
    %2681 = vmatmul.f32.gmra.mxu0 %v2518
    %v2682 = vpop.f32.mrf.mxu0
    %v2683 = vadd.f32 0.0, %v2682
    %2684 = vmatmul.f32.gmra.mxu0 %v2521
    %v2685 = vpop.f32.mrf.mxu0
    %v2686 = vadd.f32 0.0, %v2685
    %2687 = vmatmul.f32.gmra.mxu0 %v2524
    %v2688 = vpop.f32.mrf.mxu0
    %v2689 = vadd.f32 0.0, %v2688
    %2690 = vmatmul.f32.gmra.mxu0 %v2527
    %v2691 = vpop.f32.mrf.mxu0
    %v2692 = vadd.f32 0.0, %v2691
    %2693 = vmatmul.f32.gmra.mxu0 %v2530
    %v2694 = vpop.f32.mrf.mxu0
    %2695 = vmatmul.f32.gmra.mxu0 %v2533
    %v2696 = vpop.f32.mrf.mxu0
    %v2697 = vadd.f32 0.0, %v2696
    %2698 = vmatmul.f32.gmra.mxu0 %v2536
    %v2699 = vpop.f32.mrf.mxu0
    %v2700 = vadd.f32 0.0, %v2699
    %2701 = vmatmul.f32.gmra.mxu0 %v2539
    %v2702 = vpop.f32.mrf.mxu0
    %v2703 = vadd.f32 0.0, %v2702
    %2704 = vmatmul.f32.gmra.mxu0 %v2542
    %v2705 = vpop.f32.mrf.mxu0
    %v2706 = vadd.f32 0.0, %v2705
    %2707 = vmatmul.f32.gmra.mxu0 %v2545
    %v2708 = vpop.f32.mrf.mxu0
    %v2709 = vadd.f32 0.0, %v2708
    %2710 = vmatmul.f32.gmra.mxu0 %v2548
    %v2711 = vpop.f32.mrf.mxu0
    %v2712 = vadd.f32 0.0, %v2711
    %2713 = vmatmul.f32.gmra.mxu0 %v2551
    %v2714 = vpop.f32.mrf.mxu0
    %2715 = vmatmul.f32.gmra.mxu0 %v2554
    %v2716 = vpop.f32.mrf.mxu0
    %v2717 = vadd.f32 0.0, %v2716
    %2718 = vmatmul.f32.gmra.mxu0 %v2557
    %v2719 = vpop.f32.mrf.mxu0
    %v2720 = vadd.f32 0.0, %v2719
    %2721 = vmatmul.f32.gmra.mxu0 %v2560
    %v2722 = vpop.f32.mrf.mxu0
    %v2723 = vadd.f32 0.0, %v2722
    %2724 = vmatmul.f32.gmra.mxu0 %v2563
    %v2725 = vpop.f32.mrf.mxu0
    %v2726 = vadd.f32 0.0, %v2725
    %2727 = vmatmul.f32.gmra.mxu0 %v2566
    %v2728 = vpop.f32.mrf.mxu0
    %v2729 = vadd.f32 0.0, %v2728
    %2730 = vmatmul.f32.gmra.mxu0 %v2569
    %v2731 = vpop.f32.mrf.mxu0
    %v2732 = vadd.f32 0.0, %v2731
    %2733 = vmatmul.f32.gmra.mxu0 %v2572
    %v2734 = vpop.f32.mrf.mxu0
    %2735 = vmatmul.f32.gmra.mxu0 %v2575
    %v2736 = vpop.f32.mrf.mxu0
    %2737 = vmatmul.f32.gmra.mxu0 %v2578
    %v2738 = vpop.f32.mrf.mxu0
    %2739 = vmatmul.f32.gmra.mxu0 %v2581
    %v2740 = vpop.f32.mrf.mxu0
    %2741 = vmatmul.f32.gmra.mxu0 %v2584
    %v2742 = vpop.f32.mrf.mxu0
    %2743 = vmatmul.f32.gmra.mxu0 %v2587
    %v2744 = vpop.f32.mrf.mxu0
    %2745 = vmatmul.f32.gmra.mxu0 %v2590
    %v2746 = vpop.f32.mrf.mxu0
    %2747 = vmatmul.f32.gmra.mxu0 %v2593
    %v2748 = vpop.f32.mrf.mxu0
    %2749 = vmatmul.f32.gmra.mxu0 %v2596
    %v2750 = vpop.f32.mrf.mxu0
    %2751 = vmatmul.f32.gmra.mxu0 %v2599
    %v2752 = vpop.f32.mrf.mxu0
    %2753 = vmatmul.f32.gmra.mxu0 %v2602
    %v2754 = vpop.f32.mrf.mxu0
    %2755 = vmatmul.f32.gmra.mxu0 %v2605
    %v2756 = vpop.f32.mrf.mxu0
    %2757 = vmatmul.f32.gmra.mxu0 %v2608
    %v2758 = vpop.f32.mrf.mxu0
    %2759 = vmatmul.f32.gmra.mxu0 %v2611
    %v2760 = vpop.f32.mrf.mxu0
    %2761 = vmatmul.f32.gmra.mxu0 %v2614
    %v2762 = vpop.f32.mrf.mxu0
    %2763 = vdwg.mxu0
    %v2764 = vadd.f32 %v2389, %v2637
    %v2765 = vadd.f32 %v2390, %v2640
    %v2766 = vadd.f32 %v2391, %v2643
    %v2767 = vadd.f32 %v2392, %v2646
    %v2768 = vadd.f32 %v2393, %v2649
    %v2769 = vadd.f32 %v2394, %v2652
    %v2770 = vadd.f32 %v2395, %v2657
    %v2771 = vadd.f32 %v2396, %v2660
    %v2772 = vadd.f32 %v2397, %v2663
    %v2773 = vadd.f32 %v2398, %v2666
    %v2774 = vadd.f32 %v2399, %v2669
    %v2775 = vadd.f32 %v2400, %v2672
    %v2776 = vadd.f32 %v2401, %v2677
    %v2777 = vadd.f32 %v2402, %v2680
    %v2778 = vadd.f32 %v2403, %v2683
    %v2779 = vadd.f32 %v2404, %v2686
    %v2780 = vadd.f32 %v2405, %v2689
    %v2781 = vadd.f32 %v2406, %v2692
    %v2782 = vadd.f32 %v2407, %v2697
    %v2783 = vadd.f32 %v2408, %v2700
    %v2784 = vadd.f32 %v2409, %v2703
    %v2785 = vadd.f32 %v2410, %v2706
    %v2786 = vadd.f32 %v2411, %v2709
    %v2787 = vadd.f32 %v2412, %v2712
    %v2788 = vadd.f32 %v2413, %v2717
    %v2789 = vadd.f32 %v2414, %v2720
    %v2790 = vadd.f32 %v2415, %v2723
    %v2791 = vadd.f32 %v2416, %v2726
    %v2792 = vadd.f32 %v2417, %v2729
    %v2793 = vadd.f32 %v2418, %v2732
    %v2794 = vld [vmem:[#allocation2 + $0x8] sm:$0xff]
    %v2795 = vld [vmem:[#allocation2 + $0x10] sm:$0xff]
    %v2796 = vld [vmem:[#allocation2 + $0x18] sm:$0xff]
    %v2797 = vld [vmem:[#allocation2 + $0x20] sm:$0xff]
    %v2798 = vld [vmem:[#allocation2 + $0x28] sm:$0xff]
    %v2799 = vld [vmem:[#allocation2 + $0x30] sm:$0xff]
    %v2800 = vld [vmem:[#allocation2 + $0x38] sm:$0xff]
    %v2801 = vld [vmem:[#allocation2 + $0x40] sm:$0xff]
    %v2802 = vld [vmem:[#allocation2 + $0x48] sm:$0xff]
    %v2803 = vld [vmem:[#allocation2 + $0x50] sm:$0xff]
    %v2804 = vld [vmem:[#allocation2 + $0x58] sm:$0xff]
    %v2805 = vld [vmem:[#allocation2 + $0x60] sm:$0xff]
    %v2806 = vld [vmem:[#allocation2 + $0x68] sm:$0xff]
    %v2807 = vld [vmem:[#allocation2 + $0x70] sm:$0xff]
    %v2808 = vld [vmem:[#allocation2 + $0x78] sm:$0xff]
    %v2809 = vld [vmem:[#allocation2 + $0x80] sm:$0xff]
    %v2810 = vld [vmem:[#allocation2 + $0x88] sm:$0xff]
    %v2811 = vld [vmem:[#allocation2 + $0x90] sm:$0xff]
    %v2812 = vld [vmem:[#allocation2 + $0x98] sm:$0xff]
    %v2813 = vld [vmem:[#allocation2 + $0xa0] sm:$0xff]
    %v2814 = vld [vmem:[#allocation2 + $0xa8] sm:$0xff]
    %v2815 = vld [vmem:[#allocation2 + $0xb0] sm:$0xff]
    %v2816 = vld [vmem:[#allocation2 + $0xb8] sm:$0xff]
    %v2817 = vld [vmem:[#allocation2 + $0xc0] sm:$0xff]
    %v2818 = vld [vmem:[#allocation2 + $0xc8] sm:$0xff]
    %v2819 = vld [vmem:[#allocation2 + $0xd0] sm:$0xff]
    %v2820 = vld [vmem:[#allocation2 + $0xd8] sm:$0xff]
    %v2821 = vld [vmem:[#allocation2 + $0xe0] sm:$0xff]
    %v2822 = vld [vmem:[#allocation2 + $0xe8] sm:$0xff]
    %v2823 = vld [vmem:[#allocation2 + $0xf0] sm:$0xff]
    %v2824 = vld [vmem:[#allocation2 + $0xf8] sm:$0xff]
    %v2825 = vld [vmem:[#allocation2 + $0x100] sm:$0xff]
    %v2826 = vld [vmem:[#allocation2 + $0x108] sm:$0xff]
    %v2827 = vld [vmem:[#allocation2 + $0x110] sm:$0xff]
    %v2828 = vld [vmem:[#allocation2 + $0x118] sm:$0xff]
    %v2829 = vld [vmem:[#allocation2 + $0x120] sm:$0xff]
    %v2830 = vld [vmem:[#allocation2 + $0x128] sm:$0xff]
    %v2831 = vld [vmem:[#allocation2 + $0x130] sm:$0xff]
    %v2832 = vld [vmem:[#allocation2 + $0x138] sm:$0xff]
    %v2833 = vld [vmem:[#allocation2 + $0x140] sm:$0xff]
    %v2834 = vld [vmem:[#allocation2 + $0x148] sm:$0xff]
    %v2835 = vld [vmem:[#allocation2 + $0x150] sm:$0xff]
    %v2836 = vld [vmem:[#allocation2 + $0x158] sm:$0xff]
    %v2837 = vld [vmem:[#allocation2 + $0x160] sm:$0xff]
    %v2838 = vld [vmem:[#allocation2 + $0x168] sm:$0xff]
    %v2839 = vld [vmem:[#allocation2 + $0x170] sm:$0xff]
    %v2840 = vld [vmem:[#allocation2 + $0x178] sm:$0xff]
    %v2841 = vld [vmem:[#allocation2 + $0x180] sm:$0xff]
    %v2842 = vld [vmem:[#allocation2 + $0x188] sm:$0xff]
    %v2843 = vld [vmem:[%s3 + $0x18] sm:$0x3f]
    %v2845 = vsel %vm1254, %v2794, 0
    %v2848 = vsel %vm1254, %v2795, 0
    %v2851 = vsel %vm1254, %v2796, 0
    %v2854 = vsel %vm1254, %v2797, 0
    %v2857 = vsel %vm1254, %v2798, 0
    %v2860 = vsel %vm1254, %v2799, 0
    %v2863 = vsel %vm1254, %v2800, 0
    %v2866 = vsel %vm1254, %v2801, 0
    %v2869 = vsel %vm1254, %v2802, 0
    %v2872 = vsel %vm1254, %v2803, 0
    %v2875 = vsel %vm1254, %v2804, 0
    %v2878 = vsel %vm1254, %v2805, 0
    %v2881 = vsel %vm1254, %v2806, 0
    %v2884 = vsel %vm1254, %v2807, 0
    %v2887 = vsel %vm1254, %v2808, 0
    %v2890 = vsel %vm1254, %v2809, 0
    %v2893 = vsel %vm1254, %v2810, 0
    %v2896 = vsel %vm1254, %v2811, 0
    %v2899 = vsel %vm1254, %v2812, 0
    %v2902 = vsel %vm1254, %v2813, 0
    %v2905 = vsel %vm1254, %v2814, 0
    %v2908 = vsel %vm1254, %v2815, 0
    %v2911 = vsel %vm1254, %v2816, 0
    %v2914 = vsel %vm1254, %v2817, 0
    %v2917 = vsel %vm1254, %v2818, 0
    %v2920 = vsel %vm1254, %v2819, 0
    %v2923 = vsel %vm1254, %v2820, 0
    %v2926 = vsel %vm1254, %v2821, 0
    %v2929 = vsel %vm1254, %v2822, 0
    %v2932 = vsel %vm1254, %v2823, 0
    %v2935 = vsel %vm1254, %v2824, 0
    %v2938 = vsel %vm1254, %v2825, 0
    %v2941 = vsel %vm1254, %v2826, 0
    %v2944 = vsel %vm1254, %v2827, 0
    %v2947 = vsel %vm1254, %v2828, 0
    %v2950 = vsel %vm1254, %v2829, 0
    %v2953 = vsel %vm1254, %v2830, 0
    %v2956 = vsel %vm1254, %v2831, 0
    %v2959 = vsel %vm1254, %v2832, 0
    %v2962 = vsel %vm1254, %v2833, 0
    %v2965 = vsel %vm1254, %v2834, 0
    %v2968 = vsel %vm1254, %v2835, 0
    %v2971 = vsel %vm1254, %v2836, 0
    %v2974 = vsel %vm1254, %v2837, 0
    %v2977 = vsel %vm1254, %v2838, 0
    %v2980 = vsel %vm1254, %v2839, 0
    %v2983 = vsel %vm1254, %v2840, 0
    %v2986 = vsel %vm1254, %v2841, 0
    %v2989 = vsel %vm1254, %v2842, 0
    %v2992 = vsel %vm1520, %v2843, 0
    %2994 = vmatpush.msra.mxu0 0.0
    %2995 = vmatpush.msra.mxu0 0.0
    %2996 = vmatpush.msra.mxu0 0.0
    %2997 = vmatpush.msra.mxu0 0.0
    %2998 = vmatpush.msra.mxu0 0.0
    %2999 = vmatpush.msra.mxu0 0.0
    %3000 = vmatpush.msra.mxu0 0.0
    %3001 = vmatpush.msra.mxu0 0.0
    %3002 = vmatpush.msra.mxu0 0.0
    %3003 = vmatpush.msra.mxu0 0.0
    %3004 = vmatpush.msra.mxu0 0.0
    %3005 = vmatpush.msra.mxu0 0.0
    %3006 = vmatpush.msra.mxu0 0.0
    %3007 = vmatpush.msra.mxu0 0.0
    %3008 = vmatpush.msra.mxu0 0.0
    %3009 = vmatpush.msra.mxu0 %v2992
    %3010 = vmatmul.f32.gmra.mxu0 %v2845
    %v3011 = vpop.f32.mrf.mxu0
    %v3012 = vadd.f32 0.0, %v3011
    %3013 = vmatmul.f32.gmra.mxu0 %v2848
    %v3014 = vpop.f32.mrf.mxu0
    %v3015 = vadd.f32 0.0, %v3014
    %3016 = vmatmul.f32.gmra.mxu0 %v2851
    %v3017 = vpop.f32.mrf.mxu0
    %v3018 = vadd.f32 0.0, %v3017
    %3019 = vmatmul.f32.gmra.mxu0 %v2854
    %v3020 = vpop.f32.mrf.mxu0
    %v3021 = vadd.f32 0.0, %v3020
    %3022 = vmatmul.f32.gmra.mxu0 %v2857
    %v3023 = vpop.f32.mrf.mxu0
    %v3024 = vadd.f32 0.0, %v3023
    %3025 = vmatmul.f32.gmra.mxu0 %v2860
    %v3026 = vpop.f32.mrf.mxu0
    %v3027 = vadd.f32 0.0, %v3026
    %3028 = vmatmul.f32.gmra.mxu0 %v2863
    %v3029 = vpop.f32.mrf.mxu0
    %3030 = vmatmul.f32.gmra.mxu0 %v2866
    %v3031 = vpop.f32.mrf.mxu0
    %v3032 = vadd.f32 0.0, %v3031
    %3033 = vmatmul.f32.gmra.mxu0 %v2869
    %v3034 = vpop.f32.mrf.mxu0
    %v3035 = vadd.f32 0.0, %v3034
    %3036 = vmatmul.f32.gmra.mxu0 %v2872
    %v3037 = vpop.f32.mrf.mxu0
    %v3038 = vadd.f32 0.0, %v3037
    %3039 = vmatmul.f32.gmra.mxu0 %v2875
    %v3040 = vpop.f32.mrf.mxu0
    %v3041 = vadd.f32 0.0, %v3040
    %3042 = vmatmul.f32.gmra.mxu0 %v2878
    %v3043 = vpop.f32.mrf.mxu0
    %v3044 = vadd.f32 0.0, %v3043
    %3045 = vmatmul.f32.gmra.mxu0 %v2881
    %v3046 = vpop.f32.mrf.mxu0
    %v3047 = vadd.f32 0.0, %v3046
    %3048 = vmatmul.f32.gmra.mxu0 %v2884
    %v3049 = vpop.f32.mrf.mxu0
    %3050 = vmatmul.f32.gmra.mxu0 %v2887
    %v3051 = vpop.f32.mrf.mxu0
    %v3052 = vadd.f32 0.0, %v3051
    %3053 = vmatmul.f32.gmra.mxu0 %v2890
    %v3054 = vpop.f32.mrf.mxu0
    %v3055 = vadd.f32 0.0, %v3054
    %3056 = vmatmul.f32.gmra.mxu0 %v2893
    %v3057 = vpop.f32.mrf.mxu0
    %v3058 = vadd.f32 0.0, %v3057
    %3059 = vmatmul.f32.gmra.mxu0 %v2896
    %v3060 = vpop.f32.mrf.mxu0
    %v3061 = vadd.f32 0.0, %v3060
    %3062 = vmatmul.f32.gmra.mxu0 %v2899
    %v3063 = vpop.f32.mrf.mxu0
    %v3064 = vadd.f32 0.0, %v3063
    %3065 = vmatmul.f32.gmra.mxu0 %v2902
    %v3066 = vpop.f32.mrf.mxu0
    %v3067 = vadd.f32 0.0, %v3066
    %3068 = vmatmul.f32.gmra.mxu0 %v2905
    %v3069 = vpop.f32.mrf.mxu0
    %3070 = vmatmul.f32.gmra.mxu0 %v2908
    %v3071 = vpop.f32.mrf.mxu0
    %v3072 = vadd.f32 0.0, %v3071
    %3073 = vmatmul.f32.gmra.mxu0 %v2911
    %v3074 = vpop.f32.mrf.mxu0
    %v3075 = vadd.f32 0.0, %v3074
    %3076 = vmatmul.f32.gmra.mxu0 %v2914
    %v3077 = vpop.f32.mrf.mxu0
    %v3078 = vadd.f32 0.0, %v3077
    %3079 = vmatmul.f32.gmra.mxu0 %v2917
    %v3080 = vpop.f32.mrf.mxu0
    %v3081 = vadd.f32 0.0, %v3080
    %3082 = vmatmul.f32.gmra.mxu0 %v2920
    %v3083 = vpop.f32.mrf.mxu0
    %v3084 = vadd.f32 0.0, %v3083
    %3085 = vmatmul.f32.gmra.mxu0 %v2923
    %v3086 = vpop.f32.mrf.mxu0
    %v3087 = vadd.f32 0.0, %v3086
    %3088 = vmatmul.f32.gmra.mxu0 %v2926
    %v3089 = vpop.f32.mrf.mxu0
    %3090 = vmatmul.f32.gmra.mxu0 %v2929
    %v3091 = vpop.f32.mrf.mxu0
    %v3092 = vadd.f32 0.0, %v3091
    %3093 = vmatmul.f32.gmra.mxu0 %v2932
    %v3094 = vpop.f32.mrf.mxu0
    %v3095 = vadd.f32 0.0, %v3094
    %3096 = vmatmul.f32.gmra.mxu0 %v2935
    %v3097 = vpop.f32.mrf.mxu0
    %v3098 = vadd.f32 0.0, %v3097
    %3099 = vmatmul.f32.gmra.mxu0 %v2938
    %v3100 = vpop.f32.mrf.mxu0
    %v3101 = vadd.f32 0.0, %v3100
    %3102 = vmatmul.f32.gmra.mxu0 %v2941
    %v3103 = vpop.f32.mrf.mxu0
    %v3104 = vadd.f32 0.0, %v3103
    %3105 = vmatmul.f32.gmra.mxu0 %v2944
    %v3106 = vpop.f32.mrf.mxu0
    %v3107 = vadd.f32 0.0, %v3106
    %3108 = vmatmul.f32.gmra.mxu0 %v2947
    %v3109 = vpop.f32.mrf.mxu0
    %3110 = vmatmul.f32.gmra.mxu0 %v2950
    %v3111 = vpop.f32.mrf.mxu0
    %3112 = vmatmul.f32.gmra.mxu0 %v2953
    %v3113 = vpop.f32.mrf.mxu0
    %3114 = vmatmul.f32.gmra.mxu0 %v2956
    %v3115 = vpop.f32.mrf.mxu0
    %3116 = vmatmul.f32.gmra.mxu0 %v2959
    %v3117 = vpop.f32.mrf.mxu0
    %3118 = vmatmul.f32.gmra.mxu0 %v2962
    %v3119 = vpop.f32.mrf.mxu0
    %3120 = vmatmul.f32.gmra.mxu0 %v2965
    %v3121 = vpop.f32.mrf.mxu0
    %3122 = vmatmul.f32.gmra.mxu0 %v2968
    %v3123 = vpop.f32.mrf.mxu0
    %3124 = vmatmul.f32.gmra.mxu0 %v2971
    %v3125 = vpop.f32.mrf.mxu0
    %3126 = vmatmul.f32.gmra.mxu0 %v2974
    %v3127 = vpop.f32.mrf.mxu0
    %3128 = vmatmul.f32.gmra.mxu0 %v2977
    %v3129 = vpop.f32.mrf.mxu0
    %3130 = vmatmul.f32.gmra.mxu0 %v2980
    %v3131 = vpop.f32.mrf.mxu0
    %3132 = vmatmul.f32.gmra.mxu0 %v2983
    %v3133 = vpop.f32.mrf.mxu0
    %3134 = vmatmul.f32.gmra.mxu0 %v2986
    %v3135 = vpop.f32.mrf.mxu0
    %3136 = vmatmul.f32.gmra.mxu0 %v2989
    %v3137 = vpop.f32.mrf.mxu0
    %3138 = vdwg.mxu0
    %v3139 = vadd.f32 %v2764, %v3012
    %v3140 = vadd.f32 %v2765, %v3015
    %v3141 = vadd.f32 %v2766, %v3018
    %v3142 = vadd.f32 %v2767, %v3021
    %v3143 = vadd.f32 %v2768, %v3024
    %v3144 = vadd.f32 %v2769, %v3027
    %v3145 = vadd.f32 %v2770, %v3032
    %v3146 = vadd.f32 %v2771, %v3035
    %v3147 = vadd.f32 %v2772, %v3038
    %v3148 = vadd.f32 %v2773, %v3041
    %v3149 = vadd.f32 %v2774, %v3044
    %v3150 = vadd.f32 %v2775, %v3047
    %v3151 = vadd.f32 %v2776, %v3052
    %v3152 = vadd.f32 %v2777, %v3055
    %v3153 = vadd.f32 %v2778, %v3058
    %v3154 = vadd.f32 %v2779, %v3061
    %v3155 = vadd.f32 %v2780, %v3064
    %v3156 = vadd.f32 %v2781, %v3067
    %v3157 = vadd.f32 %v2782, %v3072
    %v3158 = vadd.f32 %v2783, %v3075
    %v3159 = vadd.f32 %v2784, %v3078
    %v3160 = vadd.f32 %v2785, %v3081
    %v3161 = vadd.f32 %v2786, %v3084
    %v3162 = vadd.f32 %v2787, %v3087
    %v3163 = vadd.f32 %v2788, %v3092
    %v3164 = vadd.f32 %v2789, %v3095
    %v3165 = vadd.f32 %v2790, %v3098
    %v3166 = vadd.f32 %v2791, %v3101
    %v3167 = vadd.f32 %v2792, %v3104
    %v3168 = vadd.f32 %v2793, %v3107
    %v3169 = vld [vmem:[#allocation2 + $0x1c] sm:$0xff]
    %v3170 = vld [vmem:[#allocation2 + $0x24] sm:$0xff]
    %v3171 = vld [vmem:[#allocation2 + $0x2c] sm:$0xff]
    %v3172 = vld [vmem:[#allocation2 + $0x34] sm:$0xff]
    %v3173 = vld [vmem:[#allocation2 + $0x3c] sm:$0xff]
    %v3174 = vld [vmem:[#allocation2 + $0x44] sm:$0xff]
    %v3175 = vld [vmem:[#allocation2 + $0x4c] sm:$0xff]
    %v3176 = vld [vmem:[#allocation2 + $0x54] sm:$0xff]
    %v3177 = vld [vmem:[#allocation2 + $0x5c] sm:$0xff]
    %v3178 = vld [vmem:[#allocation2 + $0x64] sm:$0xff]
    %v3179 = vld [vmem:[#allocation2 + $0x6c] sm:$0xff]
    %v3180 = vld [vmem:[#allocation2 + $0x74] sm:$0xff]
    %v3181 = vld [vmem:[#allocation2 + $0x7c] sm:$0xff]
    %v3182 = vld [vmem:[#allocation2 + $0x84] sm:$0xff]
    %v3183 = vld [vmem:[#allocation2 + $0x8c] sm:$0xff]
    %v3184 = vld [vmem:[#allocation2 + $0x94] sm:$0xff]
    %v3185 = vld [vmem:[#allocation2 + $0x9c] sm:$0xff]
    %v3186 = vld [vmem:[#allocation2 + $0xa4] sm:$0xff]
    %v3187 = vld [vmem:[#allocation2 + $0xac] sm:$0xff]
    %v3188 = vld [vmem:[#allocation2 + $0xb4] sm:$0xff]
    %v3189 = vld [vmem:[#allocation2 + $0xbc] sm:$0xff]
    %v3190 = vld [vmem:[#allocation2 + $0xc4] sm:$0xff]
    %v3191 = vld [vmem:[#allocation2 + $0xcc] sm:$0xff]
    %v3192 = vld [vmem:[#allocation2 + $0xd4] sm:$0xff]
    %v3193 = vld [vmem:[#allocation2 + $0xdc] sm:$0xff]
    %v3194 = vld [vmem:[#allocation2 + $0xe4] sm:$0xff]
    %v3195 = vld [vmem:[#allocation2 + $0xec] sm:$0xff]
    %v3196 = vld [vmem:[#allocation2 + $0xf4] sm:$0xff]
    %v3197 = vld [vmem:[#allocation2 + $0xfc] sm:$0xff]
    %v3198 = vld [vmem:[#allocation2 + $0x104] sm:$0xff]
    %v3199 = vld [vmem:[#allocation2 + $0x10c] sm:$0xff]
    %v3200 = vld [vmem:[#allocation2 + $0x114] sm:$0xff]
    %v3201 = vld [vmem:[#allocation2 + $0x11c] sm:$0xff]
    %v3202 = vld [vmem:[#allocation2 + $0x124] sm:$0xff]
    %v3203 = vld [vmem:[#allocation2 + $0x12c] sm:$0xff]
    %v3204 = vld [vmem:[#allocation2 + $0x134] sm:$0xff]
    %v3205 = vld [vmem:[#allocation2 + $0x13c] sm:$0xff]
    %v3206 = vld [vmem:[#allocation2 + $0x144] sm:$0xff]
    %v3207 = vld [vmem:[#allocation2 + $0x14c] sm:$0xff]
    %v3208 = vld [vmem:[#allocation2 + $0x154] sm:$0xff]
    %v3209 = vld [vmem:[#allocation2 + $0x15c] sm:$0xff]
    %v3210 = vld [vmem:[#allocation2 + $0x164] sm:$0xff]
    %v3211 = vld [vmem:[#allocation2 + $0x16c] sm:$0xff]
    %v3212 = vld [vmem:[#allocation2 + $0x174] sm:$0xff]
    %v3213 = vld [vmem:[#allocation2 + $0x17c] sm:$0xff]
    %v3214 = vld [vmem:[#allocation2 + $0x184] sm:$0xff]
    %v3215 = vld [vmem:[#allocation2 + $0x18c] sm:$0xff]
    %v3216 = vld [vmem:[#allocation2 + $0x194] sm:$0xff]
    %v3217 = vld [vmem:[#allocation2 + $0x19c] sm:$0xff]
    %v3218 = vld [vmem:[%s3 + $0x1e] sm:$0x3f]
    %v3220 = vsel %vm1254, %v3169, 0
    %v3223 = vsel %vm1254, %v3170, 0
    %v3226 = vsel %vm1254, %v3171, 0
    %v3229 = vsel %vm1254, %v3172, 0
    %v3232 = vsel %vm1254, %v3173, 0
    %v3235 = vsel %vm1254, %v3174, 0
    %v3238 = vsel %vm1254, %v3175, 0
    %v3241 = vsel %vm1254, %v3176, 0
    %v3244 = vsel %vm1254, %v3177, 0
    %v3247 = vsel %vm1254, %v3178, 0
    %v3250 = vsel %vm1254, %v3179, 0
    %v3253 = vsel %vm1254, %v3180, 0
    %v3256 = vsel %vm1254, %v3181, 0
    %v3259 = vsel %vm1254, %v3182, 0
    %v3262 = vsel %vm1254, %v3183, 0
    %v3265 = vsel %vm1254, %v3184, 0
    %v3268 = vsel %vm1254, %v3185, 0
    %v3271 = vsel %vm1254, %v3186, 0
    %v3274 = vsel %vm1254, %v3187, 0
    %v3277 = vsel %vm1254, %v3188, 0
    %v3280 = vsel %vm1254, %v3189, 0
    %v3283 = vsel %vm1254, %v3190, 0
    %v3286 = vsel %vm1254, %v3191, 0
    %v3289 = vsel %vm1254, %v3192, 0
    %v3292 = vsel %vm1254, %v3193, 0
    %v3295 = vsel %vm1254, %v3194, 0
    %v3298 = vsel %vm1254, %v3195, 0
    %v3301 = vsel %vm1254, %v3196, 0
    %v3304 = vsel %vm1254, %v3197, 0
    %v3307 = vsel %vm1254, %v3198, 0
    %v3310 = vsel %vm1254, %v3199, 0
    %v3313 = vsel %vm1254, %v3200, 0
    %v3316 = vsel %vm1254, %v3201, 0
    %v3319 = vsel %vm1254, %v3202, 0
    %v3322 = vsel %vm1254, %v3203, 0
    %v3325 = vsel %vm1254, %v3204, 0
    %v3328 = vsel %vm1254, %v3205, 0
    %v3331 = vsel %vm1254, %v3206, 0
    %v3334 = vsel %vm1254, %v3207, 0
    %v3337 = vsel %vm1254, %v3208, 0
    %v3340 = vsel %vm1254, %v3209, 0
    %v3343 = vsel %vm1254, %v3210, 0
    %v3346 = vsel %vm1254, %v3211, 0
    %v3349 = vsel %vm1254, %v3212, 0
    %v3352 = vsel %vm1254, %v3213, 0
    %v3355 = vsel %vm1254, %v3214, 0
    %v3358 = vsel %vm1254, %v3215, 0
    %v3361 = vsel %vm1254, %v3216, 0
    %v3364 = vsel %vm1254, %v3217, 0
    %v3367 = vsel %vm1520, %v3218, 0
    %3369 = vmatpush.msra.mxu0 0.0
    %3370 = vmatpush.msra.mxu0 0.0
    %3371 = vmatpush.msra.mxu0 0.0
    %3372 = vmatpush.msra.mxu0 0.0
    %3373 = vmatpush.msra.mxu0 0.0
    %3374 = vmatpush.msra.mxu0 0.0
    %3375 = vmatpush.msra.mxu0 0.0
    %3376 = vmatpush.msra.mxu0 0.0
    %3377 = vmatpush.msra.mxu0 0.0
    %3378 = vmatpush.msra.mxu0 0.0
    %3379 = vmatpush.msra.mxu0 0.0
    %3380 = vmatpush.msra.mxu0 0.0
    %3381 = vmatpush.msra.mxu0 0.0
    %3382 = vmatpush.msra.mxu0 0.0
    %3383 = vmatpush.msra.mxu0 0.0
    %3384 = vmatpush.msra.mxu0 %v3367
    %3385 = vmatmul.f32.gmra.mxu0 %v3220
    %v3386 = vpop.f32.mrf.mxu0
    %v3387 = vadd.f32 0.0, %v3386
    %3388 = vmatmul.f32.gmra.mxu0 %v3223
    %v3389 = vpop.f32.mrf.mxu0
    %v3390 = vadd.f32 0.0, %v3389
    %3391 = vmatmul.f32.gmra.mxu0 %v3226
    %v3392 = vpop.f32.mrf.mxu0
    %v3393 = vadd.f32 0.0, %v3392
    %3394 = vmatmul.f32.gmra.mxu0 %v3229
    %v3395 = vpop.f32.mrf.mxu0
    %v3396 = vadd.f32 0.0, %v3395
    %3397 = vmatmul.f32.gmra.mxu0 %v3232
    %v3398 = vpop.f32.mrf.mxu0
    %v3399 = vadd.f32 0.0, %v3398
    %3400 = vmatmul.f32.gmra.mxu0 %v3235
    %v3401 = vpop.f32.mrf.mxu0
    %v3402 = vadd.f32 0.0, %v3401
    %3403 = vmatmul.f32.gmra.mxu0 %v3238
    %v3404 = vpop.f32.mrf.mxu0
    %3405 = vmatmul.f32.gmra.mxu0 %v3241
    %v3406 = vpop.f32.mrf.mxu0
    %v3407 = vadd.f32 0.0, %v3406
    %3408 = vmatmul.f32.gmra.mxu0 %v3244
    %v3409 = vpop.f32.mrf.mxu0
    %v3410 = vadd.f32 0.0, %v3409
    %3411 = vmatmul.f32.gmra.mxu0 %v3247
    %v3412 = vpop.f32.mrf.mxu0
    %v3413 = vadd.f32 0.0, %v3412
    %3414 = vmatmul.f32.gmra.mxu0 %v3250
    %v3415 = vpop.f32.mrf.mxu0
    %v3416 = vadd.f32 0.0, %v3415
    %3417 = vmatmul.f32.gmra.mxu0 %v3253
    %v3418 = vpop.f32.mrf.mxu0
    %v3419 = vadd.f32 0.0, %v3418
    %3420 = vmatmul.f32.gmra.mxu0 %v3256
    %v3421 = vpop.f32.mrf.mxu0
    %v3422 = vadd.f32 0.0, %v3421
    %3423 = vmatmul.f32.gmra.mxu0 %v3259
    %v3424 = vpop.f32.mrf.mxu0
    %3425 = vmatmul.f32.gmra.mxu0 %v3262
    %v3426 = vpop.f32.mrf.mxu0
    %v3427 = vadd.f32 0.0, %v3426
    %3428 = vmatmul.f32.gmra.mxu0 %v3265
    %v3429 = vpop.f32.mrf.mxu0
    %v3430 = vadd.f32 0.0, %v3429
    %3431 = vmatmul.f32.gmra.mxu0 %v3268
    %v3432 = vpop.f32.mrf.mxu0
    %v3433 = vadd.f32 0.0, %v3432
    %3434 = vmatmul.f32.gmra.mxu0 %v3271
    %v3435 = vpop.f32.mrf.mxu0
    %v3436 = vadd.f32 0.0, %v3435
    %3437 = vmatmul.f32.gmra.mxu0 %v3274
    %v3438 = vpop.f32.mrf.mxu0
    %v3439 = vadd.f32 0.0, %v3438
    %3440 = vmatmul.f32.gmra.mxu0 %v3277
    %v3441 = vpop.f32.mrf.mxu0
    %v3442 = vadd.f32 0.0, %v3441
    %3443 = vmatmul.f32.gmra.mxu0 %v3280
    %v3444 = vpop.f32.mrf.mxu0
    %3445 = vmatmul.f32.gmra.mxu0 %v3283
    %v3446 = vpop.f32.mrf.mxu0
    %v3447 = vadd.f32 0.0, %v3446
    %3448 = vmatmul.f32.gmra.mxu0 %v3286
    %v3449 = vpop.f32.mrf.mxu0
    %v3450 = vadd.f32 0.0, %v3449
    %3451 = vmatmul.f32.gmra.mxu0 %v3289
    %v3452 = vpop.f32.mrf.mxu0
    %v3453 = vadd.f32 0.0, %v3452
    %3454 = vmatmul.f32.gmra.mxu0 %v3292
    %v3455 = vpop.f32.mrf.mxu0
    %v3456 = vadd.f32 0.0, %v3455
    %3457 = vmatmul.f32.gmra.mxu0 %v3295
    %v3458 = vpop.f32.mrf.mxu0
    %v3459 = vadd.f32 0.0, %v3458
    %3460 = vmatmul.f32.gmra.mxu0 %v3298
    %v3461 = vpop.f32.mrf.mxu0
    %v3462 = vadd.f32 0.0, %v3461
    %3463 = vmatmul.f32.gmra.mxu0 %v3301
    %v3464 = vpop.f32.mrf.mxu0
    %3465 = vmatmul.f32.gmra.mxu0 %v3304
    %v3466 = vpop.f32.mrf.mxu0
    %v3467 = vadd.f32 0.0, %v3466
    %3468 = vmatmul.f32.gmra.mxu0 %v3307
    %v3469 = vpop.f32.mrf.mxu0
    %v3470 = vadd.f32 0.0, %v3469
    %3471 = vmatmul.f32.gmra.mxu0 %v3310
    %v3472 = vpop.f32.mrf.mxu0
    %v3473 = vadd.f32 0.0, %v3472
    %3474 = vmatmul.f32.gmra.mxu0 %v3313
    %v3475 = vpop.f32.mrf.mxu0
    %v3476 = vadd.f32 0.0, %v3475
    %3477 = vmatmul.f32.gmra.mxu0 %v3316
    %v3478 = vpop.f32.mrf.mxu0
    %v3479 = vadd.f32 0.0, %v3478
    %3480 = vmatmul.f32.gmra.mxu0 %v3319
    %v3481 = vpop.f32.mrf.mxu0
    %v3482 = vadd.f32 0.0, %v3481
    %3483 = vmatmul.f32.gmra.mxu0 %v3322
    %v3484 = vpop.f32.mrf.mxu0
    %3485 = vmatmul.f32.gmra.mxu0 %v3325
    %v3486 = vpop.f32.mrf.mxu0
    %3487 = vmatmul.f32.gmra.mxu0 %v3328
    %v3488 = vpop.f32.mrf.mxu0
    %3489 = vmatmul.f32.gmra.mxu0 %v3331
    %v3490 = vpop.f32.mrf.mxu0
    %3491 = vmatmul.f32.gmra.mxu0 %v3334
    %v3492 = vpop.f32.mrf.mxu0
    %3493 = vmatmul.f32.gmra.mxu0 %v3337
    %v3494 = vpop.f32.mrf.mxu0
    %3495 = vmatmul.f32.gmra.mxu0 %v3340
    %v3496 = vpop.f32.mrf.mxu0
    %3497 = vmatmul.f32.gmra.mxu0 %v3343
    %v3498 = vpop.f32.mrf.mxu0
    %3499 = vmatmul.f32.gmra.mxu0 %v3346
    %v3500 = vpop.f32.mrf.mxu0
    %3501 = vmatmul.f32.gmra.mxu0 %v3349
    %v3502 = vpop.f32.mrf.mxu0
    %3503 = vmatmul.f32.gmra.mxu0 %v3352
    %v3504 = vpop.f32.mrf.mxu0
    %3505 = vmatmul.f32.gmra.mxu0 %v3355
    %v3506 = vpop.f32.mrf.mxu0
    %3507 = vmatmul.f32.gmra.mxu0 %v3358
    %v3508 = vpop.f32.mrf.mxu0
    %3509 = vmatmul.f32.gmra.mxu0 %v3361
    %v3510 = vpop.f32.mrf.mxu0
    %3511 = vmatmul.f32.gmra.mxu0 %v3364
    %v3512 = vpop.f32.mrf.mxu0
    %3513 = vdwg.mxu0
    %v3514 = vadd.f32 %v3139, %v3387
    %v3515 = vadd.f32 %v3140, %v3390
    %v3516 = vadd.f32 %v3141, %v3393
    %v3517 = vadd.f32 %v3142, %v3396
    %v3518 = vadd.f32 %v3143, %v3399
    %v3519 = vadd.f32 %v3144, %v3402
    %v3520 = vadd.f32 %v3145, %v3407
    %v3521 = vadd.f32 %v3146, %v3410
    %v3522 = vadd.f32 %v3147, %v3413
    %v3523 = vadd.f32 %v3148, %v3416
    %v3524 = vadd.f32 %v3149, %v3419
    %v3525 = vadd.f32 %v3150, %v3422
    %v3526 = vadd.f32 %v3151, %v3427
    %v3527 = vadd.f32 %v3152, %v3430
    %v3528 = vadd.f32 %v3153, %v3433
    %v3529 = vadd.f32 %v3154, %v3436
    %v3530 = vadd.f32 %v3155, %v3439
    %v3531 = vadd.f32 %v3156, %v3442
    %v3532 = vadd.f32 %v3157, %v3447
    %v3533 = vadd.f32 %v3158, %v3450
    %v3534 = vadd.f32 %v3159, %v3453
    %v3535 = vadd.f32 %v3160, %v3456
    %v3536 = vadd.f32 %v3161, %v3459
    %v3537 = vadd.f32 %v3162, %v3462
    %v3538 = vadd.f32 %v3163, %v3467
    %v3539 = vadd.f32 %v3164, %v3470
    %v3540 = vadd.f32 %v3165, %v3473
    %v3541 = vadd.f32 %v3166, %v3476
    %v3542 = vadd.f32 %v3167, %v3479
    %v3543 = vadd.f32 %v3168, %v3482
    %v3544 = vld [vmem:[#allocation2 + $0x1e] sm:$0xff]
    %v3545 = vld [vmem:[#allocation2 + $0x26] sm:$0xff]
    %v3546 = vld [vmem:[#allocation2 + $0x2e] sm:$0xff]
    %v3547 = vld [vmem:[#allocation2 + $0x36] sm:$0xff]
    %v3548 = vld [vmem:[#allocation2 + $0x3e] sm:$0xff]
    %v3549 = vld [vmem:[#allocation2 + $0x46] sm:$0xff]
    %v3550 = vld [vmem:[#allocation2 + $0x4e] sm:$0xff]
    %v3551 = vld [vmem:[#allocation2 + $0x56] sm:$0xff]
    %v3552 = vld [vmem:[#allocation2 + $0x5e] sm:$0xff]
    %v3553 = vld [vmem:[#allocation2 + $0x66] sm:$0xff]
    %v3554 = vld [vmem:[#allocation2 + $0x6e] sm:$0xff]
    %v3555 = vld [vmem:[#allocation2 + $0x76] sm:$0xff]
    %v3556 = vld [vmem:[#allocation2 + $0x7e] sm:$0xff]
    %v3557 = vld [vmem:[#allocation2 + $0x86] sm:$0xff]
    %v3558 = vld [vmem:[#allocation2 + $0x8e] sm:$0xff]
    %v3559 = vld [vmem:[#allocation2 + $0x96] sm:$0xff]
    %v3560 = vld [vmem:[#allocation2 + $0x9e] sm:$0xff]
    %v3561 = vld [vmem:[#allocation2 + $0xa6] sm:$0xff]
    %v3562 = vld [vmem:[#allocation2 + $0xae] sm:$0xff]
    %v3563 = vld [vmem:[#allocation2 + $0xb6] sm:$0xff]
    %v3564 = vld [vmem:[#allocation2 + $0xbe] sm:$0xff]
    %v3565 = vld [vmem:[#allocation2 + $0xc6] sm:$0xff]
    %v3566 = vld [vmem:[#allocation2 + $0xce] sm:$0xff]
    %v3567 = vld [vmem:[#allocation2 + $0xd6] sm:$0xff]
    %v3568 = vld [vmem:[#allocation2 + $0xde] sm:$0xff]
    %v3569 = vld [vmem:[#allocation2 + $0xe6] sm:$0xff]
    %v3570 = vld [vmem:[#allocation2 + $0xee] sm:$0xff]
    %v3571 = vld [vmem:[#allocation2 + $0xf6] sm:$0xff]
    %v3572 = vld [vmem:[#allocation2 + $0xfe] sm:$0xff]
    %v3573 = vld [vmem:[#allocation2 + $0x106] sm:$0xff]
    %v3574 = vld [vmem:[#allocation2 + $0x10e] sm:$0xff]
    %v3575 = vld [vmem:[#allocation2 + $0x116] sm:$0xff]
    %v3576 = vld [vmem:[#allocation2 + $0x11e] sm:$0xff]
    %v3577 = vld [vmem:[#allocation2 + $0x126] sm:$0xff]
    %v3578 = vld [vmem:[#allocation2 + $0x12e] sm:$0xff]
    %v3579 = vld [vmem:[#allocation2 + $0x136] sm:$0xff]
    %v3580 = vld [vmem:[#allocation2 + $0x13e] sm:$0xff]
    %v3581 = vld [vmem:[#allocation2 + $0x146] sm:$0xff]
    %v3582 = vld [vmem:[#allocation2 + $0x14e] sm:$0xff]
    %v3583 = vld [vmem:[#allocation2 + $0x156] sm:$0xff]
    %v3584 = vld [vmem:[#allocation2 + $0x15e] sm:$0xff]
    %v3585 = vld [vmem:[#allocation2 + $0x166] sm:$0xff]
    %v3586 = vld [vmem:[#allocation2 + $0x16e] sm:$0xff]
    %v3587 = vld [vmem:[#allocation2 + $0x176] sm:$0xff]
    %v3588 = vld [vmem:[#allocation2 + $0x17e] sm:$0xff]
    %v3589 = vld [vmem:[#allocation2 + $0x186] sm:$0xff]
    %v3590 = vld [vmem:[#allocation2 + $0x18e] sm:$0xff]
    %v3591 = vld [vmem:[#allocation2 + $0x196] sm:$0xff]
    %v3592 = vld [vmem:[#allocation2 + $0x19e] sm:$0xff]
    %v3593 = vld [vmem:[%s3 + $0x24] sm:$0x3f]
    %v3595 = vsel %vm1254, %v3544, 0
    %v3598 = vsel %vm1254, %v3545, 0
    %v3601 = vsel %vm1254, %v3546, 0
    %v3604 = vsel %vm1254, %v3547, 0
    %v3607 = vsel %vm1254, %v3548, 0
    %v3610 = vsel %vm1254, %v3549, 0
    %v3613 = vsel %vm1254, %v3550, 0
    %v3616 = vsel %vm1254, %v3551, 0
    %v3619 = vsel %vm1254, %v3552, 0
    %v3622 = vsel %vm1254, %v3553, 0
    %v3625 = vsel %vm1254, %v3554, 0
    %v3628 = vsel %vm1254, %v3555, 0
    %v3631 = vsel %vm1254, %v3556, 0
    %v3634 = vsel %vm1254, %v3557, 0
    %v3637 = vsel %vm1254, %v3558, 0
    %v3640 = vsel %vm1254, %v3559, 0
    %v3643 = vsel %vm1254, %v3560, 0
    %v3646 = vsel %vm1254, %v3561, 0
    %v3649 = vsel %vm1254, %v3562, 0
    %v3652 = vsel %vm1254, %v3563, 0
    %v3655 = vsel %vm1254, %v3564, 0
    %v3658 = vsel %vm1254, %v3565, 0
    %v3661 = vsel %vm1254, %v3566, 0
    %v3664 = vsel %vm1254, %v3567, 0
    %v3667 = vsel %vm1254, %v3568, 0
    %v3670 = vsel %vm1254, %v3569, 0
    %v3673 = vsel %vm1254, %v3570, 0
    %v3676 = vsel %vm1254, %v3571, 0
    %v3679 = vsel %vm1254, %v3572, 0
    %v3682 = vsel %vm1254, %v3573, 0
    %v3685 = vsel %vm1254, %v3574, 0
    %v3688 = vsel %vm1254, %v3575, 0
    %v3691 = vsel %vm1254, %v3576, 0
    %v3694 = vsel %vm1254, %v3577, 0
    %v3697 = vsel %vm1254, %v3578, 0
    %v3700 = vsel %vm1254, %v3579, 0
    %v3703 = vsel %vm1254, %v3580, 0
    %v3706 = vsel %vm1254, %v3581, 0
    %v3709 = vsel %vm1254, %v3582, 0
    %v3712 = vsel %vm1254, %v3583, 0
    %v3715 = vsel %vm1254, %v3584, 0
    %v3718 = vsel %vm1254, %v3585, 0
    %v3721 = vsel %vm1254, %v3586, 0
    %v3724 = vsel %vm1254, %v3587, 0
    %v3727 = vsel %vm1254, %v3588, 0
    %v3730 = vsel %vm1254, %v3589, 0
    %v3733 = vsel %vm1254, %v3590, 0
    %v3736 = vsel %vm1254, %v3591, 0
    %v3739 = vsel %vm1254, %v3592, 0
    %v3742 = vsel %vm1520, %v3593, 0
    %3744 = vmatpush.msra.mxu0 0.0
    %3745 = vmatpush.msra.mxu0 0.0
    %3746 = vmatpush.msra.mxu0 0.0
    %3747 = vmatpush.msra.mxu0 0.0
    %3748 = vmatpush.msra.mxu0 0.0
    %3749 = vmatpush.msra.mxu0 0.0
    %3750 = vmatpush.msra.mxu0 0.0
    %3751 = vmatpush.msra.mxu0 0.0
    %3752 = vmatpush.msra.mxu0 0.0
    %3753 = vmatpush.msra.mxu0 0.0
    %3754 = vmatpush.msra.mxu0 0.0
    %3755 = vmatpush.msra.mxu0 0.0
    %3756 = vmatpush.msra.mxu0 0.0
    %3757 = vmatpush.msra.mxu0 0.0
    %3758 = vmatpush.msra.mxu0 0.0
    %3759 = vmatpush.msra.mxu0 %v3742
    %3760 = vmatmul.f32.gmra.mxu0 %v3595
    %v3761 = vpop.f32.mrf.mxu0
    %v3762 = vadd.f32 0.0, %v3761
    %3763 = vmatmul.f32.gmra.mxu0 %v3598
    %v3764 = vpop.f32.mrf.mxu0
    %v3765 = vadd.f32 0.0, %v3764
    %3766 = vmatmul.f32.gmra.mxu0 %v3601
    %v3767 = vpop.f32.mrf.mxu0
    %v3768 = vadd.f32 0.0, %v3767
    %3769 = vmatmul.f32.gmra.mxu0 %v3604
    %v3770 = vpop.f32.mrf.mxu0
    %v3771 = vadd.f32 0.0, %v3770
    %3772 = vmatmul.f32.gmra.mxu0 %v3607
    %v3773 = vpop.f32.mrf.mxu0
    %v3774 = vadd.f32 0.0, %v3773
    %3775 = vmatmul.f32.gmra.mxu0 %v3610
    %v3776 = vpop.f32.mrf.mxu0
    %v3777 = vadd.f32 0.0, %v3776
    %3778 = vmatmul.f32.gmra.mxu0 %v3613
    %v3779 = vpop.f32.mrf.mxu0
    %3780 = vmatmul.f32.gmra.mxu0 %v3616
    %v3781 = vpop.f32.mrf.mxu0
    %v3782 = vadd.f32 0.0, %v3781
    %3783 = vmatmul.f32.gmra.mxu0 %v3619
    %v3784 = vpop.f32.mrf.mxu0
    %v3785 = vadd.f32 0.0, %v3784
    %3786 = vmatmul.f32.gmra.mxu0 %v3622
    %v3787 = vpop.f32.mrf.mxu0
    %v3788 = vadd.f32 0.0, %v3787
    %3789 = vmatmul.f32.gmra.mxu0 %v3625
    %v3790 = vpop.f32.mrf.mxu0
    %v3791 = vadd.f32 0.0, %v3790
    %3792 = vmatmul.f32.gmra.mxu0 %v3628
    %v3793 = vpop.f32.mrf.mxu0
    %v3794 = vadd.f32 0.0, %v3793
    %3795 = vmatmul.f32.gmra.mxu0 %v3631
    %v3796 = vpop.f32.mrf.mxu0
    %v3797 = vadd.f32 0.0, %v3796
    %3798 = vmatmul.f32.gmra.mxu0 %v3634
    %v3799 = vpop.f32.mrf.mxu0
    %3800 = vmatmul.f32.gmra.mxu0 %v3637
    %v3801 = vpop.f32.mrf.mxu0
    %v3802 = vadd.f32 0.0, %v3801
    %3803 = vmatmul.f32.gmra.mxu0 %v3640
    %v3804 = vpop.f32.mrf.mxu0
    %v3805 = vadd.f32 0.0, %v3804
    %3806 = vmatmul.f32.gmra.mxu0 %v3643
    %v3807 = vpop.f32.mrf.mxu0
    %v3808 = vadd.f32 0.0, %v3807
    %3809 = vmatmul.f32.gmra.mxu0 %v3646
    %v3810 = vpop.f32.mrf.mxu0
    %v3811 = vadd.f32 0.0, %v3810
    %3812 = vmatmul.f32.gmra.mxu0 %v3649
    %v3813 = vpop.f32.mrf.mxu0
    %v3814 = vadd.f32 0.0, %v3813
    %3815 = vmatmul.f32.gmra.mxu0 %v3652
    %v3816 = vpop.f32.mrf.mxu0
    %v3817 = vadd.f32 0.0, %v3816
    %3818 = vmatmul.f32.gmra.mxu0 %v3655
    %v3819 = vpop.f32.mrf.mxu0
    %3820 = vmatmul.f32.gmra.mxu0 %v3658
    %v3821 = vpop.f32.mrf.mxu0
    %v3822 = vadd.f32 0.0, %v3821
    %3823 = vmatmul.f32.gmra.mxu0 %v3661
    %v3824 = vpop.f32.mrf.mxu0
    %v3825 = vadd.f32 0.0, %v3824
    %3826 = vmatmul.f32.gmra.mxu0 %v3664
    %v3827 = vpop.f32.mrf.mxu0
    %v3828 = vadd.f32 0.0, %v3827
    %3829 = vmatmul.f32.gmra.mxu0 %v3667
    %v3830 = vpop.f32.mrf.mxu0
    %v3831 = vadd.f32 0.0, %v3830
    %3832 = vmatmul.f32.gmra.mxu0 %v3670
    %v3833 = vpop.f32.mrf.mxu0
    %v3834 = vadd.f32 0.0, %v3833
    %3835 = vmatmul.f32.gmra.mxu0 %v3673
    %v3836 = vpop.f32.mrf.mxu0
    %v3837 = vadd.f32 0.0, %v3836
    %3838 = vmatmul.f32.gmra.mxu0 %v3676
    %v3839 = vpop.f32.mrf.mxu0
    %3840 = vmatmul.f32.gmra.mxu0 %v3679
    %v3841 = vpop.f32.mrf.mxu0
    %v3842 = vadd.f32 0.0, %v3841
    %3843 = vmatmul.f32.gmra.mxu0 %v3682
    %v3844 = vpop.f32.mrf.mxu0
    %v3845 = vadd.f32 0.0, %v3844
    %3846 = vmatmul.f32.gmra.mxu0 %v3685
    %v3847 = vpop.f32.mrf.mxu0
    %v3848 = vadd.f32 0.0, %v3847
    %3849 = vmatmul.f32.gmra.mxu0 %v3688
    %v3850 = vpop.f32.mrf.mxu0
    %v3851 = vadd.f32 0.0, %v3850
    %3852 = vmatmul.f32.gmra.mxu0 %v3691
    %v3853 = vpop.f32.mrf.mxu0
    %v3854 = vadd.f32 0.0, %v3853
    %3855 = vmatmul.f32.gmra.mxu0 %v3694
    %v3856 = vpop.f32.mrf.mxu0
    %v3857 = vadd.f32 0.0, %v3856
    %3858 = vmatmul.f32.gmra.mxu0 %v3697
    %v3859 = vpop.f32.mrf.mxu0
    %3860 = vmatmul.f32.gmra.mxu0 %v3700
    %v3861 = vpop.f32.mrf.mxu0
    %3862 = vmatmul.f32.gmra.mxu0 %v3703
    %v3863 = vpop.f32.mrf.mxu0
    %3864 = vmatmul.f32.gmra.mxu0 %v3706
    %v3865 = vpop.f32.mrf.mxu0
    %3866 = vmatmul.f32.gmra.mxu0 %v3709
    %v3867 = vpop.f32.mrf.mxu0
    %3868 = vmatmul.f32.gmra.mxu0 %v3712
    %v3869 = vpop.f32.mrf.mxu0
    %3870 = vmatmul.f32.gmra.mxu0 %v3715
    %v3871 = vpop.f32.mrf.mxu0
    %3872 = vmatmul.f32.gmra.mxu0 %v3718
    %v3873 = vpop.f32.mrf.mxu0
    %3874 = vmatmul.f32.gmra.mxu0 %v3721
    %v3875 = vpop.f32.mrf.mxu0
    %3876 = vmatmul.f32.gmra.mxu0 %v3724
    %v3877 = vpop.f32.mrf.mxu0
    %3878 = vmatmul.f32.gmra.mxu0 %v3727
    %v3879 = vpop.f32.mrf.mxu0
    %3880 = vmatmul.f32.gmra.mxu0 %v3730
    %v3881 = vpop.f32.mrf.mxu0
    %3882 = vmatmul.f32.gmra.mxu0 %v3733
    %v3883 = vpop.f32.mrf.mxu0
    %3884 = vmatmul.f32.gmra.mxu0 %v3736
    %v3885 = vpop.f32.mrf.mxu0
    %3886 = vmatmul.f32.gmra.mxu0 %v3739
    %v3887 = vpop.f32.mrf.mxu0
    %3888 = vdwg.mxu0
    %v3889 = vadd.f32 %v3514, %v3762
    %v3890 = vadd.f32 %v3515, %v3765
    %v3891 = vadd.f32 %v3516, %v3768
    %v3892 = vadd.f32 %v3517, %v3771
    %v3893 = vadd.f32 %v3518, %v3774
    %v3894 = vadd.f32 %v3519, %v3777
    %v3895 = vadd.f32 %v3520, %v3782
    %v3896 = vadd.f32 %v3521, %v3785
    %v3897 = vadd.f32 %v3522, %v3788
    %v3898 = vadd.f32 %v3523, %v3791
    %v3899 = vadd.f32 %v3524, %v3794
    %v3900 = vadd.f32 %v3525, %v3797
    %v3901 = vadd.f32 %v3526, %v3802
    %v3902 = vadd.f32 %v3527, %v3805
    %v3903 = vadd.f32 %v3528, %v3808
    %v3904 = vadd.f32 %v3529, %v3811
    %v3905 = vadd.f32 %v3530, %v3814
    %v3906 = vadd.f32 %v3531, %v3817
    %v3907 = vadd.f32 %v3532, %v3822
    %v3908 = vadd.f32 %v3533, %v3825
    %v3909 = vadd.f32 %v3534, %v3828
    %v3910 = vadd.f32 %v3535, %v3831
    %v3911 = vadd.f32 %v3536, %v3834
    %v3912 = vadd.f32 %v3537, %v3837
    %v3913 = vadd.f32 %v3538, %v3842
    %v3914 = vadd.f32 %v3539, %v3845
    %v3915 = vadd.f32 %v3540, %v3848
    %v3916 = vadd.f32 %v3541, %v3851
    %v3917 = vadd.f32 %v3542, %v3854
    %v3918 = vadd.f32 %v3543, %v3857
    %v3919 = vld [vmem:[#allocation2 + $0x20] sm:$0xff]
    %v3920 = vld [vmem:[#allocation2 + $0x28] sm:$0xff]
    %v3921 = vld [vmem:[#allocation2 + $0x30] sm:$0xff]
    %v3922 = vld [vmem:[#allocation2 + $0x38] sm:$0xff]
    %v3923 = vld [vmem:[#allocation2 + $0x40] sm:$0xff]
    %v3924 = vld [vmem:[#allocation2 + $0x48] sm:$0xff]
    %v3925 = vld [vmem:[#allocation2 + $0x50] sm:$0xff]
    %v3926 = vld [vmem:[#allocation2 + $0x58] sm:$0xff]
    %v3927 = vld [vmem:[#allocation2 + $0x60] sm:$0xff]
    %v3928 = vld [vmem:[#allocation2 + $0x68] sm:$0xff]
    %v3929 = vld [vmem:[#allocation2 + $0x70] sm:$0xff]
    %v3930 = vld [vmem:[#allocation2 + $0x78] sm:$0xff]
    %v3931 = vld [vmem:[#allocation2 + $0x80] sm:$0xff]
    %v3932 = vld [vmem:[#allocation2 + $0x88] sm:$0xff]
    %v3933 = vld [vmem:[#allocation2 + $0x90] sm:$0xff]
    %v3934 = vld [vmem:[#allocation2 + $0x98] sm:$0xff]
    %v3935 = vld [vmem:[#allocation2 + $0xa0] sm:$0xff]
    %v3936 = vld [vmem:[#allocation2 + $0xa8] sm:$0xff]
    %v3937 = vld [vmem:[#allocation2 + $0xb0] sm:$0xff]
    %v3938 = vld [vmem:[#allocation2 + $0xb8] sm:$0xff]
    %v3939 = vld [vmem:[#allocation2 + $0xc0] sm:$0xff]
    %v3940 = vld [vmem:[#allocation2 + $0xc8] sm:$0xff]
    %v3941 = vld [vmem:[#allocation2 + $0xd0] sm:$0xff]
    %v3942 = vld [vmem:[#allocation2 + $0xd8] sm:$0xff]
    %v3943 = vld [vmem:[#allocation2 + $0xe0] sm:$0xff]
    %v3944 = vld [vmem:[#allocation2 + $0xe8] sm:$0xff]
    %v3945 = vld [vmem:[#allocation2 + $0xf0] sm:$0xff]
    %v3946 = vld [vmem:[#allocation2 + $0xf8] sm:$0xff]
    %v3947 = vld [vmem:[#allocation2 + $0x100] sm:$0xff]
    %v3948 = vld [vmem:[#allocation2 + $0x108] sm:$0xff]
    %v3949 = vld [vmem:[#allocation2 + $0x110] sm:$0xff]
    %v3950 = vld [vmem:[#allocation2 + $0x118] sm:$0xff]
    %v3951 = vld [vmem:[#allocation2 + $0x120] sm:$0xff]
    %v3952 = vld [vmem:[#allocation2 + $0x128] sm:$0xff]
    %v3953 = vld [vmem:[#allocation2 + $0x130] sm:$0xff]
    %v3954 = vld [vmem:[#allocation2 + $0x138] sm:$0xff]
    %v3955 = vld [vmem:[#allocation2 + $0x140] sm:$0xff]
    %v3956 = vld [vmem:[#allocation2 + $0x148] sm:$0xff]
    %v3957 = vld [vmem:[#allocation2 + $0x150] sm:$0xff]
    %v3958 = vld [vmem:[#allocation2 + $0x158] sm:$0xff]
    %v3959 = vld [vmem:[#allocation2 + $0x160] sm:$0xff]
    %v3960 = vld [vmem:[#allocation2 + $0x168] sm:$0xff]
    %v3961 = vld [vmem:[#allocation2 + $0x170] sm:$0xff]
    %v3962 = vld [vmem:[#allocation2 + $0x178] sm:$0xff]
    %v3963 = vld [vmem:[#allocation2 + $0x180] sm:$0xff]
    %v3964 = vld [vmem:[#allocation2 + $0x188] sm:$0xff]
    %v3965 = vld [vmem:[#allocation2 + $0x190] sm:$0xff]
    %v3966 = vld [vmem:[#allocation2 + $0x198] sm:$0xff]
    %v3967 = vld [vmem:[#allocation2 + $0x1a0] sm:$0xff]
    %v3968 = vld [vmem:[%s3 + $0x2a] sm:$0x3f]
    %v3970 = vsel %vm1254, %v3919, 0
    %v3973 = vsel %vm1254, %v3920, 0
    %v3976 = vsel %vm1254, %v3921, 0
    %v3979 = vsel %vm1254, %v3922, 0
    %v3982 = vsel %vm1254, %v3923, 0
    %v3985 = vsel %vm1254, %v3924, 0
    %v3988 = vsel %vm1254, %v3925, 0
    %v3991 = vsel %vm1254, %v3926, 0
    %v3994 = vsel %vm1254, %v3927, 0
    %v3997 = vsel %vm1254, %v3928, 0
    %v4000 = vsel %vm1254, %v3929, 0
    %v4003 = vsel %vm1254, %v3930, 0
    %v4006 = vsel %vm1254, %v3931, 0
    %v4009 = vsel %vm1254, %v3932, 0
    %v4012 = vsel %vm1254, %v3933, 0
    %v4015 = vsel %vm1254, %v3934, 0
    %v4018 = vsel %vm1254, %v3935, 0
    %v4021 = vsel %vm1254, %v3936, 0
    %v4024 = vsel %vm1254, %v3937, 0
    %v4027 = vsel %vm1254, %v3938, 0
    %v4030 = vsel %vm1254, %v3939, 0
    %v4033 = vsel %vm1254, %v3940, 0
    %v4036 = vsel %vm1254, %v3941, 0
    %v4039 = vsel %vm1254, %v3942, 0
    %v4042 = vsel %vm1254, %v3943, 0
    %v4045 = vsel %vm1254, %v3944, 0
    %v4048 = vsel %vm1254, %v3945, 0
    %v4051 = vsel %vm1254, %v3946, 0
    %v4054 = vsel %vm1254, %v3947, 0
    %v4057 = vsel %vm1254, %v3948, 0
    %v4060 = vsel %vm1254, %v3949, 0
    %v4063 = vsel %vm1254, %v3950, 0
    %v4066 = vsel %vm1254, %v3951, 0
    %v4069 = vsel %vm1254, %v3952, 0
    %v4072 = vsel %vm1254, %v3953, 0
    %v4075 = vsel %vm1254, %v3954, 0
    %v4078 = vsel %vm1254, %v3955, 0
    %v4081 = vsel %vm1254, %v3956, 0
    %v4084 = vsel %vm1254, %v3957, 0
    %v4087 = vsel %vm1254, %v3958, 0
    %v4090 = vsel %vm1254, %v3959, 0
    %v4093 = vsel %vm1254, %v3960, 0
    %v4096 = vsel %vm1254, %v3961, 0
    %v4099 = vsel %vm1254, %v3962, 0
    %v4102 = vsel %vm1254, %v3963, 0
    %v4105 = vsel %vm1254, %v3964, 0
    %v4108 = vsel %vm1254, %v3965, 0
    %v4111 = vsel %vm1254, %v3966, 0
    %v4114 = vsel %vm1254, %v3967, 0
    %v4117 = vsel %vm1520, %v3968, 0
    %4119 = vmatpush.msra.mxu0 0.0
    %4120 = vmatpush.msra.mxu0 0.0
    %4121 = vmatpush.msra.mxu0 0.0
    %4122 = vmatpush.msra.mxu0 0.0
    %4123 = vmatpush.msra.mxu0 0.0
    %4124 = vmatpush.msra.mxu0 0.0
    %4125 = vmatpush.msra.mxu0 0.0
    %4126 = vmatpush.msra.mxu0 0.0
    %4127 = vmatpush.msra.mxu0 0.0
    %4128 = vmatpush.msra.mxu0 0.0
    %4129 = vmatpush.msra.mxu0 0.0
    %4130 = vmatpush.msra.mxu0 0.0
    %4131 = vmatpush.msra.mxu0 0.0
    %4132 = vmatpush.msra.mxu0 0.0
    %4133 = vmatpush.msra.mxu0 0.0
    %4134 = vmatpush.msra.mxu0 %v4117
    %4135 = vmatmul.f32.gmra.mxu0 %v3970
    %v4136 = vpop.f32.mrf.mxu0
    %v4137 = vadd.f32 0.0, %v4136
    %4138 = vmatmul.f32.gmra.mxu0 %v3973
    %v4139 = vpop.f32.mrf.mxu0
    %v4140 = vadd.f32 0.0, %v4139
    %4141 = vmatmul.f32.gmra.mxu0 %v3976
    %v4142 = vpop.f32.mrf.mxu0
    %v4143 = vadd.f32 0.0, %v4142
    %4144 = vmatmul.f32.gmra.mxu0 %v3979
    %v4145 = vpop.f32.mrf.mxu0
    %v4146 = vadd.f32 0.0, %v4145
    %4147 = vmatmul.f32.gmra.mxu0 %v3982
    %v4148 = vpop.f32.mrf.mxu0
    %v4149 = vadd.f32 0.0, %v4148
    %4150 = vmatmul.f32.gmra.mxu0 %v3985
    %v4151 = vpop.f32.mrf.mxu0
    %v4152 = vadd.f32 0.0, %v4151
    %4153 = vmatmul.f32.gmra.mxu0 %v3988
    %v4154 = vpop.f32.mrf.mxu0
    %4155 = vmatmul.f32.gmra.mxu0 %v3991
    %v4156 = vpop.f32.mrf.mxu0
    %v4157 = vadd.f32 0.0, %v4156
    %4158 = vmatmul.f32.gmra.mxu0 %v3994
    %v4159 = vpop.f32.mrf.mxu0
    %v4160 = vadd.f32 0.0, %v4159
    %4161 = vmatmul.f32.gmra.mxu0 %v3997
    %v4162 = vpop.f32.mrf.mxu0
    %v4163 = vadd.f32 0.0, %v4162
    %4164 = vmatmul.f32.gmra.mxu0 %v4000
    %v4165 = vpop.f32.mrf.mxu0
    %v4166 = vadd.f32 0.0, %v4165
    %4167 = vmatmul.f32.gmra.mxu0 %v4003
    %v4168 = vpop.f32.mrf.mxu0
    %v4169 = vadd.f32 0.0, %v4168
    %4170 = vmatmul.f32.gmra.mxu0 %v4006
    %v4171 = vpop.f32.mrf.mxu0
    %v4172 = vadd.f32 0.0, %v4171
    %4173 = vmatmul.f32.gmra.mxu0 %v4009
    %v4174 = vpop.f32.mrf.mxu0
    %4175 = vmatmul.f32.gmra.mxu0 %v4012
    %v4176 = vpop.f32.mrf.mxu0
    %v4177 = vadd.f32 0.0, %v4176
    %4178 = vmatmul.f32.gmra.mxu0 %v4015
    %v4179 = vpop.f32.mrf.mxu0
    %v4180 = vadd.f32 0.0, %v4179
    %4181 = vmatmul.f32.gmra.mxu0 %v4018
    %v4182 = vpop.f32.mrf.mxu0
    %v4183 = vadd.f32 0.0, %v4182
    %4184 = vmatmul.f32.gmra.mxu0 %v4021
    %v4185 = vpop.f32.mrf.mxu0
    %v4186 = vadd.f32 0.0, %v4185
    %4187 = vmatmul.f32.gmra.mxu0 %v4024
    %v4188 = vpop.f32.mrf.mxu0
    %v4189 = vadd.f32 0.0, %v4188
    %4190 = vmatmul.f32.gmra.mxu0 %v4027
    %v4191 = vpop.f32.mrf.mxu0
    %v4192 = vadd.f32 0.0, %v4191
    %4193 = vmatmul.f32.gmra.mxu0 %v4030
    %v4194 = vpop.f32.mrf.mxu0
    %4195 = vmatmul.f32.gmra.mxu0 %v4033
    %v4196 = vpop.f32.mrf.mxu0
    %v4197 = vadd.f32 0.0, %v4196
    %4198 = vmatmul.f32.gmra.mxu0 %v4036
    %v4199 = vpop.f32.mrf.mxu0
    %v4200 = vadd.f32 0.0, %v4199
    %4201 = vmatmul.f32.gmra.mxu0 %v4039
    %v4202 = vpop.f32.mrf.mxu0
    %v4203 = vadd.f32 0.0, %v4202
    %4204 = vmatmul.f32.gmra.mxu0 %v4042
    %v4205 = vpop.f32.mrf.mxu0
    %v4206 = vadd.f32 0.0, %v4205
    %4207 = vmatmul.f32.gmra.mxu0 %v4045
    %v4208 = vpop.f32.mrf.mxu0
    %v4209 = vadd.f32 0.0, %v4208
    %4210 = vmatmul.f32.gmra.mxu0 %v4048
    %v4211 = vpop.f32.mrf.mxu0
    %v4212 = vadd.f32 0.0, %v4211
    %4213 = vmatmul.f32.gmra.mxu0 %v4051
    %v4214 = vpop.f32.mrf.mxu0
    %4215 = vmatmul.f32.gmra.mxu0 %v4054
    %v4216 = vpop.f32.mrf.mxu0
    %v4217 = vadd.f32 0.0, %v4216
    %4218 = vmatmul.f32.gmra.mxu0 %v4057
    %v4219 = vpop.f32.mrf.mxu0
    %v4220 = vadd.f32 0.0, %v4219
    %4221 = vmatmul.f32.gmra.mxu0 %v4060
    %v4222 = vpop.f32.mrf.mxu0
    %v4223 = vadd.f32 0.0, %v4222
    %4224 = vmatmul.f32.gmra.mxu0 %v4063
    %v4225 = vpop.f32.mrf.mxu0
    %v4226 = vadd.f32 0.0, %v4225
    %4227 = vmatmul.f32.gmra.mxu0 %v4066
    %v4228 = vpop.f32.mrf.mxu0
    %v4229 = vadd.f32 0.0, %v4228
    %4230 = vmatmul.f32.gmra.mxu0 %v4069
    %v4231 = vpop.f32.mrf.mxu0
    %v4232 = vadd.f32 0.0, %v4231
    %4233 = vmatmul.f32.gmra.mxu0 %v4072
    %v4234 = vpop.f32.mrf.mxu0
    %4235 = vmatmul.f32.gmra.mxu0 %v4075
    %v4236 = vpop.f32.mrf.mxu0
    %4237 = vmatmul.f32.gmra.mxu0 %v4078
    %v4238 = vpop.f32.mrf.mxu0
    %4239 = vmatmul.f32.gmra.mxu0 %v4081
    %v4240 = vpop.f32.mrf.mxu0
    %4241 = vmatmul.f32.gmra.mxu0 %v4084
    %v4242 = vpop.f32.mrf.mxu0
    %4243 = vmatmul.f32.gmra.mxu0 %v4087
    %v4244 = vpop.f32.mrf.mxu0
    %4245 = vmatmul.f32.gmra.mxu0 %v4090
    %v4246 = vpop.f32.mrf.mxu0
    %4247 = vmatmul.f32.gmra.mxu0 %v4093
    %v4248 = vpop.f32.mrf.mxu0
    %4249 = vmatmul.f32.gmra.mxu0 %v4096
    %v4250 = vpop.f32.mrf.mxu0
    %4251 = vmatmul.f32.gmra.mxu0 %v4099
    %v4252 = vpop.f32.mrf.mxu0
    %4253 = vmatmul.f32.gmra.mxu0 %v4102
    %v4254 = vpop.f32.mrf.mxu0
    %4255 = vmatmul.f32.gmra.mxu0 %v4105
    %v4256 = vpop.f32.mrf.mxu0
    %4257 = vmatmul.f32.gmra.mxu0 %v4108
    %v4258 = vpop.f32.mrf.mxu0
    %4259 = vmatmul.f32.gmra.mxu0 %v4111
    %v4260 = vpop.f32.mrf.mxu0
    %4261 = vmatmul.f32.gmra.mxu0 %v4114
    %v4262 = vpop.f32.mrf.mxu0
    %4263 = vdwg.mxu0
    %v4264 = vadd.f32 %v3889, %v4137
    %v4265 = vadd.f32 %v3890, %v4140
    %v4266 = vadd.f32 %v3891, %v4143
    %v4267 = vadd.f32 %v3892, %v4146
    %v4268 = vadd.f32 %v3893, %v4149
    %v4269 = vadd.f32 %v3894, %v4152
    %v4270 = vadd.f32 %v3895, %v4157
    %v4271 = vadd.f32 %v3896, %v4160
    %v4272 = vadd.f32 %v3897, %v4163
    %v4273 = vadd.f32 %v3898, %v4166
    %v4274 = vadd.f32 %v3899, %v4169
    %v4275 = vadd.f32 %v3900, %v4172
    %v4276 = vadd.f32 %v3901, %v4177
    %v4277 = vadd.f32 %v3902, %v4180
    %v4278 = vadd.f32 %v3903, %v4183
    %v4279 = vadd.f32 %v3904, %v4186
    %v4280 = vadd.f32 %v3905, %v4189
    %v4281 = vadd.f32 %v3906, %v4192
    %v4282 = vadd.f32 %v3907, %v4197
    %v4283 = vadd.f32 %v3908, %v4200
    %v4284 = vadd.f32 %v3909, %v4203
    %v4285 = vadd.f32 %v3910, %v4206
    %v4286 = vadd.f32 %v3911, %v4209
    %v4287 = vadd.f32 %v3912, %v4212
    %v4288 = vadd.f32 %v3913, %v4217
    %v4289 = vadd.f32 %v3914, %v4220
    %v4290 = vadd.f32 %v3915, %v4223
    %v4291 = vadd.f32 %v3916, %v4226
    %v4292 = vadd.f32 %v3917, %v4229
    %v4293 = vadd.f32 %v3918, %v4232
    %v4294 = vld [vmem:[#allocation2 + $0x22] sm:$0xff]
    %v4295 = vld [vmem:[#allocation2 + $0x2a] sm:$0xff]
    %v4296 = vld [vmem:[#allocation2 + $0x32] sm:$0xff]
    %v4297 = vld [vmem:[#allocation2 + $0x3a] sm:$0xff]
    %v4298 = vld [vmem:[#allocation2 + $0x42] sm:$0xff]
    %v4299 = vld [vmem:[#allocation2 + $0x4a] sm:$0xff]
    %v4300 = vld [vmem:[#allocation2 + $0x52] sm:$0xff]
    %v4301 = vld [vmem:[#allocation2 + $0x5a] sm:$0xff]
    %v4302 = vld [vmem:[#allocation2 + $0x62] sm:$0xff]
    %v4303 = vld [vmem:[#allocation2 + $0x6a] sm:$0xff]
    %v4304 = vld [vmem:[#allocation2 + $0x72] sm:$0xff]
    %v4305 = vld [vmem:[#allocation2 + $0x7a] sm:$0xff]
    %v4306 = vld [vmem:[#allocation2 + $0x82] sm:$0xff]
    %v4307 = vld [vmem:[#allocation2 + $0x8a] sm:$0xff]
    %v4308 = vld [vmem:[#allocation2 + $0x92] sm:$0xff]
    %v4309 = vld [vmem:[#allocation2 + $0x9a] sm:$0xff]
    %v4310 = vld [vmem:[#allocation2 + $0xa2] sm:$0xff]
    %v4311 = vld [vmem:[#allocation2 + $0xaa] sm:$0xff]
    %v4312 = vld [vmem:[#allocation2 + $0xb2] sm:$0xff]
    %v4313 = vld [vmem:[#allocation2 + $0xba] sm:$0xff]
    %v4314 = vld [vmem:[#allocation2 + $0xc2] sm:$0xff]
    %v4315 = vld [vmem:[#allocation2 + $0xca] sm:$0xff]
    %v4316 = vld [vmem:[#allocation2 + $0xd2] sm:$0xff]
    %v4317 = vld [vmem:[#allocation2 + $0xda] sm:$0xff]
    %v4318 = vld [vmem:[#allocation2 + $0xe2] sm:$0xff]
    %v4319 = vld [vmem:[#allocation2 + $0xea] sm:$0xff]
    %v4320 = vld [vmem:[#allocation2 + $0xf2] sm:$0xff]
    %v4321 = vld [vmem:[#allocation2 + $0xfa] sm:$0xff]
    %v4322 = vld [vmem:[#allocation2 + $0x102] sm:$0xff]
    %v4323 = vld [vmem:[#allocation2 + $0x10a] sm:$0xff]
    %v4324 = vld [vmem:[#allocation2 + $0x112] sm:$0xff]
    %v4325 = vld [vmem:[#allocation2 + $0x11a] sm:$0xff]
    %v4326 = vld [vmem:[#allocation2 + $0x122] sm:$0xff]
    %v4327 = vld [vmem:[#allocation2 + $0x12a] sm:$0xff]
    %v4328 = vld [vmem:[#allocation2 + $0x132] sm:$0xff]
    %v4329 = vld [vmem:[#allocation2 + $0x13a] sm:$0xff]
    %v4330 = vld [vmem:[#allocation2 + $0x142] sm:$0xff]
    %v4331 = vld [vmem:[#allocation2 + $0x14a] sm:$0xff]
    %v4332 = vld [vmem:[#allocation2 + $0x152] sm:$0xff]
    %v4333 = vld [vmem:[#allocation2 + $0x15a] sm:$0xff]
    %v4334 = vld [vmem:[#allocation2 + $0x162] sm:$0xff]
    %v4335 = vld [vmem:[#allocation2 + $0x16a] sm:$0xff]
    %v4336 = vld [vmem:[#allocation2 + $0x172] sm:$0xff]
    %v4337 = vld [vmem:[#allocation2 + $0x17a] sm:$0xff]
    %v4338 = vld [vmem:[#allocation2 + $0x182] sm:$0xff]
    %v4339 = vld [vmem:[#allocation2 + $0x18a] sm:$0xff]
    %v4340 = vld [vmem:[#allocation2 + $0x192] sm:$0xff]
    %v4341 = vld [vmem:[#allocation2 + $0x19a] sm:$0xff]
    %v4342 = vld [vmem:[#allocation2 + $0x1a2] sm:$0xff]
    %v4343 = vld [vmem:[%s3 + $0x30] sm:$0x3f]
    %v4345 = vsel %vm1254, %v4294, 0
    %v4348 = vsel %vm1254, %v4295, 0
    %v4351 = vsel %vm1254, %v4296, 0
    %v4354 = vsel %vm1254, %v4297, 0
    %v4357 = vsel %vm1254, %v4298, 0
    %v4360 = vsel %vm1254, %v4299, 0
    %v4363 = vsel %vm1254, %v4300, 0
    %v4366 = vsel %vm1254, %v4301, 0
    %v4369 = vsel %vm1254, %v4302, 0
    %v4372 = vsel %vm1254, %v4303, 0
    %v4375 = vsel %vm1254, %v4304, 0
    %v4378 = vsel %vm1254, %v4305, 0
    %v4381 = vsel %vm1254, %v4306, 0
    %v4384 = vsel %vm1254, %v4307, 0
    %v4387 = vsel %vm1254, %v4308, 0
    %v4390 = vsel %vm1254, %v4309, 0
    %v4393 = vsel %vm1254, %v4310, 0
    %v4396 = vsel %vm1254, %v4311, 0
    %v4399 = vsel %vm1254, %v4312, 0
    %v4402 = vsel %vm1254, %v4313, 0
    %v4405 = vsel %vm1254, %v4314, 0
    %v4408 = vsel %vm1254, %v4315, 0
    %v4411 = vsel %vm1254, %v4316, 0
    %v4414 = vsel %vm1254, %v4317, 0
    %v4417 = vsel %vm1254, %v4318, 0
    %v4420 = vsel %vm1254, %v4319, 0
    %v4423 = vsel %vm1254, %v4320, 0
    %v4426 = vsel %vm1254, %v4321, 0
    %v4429 = vsel %vm1254, %v4322, 0
    %v4432 = vsel %vm1254, %v4323, 0
    %v4435 = vsel %vm1254, %v4324, 0
    %v4438 = vsel %vm1254, %v4325, 0
    %v4441 = vsel %vm1254, %v4326, 0
    %v4444 = vsel %vm1254, %v4327, 0
    %v4447 = vsel %vm1254, %v4328, 0
    %v4450 = vsel %vm1254, %v4329, 0
    %v4453 = vsel %vm1254, %v4330, 0
    %v4456 = vsel %vm1254, %v4331, 0
    %v4459 = vsel %vm1254, %v4332, 0
    %v4462 = vsel %vm1254, %v4333, 0
    %v4465 = vsel %vm1254, %v4334, 0
    %v4468 = vsel %vm1254, %v4335, 0
    %v4471 = vsel %vm1254, %v4336, 0
    %v4474 = vsel %vm1254, %v4337, 0
    %v4477 = vsel %vm1254, %v4338, 0
    %v4480 = vsel %vm1254, %v4339, 0
    %v4483 = vsel %vm1254, %v4340, 0
    %v4486 = vsel %vm1254, %v4341, 0
    %v4489 = vsel %vm1254, %v4342, 0
    %v4492 = vsel %vm1520, %v4343, 0
    %4494 = vmatpush.msra.mxu0 0.0
    %4495 = vmatpush.msra.mxu0 0.0
    %4496 = vmatpush.msra.mxu0 0.0
    %4497 = vmatpush.msra.mxu0 0.0
    %4498 = vmatpush.msra.mxu0 0.0
    %4499 = vmatpush.msra.mxu0 0.0
    %4500 = vmatpush.msra.mxu0 0.0
    %4501 = vmatpush.msra.mxu0 0.0
    %4502 = vmatpush.msra.mxu0 0.0
    %4503 = vmatpush.msra.mxu0 0.0
    %4504 = vmatpush.msra.mxu0 0.0
    %4505 = vmatpush.msra.mxu0 0.0
    %4506 = vmatpush.msra.mxu0 0.0
    %4507 = vmatpush.msra.mxu0 0.0
    %4508 = vmatpush.msra.mxu0 0.0
    %4509 = vmatpush.msra.mxu0 %v4492
    %4510 = vmatmul.f32.gmra.mxu0 %v4345
    %v4511 = vpop.f32.mrf.mxu0
    %v4512 = vadd.f32 0.0, %v4511
    %4513 = vmatmul.f32.gmra.mxu0 %v4348
    %v4514 = vpop.f32.mrf.mxu0
    %v4515 = vadd.f32 0.0, %v4514
    %4516 = vmatmul.f32.gmra.mxu0 %v4351
    %v4517 = vpop.f32.mrf.mxu0
    %v4518 = vadd.f32 0.0, %v4517
    %4519 = vmatmul.f32.gmra.mxu0 %v4354
    %v4520 = vpop.f32.mrf.mxu0
    %v4521 = vadd.f32 0.0, %v4520
    %4522 = vmatmul.f32.gmra.mxu0 %v4357
    %v4523 = vpop.f32.mrf.mxu0
    %v4524 = vadd.f32 0.0, %v4523
    %4525 = vmatmul.f32.gmra.mxu0 %v4360
    %v4526 = vpop.f32.mrf.mxu0
    %v4527 = vadd.f32 0.0, %v4526
    %4528 = vmatmul.f32.gmra.mxu0 %v4363
    %v4529 = vpop.f32.mrf.mxu0
    %4530 = vmatmul.f32.gmra.mxu0 %v4366
    %v4531 = vpop.f32.mrf.mxu0
    %v4532 = vadd.f32 0.0, %v4531
    %4533 = vmatmul.f32.gmra.mxu0 %v4369
    %v4534 = vpop.f32.mrf.mxu0
    %v4535 = vadd.f32 0.0, %v4534
    %4536 = vmatmul.f32.gmra.mxu0 %v4372
    %v4537 = vpop.f32.mrf.mxu0
    %v4538 = vadd.f32 0.0, %v4537
    %4539 = vmatmul.f32.gmra.mxu0 %v4375
    %v4540 = vpop.f32.mrf.mxu0
    %v4541 = vadd.f32 0.0, %v4540
    %4542 = vmatmul.f32.gmra.mxu0 %v4378
    %v4543 = vpop.f32.mrf.mxu0
    %v4544 = vadd.f32 0.0, %v4543
    %4545 = vmatmul.f32.gmra.mxu0 %v4381
    %v4546 = vpop.f32.mrf.mxu0
    %v4547 = vadd.f32 0.0, %v4546
    %4548 = vmatmul.f32.gmra.mxu0 %v4384
    %v4549 = vpop.f32.mrf.mxu0
    %4550 = vmatmul.f32.gmra.mxu0 %v4387
    %v4551 = vpop.f32.mrf.mxu0
    %v4552 = vadd.f32 0.0, %v4551
    %4553 = vmatmul.f32.gmra.mxu0 %v4390
    %v4554 = vpop.f32.mrf.mxu0
    %v4555 = vadd.f32 0.0, %v4554
    %4556 = vmatmul.f32.gmra.mxu0 %v4393
    %v4557 = vpop.f32.mrf.mxu0
    %v4558 = vadd.f32 0.0, %v4557
    %4559 = vmatmul.f32.gmra.mxu0 %v4396
    %v4560 = vpop.f32.mrf.mxu0
    %v4561 = vadd.f32 0.0, %v4560
    %4562 = vmatmul.f32.gmra.mxu0 %v4399
    %v4563 = vpop.f32.mrf.mxu0
    %v4564 = vadd.f32 0.0, %v4563
    %4565 = vmatmul.f32.gmra.mxu0 %v4402
    %v4566 = vpop.f32.mrf.mxu0
    %v4567 = vadd.f32 0.0, %v4566
    %4568 = vmatmul.f32.gmra.mxu0 %v4405
    %v4569 = vpop.f32.mrf.mxu0
    %4570 = vmatmul.f32.gmra.mxu0 %v4408
    %v4571 = vpop.f32.mrf.mxu0
    %v4572 = vadd.f32 0.0, %v4571
    %4573 = vmatmul.f32.gmra.mxu0 %v4411
    %v4574 = vpop.f32.mrf.mxu0
    %v4575 = vadd.f32 0.0, %v4574
    %4576 = vmatmul.f32.gmra.mxu0 %v4414
    %v4577 = vpop.f32.mrf.mxu0
    %v4578 = vadd.f32 0.0, %v4577
    %4579 = vmatmul.f32.gmra.mxu0 %v4417
    %v4580 = vpop.f32.mrf.mxu0
    %v4581 = vadd.f32 0.0, %v4580
    %4582 = vmatmul.f32.gmra.mxu0 %v4420
    %v4583 = vpop.f32.mrf.mxu0
    %v4584 = vadd.f32 0.0, %v4583
    %4585 = vmatmul.f32.gmra.mxu0 %v4423
    %v4586 = vpop.f32.mrf.mxu0
    %v4587 = vadd.f32 0.0, %v4586
    %4588 = vmatmul.f32.gmra.mxu0 %v4426
    %v4589 = vpop.f32.mrf.mxu0
    %4590 = vmatmul.f32.gmra.mxu0 %v4429
    %v4591 = vpop.f32.mrf.mxu0
    %v4592 = vadd.f32 0.0, %v4591
    %4593 = vmatmul.f32.gmra.mxu0 %v4432
    %v4594 = vpop.f32.mrf.mxu0
    %v4595 = vadd.f32 0.0, %v4594
    %4596 = vmatmul.f32.gmra.mxu0 %v4435
    %v4597 = vpop.f32.mrf.mxu0
    %v4598 = vadd.f32 0.0, %v4597
    %4599 = vmatmul.f32.gmra.mxu0 %v4438
    %v4600 = vpop.f32.mrf.mxu0
    %v4601 = vadd.f32 0.0, %v4600
    %4602 = vmatmul.f32.gmra.mxu0 %v4441
    %v4603 = vpop.f32.mrf.mxu0
    %v4604 = vadd.f32 0.0, %v4603
    %4605 = vmatmul.f32.gmra.mxu0 %v4444
    %v4606 = vpop.f32.mrf.mxu0
    %v4607 = vadd.f32 0.0, %v4606
    %4608 = vmatmul.f32.gmra.mxu0 %v4447
    %v4609 = vpop.f32.mrf.mxu0
    %4610 = vmatmul.f32.gmra.mxu0 %v4450
    %v4611 = vpop.f32.mrf.mxu0
    %4612 = vmatmul.f32.gmra.mxu0 %v4453
    %v4613 = vpop.f32.mrf.mxu0
    %4614 = vmatmul.f32.gmra.mxu0 %v4456
    %v4615 = vpop.f32.mrf.mxu0
    %4616 = vmatmul.f32.gmra.mxu0 %v4459
    %v4617 = vpop.f32.mrf.mxu0
    %4618 = vmatmul.f32.gmra.mxu0 %v4462
    %v4619 = vpop.f32.mrf.mxu0
    %4620 = vmatmul.f32.gmra.mxu0 %v4465
    %v4621 = vpop.f32.mrf.mxu0
    %4622 = vmatmul.f32.gmra.mxu0 %v4468
    %v4623 = vpop.f32.mrf.mxu0
    %4624 = vmatmul.f32.gmra.mxu0 %v4471
    %v4625 = vpop.f32.mrf.mxu0
    %4626 = vmatmul.f32.gmra.mxu0 %v4474
    %v4627 = vpop.f32.mrf.mxu0
    %4628 = vmatmul.f32.gmra.mxu0 %v4477
    %v4629 = vpop.f32.mrf.mxu0
    %4630 = vmatmul.f32.gmra.mxu0 %v4480
    %v4631 = vpop.f32.mrf.mxu0
    %4632 = vmatmul.f32.gmra.mxu0 %v4483
    %v4633 = vpop.f32.mrf.mxu0
    %4634 = vmatmul.f32.gmra.mxu0 %v4486
    %v4635 = vpop.f32.mrf.mxu0
    %4636 = vmatmul.f32.gmra.mxu0 %v4489
    %v4637 = vpop.f32.mrf.mxu0
    %4638 = vdwg.mxu0
    %v4639 = vadd.f32 %v4264, %v4512
    %v4640 = vadd.f32 %v4265, %v4515
    %v4641 = vadd.f32 %v4266, %v4518
    %v4642 = vadd.f32 %v4267, %v4521
    %v4643 = vadd.f32 %v4268, %v4524
    %v4644 = vadd.f32 %v4269, %v4527
    %v4645 = vadd.f32 %v4270, %v4532
    %v4646 = vadd.f32 %v4271, %v4535
    %v4647 = vadd.f32 %v4272, %v4538
    %v4648 = vadd.f32 %v4273, %v4541
    %v4649 = vadd.f32 %v4274, %v4544
    %v4650 = vadd.f32 %v4275, %v4547
    %v4651 = vadd.f32 %v4276, %v4552
    %v4652 = vadd.f32 %v4277, %v4555
    %v4653 = vadd.f32 %v4278, %v4558
    %v4654 = vadd.f32 %v4279, %v4561
    %v4655 = vadd.f32 %v4280, %v4564
    %v4656 = vadd.f32 %v4281, %v4567
    %v4657 = vadd.f32 %v4282, %v4572
    %v4658 = vadd.f32 %v4283, %v4575
    %v4659 = vadd.f32 %v4284, %v4578
    %v4660 = vadd.f32 %v4285, %v4581
    %v4661 = vadd.f32 %v4286, %v4584
    %v4662 = vadd.f32 %v4287, %v4587
    %v4663 = vadd.f32 %v4288, %v4592
    %v4664 = vadd.f32 %v4289, %v4595
    %v4665 = vadd.f32 %v4290, %v4598
    %v4666 = vadd.f32 %v4291, %v4601
    %v4667 = vadd.f32 %v4292, %v4604
    %v4668 = vadd.f32 %v4293, %v4607
    %v4669 = vld [vmem:[#allocation2 + $0x24] sm:$0xff]
    %v4670 = vld [vmem:[#allocation2 + $0x2c] sm:$0xff]
    %v4671 = vld [vmem:[#allocation2 + $0x34] sm:$0xff]
    %v4672 = vld [vmem:[#allocation2 + $0x3c] sm:$0xff]
    %v4673 = vld [vmem:[#allocation2 + $0x44] sm:$0xff]
    %v4674 = vld [vmem:[#allocation2 + $0x4c] sm:$0xff]
    %v4675 = vld [vmem:[#allocation2 + $0x54] sm:$0xff]
    %v4676 = vld [vmem:[#allocation2 + $0x5c] sm:$0xff]
    %v4677 = vld [vmem:[#allocation2 + $0x64] sm:$0xff]
    %v4678 = vld [vmem:[#allocation2 + $0x6c] sm:$0xff]
    %v4679 = vld [vmem:[#allocation2 + $0x74] sm:$0xff]
    %v4680 = vld [vmem:[#allocation2 + $0x7c] sm:$0xff]
    %v4681 = vld [vmem:[#allocation2 + $0x84] sm:$0xff]
    %v4682 = vld [vmem:[#allocation2 + $0x8c] sm:$0xff]
    %v4683 = vld [vmem:[#allocation2 + $0x94] sm:$0xff]
    %v4684 = vld [vmem:[#allocation2 + $0x9c] sm:$0xff]
    %v4685 = vld [vmem:[#allocation2 + $0xa4] sm:$0xff]
    %v4686 = vld [vmem:[#allocation2 + $0xac] sm:$0xff]
    %v4687 = vld [vmem:[#allocation2 + $0xb4] sm:$0xff]
    %v4688 = vld [vmem:[#allocation2 + $0xbc] sm:$0xff]
    %v4689 = vld [vmem:[#allocation2 + $0xc4] sm:$0xff]
    %v4690 = vld [vmem:[#allocation2 + $0xcc] sm:$0xff]
    %v4691 = vld [vmem:[#allocation2 + $0xd4] sm:$0xff]
    %v4692 = vld [vmem:[#allocation2 + $0xdc] sm:$0xff]
    %v4693 = vld [vmem:[#allocation2 + $0xe4] sm:$0xff]
    %v4694 = vld [vmem:[#allocation2 + $0xec] sm:$0xff]
    %v4695 = vld [vmem:[#allocation2 + $0xf4] sm:$0xff]
    %v4696 = vld [vmem:[#allocation2 + $0xfc] sm:$0xff]
    %v4697 = vld [vmem:[#allocation2 + $0x104] sm:$0xff]
    %v4698 = vld [vmem:[#allocation2 + $0x10c] sm:$0xff]
    %v4699 = vld [vmem:[#allocation2 + $0x114] sm:$0xff]
    %v4700 = vld [vmem:[#allocation2 + $0x11c] sm:$0xff]
    %v4701 = vld [vmem:[#allocation2 + $0x124] sm:$0xff]
    %v4702 = vld [vmem:[#allocation2 + $0x12c] sm:$0xff]
    %v4703 = vld [vmem:[#allocation2 + $0x134] sm:$0xff]
    %v4704 = vld [vmem:[#allocation2 + $0x13c] sm:$0xff]
    %v4705 = vld [vmem:[#allocation2 + $0x144] sm:$0xff]
    %v4706 = vld [vmem:[#allocation2 + $0x14c] sm:$0xff]
    %v4707 = vld [vmem:[#allocation2 + $0x154] sm:$0xff]
    %v4708 = vld [vmem:[#allocation2 + $0x15c] sm:$0xff]
    %v4709 = vld [vmem:[#allocation2 + $0x164] sm:$0xff]
    %v4710 = vld [vmem:[#allocation2 + $0x16c] sm:$0xff]
    %v4711 = vld [vmem:[#allocation2 + $0x174] sm:$0xff]
    %v4712 = vld [vmem:[#allocation2 + $0x17c] sm:$0xff]
    %v4713 = vld [vmem:[#allocation2 + $0x184] sm:$0xff]
    %v4714 = vld [vmem:[#allocation2 + $0x18c] sm:$0xff]
    %v4715 = vld [vmem:[#allocation2 + $0x194] sm:$0xff]
    %v4716 = vld [vmem:[#allocation2 + $0x19c] sm:$0xff]
    %v4717 = vld [vmem:[#allocation2 + $0x1a4] sm:$0xff]
    %v4718 = vld [vmem:[%s3 + $0x36] sm:$0x3f]
    %v4720 = vsel %vm1254, %v4669, 0
    %v4723 = vsel %vm1254, %v4670, 0
    %v4726 = vsel %vm1254, %v4671, 0
    %v4729 = vsel %vm1254, %v4672, 0
    %v4732 = vsel %vm1254, %v4673, 0
    %v4735 = vsel %vm1254, %v4674, 0
    %v4738 = vsel %vm1254, %v4675, 0
    %v4741 = vsel %vm1254, %v4676, 0
    %v4744 = vsel %vm1254, %v4677, 0
    %v4747 = vsel %vm1254, %v4678, 0
    %v4750 = vsel %vm1254, %v4679, 0
    %v4753 = vsel %vm1254, %v4680, 0
    %v4756 = vsel %vm1254, %v4681, 0
    %v4759 = vsel %vm1254, %v4682, 0
    %v4762 = vsel %vm1254, %v4683, 0
    %v4765 = vsel %vm1254, %v4684, 0
    %v4768 = vsel %vm1254, %v4685, 0
    %v4771 = vsel %vm1254, %v4686, 0
    %v4774 = vsel %vm1254, %v4687, 0
    %v4777 = vsel %vm1254, %v4688, 0
    %v4780 = vsel %vm1254, %v4689, 0
    %v4783 = vsel %vm1254, %v4690, 0
    %v4786 = vsel %vm1254, %v4691, 0
    %v4789 = vsel %vm1254, %v4692, 0
    %v4792 = vsel %vm1254, %v4693, 0
    %v4795 = vsel %vm1254, %v4694, 0
    %v4798 = vsel %vm1254, %v4695, 0
    %v4801 = vsel %vm1254, %v4696, 0
    %v4804 = vsel %vm1254, %v4697, 0
    %v4807 = vsel %vm1254, %v4698, 0
    %v4810 = vsel %vm1254, %v4699, 0
    %v4813 = vsel %vm1254, %v4700, 0
    %v4816 = vsel %vm1254, %v4701, 0
    %v4819 = vsel %vm1254, %v4702, 0
    %v4822 = vsel %vm1254, %v4703, 0
    %v4825 = vsel %vm1254, %v4704, 0
    %v4828 = vsel %vm1254, %v4705, 0
    %v4831 = vsel %vm1254, %v4706, 0
    %v4834 = vsel %vm1254, %v4707, 0
    %v4837 = vsel %vm1254, %v4708, 0
    %v4840 = vsel %vm1254, %v4709, 0
    %v4843 = vsel %vm1254, %v4710, 0
    %v4846 = vsel %vm1254, %v4711, 0
    %v4849 = vsel %vm1254, %v4712, 0
    %v4852 = vsel %vm1254, %v4713, 0
    %v4855 = vsel %vm1254, %v4714, 0
    %v4858 = vsel %vm1254, %v4715, 0
    %v4861 = vsel %vm1254, %v4716, 0
    %v4864 = vsel %vm1254, %v4717, 0
    %v4867 = vsel %vm1520, %v4718, 0
    %4869 = vmatpush.msra.mxu0 0.0
    %4870 = vmatpush.msra.mxu0 0.0
    %4871 = vmatpush.msra.mxu0 0.0
    %4872 = vmatpush.msra.mxu0 0.0
    %4873 = vmatpush.msra.mxu0 0.0
    %4874 = vmatpush.msra.mxu0 0.0
    %4875 = vmatpush.msra.mxu0 0.0
    %4876 = vmatpush.msra.mxu0 0.0
    %4877 = vmatpush.msra.mxu0 0.0
    %4878 = vmatpush.msra.mxu0 0.0
    %4879 = vmatpush.msra.mxu0 0.0
    %4880 = vmatpush.msra.mxu0 0.0
    %4881 = vmatpush.msra.mxu0 0.0
    %4882 = vmatpush.msra.mxu0 0.0
    %4883 = vmatpush.msra.mxu0 0.0
    %4884 = vmatpush.msra.mxu0 %v4867
    %4885 = vmatmul.f32.gmra.mxu0 %v4720
    %v4886 = vpop.f32.mrf.mxu0
    %v4887 = vadd.f32 0.0, %v4886
    %4888 = vmatmul.f32.gmra.mxu0 %v4723
    %v4889 = vpop.f32.mrf.mxu0
    %v4890 = vadd.f32 0.0, %v4889
    %4891 = vmatmul.f32.gmra.mxu0 %v4726
    %v4892 = vpop.f32.mrf.mxu0
    %v4893 = vadd.f32 0.0, %v4892
    %4894 = vmatmul.f32.gmra.mxu0 %v4729
    %v4895 = vpop.f32.mrf.mxu0
    %v4896 = vadd.f32 0.0, %v4895
    %4897 = vmatmul.f32.gmra.mxu0 %v4732
    %v4898 = vpop.f32.mrf.mxu0
    %v4899 = vadd.f32 0.0, %v4898
    %4900 = vmatmul.f32.gmra.mxu0 %v4735
    %v4901 = vpop.f32.mrf.mxu0
    %v4902 = vadd.f32 0.0, %v4901
    %4903 = vmatmul.f32.gmra.mxu0 %v4738
    %v4904 = vpop.f32.mrf.mxu0
    %4905 = vmatmul.f32.gmra.mxu0 %v4741
    %v4906 = vpop.f32.mrf.mxu0
    %v4907 = vadd.f32 0.0, %v4906
    %4908 = vmatmul.f32.gmra.mxu0 %v4744
    %v4909 = vpop.f32.mrf.mxu0
    %v4910 = vadd.f32 0.0, %v4909
    %4911 = vmatmul.f32.gmra.mxu0 %v4747
    %v4912 = vpop.f32.mrf.mxu0
    %v4913 = vadd.f32 0.0, %v4912
    %4914 = vmatmul.f32.gmra.mxu0 %v4750
    %v4915 = vpop.f32.mrf.mxu0
    %v4916 = vadd.f32 0.0, %v4915
    %4917 = vmatmul.f32.gmra.mxu0 %v4753
    %v4918 = vpop.f32.mrf.mxu0
    %v4919 = vadd.f32 0.0, %v4918
    %4920 = vmatmul.f32.gmra.mxu0 %v4756
    %v4921 = vpop.f32.mrf.mxu0
    %v4922 = vadd.f32 0.0, %v4921
    %4923 = vmatmul.f32.gmra.mxu0 %v4759
    %v4924 = vpop.f32.mrf.mxu0
    %4925 = vmatmul.f32.gmra.mxu0 %v4762
    %v4926 = vpop.f32.mrf.mxu0
    %v4927 = vadd.f32 0.0, %v4926
    %4928 = vmatmul.f32.gmra.mxu0 %v4765
    %v4929 = vpop.f32.mrf.mxu0
    %v4930 = vadd.f32 0.0, %v4929
    %4931 = vmatmul.f32.gmra.mxu0 %v4768
    %v4932 = vpop.f32.mrf.mxu0
    %v4933 = vadd.f32 0.0, %v4932
    %4934 = vmatmul.f32.gmra.mxu0 %v4771
    %v4935 = vpop.f32.mrf.mxu0
    %v4936 = vadd.f32 0.0, %v4935
    %4937 = vmatmul.f32.gmra.mxu0 %v4774
    %v4938 = vpop.f32.mrf.mxu0
    %v4939 = vadd.f32 0.0, %v4938
    %4940 = vmatmul.f32.gmra.mxu0 %v4777
    %v4941 = vpop.f32.mrf.mxu0
    %v4942 = vadd.f32 0.0, %v4941
    %4943 = vmatmul.f32.gmra.mxu0 %v4780
    %v4944 = vpop.f32.mrf.mxu0
    %4945 = vmatmul.f32.gmra.mxu0 %v4783
    %v4946 = vpop.f32.mrf.mxu0
    %v4947 = vadd.f32 0.0, %v4946
    %4948 = vmatmul.f32.gmra.mxu0 %v4786
    %v4949 = vpop.f32.mrf.mxu0
    %v4950 = vadd.f32 0.0, %v4949
    %4951 = vmatmul.f32.gmra.mxu0 %v4789
    %v4952 = vpop.f32.mrf.mxu0
    %v4953 = vadd.f32 0.0, %v4952
    %4954 = vmatmul.f32.gmra.mxu0 %v4792
    %v4955 = vpop.f32.mrf.mxu0
    %v4956 = vadd.f32 0.0, %v4955
    %4957 = vmatmul.f32.gmra.mxu0 %v4795
    %v4958 = vpop.f32.mrf.mxu0
    %v4959 = vadd.f32 0.0, %v4958
    %4960 = vmatmul.f32.gmra.mxu0 %v4798
    %v4961 = vpop.f32.mrf.mxu0
    %v4962 = vadd.f32 0.0, %v4961
    %4963 = vmatmul.f32.gmra.mxu0 %v4801
    %v4964 = vpop.f32.mrf.mxu0
    %4965 = vmatmul.f32.gmra.mxu0 %v4804
    %v4966 = vpop.f32.mrf.mxu0
    %v4967 = vadd.f32 0.0, %v4966
    %4968 = vmatmul.f32.gmra.mxu0 %v4807
    %v4969 = vpop.f32.mrf.mxu0
    %v4970 = vadd.f32 0.0, %v4969
    %4971 = vmatmul.f32.gmra.mxu0 %v4810
    %v4972 = vpop.f32.mrf.mxu0
    %v4973 = vadd.f32 0.0, %v4972
    %4974 = vmatmul.f32.gmra.mxu0 %v4813
    %v4975 = vpop.f32.mrf.mxu0
    %v4976 = vadd.f32 0.0, %v4975
    %4977 = vmatmul.f32.gmra.mxu0 %v4816
    %v4978 = vpop.f32.mrf.mxu0
    %v4979 = vadd.f32 0.0, %v4978
    %4980 = vmatmul.f32.gmra.mxu0 %v4819
    %v4981 = vpop.f32.mrf.mxu0
    %v4982 = vadd.f32 0.0, %v4981
    %4983 = vmatmul.f32.gmra.mxu0 %v4822
    %v4984 = vpop.f32.mrf.mxu0
    %4985 = vmatmul.f32.gmra.mxu0 %v4825
    %v4986 = vpop.f32.mrf.mxu0
    %4987 = vmatmul.f32.gmra.mxu0 %v4828
    %v4988 = vpop.f32.mrf.mxu0
    %4989 = vmatmul.f32.gmra.mxu0 %v4831
    %v4990 = vpop.f32.mrf.mxu0
    %4991 = vmatmul.f32.gmra.mxu0 %v4834
    %v4992 = vpop.f32.mrf.mxu0
    %4993 = vmatmul.f32.gmra.mxu0 %v4837
    %v4994 = vpop.f32.mrf.mxu0
    %4995 = vmatmul.f32.gmra.mxu0 %v4840
    %v4996 = vpop.f32.mrf.mxu0
    %4997 = vmatmul.f32.gmra.mxu0 %v4843
    %v4998 = vpop.f32.mrf.mxu0
    %4999 = vmatmul.f32.gmra.mxu0 %v4846
    %v5000 = vpop.f32.mrf.mxu0
    %5001 = vmatmul.f32.gmra.mxu0 %v4849
    %v5002 = vpop.f32.mrf.mxu0
    %5003 = vmatmul.f32.gmra.mxu0 %v4852
    %v5004 = vpop.f32.mrf.mxu0
    %5005 = vmatmul.f32.gmra.mxu0 %v4855
    %v5006 = vpop.f32.mrf.mxu0
    %5007 = vmatmul.f32.gmra.mxu0 %v4858
    %v5008 = vpop.f32.mrf.mxu0
    %5009 = vmatmul.f32.gmra.mxu0 %v4861
    %v5010 = vpop.f32.mrf.mxu0
    %5011 = vmatmul.f32.gmra.mxu0 %v4864
    %v5012 = vpop.f32.mrf.mxu0
    %5013 = vdwg.mxu0
    %v5014 = vadd.f32 %v4639, %v4887
    %v5015 = vadd.f32 %v4640, %v4890
    %v5016 = vadd.f32 %v4641, %v4893
    %v5017 = vadd.f32 %v4642, %v4896
    %v5018 = vadd.f32 %v4643, %v4899
    %v5019 = vadd.f32 %v4644, %v4902
    %v5020 = vadd.f32 %v4645, %v4907
    %v5021 = vadd.f32 %v4646, %v4910
    %v5022 = vadd.f32 %v4647, %v4913
    %v5023 = vadd.f32 %v4648, %v4916
    %v5024 = vadd.f32 %v4649, %v4919
    %v5025 = vadd.f32 %v4650, %v4922
    %v5026 = vadd.f32 %v4651, %v4927
    %v5027 = vadd.f32 %v4652, %v4930
    %v5028 = vadd.f32 %v4653, %v4933
    %v5029 = vadd.f32 %v4654, %v4936
    %v5030 = vadd.f32 %v4655, %v4939
    %v5031 = vadd.f32 %v4656, %v4942
    %v5032 = vadd.f32 %v4657, %v4947
    %v5033 = vadd.f32 %v4658, %v4950
    %v5034 = vadd.f32 %v4659, %v4953
    %v5035 = vadd.f32 %v4660, %v4956
    %v5036 = vadd.f32 %v4661, %v4959
    %v5037 = vadd.f32 %v4662, %v4962
    %v5038 = vadd.f32 %v4663, %v4967
    %v5039 = vadd.f32 %v4664, %v4970
    %v5040 = vadd.f32 %v4665, %v4973
    %v5041 = vadd.f32 %v4666, %v4976
    %v5042 = vadd.f32 %v4667, %v4979
    %v5043 = vadd.f32 %v4668, %v4982
    %v5044 = vld [vmem:[#allocation2 + $0x38] sm:$0xff]
    %v5045 = vld [vmem:[#allocation2 + $0x40] sm:$0xff]
    %v5046 = vld [vmem:[#allocation2 + $0x48] sm:$0xff]
    %v5047 = vld [vmem:[#allocation2 + $0x50] sm:$0xff]
    %v5048 = vld [vmem:[#allocation2 + $0x58] sm:$0xff]
    %v5049 = vld [vmem:[#allocation2 + $0x60] sm:$0xff]
    %v5050 = vld [vmem:[#allocation2 + $0x68] sm:$0xff]
    %v5051 = vld [vmem:[#allocation2 + $0x70] sm:$0xff]
    %v5052 = vld [vmem:[#allocation2 + $0x78] sm:$0xff]
    %v5053 = vld [vmem:[#allocation2 + $0x80] sm:$0xff]
    %v5054 = vld [vmem:[#allocation2 + $0x88] sm:$0xff]
    %v5055 = vld [vmem:[#allocation2 + $0x90] sm:$0xff]
    %v5056 = vld [vmem:[#allocation2 + $0x98] sm:$0xff]
    %v5057 = vld [vmem:[#allocation2 + $0xa0] sm:$0xff]
    %v5058 = vld [vmem:[#allocation2 + $0xa8] sm:$0xff]
    %v5059 = vld [vmem:[#allocation2 + $0xb0] sm:$0xff]
    %v5060 = vld [vmem:[#allocation2 + $0xb8] sm:$0xff]
    %v5061 = vld [vmem:[#allocation2 + $0xc0] sm:$0xff]
    %v5062 = vld [vmem:[#allocation2 + $0xc8] sm:$0xff]
    %v5063 = vld [vmem:[#allocation2 + $0xd0] sm:$0xff]
    %v5064 = vld [vmem:[#allocation2 + $0xd8] sm:$0xff]
    %v5065 = vld [vmem:[#allocation2 + $0xe0] sm:$0xff]
    %v5066 = vld [vmem:[#allocation2 + $0xe8] sm:$0xff]
    %v5067 = vld [vmem:[#allocation2 + $0xf0] sm:$0xff]
    %v5068 = vld [vmem:[#allocation2 + $0xf8] sm:$0xff]
    %v5069 = vld [vmem:[#allocation2 + $0x100] sm:$0xff]
    %v5070 = vld [vmem:[#allocation2 + $0x108] sm:$0xff]
    %v5071 = vld [vmem:[#allocation2 + $0x110] sm:$0xff]
    %v5072 = vld [vmem:[#allocation2 + $0x118] sm:$0xff]
    %v5073 = vld [vmem:[#allocation2 + $0x120] sm:$0xff]
    %v5074 = vld [vmem:[#allocation2 + $0x128] sm:$0xff]
    %v5075 = vld [vmem:[#allocation2 + $0x130] sm:$0xff]
    %v5076 = vld [vmem:[#allocation2 + $0x138] sm:$0xff]
    %v5077 = vld [vmem:[#allocation2 + $0x140] sm:$0xff]
    %v5078 = vld [vmem:[#allocation2 + $0x148] sm:$0xff]
    %v5079 = vld [vmem:[#allocation2 + $0x150] sm:$0xff]
    %v5080 = vld [vmem:[#allocation2 + $0x158] sm:$0xff]
    %v5081 = vld [vmem:[#allocation2 + $0x160] sm:$0xff]
    %v5082 = vld [vmem:[#allocation2 + $0x168] sm:$0xff]
    %v5083 = vld [vmem:[#allocation2 + $0x170] sm:$0xff]
    %v5084 = vld [vmem:[#allocation2 + $0x178] sm:$0xff]
    %v5085 = vld [vmem:[#allocation2 + $0x180] sm:$0xff]
    %v5086 = vld [vmem:[#allocation2 + $0x188] sm:$0xff]
    %v5087 = vld [vmem:[#allocation2 + $0x190] sm:$0xff]
    %v5088 = vld [vmem:[#allocation2 + $0x198] sm:$0xff]
    %v5089 = vld [vmem:[#allocation2 + $0x1a0] sm:$0xff]
    %v5090 = vld [vmem:[#allocation2 + $0x1a8] sm:$0xff]
    %v5091 = vld [vmem:[#allocation2 + $0x1b0] sm:$0xff]
    %v5092 = vld [vmem:[#allocation2 + $0x1b8] sm:$0xff]
    %v5093 = vld [vmem:[%s3 + $0x3c] sm:$0x3f]
    %v5095 = vsel %vm1254, %v5044, 0
    %v5098 = vsel %vm1254, %v5045, 0
    %v5101 = vsel %vm1254, %v5046, 0
    %v5104 = vsel %vm1254, %v5047, 0
    %v5107 = vsel %vm1254, %v5048, 0
    %v5110 = vsel %vm1254, %v5049, 0
    %v5113 = vsel %vm1254, %v5050, 0
    %v5116 = vsel %vm1254, %v5051, 0
    %v5119 = vsel %vm1254, %v5052, 0
    %v5122 = vsel %vm1254, %v5053, 0
    %v5125 = vsel %vm1254, %v5054, 0
    %v5128 = vsel %vm1254, %v5055, 0
    %v5131 = vsel %vm1254, %v5056, 0
    %v5134 = vsel %vm1254, %v5057, 0
    %v5137 = vsel %vm1254, %v5058, 0
    %v5140 = vsel %vm1254, %v5059, 0
    %v5143 = vsel %vm1254, %v5060, 0
    %v5146 = vsel %vm1254, %v5061, 0
    %v5149 = vsel %vm1254, %v5062, 0
    %v5152 = vsel %vm1254, %v5063, 0
    %v5155 = vsel %vm1254, %v5064, 0
    %v5158 = vsel %vm1254, %v5065, 0
    %v5161 = vsel %vm1254, %v5066, 0
    %v5164 = vsel %vm1254, %v5067, 0
    %v5167 = vsel %vm1254, %v5068, 0
    %v5170 = vsel %vm1254, %v5069, 0
    %v5173 = vsel %vm1254, %v5070, 0
    %v5176 = vsel %vm1254, %v5071, 0
    %v5179 = vsel %vm1254, %v5072, 0
    %v5182 = vsel %vm1254, %v5073, 0
    %v5185 = vsel %vm1254, %v5074, 0
    %v5188 = vsel %vm1254, %v5075, 0
    %v5191 = vsel %vm1254, %v5076, 0
    %v5194 = vsel %vm1254, %v5077, 0
    %v5197 = vsel %vm1254, %v5078, 0
    %v5200 = vsel %vm1254, %v5079, 0
    %v5203 = vsel %vm1254, %v5080, 0
    %v5206 = vsel %vm1254, %v5081, 0
    %v5209 = vsel %vm1254, %v5082, 0
    %v5212 = vsel %vm1254, %v5083, 0
    %v5215 = vsel %vm1254, %v5084, 0
    %v5218 = vsel %vm1254, %v5085, 0
    %v5221 = vsel %vm1254, %v5086, 0
    %v5224 = vsel %vm1254, %v5087, 0
    %v5227 = vsel %vm1254, %v5088, 0
    %v5230 = vsel %vm1254, %v5089, 0
    %v5233 = vsel %vm1254, %v5090, 0
    %v5236 = vsel %vm1254, %v5091, 0
    %v5239 = vsel %vm1254, %v5092, 0
    %v5242 = vsel %vm1520, %v5093, 0
    %5244 = vmatpush.msra.mxu0 0.0
    %5245 = vmatpush.msra.mxu0 0.0
    %5246 = vmatpush.msra.mxu0 0.0
    %5247 = vmatpush.msra.mxu0 0.0
    %5248 = vmatpush.msra.mxu0 0.0
    %5249 = vmatpush.msra.mxu0 0.0
    %5250 = vmatpush.msra.mxu0 0.0
    %5251 = vmatpush.msra.mxu0 0.0
    %5252 = vmatpush.msra.mxu0 0.0
    %5253 = vmatpush.msra.mxu0 0.0
    %5254 = vmatpush.msra.mxu0 0.0
    %5255 = vmatpush.msra.mxu0 0.0
    %5256 = vmatpush.msra.mxu0 0.0
    %5257 = vmatpush.msra.mxu0 0.0
    %5258 = vmatpush.msra.mxu0 0.0
    %5259 = vmatpush.msra.mxu0 %v5242
    %5260 = vmatmul.f32.gmra.mxu0 %v5095
    %v5261 = vpop.f32.mrf.mxu0
    %v5262 = vadd.f32 0.0, %v5261
    %5263 = vmatmul.f32.gmra.mxu0 %v5098
    %v5264 = vpop.f32.mrf.mxu0
    %v5265 = vadd.f32 0.0, %v5264
    %5266 = vmatmul.f32.gmra.mxu0 %v5101
    %v5267 = vpop.f32.mrf.mxu0
    %v5268 = vadd.f32 0.0, %v5267
    %5269 = vmatmul.f32.gmra.mxu0 %v5104
    %v5270 = vpop.f32.mrf.mxu0
    %v5271 = vadd.f32 0.0, %v5270
    %5272 = vmatmul.f32.gmra.mxu0 %v5107
    %v5273 = vpop.f32.mrf.mxu0
    %v5274 = vadd.f32 0.0, %v5273
    %5275 = vmatmul.f32.gmra.mxu0 %v5110
    %v5276 = vpop.f32.mrf.mxu0
    %v5277 = vadd.f32 0.0, %v5276
    %5278 = vmatmul.f32.gmra.mxu0 %v5113
    %v5279 = vpop.f32.mrf.mxu0
    %5280 = vmatmul.f32.gmra.mxu0 %v5116
    %v5281 = vpop.f32.mrf.mxu0
    %v5282 = vadd.f32 0.0, %v5281
    %5283 = vmatmul.f32.gmra.mxu0 %v5119
    %v5284 = vpop.f32.mrf.mxu0
    %v5285 = vadd.f32 0.0, %v5284
    %5286 = vmatmul.f32.gmra.mxu0 %v5122
    %v5287 = vpop.f32.mrf.mxu0
    %v5288 = vadd.f32 0.0, %v5287
    %5289 = vmatmul.f32.gmra.mxu0 %v5125
    %v5290 = vpop.f32.mrf.mxu0
    %v5291 = vadd.f32 0.0, %v5290
    %5292 = vmatmul.f32.gmra.mxu0 %v5128
    %v5293 = vpop.f32.mrf.mxu0
    %v5294 = vadd.f32 0.0, %v5293
    %5295 = vmatmul.f32.gmra.mxu0 %v5131
    %v5296 = vpop.f32.mrf.mxu0
    %v5297 = vadd.f32 0.0, %v5296
    %5298 = vmatmul.f32.gmra.mxu0 %v5134
    %v5299 = vpop.f32.mrf.mxu0
    %5300 = vmatmul.f32.gmra.mxu0 %v5137
    %v5301 = vpop.f32.mrf.mxu0
    %v5302 = vadd.f32 0.0, %v5301
    %5303 = vmatmul.f32.gmra.mxu0 %v5140
    %v5304 = vpop.f32.mrf.mxu0
    %v5305 = vadd.f32 0.0, %v5304
    %5306 = vmatmul.f32.gmra.mxu0 %v5143
    %v5307 = vpop.f32.mrf.mxu0
    %v5308 = vadd.f32 0.0, %v5307
    %5309 = vmatmul.f32.gmra.mxu0 %v5146
    %v5310 = vpop.f32.mrf.mxu0
    %v5311 = vadd.f32 0.0, %v5310
    %5312 = vmatmul.f32.gmra.mxu0 %v5149
    %v5313 = vpop.f32.mrf.mxu0
    %v5314 = vadd.f32 0.0, %v5313
    %5315 = vmatmul.f32.gmra.mxu0 %v5152
    %v5316 = vpop.f32.mrf.mxu0
    %v5317 = vadd.f32 0.0, %v5316
    %5318 = vmatmul.f32.gmra.mxu0 %v5155
    %v5319 = vpop.f32.mrf.mxu0
    %5320 = vmatmul.f32.gmra.mxu0 %v5158
    %v5321 = vpop.f32.mrf.mxu0
    %v5322 = vadd.f32 0.0, %v5321
    %5323 = vmatmul.f32.gmra.mxu0 %v5161
    %v5324 = vpop.f32.mrf.mxu0
    %v5325 = vadd.f32 0.0, %v5324
    %5326 = vmatmul.f32.gmra.mxu0 %v5164
    %v5327 = vpop.f32.mrf.mxu0
    %v5328 = vadd.f32 0.0, %v5327
    %5329 = vmatmul.f32.gmra.mxu0 %v5167
    %v5330 = vpop.f32.mrf.mxu0
    %v5331 = vadd.f32 0.0, %v5330
    %5332 = vmatmul.f32.gmra.mxu0 %v5170
    %v5333 = vpop.f32.mrf.mxu0
    %v5334 = vadd.f32 0.0, %v5333
    %5335 = vmatmul.f32.gmra.mxu0 %v5173
    %v5336 = vpop.f32.mrf.mxu0
    %v5337 = vadd.f32 0.0, %v5336
    %5338 = vmatmul.f32.gmra.mxu0 %v5176
    %v5339 = vpop.f32.mrf.mxu0
    %5340 = vmatmul.f32.gmra.mxu0 %v5179
    %v5341 = vpop.f32.mrf.mxu0
    %v5342 = vadd.f32 0.0, %v5341
    %5343 = vmatmul.f32.gmra.mxu0 %v5182
    %v5344 = vpop.f32.mrf.mxu0
    %v5345 = vadd.f32 0.0, %v5344
    %5346 = vmatmul.f32.gmra.mxu0 %v5185
    %v5347 = vpop.f32.mrf.mxu0
    %v5348 = vadd.f32 0.0, %v5347
    %5349 = vmatmul.f32.gmra.mxu0 %v5188
    %v5350 = vpop.f32.mrf.mxu0
    %v5351 = vadd.f32 0.0, %v5350
    %5352 = vmatmul.f32.gmra.mxu0 %v5191
    %v5353 = vpop.f32.mrf.mxu0
    %v5354 = vadd.f32 0.0, %v5353
    %5355 = vmatmul.f32.gmra.mxu0 %v5194
    %v5356 = vpop.f32.mrf.mxu0
    %v5357 = vadd.f32 0.0, %v5356
    %5358 = vmatmul.f32.gmra.mxu0 %v5197
    %v5359 = vpop.f32.mrf.mxu0
    %5360 = vmatmul.f32.gmra.mxu0 %v5200
    %v5361 = vpop.f32.mrf.mxu0
    %5362 = vmatmul.f32.gmra.mxu0 %v5203
    %v5363 = vpop.f32.mrf.mxu0
    %5364 = vmatmul.f32.gmra.mxu0 %v5206
    %v5365 = vpop.f32.mrf.mxu0
    %5366 = vmatmul.f32.gmra.mxu0 %v5209
    %v5367 = vpop.f32.mrf.mxu0
    %5368 = vmatmul.f32.gmra.mxu0 %v5212
    %v5369 = vpop.f32.mrf.mxu0
    %5370 = vmatmul.f32.gmra.mxu0 %v5215
    %v5371 = vpop.f32.mrf.mxu0
    %5372 = vmatmul.f32.gmra.mxu0 %v5218
    %v5373 = vpop.f32.mrf.mxu0
    %5374 = vmatmul.f32.gmra.mxu0 %v5221
    %v5375 = vpop.f32.mrf.mxu0
    %5376 = vmatmul.f32.gmra.mxu0 %v5224
    %v5377 = vpop.f32.mrf.mxu0
    %5378 = vmatmul.f32.gmra.mxu0 %v5227
    %v5379 = vpop.f32.mrf.mxu0
    %5380 = vmatmul.f32.gmra.mxu0 %v5230
    %v5381 = vpop.f32.mrf.mxu0
    %5382 = vmatmul.f32.gmra.mxu0 %v5233
    %v5383 = vpop.f32.mrf.mxu0
    %5384 = vmatmul.f32.gmra.mxu0 %v5236
    %v5385 = vpop.f32.mrf.mxu0
    %5386 = vmatmul.f32.gmra.mxu0 %v5239
    %v5387 = vpop.f32.mrf.mxu0
    %5388 = vdwg.mxu0
    %v5389 = vadd.f32 %v5014, %v5262
    %v5390 = vadd.f32 %v5015, %v5265
    %v5391 = vadd.f32 %v5016, %v5268
    %v5392 = vadd.f32 %v5017, %v5271
    %v5393 = vadd.f32 %v5018, %v5274
    %v5394 = vadd.f32 %v5019, %v5277
    %v5395 = vadd.f32 %v5020, %v5282
    %v5396 = vadd.f32 %v5021, %v5285
    %v5397 = vadd.f32 %v5022, %v5288
    %v5398 = vadd.f32 %v5023, %v5291
    %v5399 = vadd.f32 %v5024, %v5294
    %v5400 = vadd.f32 %v5025, %v5297
    %v5401 = vadd.f32 %v5026, %v5302
    %v5402 = vadd.f32 %v5027, %v5305
    %v5403 = vadd.f32 %v5028, %v5308
    %v5404 = vadd.f32 %v5029, %v5311
    %v5405 = vadd.f32 %v5030, %v5314
    %v5406 = vadd.f32 %v5031, %v5317
    %v5407 = vadd.f32 %v5032, %v5322
    %v5408 = vadd.f32 %v5033, %v5325
    %v5409 = vadd.f32 %v5034, %v5328
    %v5410 = vadd.f32 %v5035, %v5331
    %v5411 = vadd.f32 %v5036, %v5334
    %v5412 = vadd.f32 %v5037, %v5337
    %v5413 = vadd.f32 %v5038, %v5342
    %v5414 = vadd.f32 %v5039, %v5345
    %v5415 = vadd.f32 %v5040, %v5348
    %v5416 = vadd.f32 %v5041, %v5351
    %v5417 = vadd.f32 %v5042, %v5354
    %v5418 = vadd.f32 %v5043, %v5357
    %v5419 = vld [vmem:[#allocation2 + $0x3a] sm:$0xff]
    %v5420 = vld [vmem:[#allocation2 + $0x42] sm:$0xff]
    %v5421 = vld [vmem:[#allocation2 + $0x4a] sm:$0xff]
    %v5422 = vld [vmem:[#allocation2 + $0x52] sm:$0xff]
    %v5423 = vld [vmem:[#allocation2 + $0x5a] sm:$0xff]
    %v5424 = vld [vmem:[#allocation2 + $0x62] sm:$0xff]
    %v5425 = vld [vmem:[#allocation2 + $0x6a] sm:$0xff]
    %v5426 = vld [vmem:[#allocation2 + $0x72] sm:$0xff]
    %v5427 = vld [vmem:[#allocation2 + $0x7a] sm:$0xff]
    %v5428 = vld [vmem:[#allocation2 + $0x82] sm:$0xff]
    %v5429 = vld [vmem:[#allocation2 + $0x8a] sm:$0xff]
    %v5430 = vld [vmem:[#allocation2 + $0x92] sm:$0xff]
    %v5431 = vld [vmem:[#allocation2 + $0x9a] sm:$0xff]
    %v5432 = vld [vmem:[#allocation2 + $0xa2] sm:$0xff]
    %v5433 = vld [vmem:[#allocation2 + $0xaa] sm:$0xff]
    %v5434 = vld [vmem:[#allocation2 + $0xb2] sm:$0xff]
    %v5435 = vld [vmem:[#allocation2 + $0xba] sm:$0xff]
    %v5436 = vld [vmem:[#allocation2 + $0xc2] sm:$0xff]
    %v5437 = vld [vmem:[#allocation2 + $0xca] sm:$0xff]
    %v5438 = vld [vmem:[#allocation2 + $0xd2] sm:$0xff]
    %v5439 = vld [vmem:[#allocation2 + $0xda] sm:$0xff]
    %v5440 = vld [vmem:[#allocation2 + $0xe2] sm:$0xff]
    %v5441 = vld [vmem:[#allocation2 + $0xea] sm:$0xff]
    %v5442 = vld [vmem:[#allocation2 + $0xf2] sm:$0xff]
    %v5443 = vld [vmem:[#allocation2 + $0xfa] sm:$0xff]
    %v5444 = vld [vmem:[#allocation2 + $0x102] sm:$0xff]
    %v5445 = vld [vmem:[#allocation2 + $0x10a] sm:$0xff]
    %v5446 = vld [vmem:[#allocation2 + $0x112] sm:$0xff]
    %v5447 = vld [vmem:[#allocation2 + $0x11a] sm:$0xff]
    %v5448 = vld [vmem:[#allocation2 + $0x122] sm:$0xff]
    %v5449 = vld [vmem:[#allocation2 + $0x12a] sm:$0xff]
    %v5450 = vld [vmem:[#allocation2 + $0x132] sm:$0xff]
    %v5451 = vld [vmem:[#allocation2 + $0x13a] sm:$0xff]
    %v5452 = vld [vmem:[#allocation2 + $0x142] sm:$0xff]
    %v5453 = vld [vmem:[#allocation2 + $0x14a] sm:$0xff]
    %v5454 = vld [vmem:[#allocation2 + $0x152] sm:$0xff]
    %v5455 = vld [vmem:[#allocation2 + $0x15a] sm:$0xff]
    %v5456 = vld [vmem:[#allocation2 + $0x162] sm:$0xff]
    %v5457 = vld [vmem:[#allocation2 + $0x16a] sm:$0xff]
    %v5458 = vld [vmem:[#allocation2 + $0x172] sm:$0xff]
    %v5459 = vld [vmem:[#allocation2 + $0x17a] sm:$0xff]
    %v5460 = vld [vmem:[#allocation2 + $0x182] sm:$0xff]
    %v5461 = vld [vmem:[#allocation2 + $0x18a] sm:$0xff]
    %v5462 = vld [vmem:[#allocation2 + $0x192] sm:$0xff]
    %v5463 = vld [vmem:[#allocation2 + $0x19a] sm:$0xff]
    %v5464 = vld [vmem:[#allocation2 + $0x1a2] sm:$0xff]
    %v5465 = vld [vmem:[#allocation2 + $0x1aa] sm:$0xff]
    %v5466 = vld [vmem:[#allocation2 + $0x1b2] sm:$0xff]
    %v5467 = vld [vmem:[#allocation2 + $0x1ba] sm:$0xff]
    %v5468 = vld [vmem:[%s3 + $0x42] sm:$0x3f]
    %v5470 = vsel %vm1254, %v5419, 0
    %v5473 = vsel %vm1254, %v5420, 0
    %v5476 = vsel %vm1254, %v5421, 0
    %v5479 = vsel %vm1254, %v5422, 0
    %v5482 = vsel %vm1254, %v5423, 0
    %v5485 = vsel %vm1254, %v5424, 0
    %v5488 = vsel %vm1254, %v5425, 0
    %v5491 = vsel %vm1254, %v5426, 0
    %v5494 = vsel %vm1254, %v5427, 0
    %v5497 = vsel %vm1254, %v5428, 0
    %v5500 = vsel %vm1254, %v5429, 0
    %v5503 = vsel %vm1254, %v5430, 0
    %v5506 = vsel %vm1254, %v5431, 0
    %v5509 = vsel %vm1254, %v5432, 0
    %v5512 = vsel %vm1254, %v5433, 0
    %v5515 = vsel %vm1254, %v5434, 0
    %v5518 = vsel %vm1254, %v5435, 0
    %v5521 = vsel %vm1254, %v5436, 0
    %v5524 = vsel %vm1254, %v5437, 0
    %v5527 = vsel %vm1254, %v5438, 0
    %v5530 = vsel %vm1254, %v5439, 0
    %v5533 = vsel %vm1254, %v5440, 0
    %v5536 = vsel %vm1254, %v5441, 0
    %v5539 = vsel %vm1254, %v5442, 0
    %v5542 = vsel %vm1254, %v5443, 0
    %v5545 = vsel %vm1254, %v5444, 0
    %v5548 = vsel %vm1254, %v5445, 0
    %v5551 = vsel %vm1254, %v5446, 0
    %v5554 = vsel %vm1254, %v5447, 0
    %v5557 = vsel %vm1254, %v5448, 0
    %v5560 = vsel %vm1254, %v5449, 0
    %v5563 = vsel %vm1254, %v5450, 0
    %v5566 = vsel %vm1254, %v5451, 0
    %v5569 = vsel %vm1254, %v5452, 0
    %v5572 = vsel %vm1254, %v5453, 0
    %v5575 = vsel %vm1254, %v5454, 0
    %v5578 = vsel %vm1254, %v5455, 0
    %v5581 = vsel %vm1254, %v5456, 0
    %v5584 = vsel %vm1254, %v5457, 0
    %v5587 = vsel %vm1254, %v5458, 0
    %v5590 = vsel %vm1254, %v5459, 0
    %v5593 = vsel %vm1254, %v5460, 0
    %v5596 = vsel %vm1254, %v5461, 0
    %v5599 = vsel %vm1254, %v5462, 0
    %v5602 = vsel %vm1254, %v5463, 0
    %v5605 = vsel %vm1254, %v5464, 0
    %v5608 = vsel %vm1254, %v5465, 0
    %v5611 = vsel %vm1254, %v5466, 0
    %v5614 = vsel %vm1254, %v5467, 0
    %v5617 = vsel %vm1520, %v5468, 0
    %5619 = vmatpush.msra.mxu0 0.0
    %5620 = vmatpush.msra.mxu0 0.0
    %5621 = vmatpush.msra.mxu0 0.0
    %5622 = vmatpush.msra.mxu0 0.0
    %5623 = vmatpush.msra.mxu0 0.0
    %5624 = vmatpush.msra.mxu0 0.0
    %5625 = vmatpush.msra.mxu0 0.0
    %5626 = vmatpush.msra.mxu0 0.0
    %5627 = vmatpush.msra.mxu0 0.0
    %5628 = vmatpush.msra.mxu0 0.0
    %5629 = vmatpush.msra.mxu0 0.0
    %5630 = vmatpush.msra.mxu0 0.0
    %5631 = vmatpush.msra.mxu0 0.0
    %5632 = vmatpush.msra.mxu0 0.0
    %5633 = vmatpush.msra.mxu0 0.0
    %5634 = vmatpush.msra.mxu0 %v5617
    %5635 = vmatmul.f32.gmra.mxu0 %v5470
    %v5636 = vpop.f32.mrf.mxu0
    %v5637 = vadd.f32 0.0, %v5636
    %5638 = vmatmul.f32.gmra.mxu0 %v5473
    %v5639 = vpop.f32.mrf.mxu0
    %v5640 = vadd.f32 0.0, %v5639
    %5641 = vmatmul.f32.gmra.mxu0 %v5476
    %v5642 = vpop.f32.mrf.mxu0
    %v5643 = vadd.f32 0.0, %v5642
    %5644 = vmatmul.f32.gmra.mxu0 %v5479
    %v5645 = vpop.f32.mrf.mxu0
    %v5646 = vadd.f32 0.0, %v5645
    %5647 = vmatmul.f32.gmra.mxu0 %v5482
    %v5648 = vpop.f32.mrf.mxu0
    %v5649 = vadd.f32 0.0, %v5648
    %5650 = vmatmul.f32.gmra.mxu0 %v5485
    %v5651 = vpop.f32.mrf.mxu0
    %v5652 = vadd.f32 0.0, %v5651
    %5653 = vmatmul.f32.gmra.mxu0 %v5488
    %v5654 = vpop.f32.mrf.mxu0
    %5655 = vmatmul.f32.gmra.mxu0 %v5491
    %v5656 = vpop.f32.mrf.mxu0
    %v5657 = vadd.f32 0.0, %v5656
    %5658 = vmatmul.f32.gmra.mxu0 %v5494
    %v5659 = vpop.f32.mrf.mxu0
    %v5660 = vadd.f32 0.0, %v5659
    %5661 = vmatmul.f32.gmra.mxu0 %v5497
    %v5662 = vpop.f32.mrf.mxu0
    %v5663 = vadd.f32 0.0, %v5662
    %5664 = vmatmul.f32.gmra.mxu0 %v5500
    %v5665 = vpop.f32.mrf.mxu0
    %v5666 = vadd.f32 0.0, %v5665
    %5667 = vmatmul.f32.gmra.mxu0 %v5503
    %v5668 = vpop.f32.mrf.mxu0
    %v5669 = vadd.f32 0.0, %v5668
    %5670 = vmatmul.f32.gmra.mxu0 %v5506
    %v5671 = vpop.f32.mrf.mxu0
    %v5672 = vadd.f32 0.0, %v5671
    %5673 = vmatmul.f32.gmra.mxu0 %v5509
    %v5674 = vpop.f32.mrf.mxu0
    %5675 = vmatmul.f32.gmra.mxu0 %v5512
    %v5676 = vpop.f32.mrf.mxu0
    %v5677 = vadd.f32 0.0, %v5676
    %5678 = vmatmul.f32.gmra.mxu0 %v5515
    %v5679 = vpop.f32.mrf.mxu0
    %v5680 = vadd.f32 0.0, %v5679
    %5681 = vmatmul.f32.gmra.mxu0 %v5518
    %v5682 = vpop.f32.mrf.mxu0
    %v5683 = vadd.f32 0.0, %v5682
    %5684 = vmatmul.f32.gmra.mxu0 %v5521
    %v5685 = vpop.f32.mrf.mxu0
    %v5686 = vadd.f32 0.0, %v5685
    %5687 = vmatmul.f32.gmra.mxu0 %v5524
    %v5688 = vpop.f32.mrf.mxu0
    %v5689 = vadd.f32 0.0, %v5688
    %5690 = vmatmul.f32.gmra.mxu0 %v5527
    %v5691 = vpop.f32.mrf.mxu0
    %v5692 = vadd.f32 0.0, %v5691
    %5693 = vmatmul.f32.gmra.mxu0 %v5530
    %v5694 = vpop.f32.mrf.mxu0
    %5695 = vmatmul.f32.gmra.mxu0 %v5533
    %v5696 = vpop.f32.mrf.mxu0
    %v5697 = vadd.f32 0.0, %v5696
    %5698 = vmatmul.f32.gmra.mxu0 %v5536
    %v5699 = vpop.f32.mrf.mxu0
    %v5700 = vadd.f32 0.0, %v5699
    %5701 = vmatmul.f32.gmra.mxu0 %v5539
    %v5702 = vpop.f32.mrf.mxu0
    %v5703 = vadd.f32 0.0, %v5702
    %5704 = vmatmul.f32.gmra.mxu0 %v5542
    %v5705 = vpop.f32.mrf.mxu0
    %v5706 = vadd.f32 0.0, %v5705
    %5707 = vmatmul.f32.gmra.mxu0 %v5545
    %v5708 = vpop.f32.mrf.mxu0
    %v5709 = vadd.f32 0.0, %v5708
    %5710 = vmatmul.f32.gmra.mxu0 %v5548
    %v5711 = vpop.f32.mrf.mxu0
    %v5712 = vadd.f32 0.0, %v5711
    %5713 = vmatmul.f32.gmra.mxu0 %v5551
    %v5714 = vpop.f32.mrf.mxu0
    %5715 = vmatmul.f32.gmra.mxu0 %v5554
    %v5716 = vpop.f32.mrf.mxu0
    %v5717 = vadd.f32 0.0, %v5716
    %5718 = vmatmul.f32.gmra.mxu0 %v5557
    %v5719 = vpop.f32.mrf.mxu0
    %v5720 = vadd.f32 0.0, %v5719
    %5721 = vmatmul.f32.gmra.mxu0 %v5560
    %v5722 = vpop.f32.mrf.mxu0
    %v5723 = vadd.f32 0.0, %v5722
    %5724 = vmatmul.f32.gmra.mxu0 %v5563
    %v5725 = vpop.f32.mrf.mxu0
    %v5726 = vadd.f32 0.0, %v5725
    %5727 = vmatmul.f32.gmra.mxu0 %v5566
    %v5728 = vpop.f32.mrf.mxu0
    %v5729 = vadd.f32 0.0, %v5728
    %5730 = vmatmul.f32.gmra.mxu0 %v5569
    %v5731 = vpop.f32.mrf.mxu0
    %v5732 = vadd.f32 0.0, %v5731
    %5733 = vmatmul.f32.gmra.mxu0 %v5572
    %v5734 = vpop.f32.mrf.mxu0
    %5735 = vmatmul.f32.gmra.mxu0 %v5575
    %v5736 = vpop.f32.mrf.mxu0
    %5737 = vmatmul.f32.gmra.mxu0 %v5578
    %v5738 = vpop.f32.mrf.mxu0
    %5739 = vmatmul.f32.gmra.mxu0 %v5581
    %v5740 = vpop.f32.mrf.mxu0
    %5741 = vmatmul.f32.gmra.mxu0 %v5584
    %v5742 = vpop.f32.mrf.mxu0
    %5743 = vmatmul.f32.gmra.mxu0 %v5587
    %v5744 = vpop.f32.mrf.mxu0
    %5745 = vmatmul.f32.gmra.mxu0 %v5590
    %v5746 = vpop.f32.mrf.mxu0
    %5747 = vmatmul.f32.gmra.mxu0 %v5593
    %v5748 = vpop.f32.mrf.mxu0
    %5749 = vmatmul.f32.gmra.mxu0 %v5596
    %v5750 = vpop.f32.mrf.mxu0
    %5751 = vmatmul.f32.gmra.mxu0 %v5599
    %v5752 = vpop.f32.mrf.mxu0
    %5753 = vmatmul.f32.gmra.mxu0 %v5602
    %v5754 = vpop.f32.mrf.mxu0
    %5755 = vmatmul.f32.gmra.mxu0 %v5605
    %v5756 = vpop.f32.mrf.mxu0
    %5757 = vmatmul.f32.gmra.mxu0 %v5608
    %v5758 = vpop.f32.mrf.mxu0
    %5759 = vmatmul.f32.gmra.mxu0 %v5611
    %v5760 = vpop.f32.mrf.mxu0
    %5761 = vmatmul.f32.gmra.mxu0 %v5614
    %v5762 = vpop.f32.mrf.mxu0
    %5763 = vdwg.mxu0
    %v5764 = vadd.f32 %v5389, %v5637
    %v5765 = vadd.f32 %v5390, %v5640
    %v5766 = vadd.f32 %v5391, %v5643
    %v5767 = vadd.f32 %v5392, %v5646
    %v5768 = vadd.f32 %v5393, %v5649
    %v5769 = vadd.f32 %v5394, %v5652
    %v5770 = vadd.f32 %v5395, %v5657
    %v5771 = vadd.f32 %v5396, %v5660
    %v5772 = vadd.f32 %v5397, %v5663
    %v5773 = vadd.f32 %v5398, %v5666
    %v5774 = vadd.f32 %v5399, %v5669
    %v5775 = vadd.f32 %v5400, %v5672
    %v5776 = vadd.f32 %v5401, %v5677
    %v5777 = vadd.f32 %v5402, %v5680
    %v5778 = vadd.f32 %v5403, %v5683
    %v5779 = vadd.f32 %v5404, %v5686
    %v5780 = vadd.f32 %v5405, %v5689
    %v5781 = vadd.f32 %v5406, %v5692
    %v5782 = vadd.f32 %v5407, %v5697
    %v5783 = vadd.f32 %v5408, %v5700
    %v5784 = vadd.f32 %v5409, %v5703
    %v5785 = vadd.f32 %v5410, %v5706
    %v5786 = vadd.f32 %v5411, %v5709
    %v5787 = vadd.f32 %v5412, %v5712
    %v5788 = vadd.f32 %v5413, %v5717
    %v5789 = vadd.f32 %v5414, %v5720
    %v5790 = vadd.f32 %v5415, %v5723
    %v5791 = vadd.f32 %v5416, %v5726
    %v5792 = vadd.f32 %v5417, %v5729
    %v5793 = vadd.f32 %v5418, %v5732
    %v5794 = vld [vmem:[#allocation2 + $0x3c] sm:$0xff]
    %v5795 = vld [vmem:[#allocation2 + $0x44] sm:$0xff]
    %v5796 = vld [vmem:[#allocation2 + $0x4c] sm:$0xff]
    %v5797 = vld [vmem:[#allocation2 + $0x54] sm:$0xff]
    %v5798 = vld [vmem:[#allocation2 + $0x5c] sm:$0xff]
    %v5799 = vld [vmem:[#allocation2 + $0x64] sm:$0xff]
    %v5800 = vld [vmem:[#allocation2 + $0x6c] sm:$0xff]
    %v5801 = vld [vmem:[#allocation2 + $0x74] sm:$0xff]
    %v5802 = vld [vmem:[#allocation2 + $0x7c] sm:$0xff]
    %v5803 = vld [vmem:[#allocation2 + $0x84] sm:$0xff]
    %v5804 = vld [vmem:[#allocation2 + $0x8c] sm:$0xff]
    %v5805 = vld [vmem:[#allocation2 + $0x94] sm:$0xff]
    %v5806 = vld [vmem:[#allocation2 + $0x9c] sm:$0xff]
    %v5807 = vld [vmem:[#allocation2 + $0xa4] sm:$0xff]
    %v5808 = vld [vmem:[#allocation2 + $0xac] sm:$0xff]
    %v5809 = vld [vmem:[#allocation2 + $0xb4] sm:$0xff]
    %v5810 = vld [vmem:[#allocation2 + $0xbc] sm:$0xff]
    %v5811 = vld [vmem:[#allocation2 + $0xc4] sm:$0xff]
    %v5812 = vld [vmem:[#allocation2 + $0xcc] sm:$0xff]
    %v5813 = vld [vmem:[#allocation2 + $0xd4] sm:$0xff]
    %v5814 = vld [vmem:[#allocation2 + $0xdc] sm:$0xff]
    %v5815 = vld [vmem:[#allocation2 + $0xe4] sm:$0xff]
    %v5816 = vld [vmem:[#allocation2 + $0xec] sm:$0xff]
    %v5817 = vld [vmem:[#allocation2 + $0xf4] sm:$0xff]
    %v5818 = vld [vmem:[#allocation2 + $0xfc] sm:$0xff]
    %v5819 = vld [vmem:[#allocation2 + $0x104] sm:$0xff]
    %v5820 = vld [vmem:[#allocation2 + $0x10c] sm:$0xff]
    %v5821 = vld [vmem:[#allocation2 + $0x114] sm:$0xff]
    %v5822 = vld [vmem:[#allocation2 + $0x11c] sm:$0xff]
    %v5823 = vld [vmem:[#allocation2 + $0x124] sm:$0xff]
    %v5824 = vld [vmem:[#allocation2 + $0x12c] sm:$0xff]
    %v5825 = vld [vmem:[#allocation2 + $0x134] sm:$0xff]
    %v5826 = vld [vmem:[#allocation2 + $0x13c] sm:$0xff]
    %v5827 = vld [vmem:[#allocation2 + $0x144] sm:$0xff]
    %v5828 = vld [vmem:[#allocation2 + $0x14c] sm:$0xff]
    %v5829 = vld [vmem:[#allocation2 + $0x154] sm:$0xff]
    %v5830 = vld [vmem:[#allocation2 + $0x15c] sm:$0xff]
    %v5831 = vld [vmem:[#allocation2 + $0x164] sm:$0xff]
    %v5832 = vld [vmem:[#allocation2 + $0x16c] sm:$0xff]
    %v5833 = vld [vmem:[#allocation2 + $0x174] sm:$0xff]
    %v5834 = vld [vmem:[#allocation2 + $0x17c] sm:$0xff]
    %v5835 = vld [vmem:[#allocation2 + $0x184] sm:$0xff]
    %v5836 = vld [vmem:[#allocation2 + $0x18c] sm:$0xff]
    %v5837 = vld [vmem:[#allocation2 + $0x194] sm:$0xff]
    %v5838 = vld [vmem:[#allocation2 + $0x19c] sm:$0xff]
    %v5839 = vld [vmem:[#allocation2 + $0x1a4] sm:$0xff]
    %v5840 = vld [vmem:[#allocation2 + $0x1ac] sm:$0xff]
    %v5841 = vld [vmem:[#allocation2 + $0x1b4] sm:$0xff]
    %v5842 = vld [vmem:[#allocation2 + $0x1bc] sm:$0xff]
    %v5843 = vld [vmem:[%s3 + $0x48] sm:$0x3f]
    %v5845 = vsel %vm1254, %v5794, 0
    %v5848 = vsel %vm1254, %v5795, 0
    %v5851 = vsel %vm1254, %v5796, 0
    %v5854 = vsel %vm1254, %v5797, 0
    %v5857 = vsel %vm1254, %v5798, 0
    %v5860 = vsel %vm1254, %v5799, 0
    %v5863 = vsel %vm1254, %v5800, 0
    %v5866 = vsel %vm1254, %v5801, 0
    %v5869 = vsel %vm1254, %v5802, 0
    %v5872 = vsel %vm1254, %v5803, 0
    %v5875 = vsel %vm1254, %v5804, 0
    %v5878 = vsel %vm1254, %v5805, 0
    %v5881 = vsel %vm1254, %v5806, 0
    %v5884 = vsel %vm1254, %v5807, 0
    %v5887 = vsel %vm1254, %v5808, 0
    %v5890 = vsel %vm1254, %v5809, 0
    %v5893 = vsel %vm1254, %v5810, 0
    %v5896 = vsel %vm1254, %v5811, 0
    %v5899 = vsel %vm1254, %v5812, 0
    %v5902 = vsel %vm1254, %v5813, 0
    %v5905 = vsel %vm1254, %v5814, 0
    %v5908 = vsel %vm1254, %v5815, 0
    %v5911 = vsel %vm1254, %v5816, 0
    %v5914 = vsel %vm1254, %v5817, 0
    %v5917 = vsel %vm1254, %v5818, 0
    %v5920 = vsel %vm1254, %v5819, 0
    %v5923 = vsel %vm1254, %v5820, 0
    %v5926 = vsel %vm1254, %v5821, 0
    %v5929 = vsel %vm1254, %v5822, 0
    %v5932 = vsel %vm1254, %v5823, 0
    %v5935 = vsel %vm1254, %v5824, 0
    %v5938 = vsel %vm1254, %v5825, 0
    %v5941 = vsel %vm1254, %v5826, 0
    %v5944 = vsel %vm1254, %v5827, 0
    %v5947 = vsel %vm1254, %v5828, 0
    %v5950 = vsel %vm1254, %v5829, 0
    %v5953 = vsel %vm1254, %v5830, 0
    %v5956 = vsel %vm1254, %v5831, 0
    %v5959 = vsel %vm1254, %v5832, 0
    %v5962 = vsel %vm1254, %v5833, 0
    %v5965 = vsel %vm1254, %v5834, 0
    %v5968 = vsel %vm1254, %v5835, 0
    %v5971 = vsel %vm1254, %v5836, 0
    %v5974 = vsel %vm1254, %v5837, 0
    %v5977 = vsel %vm1254, %v5838, 0
    %v5980 = vsel %vm1254, %v5839, 0
    %v5983 = vsel %vm1254, %v5840, 0
    %v5986 = vsel %vm1254, %v5841, 0
    %v5989 = vsel %vm1254, %v5842, 0
    %v5992 = vsel %vm1520, %v5843, 0
    %5994 = vmatpush.msra.mxu0 0.0
    %5995 = vmatpush.msra.mxu0 0.0
    %5996 = vmatpush.msra.mxu0 0.0
    %5997 = vmatpush.msra.mxu0 0.0
    %5998 = vmatpush.msra.mxu0 0.0
    %5999 = vmatpush.msra.mxu0 0.0
    %6000 = vmatpush.msra.mxu0 0.0
    %6001 = vmatpush.msra.mxu0 0.0
    %6002 = vmatpush.msra.mxu0 0.0
    %6003 = vmatpush.msra.mxu0 0.0
    %6004 = vmatpush.msra.mxu0 0.0
    %6005 = vmatpush.msra.mxu0 0.0
    %6006 = vmatpush.msra.mxu0 0.0
    %6007 = vmatpush.msra.mxu0 0.0
    %6008 = vmatpush.msra.mxu0 0.0
    %6009 = vmatpush.msra.mxu0 %v5992
    %6010 = vmatmul.f32.gmra.mxu0 %v5845
    %v6011 = vpop.f32.mrf.mxu0
    %v6012 = vadd.f32 0.0, %v6011
    %6013 = vmatmul.f32.gmra.mxu0 %v5848
    %v6014 = vpop.f32.mrf.mxu0
    %v6015 = vadd.f32 0.0, %v6014
    %6016 = vmatmul.f32.gmra.mxu0 %v5851
    %v6017 = vpop.f32.mrf.mxu0
    %v6018 = vadd.f32 0.0, %v6017
    %6019 = vmatmul.f32.gmra.mxu0 %v5854
    %v6020 = vpop.f32.mrf.mxu0
    %v6021 = vadd.f32 0.0, %v6020
    %6022 = vmatmul.f32.gmra.mxu0 %v5857
    %v6023 = vpop.f32.mrf.mxu0
    %v6024 = vadd.f32 0.0, %v6023
    %6025 = vmatmul.f32.gmra.mxu0 %v5860
    %v6026 = vpop.f32.mrf.mxu0
    %v6027 = vadd.f32 0.0, %v6026
    %6028 = vmatmul.f32.gmra.mxu0 %v5863
    %v6029 = vpop.f32.mrf.mxu0
    %6030 = vmatmul.f32.gmra.mxu0 %v5866
    %v6031 = vpop.f32.mrf.mxu0
    %v6032 = vadd.f32 0.0, %v6031
    %6033 = vmatmul.f32.gmra.mxu0 %v5869
    %v6034 = vpop.f32.mrf.mxu0
    %v6035 = vadd.f32 0.0, %v6034
    %6036 = vmatmul.f32.gmra.mxu0 %v5872
    %v6037 = vpop.f32.mrf.mxu0
    %v6038 = vadd.f32 0.0, %v6037
    %6039 = vmatmul.f32.gmra.mxu0 %v5875
    %v6040 = vpop.f32.mrf.mxu0
    %v6041 = vadd.f32 0.0, %v6040
    %6042 = vmatmul.f32.gmra.mxu0 %v5878
    %v6043 = vpop.f32.mrf.mxu0
    %v6044 = vadd.f32 0.0, %v6043
    %6045 = vmatmul.f32.gmra.mxu0 %v5881
    %v6046 = vpop.f32.mrf.mxu0
    %v6047 = vadd.f32 0.0, %v6046
    %6048 = vmatmul.f32.gmra.mxu0 %v5884
    %v6049 = vpop.f32.mrf.mxu0
    %6050 = vmatmul.f32.gmra.mxu0 %v5887
    %v6051 = vpop.f32.mrf.mxu0
    %v6052 = vadd.f32 0.0, %v6051
    %6053 = vmatmul.f32.gmra.mxu0 %v5890
    %v6054 = vpop.f32.mrf.mxu0
    %v6055 = vadd.f32 0.0, %v6054
    %6056 = vmatmul.f32.gmra.mxu0 %v5893
    %v6057 = vpop.f32.mrf.mxu0
    %v6058 = vadd.f32 0.0, %v6057
    %6059 = vmatmul.f32.gmra.mxu0 %v5896
    %v6060 = vpop.f32.mrf.mxu0
    %v6061 = vadd.f32 0.0, %v6060
    %6062 = vmatmul.f32.gmra.mxu0 %v5899
    %v6063 = vpop.f32.mrf.mxu0
    %v6064 = vadd.f32 0.0, %v6063
    %6065 = vmatmul.f32.gmra.mxu0 %v5902
    %v6066 = vpop.f32.mrf.mxu0
    %v6067 = vadd.f32 0.0, %v6066
    %6068 = vmatmul.f32.gmra.mxu0 %v5905
    %v6069 = vpop.f32.mrf.mxu0
    %6070 = vmatmul.f32.gmra.mxu0 %v5908
    %v6071 = vpop.f32.mrf.mxu0
    %v6072 = vadd.f32 0.0, %v6071
    %6073 = vmatmul.f32.gmra.mxu0 %v5911
    %v6074 = vpop.f32.mrf.mxu0
    %v6075 = vadd.f32 0.0, %v6074
    %6076 = vmatmul.f32.gmra.mxu0 %v5914
    %v6077 = vpop.f32.mrf.mxu0
    %v6078 = vadd.f32 0.0, %v6077
    %6079 = vmatmul.f32.gmra.mxu0 %v5917
    %v6080 = vpop.f32.mrf.mxu0
    %v6081 = vadd.f32 0.0, %v6080
    %6082 = vmatmul.f32.gmra.mxu0 %v5920
    %v6083 = vpop.f32.mrf.mxu0
    %v6084 = vadd.f32 0.0, %v6083
    %6085 = vmatmul.f32.gmra.mxu0 %v5923
    %v6086 = vpop.f32.mrf.mxu0
    %v6087 = vadd.f32 0.0, %v6086
    %6088 = vmatmul.f32.gmra.mxu0 %v5926
    %v6089 = vpop.f32.mrf.mxu0
    %6090 = vmatmul.f32.gmra.mxu0 %v5929
    %v6091 = vpop.f32.mrf.mxu0
    %v6092 = vadd.f32 0.0, %v6091
    %6093 = vmatmul.f32.gmra.mxu0 %v5932
    %v6094 = vpop.f32.mrf.mxu0
    %v6095 = vadd.f32 0.0, %v6094
    %6096 = vmatmul.f32.gmra.mxu0 %v5935
    %v6097 = vpop.f32.mrf.mxu0
    %v6098 = vadd.f32 0.0, %v6097
    %6099 = vmatmul.f32.gmra.mxu0 %v5938
    %v6100 = vpop.f32.mrf.mxu0
    %v6101 = vadd.f32 0.0, %v6100
    %6102 = vmatmul.f32.gmra.mxu0 %v5941
    %v6103 = vpop.f32.mrf.mxu0
    %v6104 = vadd.f32 0.0, %v6103
    %6105 = vmatmul.f32.gmra.mxu0 %v5944
    %v6106 = vpop.f32.mrf.mxu0
    %v6107 = vadd.f32 0.0, %v6106
    %6108 = vmatmul.f32.gmra.mxu0 %v5947
    %v6109 = vpop.f32.mrf.mxu0
    %6110 = vmatmul.f32.gmra.mxu0 %v5950
    %v6111 = vpop.f32.mrf.mxu0
    %6112 = vmatmul.f32.gmra.mxu0 %v5953
    %v6113 = vpop.f32.mrf.mxu0
    %6114 = vmatmul.f32.gmra.mxu0 %v5956
    %v6115 = vpop.f32.mrf.mxu0
    %6116 = vmatmul.f32.gmra.mxu0 %v5959
    %v6117 = vpop.f32.mrf.mxu0
    %6118 = vmatmul.f32.gmra.mxu0 %v5962
    %v6119 = vpop.f32.mrf.mxu0
    %6120 = vmatmul.f32.gmra.mxu0 %v5965
    %v6121 = vpop.f32.mrf.mxu0
    %6122 = vmatmul.f32.gmra.mxu0 %v5968
    %v6123 = vpop.f32.mrf.mxu0
    %6124 = vmatmul.f32.gmra.mxu0 %v5971
    %v6125 = vpop.f32.mrf.mxu0
    %6126 = vmatmul.f32.gmra.mxu0 %v5974
    %v6127 = vpop.f32.mrf.mxu0
    %6128 = vmatmul.f32.gmra.mxu0 %v5977
    %v6129 = vpop.f32.mrf.mxu0
    %6130 = vmatmul.f32.gmra.mxu0 %v5980
    %v6131 = vpop.f32.mrf.mxu0
    %6132 = vmatmul.f32.gmra.mxu0 %v5983
    %v6133 = vpop.f32.mrf.mxu0
    %6134 = vmatmul.f32.gmra.mxu0 %v5986
    %v6135 = vpop.f32.mrf.mxu0
    %6136 = vmatmul.f32.gmra.mxu0 %v5989
    %v6137 = vpop.f32.mrf.mxu0
    %6138 = vdwg.mxu0
    %v6139 = vadd.f32 %v5764, %v6012
    %v6140 = vadd.f32 %v5765, %v6015
    %v6141 = vadd.f32 %v5766, %v6018
    %v6142 = vadd.f32 %v5767, %v6021
    %v6143 = vadd.f32 %v5768, %v6024
    %v6144 = vadd.f32 %v5769, %v6027
    %v6145 = vadd.f32 %v5770, %v6032
    %v6146 = vadd.f32 %v5771, %v6035
    %v6147 = vadd.f32 %v5772, %v6038
    %v6148 = vadd.f32 %v5773, %v6041
    %v6149 = vadd.f32 %v5774, %v6044
    %v6150 = vadd.f32 %v5775, %v6047
    %v6151 = vadd.f32 %v5776, %v6052
    %v6152 = vadd.f32 %v5777, %v6055
    %v6153 = vadd.f32 %v5778, %v6058
    %v6154 = vadd.f32 %v5779, %v6061
    %v6155 = vadd.f32 %v5780, %v6064
    %v6156 = vadd.f32 %v5781, %v6067
    %v6157 = vadd.f32 %v5782, %v6072
    %v6158 = vadd.f32 %v5783, %v6075
    %v6159 = vadd.f32 %v5784, %v6078
    %v6160 = vadd.f32 %v5785, %v6081
    %v6161 = vadd.f32 %v5786, %v6084
    %v6162 = vadd.f32 %v5787, %v6087
    %v6163 = vadd.f32 %v5788, %v6092
    %v6164 = vadd.f32 %v5789, %v6095
    %v6165 = vadd.f32 %v5790, %v6098
    %v6166 = vadd.f32 %v5791, %v6101
    %v6167 = vadd.f32 %v5792, %v6104
    %v6168 = vadd.f32 %v5793, %v6107
    %v6169 = vld [vmem:[#allocation2 + $0x3e] sm:$0xff]
    %v6170 = vld [vmem:[#allocation2 + $0x46] sm:$0xff]
    %v6171 = vld [vmem:[#allocation2 + $0x4e] sm:$0xff]
    %v6172 = vld [vmem:[#allocation2 + $0x56] sm:$0xff]
    %v6173 = vld [vmem:[#allocation2 + $0x5e] sm:$0xff]
    %v6174 = vld [vmem:[#allocation2 + $0x66] sm:$0xff]
    %v6175 = vld [vmem:[#allocation2 + $0x6e] sm:$0xff]
    %v6176 = vld [vmem:[#allocation2 + $0x76] sm:$0xff]
    %v6177 = vld [vmem:[#allocation2 + $0x7e] sm:$0xff]
    %v6178 = vld [vmem:[#allocation2 + $0x86] sm:$0xff]
    %v6179 = vld [vmem:[#allocation2 + $0x8e] sm:$0xff]
    %v6180 = vld [vmem:[#allocation2 + $0x96] sm:$0xff]
    %v6181 = vld [vmem:[#allocation2 + $0x9e] sm:$0xff]
    %v6182 = vld [vmem:[#allocation2 + $0xa6] sm:$0xff]
    %v6183 = vld [vmem:[#allocation2 + $0xae] sm:$0xff]
    %v6184 = vld [vmem:[#allocation2 + $0xb6] sm:$0xff]
    %v6185 = vld [vmem:[#allocation2 + $0xbe] sm:$0xff]
    %v6186 = vld [vmem:[#allocation2 + $0xc6] sm:$0xff]
    %v6187 = vld [vmem:[#allocation2 + $0xce] sm:$0xff]
    %v6188 = vld [vmem:[#allocation2 + $0xd6] sm:$0xff]
    %v6189 = vld [vmem:[#allocation2 + $0xde] sm:$0xff]
    %v6190 = vld [vmem:[#allocation2 + $0xe6] sm:$0xff]
    %v6191 = vld [vmem:[#allocation2 + $0xee] sm:$0xff]
    %v6192 = vld [vmem:[#allocation2 + $0xf6] sm:$0xff]
    %v6193 = vld [vmem:[#allocation2 + $0xfe] sm:$0xff]
    %v6194 = vld [vmem:[#allocation2 + $0x106] sm:$0xff]
    %v6195 = vld [vmem:[#allocation2 + $0x10e] sm:$0xff]
    %v6196 = vld [vmem:[#allocation2 + $0x116] sm:$0xff]
    %v6197 = vld [vmem:[#allocation2 + $0x11e] sm:$0xff]
    %v6198 = vld [vmem:[#allocation2 + $0x126] sm:$0xff]
    %v6199 = vld [vmem:[#allocation2 + $0x12e] sm:$0xff]
    %v6200 = vld [vmem:[#allocation2 + $0x136] sm:$0xff]
    %v6201 = vld [vmem:[#allocation2 + $0x13e] sm:$0xff]
    %v6202 = vld [vmem:[#allocation2 + $0x146] sm:$0xff]
    %v6203 = vld [vmem:[#allocation2 + $0x14e] sm:$0xff]
    %v6204 = vld [vmem:[#allocation2 + $0x156] sm:$0xff]
    %v6205 = vld [vmem:[#allocation2 + $0x15e] sm:$0xff]
    %v6206 = vld [vmem:[#allocation2 + $0x166] sm:$0xff]
    %v6207 = vld [vmem:[#allocation2 + $0x16e] sm:$0xff]
    %v6208 = vld [vmem:[#allocation2 + $0x176] sm:$0xff]
    %v6209 = vld [vmem:[#allocation2 + $0x17e] sm:$0xff]
    %v6210 = vld [vmem:[#allocation2 + $0x186] sm:$0xff]
    %v6211 = vld [vmem:[#allocation2 + $0x18e] sm:$0xff]
    %v6212 = vld [vmem:[#allocation2 + $0x196] sm:$0xff]
    %v6213 = vld [vmem:[#allocation2 + $0x19e] sm:$0xff]
    %v6214 = vld [vmem:[#allocation2 + $0x1a6] sm:$0xff]
    %v6215 = vld [vmem:[#allocation2 + $0x1ae] sm:$0xff]
    %v6216 = vld [vmem:[#allocation2 + $0x1b6] sm:$0xff]
    %v6217 = vld [vmem:[#allocation2 + $0x1be] sm:$0xff]
    %v6218 = vld [vmem:[%s3 + $0x4e] sm:$0x3f]
    %v6220 = vsel %vm1254, %v6169, 0
    %v6223 = vsel %vm1254, %v6170, 0
    %v6226 = vsel %vm1254, %v6171, 0
    %v6229 = vsel %vm1254, %v6172, 0
    %v6232 = vsel %vm1254, %v6173, 0
    %v6235 = vsel %vm1254, %v6174, 0
    %v6238 = vsel %vm1254, %v6175, 0
    %v6241 = vsel %vm1254, %v6176, 0
    %v6244 = vsel %vm1254, %v6177, 0
    %v6247 = vsel %vm1254, %v6178, 0
    %v6250 = vsel %vm1254, %v6179, 0
    %v6253 = vsel %vm1254, %v6180, 0
    %v6256 = vsel %vm1254, %v6181, 0
    %v6259 = vsel %vm1254, %v6182, 0
    %v6262 = vsel %vm1254, %v6183, 0
    %v6265 = vsel %vm1254, %v6184, 0
    %v6268 = vsel %vm1254, %v6185, 0
    %v6271 = vsel %vm1254, %v6186, 0
    %v6274 = vsel %vm1254, %v6187, 0
    %v6277 = vsel %vm1254, %v6188, 0
    %v6280 = vsel %vm1254, %v6189, 0
    %v6283 = vsel %vm1254, %v6190, 0
    %v6286 = vsel %vm1254, %v6191, 0
    %v6289 = vsel %vm1254, %v6192, 0
    %v6292 = vsel %vm1254, %v6193, 0
    %v6295 = vsel %vm1254, %v6194, 0
    %v6298 = vsel %vm1254, %v6195, 0
    %v6301 = vsel %vm1254, %v6196, 0
    %v6304 = vsel %vm1254, %v6197, 0
    %v6307 = vsel %vm1254, %v6198, 0
    %v6310 = vsel %vm1254, %v6199, 0
    %v6313 = vsel %vm1254, %v6200, 0
    %v6316 = vsel %vm1254, %v6201, 0
    %v6319 = vsel %vm1254, %v6202, 0
    %v6322 = vsel %vm1254, %v6203, 0
    %v6325 = vsel %vm1254, %v6204, 0
    %v6328 = vsel %vm1254, %v6205, 0
    %v6331 = vsel %vm1254, %v6206, 0
    %v6334 = vsel %vm1254, %v6207, 0
    %v6337 = vsel %vm1254, %v6208, 0
    %v6340 = vsel %vm1254, %v6209, 0
    %v6343 = vsel %vm1254, %v6210, 0
    %v6346 = vsel %vm1254, %v6211, 0
    %v6349 = vsel %vm1254, %v6212, 0
    %v6352 = vsel %vm1254, %v6213, 0
    %v6355 = vsel %vm1254, %v6214, 0
    %v6358 = vsel %vm1254, %v6215, 0
    %v6361 = vsel %vm1254, %v6216, 0
    %v6364 = vsel %vm1254, %v6217, 0
    %v6367 = vsel %vm1520, %v6218, 0
    %6369 = vmatpush.msra.mxu0 0.0
    %6370 = vmatpush.msra.mxu0 0.0
    %6371 = vmatpush.msra.mxu0 0.0
    %6372 = vmatpush.msra.mxu0 0.0
    %6373 = vmatpush.msra.mxu0 0.0
    %6374 = vmatpush.msra.mxu0 0.0
    %6375 = vmatpush.msra.mxu0 0.0
    %6376 = vmatpush.msra.mxu0 0.0
    %6377 = vmatpush.msra.mxu0 0.0
    %6378 = vmatpush.msra.mxu0 0.0
    %6379 = vmatpush.msra.mxu0 0.0
    %6380 = vmatpush.msra.mxu0 0.0
    %6381 = vmatpush.msra.mxu0 0.0
    %6382 = vmatpush.msra.mxu0 0.0
    %6383 = vmatpush.msra.mxu0 0.0
    %6384 = vmatpush.msra.mxu0 %v6367
    %6385 = vmatmul.f32.gmra.mxu0 %v6220
    %v6386 = vpop.f32.mrf.mxu0
    %v6387 = vadd.f32 0.0, %v6386
    %6388 = vmatmul.f32.gmra.mxu0 %v6223
    %v6389 = vpop.f32.mrf.mxu0
    %v6390 = vadd.f32 0.0, %v6389
    %6391 = vmatmul.f32.gmra.mxu0 %v6226
    %v6392 = vpop.f32.mrf.mxu0
    %v6393 = vadd.f32 0.0, %v6392
    %6394 = vmatmul.f32.gmra.mxu0 %v6229
    %v6395 = vpop.f32.mrf.mxu0
    %v6396 = vadd.f32 0.0, %v6395
    %6397 = vmatmul.f32.gmra.mxu0 %v6232
    %v6398 = vpop.f32.mrf.mxu0
    %v6399 = vadd.f32 0.0, %v6398
    %6400 = vmatmul.f32.gmra.mxu0 %v6235
    %v6401 = vpop.f32.mrf.mxu0
    %v6402 = vadd.f32 0.0, %v6401
    %6403 = vmatmul.f32.gmra.mxu0 %v6238
    %v6404 = vpop.f32.mrf.mxu0
    %6405 = vmatmul.f32.gmra.mxu0 %v6241
    %v6406 = vpop.f32.mrf.mxu0
    %v6407 = vadd.f32 0.0, %v6406
    %6408 = vmatmul.f32.gmra.mxu0 %v6244
    %v6409 = vpop.f32.mrf.mxu0
    %v6410 = vadd.f32 0.0, %v6409
    %6411 = vmatmul.f32.gmra.mxu0 %v6247
    %v6412 = vpop.f32.mrf.mxu0
    %v6413 = vadd.f32 0.0, %v6412
    %6414 = vmatmul.f32.gmra.mxu0 %v6250
    %v6415 = vpop.f32.mrf.mxu0
    %v6416 = vadd.f32 0.0, %v6415
    %6417 = vmatmul.f32.gmra.mxu0 %v6253
    %v6418 = vpop.f32.mrf.mxu0
    %v6419 = vadd.f32 0.0, %v6418
    %6420 = vmatmul.f32.gmra.mxu0 %v6256
    %v6421 = vpop.f32.mrf.mxu0
    %v6422 = vadd.f32 0.0, %v6421
    %6423 = vmatmul.f32.gmra.mxu0 %v6259
    %v6424 = vpop.f32.mrf.mxu0
    %6425 = vmatmul.f32.gmra.mxu0 %v6262
    %v6426 = vpop.f32.mrf.mxu0
    %v6427 = vadd.f32 0.0, %v6426
    %6428 = vmatmul.f32.gmra.mxu0 %v6265
    %v6429 = vpop.f32.mrf.mxu0
    %v6430 = vadd.f32 0.0, %v6429
    %6431 = vmatmul.f32.gmra.mxu0 %v6268
    %v6432 = vpop.f32.mrf.mxu0
    %v6433 = vadd.f32 0.0, %v6432
    %6434 = vmatmul.f32.gmra.mxu0 %v6271
    %v6435 = vpop.f32.mrf.mxu0
    %v6436 = vadd.f32 0.0, %v6435
    %6437 = vmatmul.f32.gmra.mxu0 %v6274
    %v6438 = vpop.f32.mrf.mxu0
    %v6439 = vadd.f32 0.0, %v6438
    %6440 = vmatmul.f32.gmra.mxu0 %v6277
    %v6441 = vpop.f32.mrf.mxu0
    %v6442 = vadd.f32 0.0, %v6441
    %6443 = vmatmul.f32.gmra.mxu0 %v6280
    %v6444 = vpop.f32.mrf.mxu0
    %6445 = vmatmul.f32.gmra.mxu0 %v6283
    %v6446 = vpop.f32.mrf.mxu0
    %v6447 = vadd.f32 0.0, %v6446
    %6448 = vmatmul.f32.gmra.mxu0 %v6286
    %v6449 = vpop.f32.mrf.mxu0
    %v6450 = vadd.f32 0.0, %v6449
    %6451 = vmatmul.f32.gmra.mxu0 %v6289
    %v6452 = vpop.f32.mrf.mxu0
    %v6453 = vadd.f32 0.0, %v6452
    %6454 = vmatmul.f32.gmra.mxu0 %v6292
    %v6455 = vpop.f32.mrf.mxu0
    %v6456 = vadd.f32 0.0, %v6455
    %6457 = vmatmul.f32.gmra.mxu0 %v6295
    %v6458 = vpop.f32.mrf.mxu0
    %v6459 = vadd.f32 0.0, %v6458
    %6460 = vmatmul.f32.gmra.mxu0 %v6298
    %v6461 = vpop.f32.mrf.mxu0
    %v6462 = vadd.f32 0.0, %v6461
    %6463 = vmatmul.f32.gmra.mxu0 %v6301
    %v6464 = vpop.f32.mrf.mxu0
    %6465 = vmatmul.f32.gmra.mxu0 %v6304
    %v6466 = vpop.f32.mrf.mxu0
    %v6467 = vadd.f32 0.0, %v6466
    %6468 = vmatmul.f32.gmra.mxu0 %v6307
    %v6469 = vpop.f32.mrf.mxu0
    %v6470 = vadd.f32 0.0, %v6469
    %6471 = vmatmul.f32.gmra.mxu0 %v6310
    %v6472 = vpop.f32.mrf.mxu0
    %v6473 = vadd.f32 0.0, %v6472
    %6474 = vmatmul.f32.gmra.mxu0 %v6313
    %v6475 = vpop.f32.mrf.mxu0
    %v6476 = vadd.f32 0.0, %v6475
    %6477 = vmatmul.f32.gmra.mxu0 %v6316
    %v6478 = vpop.f32.mrf.mxu0
    %v6479 = vadd.f32 0.0, %v6478
    %6480 = vmatmul.f32.gmra.mxu0 %v6319
    %v6481 = vpop.f32.mrf.mxu0
    %v6482 = vadd.f32 0.0, %v6481
    %6483 = vmatmul.f32.gmra.mxu0 %v6322
    %v6484 = vpop.f32.mrf.mxu0
    %6485 = vmatmul.f32.gmra.mxu0 %v6325
    %v6486 = vpop.f32.mrf.mxu0
    %6487 = vmatmul.f32.gmra.mxu0 %v6328
    %v6488 = vpop.f32.mrf.mxu0
    %6489 = vmatmul.f32.gmra.mxu0 %v6331
    %v6490 = vpop.f32.mrf.mxu0
    %6491 = vmatmul.f32.gmra.mxu0 %v6334
    %v6492 = vpop.f32.mrf.mxu0
    %6493 = vmatmul.f32.gmra.mxu0 %v6337
    %v6494 = vpop.f32.mrf.mxu0
    %6495 = vmatmul.f32.gmra.mxu0 %v6340
    %v6496 = vpop.f32.mrf.mxu0
    %6497 = vmatmul.f32.gmra.mxu0 %v6343
    %v6498 = vpop.f32.mrf.mxu0
    %6499 = vmatmul.f32.gmra.mxu0 %v6346
    %v6500 = vpop.f32.mrf.mxu0
    %6501 = vmatmul.f32.gmra.mxu0 %v6349
    %v6502 = vpop.f32.mrf.mxu0
    %6503 = vmatmul.f32.gmra.mxu0 %v6352
    %v6504 = vpop.f32.mrf.mxu0
    %6505 = vmatmul.f32.gmra.mxu0 %v6355
    %v6506 = vpop.f32.mrf.mxu0
    %6507 = vmatmul.f32.gmra.mxu0 %v6358
    %v6508 = vpop.f32.mrf.mxu0
    %6509 = vmatmul.f32.gmra.mxu0 %v6361
    %v6510 = vpop.f32.mrf.mxu0
    %6511 = vmatmul.f32.gmra.mxu0 %v6364
    %v6512 = vpop.f32.mrf.mxu0
    %6513 = vdwg.mxu0
    %v6514 = vadd.f32 %v6139, %v6387
    %v6515 = vadd.f32 %v6140, %v6390
    %v6516 = vadd.f32 %v6141, %v6393
    %v6517 = vadd.f32 %v6142, %v6396
    %v6518 = vadd.f32 %v6143, %v6399
    %v6519 = vadd.f32 %v6144, %v6402
    %v6520 = vadd.f32 %v6145, %v6407
    %v6521 = vadd.f32 %v6146, %v6410
    %v6522 = vadd.f32 %v6147, %v6413
    %v6523 = vadd.f32 %v6148, %v6416
    %v6524 = vadd.f32 %v6149, %v6419
    %v6525 = vadd.f32 %v6150, %v6422
    %v6526 = vadd.f32 %v6151, %v6427
    %v6527 = vadd.f32 %v6152, %v6430
    %v6528 = vadd.f32 %v6153, %v6433
    %v6529 = vadd.f32 %v6154, %v6436
    %v6530 = vadd.f32 %v6155, %v6439
    %v6531 = vadd.f32 %v6156, %v6442
    %v6532 = vadd.f32 %v6157, %v6447
    %v6533 = vadd.f32 %v6158, %v6450
    %v6534 = vadd.f32 %v6159, %v6453
    %v6535 = vadd.f32 %v6160, %v6456
    %v6536 = vadd.f32 %v6161, %v6459
    %v6537 = vadd.f32 %v6162, %v6462
    %v6538 = vadd.f32 %v6163, %v6467
    %v6539 = vadd.f32 %v6164, %v6470
    %v6540 = vadd.f32 %v6165, %v6473
    %v6541 = vadd.f32 %v6166, %v6476
    %v6542 = vadd.f32 %v6167, %v6479
    %v6543 = vadd.f32 %v6168, %v6482
    %v6544 = vld [vmem:[#allocation2 + $0x40] sm:$0xff]
    %v6545 = vld [vmem:[#allocation2 + $0x48] sm:$0xff]
    %v6546 = vld [vmem:[#allocation2 + $0x50] sm:$0xff]
    %v6547 = vld [vmem:[#allocation2 + $0x58] sm:$0xff]
    %v6548 = vld [vmem:[#allocation2 + $0x60] sm:$0xff]
    %v6549 = vld [vmem:[#allocation2 + $0x68] sm:$0xff]
    %v6550 = vld [vmem:[#allocation2 + $0x70] sm:$0xff]
    %v6551 = vld [vmem:[#allocation2 + $0x78] sm:$0xff]
    %v6552 = vld [vmem:[#allocation2 + $0x80] sm:$0xff]
    %v6553 = vld [vmem:[#allocation2 + $0x88] sm:$0xff]
    %v6554 = vld [vmem:[#allocation2 + $0x90] sm:$0xff]
    %v6555 = vld [vmem:[#allocation2 + $0x98] sm:$0xff]
    %v6556 = vld [vmem:[#allocation2 + $0xa0] sm:$0xff]
    %v6557 = vld [vmem:[#allocation2 + $0xa8] sm:$0xff]
    %v6558 = vld [vmem:[#allocation2 + $0xb0] sm:$0xff]
    %v6559 = vld [vmem:[#allocation2 + $0xb8] sm:$0xff]
    %v6560 = vld [vmem:[#allocation2 + $0xc0] sm:$0xff]
    %v6561 = vld [vmem:[#allocation2 + $0xc8] sm:$0xff]
    %v6562 = vld [vmem:[#allocation2 + $0xd0] sm:$0xff]
    %v6563 = vld [vmem:[#allocation2 + $0xd8] sm:$0xff]
    %v6564 = vld [vmem:[#allocation2 + $0xe0] sm:$0xff]
    %v6565 = vld [vmem:[#allocation2 + $0xe8] sm:$0xff]
    %v6566 = vld [vmem:[#allocation2 + $0xf0] sm:$0xff]
    %v6567 = vld [vmem:[#allocation2 + $0xf8] sm:$0xff]
    %v6568 = vld [vmem:[#allocation2 + $0x100] sm:$0xff]
    %v6569 = vld [vmem:[#allocation2 + $0x108] sm:$0xff]
    %v6570 = vld [vmem:[#allocation2 + $0x110] sm:$0xff]
    %v6571 = vld [vmem:[#allocation2 + $0x118] sm:$0xff]
    %v6572 = vld [vmem:[#allocation2 + $0x120] sm:$0xff]
    %v6573 = vld [vmem:[#allocation2 + $0x128] sm:$0xff]
    %v6574 = vld [vmem:[#allocation2 + $0x130] sm:$0xff]
    %v6575 = vld [vmem:[#allocation2 + $0x138] sm:$0xff]
    %v6576 = vld [vmem:[#allocation2 + $0x140] sm:$0xff]
    %v6577 = vld [vmem:[#allocation2 + $0x148] sm:$0xff]
    %v6578 = vld [vmem:[#allocation2 + $0x150] sm:$0xff]
    %v6579 = vld [vmem:[#allocation2 + $0x158] sm:$0xff]
    %v6580 = vld [vmem:[#allocation2 + $0x160] sm:$0xff]
    %v6581 = vld [vmem:[#allocation2 + $0x168] sm:$0xff]
    %v6582 = vld [vmem:[#allocation2 + $0x170] sm:$0xff]
    %v6583 = vld [vmem:[#allocation2 + $0x178] sm:$0xff]
    %v6584 = vld [vmem:[#allocation2 + $0x180] sm:$0xff]
    %v6585 = vld [vmem:[#allocation2 + $0x188] sm:$0xff]
    %v6586 = vld [vmem:[#allocation2 + $0x190] sm:$0xff]
    %v6587 = vld [vmem:[#allocation2 + $0x198] sm:$0xff]
    %v6588 = vld [vmem:[#allocation2 + $0x1a0] sm:$0xff]
    %v6589 = vld [vmem:[#allocation2 + $0x1a8] sm:$0xff]
    %v6590 = vld [vmem:[#allocation2 + $0x1b0] sm:$0xff]
    %v6591 = vld [vmem:[#allocation2 + $0x1b8] sm:$0xff]
    %v6592 = vld [vmem:[#allocation2 + $0x1c0] sm:$0xff]
    %v6593 = vld [vmem:[%s3 + $0x54] sm:$0x3f]
    %v6595 = vsel %vm1254, %v6544, 0
    %v6598 = vsel %vm1254, %v6545, 0
    %v6601 = vsel %vm1254, %v6546, 0
    %v6604 = vsel %vm1254, %v6547, 0
    %v6607 = vsel %vm1254, %v6548, 0
    %v6610 = vsel %vm1254, %v6549, 0
    %v6613 = vsel %vm1254, %v6550, 0
    %v6616 = vsel %vm1254, %v6551, 0
    %v6619 = vsel %vm1254, %v6552, 0
    %v6622 = vsel %vm1254, %v6553, 0
    %v6625 = vsel %vm1254, %v6554, 0
    %v6628 = vsel %vm1254, %v6555, 0
    %v6631 = vsel %vm1254, %v6556, 0
    %v6634 = vsel %vm1254, %v6557, 0
    %v6637 = vsel %vm1254, %v6558, 0
    %v6640 = vsel %vm1254, %v6559, 0
    %v6643 = vsel %vm1254, %v6560, 0
    %v6646 = vsel %vm1254, %v6561, 0
    %v6649 = vsel %vm1254, %v6562, 0
    %v6652 = vsel %vm1254, %v6563, 0
    %v6655 = vsel %vm1254, %v6564, 0
    %v6658 = vsel %vm1254, %v6565, 0
    %v6661 = vsel %vm1254, %v6566, 0
    %v6664 = vsel %vm1254, %v6567, 0
    %v6667 = vsel %vm1254, %v6568, 0
    %v6670 = vsel %vm1254, %v6569, 0
    %v6673 = vsel %vm1254, %v6570, 0
    %v6676 = vsel %vm1254, %v6571, 0
    %v6679 = vsel %vm1254, %v6572, 0
    %v6682 = vsel %vm1254, %v6573, 0
    %v6685 = vsel %vm1254, %v6574, 0
    %v6688 = vsel %vm1254, %v6575, 0
    %v6691 = vsel %vm1254, %v6576, 0
    %v6694 = vsel %vm1254, %v6577, 0
    %v6697 = vsel %vm1254, %v6578, 0
    %v6700 = vsel %vm1254, %v6579, 0
    %v6703 = vsel %vm1254, %v6580, 0
    %v6706 = vsel %vm1254, %v6581, 0
    %v6709 = vsel %vm1254, %v6582, 0
    %v6712 = vsel %vm1254, %v6583, 0
    %v6715 = vsel %vm1254, %v6584, 0
    %v6718 = vsel %vm1254, %v6585, 0
    %v6721 = vsel %vm1254, %v6586, 0
    %v6724 = vsel %vm1254, %v6587, 0
    %v6727 = vsel %vm1254, %v6588, 0
    %v6730 = vsel %vm1254, %v6589, 0
    %v6733 = vsel %vm1254, %v6590, 0
    %v6736 = vsel %vm1254, %v6591, 0
    %v6739 = vsel %vm1254, %v6592, 0
    %v6742 = vsel %vm1520, %v6593, 0
    %6744 = vmatpush.msra.mxu0 0.0
    %6745 = vmatpush.msra.mxu0 0.0
    %6746 = vmatpush.msra.mxu0 0.0
    %6747 = vmatpush.msra.mxu0 0.0
    %6748 = vmatpush.msra.mxu0 0.0
    %6749 = vmatpush.msra.mxu0 0.0
    %6750 = vmatpush.msra.mxu0 0.0
    %6751 = vmatpush.msra.mxu0 0.0
    %6752 = vmatpush.msra.mxu0 0.0
    %6753 = vmatpush.msra.mxu0 0.0
    %6754 = vmatpush.msra.mxu0 0.0
    %6755 = vmatpush.msra.mxu0 0.0
    %6756 = vmatpush.msra.mxu0 0.0
    %6757 = vmatpush.msra.mxu0 0.0
    %6758 = vmatpush.msra.mxu0 0.0
    %6759 = vmatpush.msra.mxu0 %v6742
    %6760 = vmatmul.f32.gmra.mxu0 %v6595
    %v6761 = vpop.f32.mrf.mxu0
    %v6762 = vadd.f32 0.0, %v6761
    %6763 = vmatmul.f32.gmra.mxu0 %v6598
    %v6764 = vpop.f32.mrf.mxu0
    %v6765 = vadd.f32 0.0, %v6764
    %6766 = vmatmul.f32.gmra.mxu0 %v6601
    %v6767 = vpop.f32.mrf.mxu0
    %v6768 = vadd.f32 0.0, %v6767
    %6769 = vmatmul.f32.gmra.mxu0 %v6604
    %v6770 = vpop.f32.mrf.mxu0
    %v6771 = vadd.f32 0.0, %v6770
    %6772 = vmatmul.f32.gmra.mxu0 %v6607
    %v6773 = vpop.f32.mrf.mxu0
    %v6774 = vadd.f32 0.0, %v6773
    %6775 = vmatmul.f32.gmra.mxu0 %v6610
    %v6776 = vpop.f32.mrf.mxu0
    %v6777 = vadd.f32 0.0, %v6776
    %6778 = vmatmul.f32.gmra.mxu0 %v6613
    %v6779 = vpop.f32.mrf.mxu0
    %6780 = vmatmul.f32.gmra.mxu0 %v6616
    %v6781 = vpop.f32.mrf.mxu0
    %v6782 = vadd.f32 0.0, %v6781
    %6783 = vmatmul.f32.gmra.mxu0 %v6619
    %v6784 = vpop.f32.mrf.mxu0
    %v6785 = vadd.f32 0.0, %v6784
    %6786 = vmatmul.f32.gmra.mxu0 %v6622
    %v6787 = vpop.f32.mrf.mxu0
    %v6788 = vadd.f32 0.0, %v6787
    %6789 = vmatmul.f32.gmra.mxu0 %v6625
    %v6790 = vpop.f32.mrf.mxu0
    %v6791 = vadd.f32 0.0, %v6790
    %6792 = vmatmul.f32.gmra.mxu0 %v6628
    %v6793 = vpop.f32.mrf.mxu0
    %v6794 = vadd.f32 0.0, %v6793
    %6795 = vmatmul.f32.gmra.mxu0 %v6631
    %v6796 = vpop.f32.mrf.mxu0
    %v6797 = vadd.f32 0.0, %v6796
    %6798 = vmatmul.f32.gmra.mxu0 %v6634
    %v6799 = vpop.f32.mrf.mxu0
    %6800 = vmatmul.f32.gmra.mxu0 %v6637
    %v6801 = vpop.f32.mrf.mxu0
    %v6802 = vadd.f32 0.0, %v6801
    %6803 = vmatmul.f32.gmra.mxu0 %v6640
    %v6804 = vpop.f32.mrf.mxu0
    %v6805 = vadd.f32 0.0, %v6804
    %6806 = vmatmul.f32.gmra.mxu0 %v6643
    %v6807 = vpop.f32.mrf.mxu0
    %v6808 = vadd.f32 0.0, %v6807
    %6809 = vmatmul.f32.gmra.mxu0 %v6646
    %v6810 = vpop.f32.mrf.mxu0
    %v6811 = vadd.f32 0.0, %v6810
    %6812 = vmatmul.f32.gmra.mxu0 %v6649
    %v6813 = vpop.f32.mrf.mxu0
    %v6814 = vadd.f32 0.0, %v6813
    %6815 = vmatmul.f32.gmra.mxu0 %v6652
    %v6816 = vpop.f32.mrf.mxu0
    %v6817 = vadd.f32 0.0, %v6816
    %6818 = vmatmul.f32.gmra.mxu0 %v6655
    %v6819 = vpop.f32.mrf.mxu0
    %6820 = vmatmul.f32.gmra.mxu0 %v6658
    %v6821 = vpop.f32.mrf.mxu0
    %v6822 = vadd.f32 0.0, %v6821
    %6823 = vmatmul.f32.gmra.mxu0 %v6661
    %v6824 = vpop.f32.mrf.mxu0
    %v6825 = vadd.f32 0.0, %v6824
    %6826 = vmatmul.f32.gmra.mxu0 %v6664
    %v6827 = vpop.f32.mrf.mxu0
    %v6828 = vadd.f32 0.0, %v6827
    %6829 = vmatmul.f32.gmra.mxu0 %v6667
    %v6830 = vpop.f32.mrf.mxu0
    %v6831 = vadd.f32 0.0, %v6830
    %6832 = vmatmul.f32.gmra.mxu0 %v6670
    %v6833 = vpop.f32.mrf.mxu0
    %v6834 = vadd.f32 0.0, %v6833
    %6835 = vmatmul.f32.gmra.mxu0 %v6673
    %v6836 = vpop.f32.mrf.mxu0
    %v6837 = vadd.f32 0.0, %v6836
    %6838 = vmatmul.f32.gmra.mxu0 %v6676
    %v6839 = vpop.f32.mrf.mxu0
    %6840 = vmatmul.f32.gmra.mxu0 %v6679
    %v6841 = vpop.f32.mrf.mxu0
    %v6842 = vadd.f32 0.0, %v6841
    %6843 = vmatmul.f32.gmra.mxu0 %v6682
    %v6844 = vpop.f32.mrf.mxu0
    %v6845 = vadd.f32 0.0, %v6844
    %6846 = vmatmul.f32.gmra.mxu0 %v6685
    %v6847 = vpop.f32.mrf.mxu0
    %v6848 = vadd.f32 0.0, %v6847
    %6849 = vmatmul.f32.gmra.mxu0 %v6688
    %v6850 = vpop.f32.mrf.mxu0
    %v6851 = vadd.f32 0.0, %v6850
    %6852 = vmatmul.f32.gmra.mxu0 %v6691
    %v6853 = vpop.f32.mrf.mxu0
    %v6854 = vadd.f32 0.0, %v6853
    %6855 = vmatmul.f32.gmra.mxu0 %v6694
    %v6856 = vpop.f32.mrf.mxu0
    %v6857 = vadd.f32 0.0, %v6856
    %6858 = vmatmul.f32.gmra.mxu0 %v6697
    %v6859 = vpop.f32.mrf.mxu0
    %6860 = vmatmul.f32.gmra.mxu0 %v6700
    %v6861 = vpop.f32.mrf.mxu0
    %6862 = vmatmul.f32.gmra.mxu0 %v6703
    %v6863 = vpop.f32.mrf.mxu0
    %6864 = vmatmul.f32.gmra.mxu0 %v6706
    %v6865 = vpop.f32.mrf.mxu0
    %6866 = vmatmul.f32.gmra.mxu0 %v6709
    %v6867 = vpop.f32.mrf.mxu0
    %6868 = vmatmul.f32.gmra.mxu0 %v6712
    %v6869 = vpop.f32.mrf.mxu0
    %6870 = vmatmul.f32.gmra.mxu0 %v6715
    %v6871 = vpop.f32.mrf.mxu0
    %6872 = vmatmul.f32.gmra.mxu0 %v6718
    %v6873 = vpop.f32.mrf.mxu0
    %6874 = vmatmul.f32.gmra.mxu0 %v6721
    %v6875 = vpop.f32.mrf.mxu0
    %6876 = vmatmul.f32.gmra.mxu0 %v6724
    %v6877 = vpop.f32.mrf.mxu0
    %6878 = vmatmul.f32.gmra.mxu0 %v6727
    %v6879 = vpop.f32.mrf.mxu0
    %6880 = vmatmul.f32.gmra.mxu0 %v6730
    %v6881 = vpop.f32.mrf.mxu0
    %6882 = vmatmul.f32.gmra.mxu0 %v6733
    %v6883 = vpop.f32.mrf.mxu0
    %6884 = vmatmul.f32.gmra.mxu0 %v6736
    %v6885 = vpop.f32.mrf.mxu0
    %6886 = vmatmul.f32.gmra.mxu0 %v6739
    %v6887 = vpop.f32.mrf.mxu0
    %6888 = vdwg.mxu0
    %v6889 = vadd.f32 %v6514, %v6762
    %v6890 = vadd.f32 %v6515, %v6765
    %v6891 = vadd.f32 %v6516, %v6768
    %v6892 = vadd.f32 %v6517, %v6771
    %v6893 = vadd.f32 %v6518, %v6774
    %v6894 = vadd.f32 %v6519, %v6777
    %v6895 = vadd.f32 %v6520, %v6782
    %v6896 = vadd.f32 %v6521, %v6785
    %v6897 = vadd.f32 %v6522, %v6788
    %v6898 = vadd.f32 %v6523, %v6791
    %v6899 = vadd.f32 %v6524, %v6794
    %v6900 = vadd.f32 %v6525, %v6797
    %v6901 = vadd.f32 %v6526, %v6802
    %v6902 = vadd.f32 %v6527, %v6805
    %v6903 = vadd.f32 %v6528, %v6808
    %v6904 = vadd.f32 %v6529, %v6811
    %v6905 = vadd.f32 %v6530, %v6814
    %v6906 = vadd.f32 %v6531, %v6817
    %v6907 = vadd.f32 %v6532, %v6822
    %v6908 = vadd.f32 %v6533, %v6825
    %v6909 = vadd.f32 %v6534, %v6828
    %v6910 = vadd.f32 %v6535, %v6831
    %v6911 = vadd.f32 %v6536, %v6834
    %v6912 = vadd.f32 %v6537, %v6837
    %v6913 = vadd.f32 %v6538, %v6842
    %v6914 = vadd.f32 %v6539, %v6845
    %v6915 = vadd.f32 %v6540, %v6848
    %v6916 = vadd.f32 %v6541, %v6851
    %v6917 = vadd.f32 %v6542, %v6854
    %v6918 = vadd.f32 %v6543, %v6857
    %v6919 = vld [vmem:[#allocation2 + $0x54] sm:$0xff]
    %v6920 = vld [vmem:[#allocation2 + $0x5c] sm:$0xff]
    %v6921 = vld [vmem:[#allocation2 + $0x64] sm:$0xff]
    %v6922 = vld [vmem:[#allocation2 + $0x6c] sm:$0xff]
    %v6923 = vld [vmem:[#allocation2 + $0x74] sm:$0xff]
    %v6924 = vld [vmem:[#allocation2 + $0x7c] sm:$0xff]
    %v6925 = vld [vmem:[#allocation2 + $0x84] sm:$0xff]
    %v6926 = vld [vmem:[#allocation2 + $0x8c] sm:$0xff]
    %v6927 = vld [vmem:[#allocation2 + $0x94] sm:$0xff]
    %v6928 = vld [vmem:[#allocation2 + $0x9c] sm:$0xff]
    %v6929 = vld [vmem:[#allocation2 + $0xa4] sm:$0xff]
    %v6930 = vld [vmem:[#allocation2 + $0xac] sm:$0xff]
    %v6931 = vld [vmem:[#allocation2 + $0xb4] sm:$0xff]
    %v6932 = vld [vmem:[#allocation2 + $0xbc] sm:$0xff]
    %v6933 = vld [vmem:[#allocation2 + $0xc4] sm:$0xff]
    %v6934 = vld [vmem:[#allocation2 + $0xcc] sm:$0xff]
    %v6935 = vld [vmem:[#allocation2 + $0xd4] sm:$0xff]
    %v6936 = vld [vmem:[#allocation2 + $0xdc] sm:$0xff]
    %v6937 = vld [vmem:[#allocation2 + $0xe4] sm:$0xff]
    %v6938 = vld [vmem:[#allocation2 + $0xec] sm:$0xff]
    %v6939 = vld [vmem:[#allocation2 + $0xf4] sm:$0xff]
    %v6940 = vld [vmem:[#allocation2 + $0xfc] sm:$0xff]
    %v6941 = vld [vmem:[#allocation2 + $0x104] sm:$0xff]
    %v6942 = vld [vmem:[#allocation2 + $0x10c] sm:$0xff]
    %v6943 = vld [vmem:[#allocation2 + $0x114] sm:$0xff]
    %v6944 = vld [vmem:[#allocation2 + $0x11c] sm:$0xff]
    %v6945 = vld [vmem:[#allocation2 + $0x124] sm:$0xff]
    %v6946 = vld [vmem:[#allocation2 + $0x12c] sm:$0xff]
    %v6947 = vld [vmem:[#allocation2 + $0x134] sm:$0xff]
    %v6948 = vld [vmem:[#allocation2 + $0x13c] sm:$0xff]
    %v6949 = vld [vmem:[#allocation2 + $0x144] sm:$0xff]
    %v6950 = vld [vmem:[#allocation2 + $0x14c] sm:$0xff]
    %v6951 = vld [vmem:[#allocation2 + $0x154] sm:$0xff]
    %v6952 = vld [vmem:[#allocation2 + $0x15c] sm:$0xff]
    %v6953 = vld [vmem:[#allocation2 + $0x164] sm:$0xff]
    %v6954 = vld [vmem:[#allocation2 + $0x16c] sm:$0xff]
    %v6955 = vld [vmem:[#allocation2 + $0x174] sm:$0xff]
    %v6956 = vld [vmem:[#allocation2 + $0x17c] sm:$0xff]
    %v6957 = vld [vmem:[#allocation2 + $0x184] sm:$0xff]
    %v6958 = vld [vmem:[#allocation2 + $0x18c] sm:$0xff]
    %v6959 = vld [vmem:[#allocation2 + $0x194] sm:$0xff]
    %v6960 = vld [vmem:[#allocation2 + $0x19c] sm:$0xff]
    %v6961 = vld [vmem:[#allocation2 + $0x1a4] sm:$0xff]
    %v6962 = vld [vmem:[#allocation2 + $0x1ac] sm:$0xff]
    %v6963 = vld [vmem:[#allocation2 + $0x1b4] sm:$0xff]
    %v6964 = vld [vmem:[#allocation2 + $0x1bc] sm:$0xff]
    %v6965 = vld [vmem:[#allocation2 + $0x1c4] sm:$0xff]
    %v6966 = vld [vmem:[#allocation2 + $0x1cc] sm:$0xff]
    %v6967 = vld [vmem:[#allocation2 + $0x1d4] sm:$0xff]
    %v6968 = vld [vmem:[%s3 + $0x5a] sm:$0x3f]
    %v6970 = vsel %vm1254, %v6919, 0
    %v6973 = vsel %vm1254, %v6920, 0
    %v6976 = vsel %vm1254, %v6921, 0
    %v6979 = vsel %vm1254, %v6922, 0
    %v6982 = vsel %vm1254, %v6923, 0
    %v6985 = vsel %vm1254, %v6924, 0
    %v6988 = vsel %vm1254, %v6925, 0
    %v6991 = vsel %vm1254, %v6926, 0
    %v6994 = vsel %vm1254, %v6927, 0
    %v6997 = vsel %vm1254, %v6928, 0
    %v7000 = vsel %vm1254, %v6929, 0
    %v7003 = vsel %vm1254, %v6930, 0
    %v7006 = vsel %vm1254, %v6931, 0
    %v7009 = vsel %vm1254, %v6932, 0
    %v7012 = vsel %vm1254, %v6933, 0
    %v7015 = vsel %vm1254, %v6934, 0
    %v7018 = vsel %vm1254, %v6935, 0
    %v7021 = vsel %vm1254, %v6936, 0
    %v7024 = vsel %vm1254, %v6937, 0
    %v7027 = vsel %vm1254, %v6938, 0
    %v7030 = vsel %vm1254, %v6939, 0
    %v7033 = vsel %vm1254, %v6940, 0
    %v7036 = vsel %vm1254, %v6941, 0
    %v7039 = vsel %vm1254, %v6942, 0
    %v7042 = vsel %vm1254, %v6943, 0
    %v7045 = vsel %vm1254, %v6944, 0
    %v7048 = vsel %vm1254, %v6945, 0
    %v7051 = vsel %vm1254, %v6946, 0
    %v7054 = vsel %vm1254, %v6947, 0
    %v7057 = vsel %vm1254, %v6948, 0
    %v7060 = vsel %vm1254, %v6949, 0
    %v7063 = vsel %vm1254, %v6950, 0
    %v7066 = vsel %vm1254, %v6951, 0
    %v7069 = vsel %vm1254, %v6952, 0
    %v7072 = vsel %vm1254, %v6953, 0
    %v7075 = vsel %vm1254, %v6954, 0
    %v7078 = vsel %vm1254, %v6955, 0
    %v7081 = vsel %vm1254, %v6956, 0
    %v7084 = vsel %vm1254, %v6957, 0
    %v7087 = vsel %vm1254, %v6958, 0
    %v7090 = vsel %vm1254, %v6959, 0
    %v7093 = vsel %vm1254, %v6960, 0
    %v7096 = vsel %vm1254, %v6961, 0
    %v7099 = vsel %vm1254, %v6962, 0
    %v7102 = vsel %vm1254, %v6963, 0
    %v7105 = vsel %vm1254, %v6964, 0
    %v7108 = vsel %vm1254, %v6965, 0
    %v7111 = vsel %vm1254, %v6966, 0
    %v7114 = vsel %vm1254, %v6967, 0
    %v7117 = vsel %vm1520, %v6968, 0
    %7119 = vmatpush.msra.mxu0 0.0
    %7120 = vmatpush.msra.mxu0 0.0
    %7121 = vmatpush.msra.mxu0 0.0
    %7122 = vmatpush.msra.mxu0 0.0
    %7123 = vmatpush.msra.mxu0 0.0
    %7124 = vmatpush.msra.mxu0 0.0
    %7125 = vmatpush.msra.mxu0 0.0
    %7126 = vmatpush.msra.mxu0 0.0
    %7127 = vmatpush.msra.mxu0 0.0
    %7128 = vmatpush.msra.mxu0 0.0
    %7129 = vmatpush.msra.mxu0 0.0
    %7130 = vmatpush.msra.mxu0 0.0
    %7131 = vmatpush.msra.mxu0 0.0
    %7132 = vmatpush.msra.mxu0 0.0
    %7133 = vmatpush.msra.mxu0 0.0
    %7134 = vmatpush.msra.mxu0 %v7117
    %7135 = vmatmul.f32.gmra.mxu0 %v6970
    %v7136 = vpop.f32.mrf.mxu0
    %v7137 = vadd.f32 0.0, %v7136
    %7138 = vmatmul.f32.gmra.mxu0 %v6973
    %v7139 = vpop.f32.mrf.mxu0
    %v7140 = vadd.f32 0.0, %v7139
    %7141 = vmatmul.f32.gmra.mxu0 %v6976
    %v7142 = vpop.f32.mrf.mxu0
    %v7143 = vadd.f32 0.0, %v7142
    %7144 = vmatmul.f32.gmra.mxu0 %v6979
    %v7145 = vpop.f32.mrf.mxu0
    %v7146 = vadd.f32 0.0, %v7145
    %7147 = vmatmul.f32.gmra.mxu0 %v6982
    %v7148 = vpop.f32.mrf.mxu0
    %v7149 = vadd.f32 0.0, %v7148
    %7150 = vmatmul.f32.gmra.mxu0 %v6985
    %v7151 = vpop.f32.mrf.mxu0
    %v7152 = vadd.f32 0.0, %v7151
    %7153 = vmatmul.f32.gmra.mxu0 %v6988
    %v7154 = vpop.f32.mrf.mxu0
    %7155 = vmatmul.f32.gmra.mxu0 %v6991
    %v7156 = vpop.f32.mrf.mxu0
    %v7157 = vadd.f32 0.0, %v7156
    %7158 = vmatmul.f32.gmra.mxu0 %v6994
    %v7159 = vpop.f32.mrf.mxu0
    %v7160 = vadd.f32 0.0, %v7159
    %7161 = vmatmul.f32.gmra.mxu0 %v6997
    %v7162 = vpop.f32.mrf.mxu0
    %v7163 = vadd.f32 0.0, %v7162
    %7164 = vmatmul.f32.gmra.mxu0 %v7000
    %v7165 = vpop.f32.mrf.mxu0
    %v7166 = vadd.f32 0.0, %v7165
    %7167 = vmatmul.f32.gmra.mxu0 %v7003
    %v7168 = vpop.f32.mrf.mxu0
    %v7169 = vadd.f32 0.0, %v7168
    %7170 = vmatmul.f32.gmra.mxu0 %v7006
    %v7171 = vpop.f32.mrf.mxu0
    %v7172 = vadd.f32 0.0, %v7171
    %7173 = vmatmul.f32.gmra.mxu0 %v7009
    %v7174 = vpop.f32.mrf.mxu0
    %7175 = vmatmul.f32.gmra.mxu0 %v7012
    %v7176 = vpop.f32.mrf.mxu0
    %v7177 = vadd.f32 0.0, %v7176
    %7178 = vmatmul.f32.gmra.mxu0 %v7015
    %v7179 = vpop.f32.mrf.mxu0
    %v7180 = vadd.f32 0.0, %v7179
    %7181 = vmatmul.f32.gmra.mxu0 %v7018
    %v7182 = vpop.f32.mrf.mxu0
    %v7183 = vadd.f32 0.0, %v7182
    %7184 = vmatmul.f32.gmra.mxu0 %v7021
    %v7185 = vpop.f32.mrf.mxu0
    %v7186 = vadd.f32 0.0, %v7185
    %7187 = vmatmul.f32.gmra.mxu0 %v7024
    %v7188 = vpop.f32.mrf.mxu0
    %v7189 = vadd.f32 0.0, %v7188
    %7190 = vmatmul.f32.gmra.mxu0 %v7027
    %v7191 = vpop.f32.mrf.mxu0
    %v7192 = vadd.f32 0.0, %v7191
    %7193 = vmatmul.f32.gmra.mxu0 %v7030
    %v7194 = vpop.f32.mrf.mxu0
    %7195 = vmatmul.f32.gmra.mxu0 %v7033
    %v7196 = vpop.f32.mrf.mxu0
    %v7197 = vadd.f32 0.0, %v7196
    %7198 = vmatmul.f32.gmra.mxu0 %v7036
    %v7199 = vpop.f32.mrf.mxu0
    %v7200 = vadd.f32 0.0, %v7199
    %7201 = vmatmul.f32.gmra.mxu0 %v7039
    %v7202 = vpop.f32.mrf.mxu0
    %v7203 = vadd.f32 0.0, %v7202
    %7204 = vmatmul.f32.gmra.mxu0 %v7042
    %v7205 = vpop.f32.mrf.mxu0
    %v7206 = vadd.f32 0.0, %v7205
    %7207 = vmatmul.f32.gmra.mxu0 %v7045
    %v7208 = vpop.f32.mrf.mxu0
    %v7209 = vadd.f32 0.0, %v7208
    %7210 = vmatmul.f32.gmra.mxu0 %v7048
    %v7211 = vpop.f32.mrf.mxu0
    %v7212 = vadd.f32 0.0, %v7211
    %7213 = vmatmul.f32.gmra.mxu0 %v7051
    %v7214 = vpop.f32.mrf.mxu0
    %7215 = vmatmul.f32.gmra.mxu0 %v7054
    %v7216 = vpop.f32.mrf.mxu0
    %v7217 = vadd.f32 0.0, %v7216
    %7218 = vmatmul.f32.gmra.mxu0 %v7057
    %v7219 = vpop.f32.mrf.mxu0
    %v7220 = vadd.f32 0.0, %v7219
    %7221 = vmatmul.f32.gmra.mxu0 %v7060
    %v7222 = vpop.f32.mrf.mxu0
    %v7223 = vadd.f32 0.0, %v7222
    %7224 = vmatmul.f32.gmra.mxu0 %v7063
    %v7225 = vpop.f32.mrf.mxu0
    %v7226 = vadd.f32 0.0, %v7225
    %7227 = vmatmul.f32.gmra.mxu0 %v7066
    %v7228 = vpop.f32.mrf.mxu0
    %v7229 = vadd.f32 0.0, %v7228
    %7230 = vmatmul.f32.gmra.mxu0 %v7069
    %v7231 = vpop.f32.mrf.mxu0
    %v7232 = vadd.f32 0.0, %v7231
    %7233 = vmatmul.f32.gmra.mxu0 %v7072
    %v7234 = vpop.f32.mrf.mxu0
    %7235 = vmatmul.f32.gmra.mxu0 %v7075
    %v7236 = vpop.f32.mrf.mxu0
    %7237 = vmatmul.f32.gmra.mxu0 %v7078
    %v7238 = vpop.f32.mrf.mxu0
    %7239 = vmatmul.f32.gmra.mxu0 %v7081
    %v7240 = vpop.f32.mrf.mxu0
    %7241 = vmatmul.f32.gmra.mxu0 %v7084
    %v7242 = vpop.f32.mrf.mxu0
    %7243 = vmatmul.f32.gmra.mxu0 %v7087
    %v7244 = vpop.f32.mrf.mxu0
    %7245 = vmatmul.f32.gmra.mxu0 %v7090
    %v7246 = vpop.f32.mrf.mxu0
    %7247 = vmatmul.f32.gmra.mxu0 %v7093
    %v7248 = vpop.f32.mrf.mxu0
    %7249 = vmatmul.f32.gmra.mxu0 %v7096
    %v7250 = vpop.f32.mrf.mxu0
    %7251 = vmatmul.f32.gmra.mxu0 %v7099
    %v7252 = vpop.f32.mrf.mxu0
    %7253 = vmatmul.f32.gmra.mxu0 %v7102
    %v7254 = vpop.f32.mrf.mxu0
    %7255 = vmatmul.f32.gmra.mxu0 %v7105
    %v7256 = vpop.f32.mrf.mxu0
    %7257 = vmatmul.f32.gmra.mxu0 %v7108
    %v7258 = vpop.f32.mrf.mxu0
    %7259 = vmatmul.f32.gmra.mxu0 %v7111
    %v7260 = vpop.f32.mrf.mxu0
    %7261 = vmatmul.f32.gmra.mxu0 %v7114
    %v7262 = vpop.f32.mrf.mxu0
    %7263 = vdwg.mxu0
    %v7264 = vadd.f32 %v6889, %v7137
    %v7265 = vadd.f32 %v6890, %v7140
    %v7266 = vadd.f32 %v6891, %v7143
    %v7267 = vadd.f32 %v6892, %v7146
    %v7268 = vadd.f32 %v6893, %v7149
    %v7269 = vadd.f32 %v6894, %v7152
    %v7270 = vadd.f32 %v6895, %v7157
    %v7271 = vadd.f32 %v6896, %v7160
    %v7272 = vadd.f32 %v6897, %v7163
    %v7273 = vadd.f32 %v6898, %v7166
    %v7274 = vadd.f32 %v6899, %v7169
    %v7275 = vadd.f32 %v6900, %v7172
    %v7276 = vadd.f32 %v6901, %v7177
    %v7277 = vadd.f32 %v6902, %v7180
    %v7278 = vadd.f32 %v6903, %v7183
    %v7279 = vadd.f32 %v6904, %v7186
    %v7280 = vadd.f32 %v6905, %v7189
    %v7281 = vadd.f32 %v6906, %v7192
    %v7282 = vadd.f32 %v6907, %v7197
    %v7283 = vadd.f32 %v6908, %v7200
    %v7284 = vadd.f32 %v6909, %v7203
    %v7285 = vadd.f32 %v6910, %v7206
    %v7286 = vadd.f32 %v6911, %v7209
    %v7287 = vadd.f32 %v6912, %v7212
    %v7288 = vadd.f32 %v6913, %v7217
    %v7289 = vadd.f32 %v6914, %v7220
    %v7290 = vadd.f32 %v6915, %v7223
    %v7291 = vadd.f32 %v6916, %v7226
    %v7292 = vadd.f32 %v6917, %v7229
    %v7293 = vadd.f32 %v6918, %v7232
    %v7294 = vld [vmem:[#allocation2 + $0x56] sm:$0xff]
    %v7295 = vld [vmem:[#allocation2 + $0x5e] sm:$0xff]
    %v7296 = vld [vmem:[#allocation2 + $0x66] sm:$0xff]
    %v7297 = vld [vmem:[#allocation2 + $0x6e] sm:$0xff]
    %v7298 = vld [vmem:[#allocation2 + $0x76] sm:$0xff]
    %v7299 = vld [vmem:[#allocation2 + $0x7e] sm:$0xff]
    %v7300 = vld [vmem:[#allocation2 + $0x86] sm:$0xff]
    %v7301 = vld [vmem:[#allocation2 + $0x8e] sm:$0xff]
    %v7302 = vld [vmem:[#allocation2 + $0x96] sm:$0xff]
    %v7303 = vld [vmem:[#allocation2 + $0x9e] sm:$0xff]
    %v7304 = vld [vmem:[#allocation2 + $0xa6] sm:$0xff]
    %v7305 = vld [vmem:[#allocation2 + $0xae] sm:$0xff]
    %v7306 = vld [vmem:[#allocation2 + $0xb6] sm:$0xff]
    %v7307 = vld [vmem:[#allocation2 + $0xbe] sm:$0xff]
    %v7308 = vld [vmem:[#allocation2 + $0xc6] sm:$0xff]
    %v7309 = vld [vmem:[#allocation2 + $0xce] sm:$0xff]
    %v7310 = vld [vmem:[#allocation2 + $0xd6] sm:$0xff]
    %v7311 = vld [vmem:[#allocation2 + $0xde] sm:$0xff]
    %v7312 = vld [vmem:[#allocation2 + $0xe6] sm:$0xff]
    %v7313 = vld [vmem:[#allocation2 + $0xee] sm:$0xff]
    %v7314 = vld [vmem:[#allocation2 + $0xf6] sm:$0xff]
    %v7315 = vld [vmem:[#allocation2 + $0xfe] sm:$0xff]
    %v7316 = vld [vmem:[#allocation2 + $0x106] sm:$0xff]
    %v7317 = vld [vmem:[#allocation2 + $0x10e] sm:$0xff]
    %v7318 = vld [vmem:[#allocation2 + $0x116] sm:$0xff]
    %v7319 = vld [vmem:[#allocation2 + $0x11e] sm:$0xff]
    %v7320 = vld [vmem:[#allocation2 + $0x126] sm:$0xff]
    %v7321 = vld [vmem:[#allocation2 + $0x12e] sm:$0xff]
    %v7322 = vld [vmem:[#allocation2 + $0x136] sm:$0xff]
    %v7323 = vld [vmem:[#allocation2 + $0x13e] sm:$0xff]
    %v7324 = vld [vmem:[#allocation2 + $0x146] sm:$0xff]
    %v7325 = vld [vmem:[#allocation2 + $0x14e] sm:$0xff]
    %v7326 = vld [vmem:[#allocation2 + $0x156] sm:$0xff]
    %v7327 = vld [vmem:[#allocation2 + $0x15e] sm:$0xff]
    %v7328 = vld [vmem:[#allocation2 + $0x166] sm:$0xff]
    %v7329 = vld [vmem:[#allocation2 + $0x16e] sm:$0xff]
    %v7330 = vld [vmem:[#allocation2 + $0x176] sm:$0xff]
    %v7331 = vld [vmem:[#allocation2 + $0x17e] sm:$0xff]
    %v7332 = vld [vmem:[#allocation2 + $0x186] sm:$0xff]
    %v7333 = vld [vmem:[#allocation2 + $0x18e] sm:$0xff]
    %v7334 = vld [vmem:[#allocation2 + $0x196] sm:$0xff]
    %v7335 = vld [vmem:[#allocation2 + $0x19e] sm:$0xff]
    %v7336 = vld [vmem:[#allocation2 + $0x1a6] sm:$0xff]
    %v7337 = vld [vmem:[#allocation2 + $0x1ae] sm:$0xff]
    %v7338 = vld [vmem:[#allocation2 + $0x1b6] sm:$0xff]
    %v7339 = vld [vmem:[#allocation2 + $0x1be] sm:$0xff]
    %v7340 = vld [vmem:[#allocation2 + $0x1c6] sm:$0xff]
    %v7341 = vld [vmem:[#allocation2 + $0x1ce] sm:$0xff]
    %v7342 = vld [vmem:[#allocation2 + $0x1d6] sm:$0xff]
    %v7343 = vld [vmem:[%s3 + $0x60] sm:$0x3f]
    %v7345 = vsel %vm1254, %v7294, 0
    %v7348 = vsel %vm1254, %v7295, 0
    %v7351 = vsel %vm1254, %v7296, 0
    %v7354 = vsel %vm1254, %v7297, 0
    %v7357 = vsel %vm1254, %v7298, 0
    %v7360 = vsel %vm1254, %v7299, 0
    %v7363 = vsel %vm1254, %v7300, 0
    %v7366 = vsel %vm1254, %v7301, 0
    %v7369 = vsel %vm1254, %v7302, 0
    %v7372 = vsel %vm1254, %v7303, 0
    %v7375 = vsel %vm1254, %v7304, 0
    %v7378 = vsel %vm1254, %v7305, 0
    %v7381 = vsel %vm1254, %v7306, 0
    %v7384 = vsel %vm1254, %v7307, 0
    %v7387 = vsel %vm1254, %v7308, 0
    %v7390 = vsel %vm1254, %v7309, 0
    %v7393 = vsel %vm1254, %v7310, 0
    %v7396 = vsel %vm1254, %v7311, 0
    %v7399 = vsel %vm1254, %v7312, 0
    %v7402 = vsel %vm1254, %v7313, 0
    %v7405 = vsel %vm1254, %v7314, 0
    %v7408 = vsel %vm1254, %v7315, 0
    %v7411 = vsel %vm1254, %v7316, 0
    %v7414 = vsel %vm1254, %v7317, 0
    %v7417 = vsel %vm1254, %v7318, 0
    %v7420 = vsel %vm1254, %v7319, 0
    %v7423 = vsel %vm1254, %v7320, 0
    %v7426 = vsel %vm1254, %v7321, 0
    %v7429 = vsel %vm1254, %v7322, 0
    %v7432 = vsel %vm1254, %v7323, 0
    %v7435 = vsel %vm1254, %v7324, 0
    %v7438 = vsel %vm1254, %v7325, 0
    %v7441 = vsel %vm1254, %v7326, 0
    %v7444 = vsel %vm1254, %v7327, 0
    %v7447 = vsel %vm1254, %v7328, 0
    %v7450 = vsel %vm1254, %v7329, 0
    %v7453 = vsel %vm1254, %v7330, 0
    %v7456 = vsel %vm1254, %v7331, 0
    %v7459 = vsel %vm1254, %v7332, 0
    %v7462 = vsel %vm1254, %v7333, 0
    %v7465 = vsel %vm1254, %v7334, 0
    %v7468 = vsel %vm1254, %v7335, 0
    %v7471 = vsel %vm1254, %v7336, 0
    %v7474 = vsel %vm1254, %v7337, 0
    %v7477 = vsel %vm1254, %v7338, 0
    %v7480 = vsel %vm1254, %v7339, 0
    %v7483 = vsel %vm1254, %v7340, 0
    %v7486 = vsel %vm1254, %v7341, 0
    %v7489 = vsel %vm1254, %v7342, 0
    %v7492 = vsel %vm1520, %v7343, 0
    %7494 = vmatpush.msra.mxu0 0.0
    %7495 = vmatpush.msra.mxu0 0.0
    %7496 = vmatpush.msra.mxu0 0.0
    %7497 = vmatpush.msra.mxu0 0.0
    %7498 = vmatpush.msra.mxu0 0.0
    %7499 = vmatpush.msra.mxu0 0.0
    %7500 = vmatpush.msra.mxu0 0.0
    %7501 = vmatpush.msra.mxu0 0.0
    %7502 = vmatpush.msra.mxu0 0.0
    %7503 = vmatpush.msra.mxu0 0.0
    %7504 = vmatpush.msra.mxu0 0.0
    %7505 = vmatpush.msra.mxu0 0.0
    %7506 = vmatpush.msra.mxu0 0.0
    %7507 = vmatpush.msra.mxu0 0.0
    %7508 = vmatpush.msra.mxu0 0.0
    %7509 = vmatpush.msra.mxu0 %v7492
    %7510 = vmatmul.f32.gmra.mxu0 %v7345
    %v7511 = vpop.f32.mrf.mxu0
    %v7512 = vadd.f32 0.0, %v7511
    %7513 = vmatmul.f32.gmra.mxu0 %v7348
    %v7514 = vpop.f32.mrf.mxu0
    %v7515 = vadd.f32 0.0, %v7514
    %7516 = vmatmul.f32.gmra.mxu0 %v7351
    %v7517 = vpop.f32.mrf.mxu0
    %v7518 = vadd.f32 0.0, %v7517
    %7519 = vmatmul.f32.gmra.mxu0 %v7354
    %v7520 = vpop.f32.mrf.mxu0
    %v7521 = vadd.f32 0.0, %v7520
    %7522 = vmatmul.f32.gmra.mxu0 %v7357
    %v7523 = vpop.f32.mrf.mxu0
    %v7524 = vadd.f32 0.0, %v7523
    %7525 = vmatmul.f32.gmra.mxu0 %v7360
    %v7526 = vpop.f32.mrf.mxu0
    %v7527 = vadd.f32 0.0, %v7526
    %7528 = vmatmul.f32.gmra.mxu0 %v7363
    %v7529 = vpop.f32.mrf.mxu0
    %7530 = vmatmul.f32.gmra.mxu0 %v7366
    %v7531 = vpop.f32.mrf.mxu0
    %v7532 = vadd.f32 0.0, %v7531
    %7533 = vmatmul.f32.gmra.mxu0 %v7369
    %v7534 = vpop.f32.mrf.mxu0
    %v7535 = vadd.f32 0.0, %v7534
    %7536 = vmatmul.f32.gmra.mxu0 %v7372
    %v7537 = vpop.f32.mrf.mxu0
    %v7538 = vadd.f32 0.0, %v7537
    %7539 = vmatmul.f32.gmra.mxu0 %v7375
    %v7540 = vpop.f32.mrf.mxu0
    %v7541 = vadd.f32 0.0, %v7540
    %7542 = vmatmul.f32.gmra.mxu0 %v7378
    %v7543 = vpop.f32.mrf.mxu0
    %v7544 = vadd.f32 0.0, %v7543
    %7545 = vmatmul.f32.gmra.mxu0 %v7381
    %v7546 = vpop.f32.mrf.mxu0
    %v7547 = vadd.f32 0.0, %v7546
    %7548 = vmatmul.f32.gmra.mxu0 %v7384
    %v7549 = vpop.f32.mrf.mxu0
    %7550 = vmatmul.f32.gmra.mxu0 %v7387
    %v7551 = vpop.f32.mrf.mxu0
    %v7552 = vadd.f32 0.0, %v7551
    %7553 = vmatmul.f32.gmra.mxu0 %v7390
    %v7554 = vpop.f32.mrf.mxu0
    %v7555 = vadd.f32 0.0, %v7554
    %7556 = vmatmul.f32.gmra.mxu0 %v7393
    %v7557 = vpop.f32.mrf.mxu0
    %v7558 = vadd.f32 0.0, %v7557
    %7559 = vmatmul.f32.gmra.mxu0 %v7396
    %v7560 = vpop.f32.mrf.mxu0
    %v7561 = vadd.f32 0.0, %v7560
    %7562 = vmatmul.f32.gmra.mxu0 %v7399
    %v7563 = vpop.f32.mrf.mxu0
    %v7564 = vadd.f32 0.0, %v7563
    %7565 = vmatmul.f32.gmra.mxu0 %v7402
    %v7566 = vpop.f32.mrf.mxu0
    %v7567 = vadd.f32 0.0, %v7566
    %7568 = vmatmul.f32.gmra.mxu0 %v7405
    %v7569 = vpop.f32.mrf.mxu0
    %7570 = vmatmul.f32.gmra.mxu0 %v7408
    %v7571 = vpop.f32.mrf.mxu0
    %v7572 = vadd.f32 0.0, %v7571
    %7573 = vmatmul.f32.gmra.mxu0 %v7411
    %v7574 = vpop.f32.mrf.mxu0
    %v7575 = vadd.f32 0.0, %v7574
    %7576 = vmatmul.f32.gmra.mxu0 %v7414
    %v7577 = vpop.f32.mrf.mxu0
    %v7578 = vadd.f32 0.0, %v7577
    %7579 = vmatmul.f32.gmra.mxu0 %v7417
    %v7580 = vpop.f32.mrf.mxu0
    %v7581 = vadd.f32 0.0, %v7580
    %7582 = vmatmul.f32.gmra.mxu0 %v7420
    %v7583 = vpop.f32.mrf.mxu0
    %v7584 = vadd.f32 0.0, %v7583
    %7585 = vmatmul.f32.gmra.mxu0 %v7423
    %v7586 = vpop.f32.mrf.mxu0
    %v7587 = vadd.f32 0.0, %v7586
    %7588 = vmatmul.f32.gmra.mxu0 %v7426
    %v7589 = vpop.f32.mrf.mxu0
    %7590 = vmatmul.f32.gmra.mxu0 %v7429
    %v7591 = vpop.f32.mrf.mxu0
    %v7592 = vadd.f32 0.0, %v7591
    %7593 = vmatmul.f32.gmra.mxu0 %v7432
    %v7594 = vpop.f32.mrf.mxu0
    %v7595 = vadd.f32 0.0, %v7594
    %7596 = vmatmul.f32.gmra.mxu0 %v7435
    %v7597 = vpop.f32.mrf.mxu0
    %v7598 = vadd.f32 0.0, %v7597
    %7599 = vmatmul.f32.gmra.mxu0 %v7438
    %v7600 = vpop.f32.mrf.mxu0
    %v7601 = vadd.f32 0.0, %v7600
    %7602 = vmatmul.f32.gmra.mxu0 %v7441
    %v7603 = vpop.f32.mrf.mxu0
    %v7604 = vadd.f32 0.0, %v7603
    %7605 = vmatmul.f32.gmra.mxu0 %v7444
    %v7606 = vpop.f32.mrf.mxu0
    %v7607 = vadd.f32 0.0, %v7606
    %7608 = vmatmul.f32.gmra.mxu0 %v7447
    %v7609 = vpop.f32.mrf.mxu0
    %7610 = vmatmul.f32.gmra.mxu0 %v7450
    %v7611 = vpop.f32.mrf.mxu0
    %7612 = vmatmul.f32.gmra.mxu0 %v7453
    %v7613 = vpop.f32.mrf.mxu0
    %7614 = vmatmul.f32.gmra.mxu0 %v7456
    %v7615 = vpop.f32.mrf.mxu0
    %7616 = vmatmul.f32.gmra.mxu0 %v7459
    %v7617 = vpop.f32.mrf.mxu0
    %7618 = vmatmul.f32.gmra.mxu0 %v7462
    %v7619 = vpop.f32.mrf.mxu0
    %7620 = vmatmul.f32.gmra.mxu0 %v7465
    %v7621 = vpop.f32.mrf.mxu0
    %7622 = vmatmul.f32.gmra.mxu0 %v7468
    %v7623 = vpop.f32.mrf.mxu0
    %7624 = vmatmul.f32.gmra.mxu0 %v7471
    %v7625 = vpop.f32.mrf.mxu0
    %7626 = vmatmul.f32.gmra.mxu0 %v7474
    %v7627 = vpop.f32.mrf.mxu0
    %7628 = vmatmul.f32.gmra.mxu0 %v7477
    %v7629 = vpop.f32.mrf.mxu0
    %7630 = vmatmul.f32.gmra.mxu0 %v7480
    %v7631 = vpop.f32.mrf.mxu0
    %7632 = vmatmul.f32.gmra.mxu0 %v7483
    %v7633 = vpop.f32.mrf.mxu0
    %7634 = vmatmul.f32.gmra.mxu0 %v7486
    %v7635 = vpop.f32.mrf.mxu0
    %7636 = vmatmul.f32.gmra.mxu0 %v7489
    %v7637 = vpop.f32.mrf.mxu0
    %7638 = vdwg.mxu0
    %v7639 = vadd.f32 %v7264, %v7512
    %v7640 = vadd.f32 %v7265, %v7515
    %v7641 = vadd.f32 %v7266, %v7518
    %v7642 = vadd.f32 %v7267, %v7521
    %v7643 = vadd.f32 %v7268, %v7524
    %v7644 = vadd.f32 %v7269, %v7527
    %v7645 = vadd.f32 %v7270, %v7532
    %v7646 = vadd.f32 %v7271, %v7535
    %v7647 = vadd.f32 %v7272, %v7538
    %v7648 = vadd.f32 %v7273, %v7541
    %v7649 = vadd.f32 %v7274, %v7544
    %v7650 = vadd.f32 %v7275, %v7547
    %v7651 = vadd.f32 %v7276, %v7552
    %v7652 = vadd.f32 %v7277, %v7555
    %v7653 = vadd.f32 %v7278, %v7558
    %v7654 = vadd.f32 %v7279, %v7561
    %v7655 = vadd.f32 %v7280, %v7564
    %v7656 = vadd.f32 %v7281, %v7567
    %v7657 = vadd.f32 %v7282, %v7572
    %v7658 = vadd.f32 %v7283, %v7575
    %v7659 = vadd.f32 %v7284, %v7578
    %v7660 = vadd.f32 %v7285, %v7581
    %v7661 = vadd.f32 %v7286, %v7584
    %v7662 = vadd.f32 %v7287, %v7587
    %v7663 = vadd.f32 %v7288, %v7592
    %v7664 = vadd.f32 %v7289, %v7595
    %v7665 = vadd.f32 %v7290, %v7598
    %v7666 = vadd.f32 %v7291, %v7601
    %v7667 = vadd.f32 %v7292, %v7604
    %v7668 = vadd.f32 %v7293, %v7607
    %v7669 = vld [vmem:[#allocation2 + $0x58] sm:$0xff]
    %v7670 = vld [vmem:[#allocation2 + $0x60] sm:$0xff]
    %v7671 = vld [vmem:[#allocation2 + $0x68] sm:$0xff]
    %v7672 = vld [vmem:[#allocation2 + $0x70] sm:$0xff]
    %v7673 = vld [vmem:[#allocation2 + $0x78] sm:$0xff]
    %v7674 = vld [vmem:[#allocation2 + $0x80] sm:$0xff]
    %v7675 = vld [vmem:[#allocation2 + $0x88] sm:$0xff]
    %v7676 = vld [vmem:[#allocation2 + $0x90] sm:$0xff]
    %v7677 = vld [vmem:[#allocation2 + $0x98] sm:$0xff]
    %v7678 = vld [vmem:[#allocation2 + $0xa0] sm:$0xff]
    %v7679 = vld [vmem:[#allocation2 + $0xa8] sm:$0xff]
    %v7680 = vld [vmem:[#allocation2 + $0xb0] sm:$0xff]
    %v7681 = vld [vmem:[#allocation2 + $0xb8] sm:$0xff]
    %v7682 = vld [vmem:[#allocation2 + $0xc0] sm:$0xff]
    %v7683 = vld [vmem:[#allocation2 + $0xc8] sm:$0xff]
    %v7684 = vld [vmem:[#allocation2 + $0xd0] sm:$0xff]
    %v7685 = vld [vmem:[#allocation2 + $0xd8] sm:$0xff]
    %v7686 = vld [vmem:[#allocation2 + $0xe0] sm:$0xff]
    %v7687 = vld [vmem:[#allocation2 + $0xe8] sm:$0xff]
    %v7688 = vld [vmem:[#allocation2 + $0xf0] sm:$0xff]
    %v7689 = vld [vmem:[#allocation2 + $0xf8] sm:$0xff]
    %v7690 = vld [vmem:[#allocation2 + $0x100] sm:$0xff]
    %v7691 = vld [vmem:[#allocation2 + $0x108] sm:$0xff]
    %v7692 = vld [vmem:[#allocation2 + $0x110] sm:$0xff]
    %v7693 = vld [vmem:[#allocation2 + $0x118] sm:$0xff]
    %v7694 = vld [vmem:[#allocation2 + $0x120] sm:$0xff]
    %v7695 = vld [vmem:[#allocation2 + $0x128] sm:$0xff]
    %v7696 = vld [vmem:[#allocation2 + $0x130] sm:$0xff]
    %v7697 = vld [vmem:[#allocation2 + $0x138] sm:$0xff]
    %v7698 = vld [vmem:[#allocation2 + $0x140] sm:$0xff]
    %v7699 = vld [vmem:[#allocation2 + $0x148] sm:$0xff]
    %v7700 = vld [vmem:[#allocation2 + $0x150] sm:$0xff]
    %v7701 = vld [vmem:[#allocation2 + $0x158] sm:$0xff]
    %v7702 = vld [vmem:[#allocation2 + $0x160] sm:$0xff]
    %v7703 = vld [vmem:[#allocation2 + $0x168] sm:$0xff]
    %v7704 = vld [vmem:[#allocation2 + $0x170] sm:$0xff]
    %v7705 = vld [vmem:[#allocation2 + $0x178] sm:$0xff]
    %v7706 = vld [vmem:[#allocation2 + $0x180] sm:$0xff]
    %v7707 = vld [vmem:[#allocation2 + $0x188] sm:$0xff]
    %v7708 = vld [vmem:[#allocation2 + $0x190] sm:$0xff]
    %v7709 = vld [vmem:[#allocation2 + $0x198] sm:$0xff]
    %v7710 = vld [vmem:[#allocation2 + $0x1a0] sm:$0xff]
    %v7711 = vld [vmem:[#allocation2 + $0x1a8] sm:$0xff]
    %v7712 = vld [vmem:[#allocation2 + $0x1b0] sm:$0xff]
    %v7713 = vld [vmem:[#allocation2 + $0x1b8] sm:$0xff]
    %v7714 = vld [vmem:[#allocation2 + $0x1c0] sm:$0xff]
    %v7715 = vld [vmem:[#allocation2 + $0x1c8] sm:$0xff]
    %v7716 = vld [vmem:[#allocation2 + $0x1d0] sm:$0xff]
    %v7717 = vld [vmem:[#allocation2 + $0x1d8] sm:$0xff]
    %v7718 = vld [vmem:[%s3 + $0x66] sm:$0x3f]
    %v7720 = vsel %vm1254, %v7669, 0
    %v7723 = vsel %vm1254, %v7670, 0
    %v7726 = vsel %vm1254, %v7671, 0
    %v7729 = vsel %vm1254, %v7672, 0
    %v7732 = vsel %vm1254, %v7673, 0
    %v7735 = vsel %vm1254, %v7674, 0
    %v7738 = vsel %vm1254, %v7675, 0
    %v7741 = vsel %vm1254, %v7676, 0
    %v7744 = vsel %vm1254, %v7677, 0
    %v7747 = vsel %vm1254, %v7678, 0
    %v7750 = vsel %vm1254, %v7679, 0
    %v7753 = vsel %vm1254, %v7680, 0
    %v7756 = vsel %vm1254, %v7681, 0
    %v7759 = vsel %vm1254, %v7682, 0
    %v7762 = vsel %vm1254, %v7683, 0
    %v7765 = vsel %vm1254, %v7684, 0
    %v7768 = vsel %vm1254, %v7685, 0
    %v7771 = vsel %vm1254, %v7686, 0
    %v7774 = vsel %vm1254, %v7687, 0
    %v7777 = vsel %vm1254, %v7688, 0
    %v7780 = vsel %vm1254, %v7689, 0
    %v7783 = vsel %vm1254, %v7690, 0
    %v7786 = vsel %vm1254, %v7691, 0
    %v7789 = vsel %vm1254, %v7692, 0
    %v7792 = vsel %vm1254, %v7693, 0
    %v7795 = vsel %vm1254, %v7694, 0
    %v7798 = vsel %vm1254, %v7695, 0
    %v7801 = vsel %vm1254, %v7696, 0
    %v7804 = vsel %vm1254, %v7697, 0
    %v7807 = vsel %vm1254, %v7698, 0
    %v7810 = vsel %vm1254, %v7699, 0
    %v7813 = vsel %vm1254, %v7700, 0
    %v7816 = vsel %vm1254, %v7701, 0
    %v7819 = vsel %vm1254, %v7702, 0
    %v7822 = vsel %vm1254, %v7703, 0
    %v7825 = vsel %vm1254, %v7704, 0
    %v7828 = vsel %vm1254, %v7705, 0
    %v7831 = vsel %vm1254, %v7706, 0
    %v7834 = vsel %vm1254, %v7707, 0
    %v7837 = vsel %vm1254, %v7708, 0
    %v7840 = vsel %vm1254, %v7709, 0
    %v7843 = vsel %vm1254, %v7710, 0
    %v7846 = vsel %vm1254, %v7711, 0
    %v7849 = vsel %vm1254, %v7712, 0
    %v7852 = vsel %vm1254, %v7713, 0
    %v7855 = vsel %vm1254, %v7714, 0
    %v7858 = vsel %vm1254, %v7715, 0
    %v7861 = vsel %vm1254, %v7716, 0
    %v7864 = vsel %vm1254, %v7717, 0
    %v7867 = vsel %vm1520, %v7718, 0
    %7869 = vmatpush.msra.mxu0 0.0
    %7870 = vmatpush.msra.mxu0 0.0
    %7871 = vmatpush.msra.mxu0 0.0
    %7872 = vmatpush.msra.mxu0 0.0
    %7873 = vmatpush.msra.mxu0 0.0
    %7874 = vmatpush.msra.mxu0 0.0
    %7875 = vmatpush.msra.mxu0 0.0
    %7876 = vmatpush.msra.mxu0 0.0
    %7877 = vmatpush.msra.mxu0 0.0
    %7878 = vmatpush.msra.mxu0 0.0
    %7879 = vmatpush.msra.mxu0 0.0
    %7880 = vmatpush.msra.mxu0 0.0
    %7881 = vmatpush.msra.mxu0 0.0
    %7882 = vmatpush.msra.mxu0 0.0
    %7883 = vmatpush.msra.mxu0 0.0
    %7884 = vmatpush.msra.mxu0 %v7867
    %7885 = vmatmul.f32.gmra.mxu0 %v7720
    %v7886 = vpop.f32.mrf.mxu0
    %v7887 = vadd.f32 0.0, %v7886
    %7888 = vmatmul.f32.gmra.mxu0 %v7723
    %v7889 = vpop.f32.mrf.mxu0
    %v7890 = vadd.f32 0.0, %v7889
    %7891 = vmatmul.f32.gmra.mxu0 %v7726
    %v7892 = vpop.f32.mrf.mxu0
    %v7893 = vadd.f32 0.0, %v7892
    %7894 = vmatmul.f32.gmra.mxu0 %v7729
    %v7895 = vpop.f32.mrf.mxu0
    %v7896 = vadd.f32 0.0, %v7895
    %7897 = vmatmul.f32.gmra.mxu0 %v7732
    %v7898 = vpop.f32.mrf.mxu0
    %v7899 = vadd.f32 0.0, %v7898
    %7900 = vmatmul.f32.gmra.mxu0 %v7735
    %v7901 = vpop.f32.mrf.mxu0
    %v7902 = vadd.f32 0.0, %v7901
    %7903 = vmatmul.f32.gmra.mxu0 %v7738
    %v7904 = vpop.f32.mrf.mxu0
    %7905 = vmatmul.f32.gmra.mxu0 %v7741
    %v7906 = vpop.f32.mrf.mxu0
    %v7907 = vadd.f32 0.0, %v7906
    %7908 = vmatmul.f32.gmra.mxu0 %v7744
    %v7909 = vpop.f32.mrf.mxu0
    %v7910 = vadd.f32 0.0, %v7909
    %7911 = vmatmul.f32.gmra.mxu0 %v7747
    %v7912 = vpop.f32.mrf.mxu0
    %v7913 = vadd.f32 0.0, %v7912
    %7914 = vmatmul.f32.gmra.mxu0 %v7750
    %v7915 = vpop.f32.mrf.mxu0
    %v7916 = vadd.f32 0.0, %v7915
    %7917 = vmatmul.f32.gmra.mxu0 %v7753
    %v7918 = vpop.f32.mrf.mxu0
    %v7919 = vadd.f32 0.0, %v7918
    %7920 = vmatmul.f32.gmra.mxu0 %v7756
    %v7921 = vpop.f32.mrf.mxu0
    %v7922 = vadd.f32 0.0, %v7921
    %7923 = vmatmul.f32.gmra.mxu0 %v7759
    %v7924 = vpop.f32.mrf.mxu0
    %7925 = vmatmul.f32.gmra.mxu0 %v7762
    %v7926 = vpop.f32.mrf.mxu0
    %v7927 = vadd.f32 0.0, %v7926
    %7928 = vmatmul.f32.gmra.mxu0 %v7765
    %v7929 = vpop.f32.mrf.mxu0
    %v7930 = vadd.f32 0.0, %v7929
    %7931 = vmatmul.f32.gmra.mxu0 %v7768
    %v7932 = vpop.f32.mrf.mxu0
    %v7933 = vadd.f32 0.0, %v7932
    %7934 = vmatmul.f32.gmra.mxu0 %v7771
    %v7935 = vpop.f32.mrf.mxu0
    %v7936 = vadd.f32 0.0, %v7935
    %7937 = vmatmul.f32.gmra.mxu0 %v7774
    %v7938 = vpop.f32.mrf.mxu0
    %v7939 = vadd.f32 0.0, %v7938
    %7940 = vmatmul.f32.gmra.mxu0 %v7777
    %v7941 = vpop.f32.mrf.mxu0
    %v7942 = vadd.f32 0.0, %v7941
    %7943 = vmatmul.f32.gmra.mxu0 %v7780
    %v7944 = vpop.f32.mrf.mxu0
    %7945 = vmatmul.f32.gmra.mxu0 %v7783
    %v7946 = vpop.f32.mrf.mxu0
    %v7947 = vadd.f32 0.0, %v7946
    %7948 = vmatmul.f32.gmra.mxu0 %v7786
    %v7949 = vpop.f32.mrf.mxu0
    %v7950 = vadd.f32 0.0, %v7949
    %7951 = vmatmul.f32.gmra.mxu0 %v7789
    %v7952 = vpop.f32.mrf.mxu0
    %v7953 = vadd.f32 0.0, %v7952
    %7954 = vmatmul.f32.gmra.mxu0 %v7792
    %v7955 = vpop.f32.mrf.mxu0
    %v7956 = vadd.f32 0.0, %v7955
    %7957 = vmatmul.f32.gmra.mxu0 %v7795
    %v7958 = vpop.f32.mrf.mxu0
    %v7959 = vadd.f32 0.0, %v7958
    %7960 = vmatmul.f32.gmra.mxu0 %v7798
    %v7961 = vpop.f32.mrf.mxu0
    %v7962 = vadd.f32 0.0, %v7961
    %7963 = vmatmul.f32.gmra.mxu0 %v7801
    %v7964 = vpop.f32.mrf.mxu0
    %7965 = vmatmul.f32.gmra.mxu0 %v7804
    %v7966 = vpop.f32.mrf.mxu0
    %v7967 = vadd.f32 0.0, %v7966
    %7968 = vmatmul.f32.gmra.mxu0 %v7807
    %v7969 = vpop.f32.mrf.mxu0
    %v7970 = vadd.f32 0.0, %v7969
    %7971 = vmatmul.f32.gmra.mxu0 %v7810
    %v7972 = vpop.f32.mrf.mxu0
    %v7973 = vadd.f32 0.0, %v7972
    %7974 = vmatmul.f32.gmra.mxu0 %v7813
    %v7975 = vpop.f32.mrf.mxu0
    %v7976 = vadd.f32 0.0, %v7975
    %7977 = vmatmul.f32.gmra.mxu0 %v7816
    %v7978 = vpop.f32.mrf.mxu0
    %v7979 = vadd.f32 0.0, %v7978
    %7980 = vmatmul.f32.gmra.mxu0 %v7819
    %v7981 = vpop.f32.mrf.mxu0
    %v7982 = vadd.f32 0.0, %v7981
    %7983 = vmatmul.f32.gmra.mxu0 %v7822
    %v7984 = vpop.f32.mrf.mxu0
    %7985 = vmatmul.f32.gmra.mxu0 %v7825
    %v7986 = vpop.f32.mrf.mxu0
    %7987 = vmatmul.f32.gmra.mxu0 %v7828
    %v7988 = vpop.f32.mrf.mxu0
    %7989 = vmatmul.f32.gmra.mxu0 %v7831
    %v7990 = vpop.f32.mrf.mxu0
    %7991 = vmatmul.f32.gmra.mxu0 %v7834
    %v7992 = vpop.f32.mrf.mxu0
    %7993 = vmatmul.f32.gmra.mxu0 %v7837
    %v7994 = vpop.f32.mrf.mxu0
    %7995 = vmatmul.f32.gmra.mxu0 %v7840
    %v7996 = vpop.f32.mrf.mxu0
    %7997 = vmatmul.f32.gmra.mxu0 %v7843
    %v7998 = vpop.f32.mrf.mxu0
    %7999 = vmatmul.f32.gmra.mxu0 %v7846
    %v8000 = vpop.f32.mrf.mxu0
    %8001 = vmatmul.f32.gmra.mxu0 %v7849
    %v8002 = vpop.f32.mrf.mxu0
    %8003 = vmatmul.f32.gmra.mxu0 %v7852
    %v8004 = vpop.f32.mrf.mxu0
    %8005 = vmatmul.f32.gmra.mxu0 %v7855
    %v8006 = vpop.f32.mrf.mxu0
    %8007 = vmatmul.f32.gmra.mxu0 %v7858
    %v8008 = vpop.f32.mrf.mxu0
    %8009 = vmatmul.f32.gmra.mxu0 %v7861
    %v8010 = vpop.f32.mrf.mxu0
    %8011 = vmatmul.f32.gmra.mxu0 %v7864
    %v8012 = vpop.f32.mrf.mxu0
    %8013 = vdwg.mxu0
    %v8014 = vadd.f32 %v7639, %v7887
    %v8015 = vadd.f32 %v7640, %v7890
    %v8016 = vadd.f32 %v7641, %v7893
    %v8017 = vadd.f32 %v7642, %v7896
    %v8018 = vadd.f32 %v7643, %v7899
    %v8019 = vadd.f32 %v7644, %v7902
    %v8020 = vadd.f32 %v7645, %v7907
    %v8021 = vadd.f32 %v7646, %v7910
    %v8022 = vadd.f32 %v7647, %v7913
    %v8023 = vadd.f32 %v7648, %v7916
    %v8024 = vadd.f32 %v7649, %v7919
    %v8025 = vadd.f32 %v7650, %v7922
    %v8026 = vadd.f32 %v7651, %v7927
    %v8027 = vadd.f32 %v7652, %v7930
    %v8028 = vadd.f32 %v7653, %v7933
    %v8029 = vadd.f32 %v7654, %v7936
    %v8030 = vadd.f32 %v7655, %v7939
    %v8031 = vadd.f32 %v7656, %v7942
    %v8032 = vadd.f32 %v7657, %v7947
    %v8033 = vadd.f32 %v7658, %v7950
    %v8034 = vadd.f32 %v7659, %v7953
    %v8035 = vadd.f32 %v7660, %v7956
    %v8036 = vadd.f32 %v7661, %v7959
    %v8037 = vadd.f32 %v7662, %v7962
    %v8038 = vadd.f32 %v7663, %v7967
    %v8039 = vadd.f32 %v7664, %v7970
    %v8040 = vadd.f32 %v7665, %v7973
    %v8041 = vadd.f32 %v7666, %v7976
    %v8042 = vadd.f32 %v7667, %v7979
    %v8043 = vadd.f32 %v7668, %v7982
    %v8044 = vld [vmem:[#allocation2 + $0x5a] sm:$0xff]
    %v8045 = vld [vmem:[#allocation2 + $0x62] sm:$0xff]
    %v8046 = vld [vmem:[#allocation2 + $0x6a] sm:$0xff]
    %v8047 = vld [vmem:[#allocation2 + $0x72] sm:$0xff]
    %v8048 = vld [vmem:[#allocation2 + $0x7a] sm:$0xff]
    %v8049 = vld [vmem:[#allocation2 + $0x82] sm:$0xff]
    %v8050 = vld [vmem:[#allocation2 + $0x8a] sm:$0xff]
    %v8051 = vld [vmem:[#allocation2 + $0x92] sm:$0xff]
    %v8052 = vld [vmem:[#allocation2 + $0x9a] sm:$0xff]
    %v8053 = vld [vmem:[#allocation2 + $0xa2] sm:$0xff]
    %v8054 = vld [vmem:[#allocation2 + $0xaa] sm:$0xff]
    %v8055 = vld [vmem:[#allocation2 + $0xb2] sm:$0xff]
    %v8056 = vld [vmem:[#allocation2 + $0xba] sm:$0xff]
    %v8057 = vld [vmem:[#allocation2 + $0xc2] sm:$0xff]
    %v8058 = vld [vmem:[#allocation2 + $0xca] sm:$0xff]
    %v8059 = vld [vmem:[#allocation2 + $0xd2] sm:$0xff]
    %v8060 = vld [vmem:[#allocation2 + $0xda] sm:$0xff]
    %v8061 = vld [vmem:[#allocation2 + $0xe2] sm:$0xff]
    %v8062 = vld [vmem:[#allocation2 + $0xea] sm:$0xff]
    %v8063 = vld [vmem:[#allocation2 + $0xf2] sm:$0xff]
    %v8064 = vld [vmem:[#allocation2 + $0xfa] sm:$0xff]
    %v8065 = vld [vmem:[#allocation2 + $0x102] sm:$0xff]
    %v8066 = vld [vmem:[#allocation2 + $0x10a] sm:$0xff]
    %v8067 = vld [vmem:[#allocation2 + $0x112] sm:$0xff]
    %v8068 = vld [vmem:[#allocation2 + $0x11a] sm:$0xff]
    %v8069 = vld [vmem:[#allocation2 + $0x122] sm:$0xff]
    %v8070 = vld [vmem:[#allocation2 + $0x12a] sm:$0xff]
    %v8071 = vld [vmem:[#allocation2 + $0x132] sm:$0xff]
    %v8072 = vld [vmem:[#allocation2 + $0x13a] sm:$0xff]
    %v8073 = vld [vmem:[#allocation2 + $0x142] sm:$0xff]
    %v8074 = vld [vmem:[#allocation2 + $0x14a] sm:$0xff]
    %v8075 = vld [vmem:[#allocation2 + $0x152] sm:$0xff]
    %v8076 = vld [vmem:[#allocation2 + $0x15a] sm:$0xff]
    %v8077 = vld [vmem:[#allocation2 + $0x162] sm:$0xff]
    %v8078 = vld [vmem:[#allocation2 + $0x16a] sm:$0xff]
    %v8079 = vld [vmem:[#allocation2 + $0x172] sm:$0xff]
    %v8080 = vld [vmem:[#allocation2 + $0x17a] sm:$0xff]
    %v8081 = vld [vmem:[#allocation2 + $0x182] sm:$0xff]
    %v8082 = vld [vmem:[#allocation2 + $0x18a] sm:$0xff]
    %v8083 = vld [vmem:[#allocation2 + $0x192] sm:$0xff]
    %v8084 = vld [vmem:[#allocation2 + $0x19a] sm:$0xff]
    %v8085 = vld [vmem:[#allocation2 + $0x1a2] sm:$0xff]
    %v8086 = vld [vmem:[#allocation2 + $0x1aa] sm:$0xff]
    %v8087 = vld [vmem:[#allocation2 + $0x1b2] sm:$0xff]
    %v8088 = vld [vmem:[#allocation2 + $0x1ba] sm:$0xff]
    %v8089 = vld [vmem:[#allocation2 + $0x1c2] sm:$0xff]
    %v8090 = vld [vmem:[#allocation2 + $0x1ca] sm:$0xff]
    %v8091 = vld [vmem:[#allocation2 + $0x1d2] sm:$0xff]
    %v8092 = vld [vmem:[#allocation2 + $0x1da] sm:$0xff]
    %v8093 = vld [vmem:[%s3 + $0x6c] sm:$0x3f]
    %v8095 = vsel %vm1254, %v8044, 0
    %v8098 = vsel %vm1254, %v8045, 0
    %v8101 = vsel %vm1254, %v8046, 0
    %v8104 = vsel %vm1254, %v8047, 0
    %v8107 = vsel %vm1254, %v8048, 0
    %v8110 = vsel %vm1254, %v8049, 0
    %v8113 = vsel %vm1254, %v8050, 0
    %v8116 = vsel %vm1254, %v8051, 0
    %v8119 = vsel %vm1254, %v8052, 0
    %v8122 = vsel %vm1254, %v8053, 0
    %v8125 = vsel %vm1254, %v8054, 0
    %v8128 = vsel %vm1254, %v8055, 0
    %v8131 = vsel %vm1254, %v8056, 0
    %v8134 = vsel %vm1254, %v8057, 0
    %v8137 = vsel %vm1254, %v8058, 0
    %v8140 = vsel %vm1254, %v8059, 0
    %v8143 = vsel %vm1254, %v8060, 0
    %v8146 = vsel %vm1254, %v8061, 0
    %v8149 = vsel %vm1254, %v8062, 0
    %v8152 = vsel %vm1254, %v8063, 0
    %v8155 = vsel %vm1254, %v8064, 0
    %v8158 = vsel %vm1254, %v8065, 0
    %v8161 = vsel %vm1254, %v8066, 0
    %v8164 = vsel %vm1254, %v8067, 0
    %v8167 = vsel %vm1254, %v8068, 0
    %v8170 = vsel %vm1254, %v8069, 0
    %v8173 = vsel %vm1254, %v8070, 0
    %v8176 = vsel %vm1254, %v8071, 0
    %v8179 = vsel %vm1254, %v8072, 0
    %v8182 = vsel %vm1254, %v8073, 0
    %v8185 = vsel %vm1254, %v8074, 0
    %v8188 = vsel %vm1254, %v8075, 0
    %v8191 = vsel %vm1254, %v8076, 0
    %v8194 = vsel %vm1254, %v8077, 0
    %v8197 = vsel %vm1254, %v8078, 0
    %v8200 = vsel %vm1254, %v8079, 0
    %v8203 = vsel %vm1254, %v8080, 0
    %v8206 = vsel %vm1254, %v8081, 0
    %v8209 = vsel %vm1254, %v8082, 0
    %v8212 = vsel %vm1254, %v8083, 0
    %v8215 = vsel %vm1254, %v8084, 0
    %v8218 = vsel %vm1254, %v8085, 0
    %v8221 = vsel %vm1254, %v8086, 0
    %v8224 = vsel %vm1254, %v8087, 0
    %v8227 = vsel %vm1254, %v8088, 0
    %v8230 = vsel %vm1254, %v8089, 0
    %v8233 = vsel %vm1254, %v8090, 0
    %v8236 = vsel %vm1254, %v8091, 0
    %v8239 = vsel %vm1254, %v8092, 0
    %v8242 = vsel %vm1520, %v8093, 0
    %8244 = vmatpush.msra.mxu0 0.0
    %8245 = vmatpush.msra.mxu0 0.0
    %8246 = vmatpush.msra.mxu0 0.0
    %8247 = vmatpush.msra.mxu0 0.0
    %8248 = vmatpush.msra.mxu0 0.0
    %8249 = vmatpush.msra.mxu0 0.0
    %8250 = vmatpush.msra.mxu0 0.0
    %8251 = vmatpush.msra.mxu0 0.0
    %8252 = vmatpush.msra.mxu0 0.0
    %8253 = vmatpush.msra.mxu0 0.0
    %8254 = vmatpush.msra.mxu0 0.0
    %8255 = vmatpush.msra.mxu0 0.0
    %8256 = vmatpush.msra.mxu0 0.0
    %8257 = vmatpush.msra.mxu0 0.0
    %8258 = vmatpush.msra.mxu0 0.0
    %8259 = vmatpush.msra.mxu0 %v8242
    %8260 = vmatmul.f32.gmra.mxu0 %v8095
    %v8261 = vpop.f32.mrf.mxu0
    %v8262 = vadd.f32 0.0, %v8261
    %8263 = vmatmul.f32.gmra.mxu0 %v8098
    %v8264 = vpop.f32.mrf.mxu0
    %v8265 = vadd.f32 0.0, %v8264
    %8266 = vmatmul.f32.gmra.mxu0 %v8101
    %v8267 = vpop.f32.mrf.mxu0
    %v8268 = vadd.f32 0.0, %v8267
    %8269 = vmatmul.f32.gmra.mxu0 %v8104
    %v8270 = vpop.f32.mrf.mxu0
    %v8271 = vadd.f32 0.0, %v8270
    %8272 = vmatmul.f32.gmra.mxu0 %v8107
    %v8273 = vpop.f32.mrf.mxu0
    %v8274 = vadd.f32 0.0, %v8273
    %8275 = vmatmul.f32.gmra.mxu0 %v8110
    %v8276 = vpop.f32.mrf.mxu0
    %v8277 = vadd.f32 0.0, %v8276
    %8278 = vmatmul.f32.gmra.mxu0 %v8113
    %v8279 = vpop.f32.mrf.mxu0
    %8280 = vmatmul.f32.gmra.mxu0 %v8116
    %v8281 = vpop.f32.mrf.mxu0
    %v8282 = vadd.f32 0.0, %v8281
    %8283 = vmatmul.f32.gmra.mxu0 %v8119
    %v8284 = vpop.f32.mrf.mxu0
    %v8285 = vadd.f32 0.0, %v8284
    %8286 = vmatmul.f32.gmra.mxu0 %v8122
    %v8287 = vpop.f32.mrf.mxu0
    %v8288 = vadd.f32 0.0, %v8287
    %8289 = vmatmul.f32.gmra.mxu0 %v8125
    %v8290 = vpop.f32.mrf.mxu0
    %v8291 = vadd.f32 0.0, %v8290
    %8292 = vmatmul.f32.gmra.mxu0 %v8128
    %v8293 = vpop.f32.mrf.mxu0
    %v8294 = vadd.f32 0.0, %v8293
    %8295 = vmatmul.f32.gmra.mxu0 %v8131
    %v8296 = vpop.f32.mrf.mxu0
    %v8297 = vadd.f32 0.0, %v8296
    %8298 = vmatmul.f32.gmra.mxu0 %v8134
    %v8299 = vpop.f32.mrf.mxu0
    %8300 = vmatmul.f32.gmra.mxu0 %v8137
    %v8301 = vpop.f32.mrf.mxu0
    %v8302 = vadd.f32 0.0, %v8301
    %8303 = vmatmul.f32.gmra.mxu0 %v8140
    %v8304 = vpop.f32.mrf.mxu0
    %v8305 = vadd.f32 0.0, %v8304
    %8306 = vmatmul.f32.gmra.mxu0 %v8143
    %v8307 = vpop.f32.mrf.mxu0
    %v8308 = vadd.f32 0.0, %v8307
    %8309 = vmatmul.f32.gmra.mxu0 %v8146
    %v8310 = vpop.f32.mrf.mxu0
    %v8311 = vadd.f32 0.0, %v8310
    %8312 = vmatmul.f32.gmra.mxu0 %v8149
    %v8313 = vpop.f32.mrf.mxu0
    %v8314 = vadd.f32 0.0, %v8313
    %8315 = vmatmul.f32.gmra.mxu0 %v8152
    %v8316 = vpop.f32.mrf.mxu0
    %v8317 = vadd.f32 0.0, %v8316
    %8318 = vmatmul.f32.gmra.mxu0 %v8155
    %v8319 = vpop.f32.mrf.mxu0
    %8320 = vmatmul.f32.gmra.mxu0 %v8158
    %v8321 = vpop.f32.mrf.mxu0
    %v8322 = vadd.f32 0.0, %v8321
    %8323 = vmatmul.f32.gmra.mxu0 %v8161
    %v8324 = vpop.f32.mrf.mxu0
    %v8325 = vadd.f32 0.0, %v8324
    %8326 = vmatmul.f32.gmra.mxu0 %v8164
    %v8327 = vpop.f32.mrf.mxu0
    %v8328 = vadd.f32 0.0, %v8327
    %8329 = vmatmul.f32.gmra.mxu0 %v8167
    %v8330 = vpop.f32.mrf.mxu0
    %v8331 = vadd.f32 0.0, %v8330
    %8332 = vmatmul.f32.gmra.mxu0 %v8170
    %v8333 = vpop.f32.mrf.mxu0
    %v8334 = vadd.f32 0.0, %v8333
    %8335 = vmatmul.f32.gmra.mxu0 %v8173
    %v8336 = vpop.f32.mrf.mxu0
    %v8337 = vadd.f32 0.0, %v8336
    %8338 = vmatmul.f32.gmra.mxu0 %v8176
    %v8339 = vpop.f32.mrf.mxu0
    %8340 = vmatmul.f32.gmra.mxu0 %v8179
    %v8341 = vpop.f32.mrf.mxu0
    %v8342 = vadd.f32 0.0, %v8341
    %8343 = vmatmul.f32.gmra.mxu0 %v8182
    %v8344 = vpop.f32.mrf.mxu0
    %v8345 = vadd.f32 0.0, %v8344
    %8346 = vmatmul.f32.gmra.mxu0 %v8185
    %v8347 = vpop.f32.mrf.mxu0
    %v8348 = vadd.f32 0.0, %v8347
    %8349 = vmatmul.f32.gmra.mxu0 %v8188
    %v8350 = vpop.f32.mrf.mxu0
    %v8351 = vadd.f32 0.0, %v8350
    %8352 = vmatmul.f32.gmra.mxu0 %v8191
    %v8353 = vpop.f32.mrf.mxu0
    %v8354 = vadd.f32 0.0, %v8353
    %8355 = vmatmul.f32.gmra.mxu0 %v8194
    %v8356 = vpop.f32.mrf.mxu0
    %v8357 = vadd.f32 0.0, %v8356
    %8358 = vmatmul.f32.gmra.mxu0 %v8197
    %v8359 = vpop.f32.mrf.mxu0
    %8360 = vmatmul.f32.gmra.mxu0 %v8200
    %v8361 = vpop.f32.mrf.mxu0
    %8362 = vmatmul.f32.gmra.mxu0 %v8203
    %v8363 = vpop.f32.mrf.mxu0
    %8364 = vmatmul.f32.gmra.mxu0 %v8206
    %v8365 = vpop.f32.mrf.mxu0
    %8366 = vmatmul.f32.gmra.mxu0 %v8209
    %v8367 = vpop.f32.mrf.mxu0
    %8368 = vmatmul.f32.gmra.mxu0 %v8212
    %v8369 = vpop.f32.mrf.mxu0
    %8370 = vmatmul.f32.gmra.mxu0 %v8215
    %v8371 = vpop.f32.mrf.mxu0
    %8372 = vmatmul.f32.gmra.mxu0 %v8218
    %v8373 = vpop.f32.mrf.mxu0
    %8374 = vmatmul.f32.gmra.mxu0 %v8221
    %v8375 = vpop.f32.mrf.mxu0
    %8376 = vmatmul.f32.gmra.mxu0 %v8224
    %v8377 = vpop.f32.mrf.mxu0
    %8378 = vmatmul.f32.gmra.mxu0 %v8227
    %v8379 = vpop.f32.mrf.mxu0
    %8380 = vmatmul.f32.gmra.mxu0 %v8230
    %v8381 = vpop.f32.mrf.mxu0
    %8382 = vmatmul.f32.gmra.mxu0 %v8233
    %v8383 = vpop.f32.mrf.mxu0
    %8384 = vmatmul.f32.gmra.mxu0 %v8236
    %v8385 = vpop.f32.mrf.mxu0
    %8386 = vmatmul.f32.gmra.mxu0 %v8239
    %v8387 = vpop.f32.mrf.mxu0
    %8388 = vdwg.mxu0
    %v8389 = vadd.f32 %v8014, %v8262
    %v8390 = vadd.f32 %v8015, %v8265
    %v8391 = vadd.f32 %v8016, %v8268
    %v8392 = vadd.f32 %v8017, %v8271
    %v8393 = vadd.f32 %v8018, %v8274
    %v8394 = vadd.f32 %v8019, %v8277
    %v8395 = vadd.f32 %v8020, %v8282
    %v8396 = vadd.f32 %v8021, %v8285
    %v8397 = vadd.f32 %v8022, %v8288
    %v8398 = vadd.f32 %v8023, %v8291
    %v8399 = vadd.f32 %v8024, %v8294
    %v8400 = vadd.f32 %v8025, %v8297
    %v8401 = vadd.f32 %v8026, %v8302
    %v8402 = vadd.f32 %v8027, %v8305
    %v8403 = vadd.f32 %v8028, %v8308
    %v8404 = vadd.f32 %v8029, %v8311
    %v8405 = vadd.f32 %v8030, %v8314
    %v8406 = vadd.f32 %v8031, %v8317
    %v8407 = vadd.f32 %v8032, %v8322
    %v8408 = vadd.f32 %v8033, %v8325
    %v8409 = vadd.f32 %v8034, %v8328
    %v8410 = vadd.f32 %v8035, %v8331
    %v8411 = vadd.f32 %v8036, %v8334
    %v8412 = vadd.f32 %v8037, %v8337
    %v8413 = vadd.f32 %v8038, %v8342
    %v8414 = vadd.f32 %v8039, %v8345
    %v8415 = vadd.f32 %v8040, %v8348
    %v8416 = vadd.f32 %v8041, %v8351
    %v8417 = vadd.f32 %v8042, %v8354
    %v8418 = vadd.f32 %v8043, %v8357
    %v8419 = vld [vmem:[#allocation2 + $0x5c] sm:$0xff]
    %v8420 = vld [vmem:[#allocation2 + $0x64] sm:$0xff]
    %v8421 = vld [vmem:[#allocation2 + $0x6c] sm:$0xff]
    %v8422 = vld [vmem:[#allocation2 + $0x74] sm:$0xff]
    %v8423 = vld [vmem:[#allocation2 + $0x7c] sm:$0xff]
    %v8424 = vld [vmem:[#allocation2 + $0x84] sm:$0xff]
    %v8425 = vld [vmem:[#allocation2 + $0x8c] sm:$0xff]
    %v8426 = vld [vmem:[#allocation2 + $0x94] sm:$0xff]
    %v8427 = vld [vmem:[#allocation2 + $0x9c] sm:$0xff]
    %v8428 = vld [vmem:[#allocation2 + $0xa4] sm:$0xff]
    %v8429 = vld [vmem:[#allocation2 + $0xac] sm:$0xff]
    %v8430 = vld [vmem:[#allocation2 + $0xb4] sm:$0xff]
    %v8431 = vld [vmem:[#allocation2 + $0xbc] sm:$0xff]
    %v8432 = vld [vmem:[#allocation2 + $0xc4] sm:$0xff]
    %v8433 = vld [vmem:[#allocation2 + $0xcc] sm:$0xff]
    %v8434 = vld [vmem:[#allocation2 + $0xd4] sm:$0xff]
    %v8435 = vld [vmem:[#allocation2 + $0xdc] sm:$0xff]
    %v8436 = vld [vmem:[#allocation2 + $0xe4] sm:$0xff]
    %v8437 = vld [vmem:[#allocation2 + $0xec] sm:$0xff]
    %v8438 = vld [vmem:[#allocation2 + $0xf4] sm:$0xff]
    %v8439 = vld [vmem:[#allocation2 + $0xfc] sm:$0xff]
    %v8440 = vld [vmem:[#allocation2 + $0x104] sm:$0xff]
    %v8441 = vld [vmem:[#allocation2 + $0x10c] sm:$0xff]
    %v8442 = vld [vmem:[#allocation2 + $0x114] sm:$0xff]
    %v8443 = vld [vmem:[#allocation2 + $0x11c] sm:$0xff]
    %v8444 = vld [vmem:[#allocation2 + $0x124] sm:$0xff]
    %v8445 = vld [vmem:[#allocation2 + $0x12c] sm:$0xff]
    %v8446 = vld [vmem:[#allocation2 + $0x134] sm:$0xff]
    %v8447 = vld [vmem:[#allocation2 + $0x13c] sm:$0xff]
    %v8448 = vld [vmem:[#allocation2 + $0x144] sm:$0xff]
    %v8449 = vld [vmem:[#allocation2 + $0x14c] sm:$0xff]
    %v8450 = vld [vmem:[#allocation2 + $0x154] sm:$0xff]
    %v8451 = vld [vmem:[#allocation2 + $0x15c] sm:$0xff]
    %v8452 = vld [vmem:[#allocation2 + $0x164] sm:$0xff]
    %v8453 = vld [vmem:[#allocation2 + $0x16c] sm:$0xff]
    %v8454 = vld [vmem:[#allocation2 + $0x174] sm:$0xff]
    %v8455 = vld [vmem:[#allocation2 + $0x17c] sm:$0xff]
    %v8456 = vld [vmem:[#allocation2 + $0x184] sm:$0xff]
    %v8457 = vld [vmem:[#allocation2 + $0x18c] sm:$0xff]
    %v8458 = vld [vmem:[#allocation2 + $0x194] sm:$0xff]
    %v8459 = vld [vmem:[#allocation2 + $0x19c] sm:$0xff]
    %v8460 = vld [vmem:[#allocation2 + $0x1a4] sm:$0xff]
    %v8461 = vld [vmem:[#allocation2 + $0x1ac] sm:$0xff]
    %v8462 = vld [vmem:[#allocation2 + $0x1b4] sm:$0xff]
    %v8463 = vld [vmem:[#allocation2 + $0x1bc] sm:$0xff]
    %v8464 = vld [vmem:[#allocation2 + $0x1c4] sm:$0xff]
    %v8465 = vld [vmem:[#allocation2 + $0x1cc] sm:$0xff]
    %v8466 = vld [vmem:[#allocation2 + $0x1d4] sm:$0xff]
    %v8467 = vld [vmem:[#allocation2 + $0x1dc] sm:$0xff]
    %v8468 = vld [vmem:[%s3 + $0x72] sm:$0x3f]
    %v8470 = vsel %vm1254, %v8419, 0
    %v8473 = vsel %vm1254, %v8420, 0
    %v8476 = vsel %vm1254, %v8421, 0
    %v8479 = vsel %vm1254, %v8422, 0
    %v8482 = vsel %vm1254, %v8423, 0
    %v8485 = vsel %vm1254, %v8424, 0
    %v8488 = vsel %vm1254, %v8425, 0
    %v8491 = vsel %vm1254, %v8426, 0
    %v8494 = vsel %vm1254, %v8427, 0
    %v8497 = vsel %vm1254, %v8428, 0
    %v8500 = vsel %vm1254, %v8429, 0
    %v8503 = vsel %vm1254, %v8430, 0
    %v8506 = vsel %vm1254, %v8431, 0
    %v8509 = vsel %vm1254, %v8432, 0
    %v8512 = vsel %vm1254, %v8433, 0
    %v8515 = vsel %vm1254, %v8434, 0
    %v8518 = vsel %vm1254, %v8435, 0
    %v8521 = vsel %vm1254, %v8436, 0
    %v8524 = vsel %vm1254, %v8437, 0
    %v8527 = vsel %vm1254, %v8438, 0
    %v8530 = vsel %vm1254, %v8439, 0
    %v8533 = vsel %vm1254, %v8440, 0
    %v8536 = vsel %vm1254, %v8441, 0
    %v8539 = vsel %vm1254, %v8442, 0
    %v8542 = vsel %vm1254, %v8443, 0
    %v8545 = vsel %vm1254, %v8444, 0
    %v8548 = vsel %vm1254, %v8445, 0
    %v8551 = vsel %vm1254, %v8446, 0
    %v8554 = vsel %vm1254, %v8447, 0
    %v8557 = vsel %vm1254, %v8448, 0
    %v8560 = vsel %vm1254, %v8449, 0
    %v8563 = vsel %vm1254, %v8450, 0
    %v8566 = vsel %vm1254, %v8451, 0
    %v8569 = vsel %vm1254, %v8452, 0
    %v8572 = vsel %vm1254, %v8453, 0
    %v8575 = vsel %vm1254, %v8454, 0
    %v8578 = vsel %vm1254, %v8455, 0
    %v8581 = vsel %vm1254, %v8456, 0
    %v8584 = vsel %vm1254, %v8457, 0
    %v8587 = vsel %vm1254, %v8458, 0
    %v8590 = vsel %vm1254, %v8459, 0
    %v8593 = vsel %vm1254, %v8460, 0
    %v8596 = vsel %vm1254, %v8461, 0
    %v8599 = vsel %vm1254, %v8462, 0
    %v8602 = vsel %vm1254, %v8463, 0
    %v8605 = vsel %vm1254, %v8464, 0
    %v8608 = vsel %vm1254, %v8465, 0
    %v8611 = vsel %vm1254, %v8466, 0
    %v8614 = vsel %vm1254, %v8467, 0
    %v8617 = vsel %vm1520, %v8468, 0
    %8619 = vmatpush.msra.mxu0 0.0
    %8620 = vmatpush.msra.mxu0 0.0
    %8621 = vmatpush.msra.mxu0 0.0
    %8622 = vmatpush.msra.mxu0 0.0
    %8623 = vmatpush.msra.mxu0 0.0
    %8624 = vmatpush.msra.mxu0 0.0
    %8625 = vmatpush.msra.mxu0 0.0
    %8626 = vmatpush.msra.mxu0 0.0
    %8627 = vmatpush.msra.mxu0 0.0
    %8628 = vmatpush.msra.mxu0 0.0
    %8629 = vmatpush.msra.mxu0 0.0
    %8630 = vmatpush.msra.mxu0 0.0
    %8631 = vmatpush.msra.mxu0 0.0
    %8632 = vmatpush.msra.mxu0 0.0
    %8633 = vmatpush.msra.mxu0 0.0
    %8634 = vmatpush.msra.mxu0 %v8617
    %8635 = vmatmul.f32.gmra.mxu0 %v8470
    %v8636 = vpop.f32.mrf.mxu0
    %v8637 = vadd.f32 0.0, %v8636
    %8638 = vmatmul.f32.gmra.mxu0 %v8473
    %v8639 = vpop.f32.mrf.mxu0
    %v8640 = vadd.f32 0.0, %v8639
    %8641 = vmatmul.f32.gmra.mxu0 %v8476
    %v8642 = vpop.f32.mrf.mxu0
    %v8643 = vadd.f32 0.0, %v8642
    %8644 = vmatmul.f32.gmra.mxu0 %v8479
    %v8645 = vpop.f32.mrf.mxu0
    %v8646 = vadd.f32 0.0, %v8645
    %8647 = vmatmul.f32.gmra.mxu0 %v8482
    %v8648 = vpop.f32.mrf.mxu0
    %v8649 = vadd.f32 0.0, %v8648
    %8650 = vmatmul.f32.gmra.mxu0 %v8485
    %v8651 = vpop.f32.mrf.mxu0
    %v8652 = vadd.f32 0.0, %v8651
    %8653 = vmatmul.f32.gmra.mxu0 %v8488
    %v8654 = vpop.f32.mrf.mxu0
    %8655 = vmatmul.f32.gmra.mxu0 %v8491
    %v8656 = vpop.f32.mrf.mxu0
    %v8657 = vadd.f32 0.0, %v8656
    %8658 = vmatmul.f32.gmra.mxu0 %v8494
    %v8659 = vpop.f32.mrf.mxu0
    %v8660 = vadd.f32 0.0, %v8659
    %8661 = vmatmul.f32.gmra.mxu0 %v8497
    %v8662 = vpop.f32.mrf.mxu0
    %v8663 = vadd.f32 0.0, %v8662
    %8664 = vmatmul.f32.gmra.mxu0 %v8500
    %v8665 = vpop.f32.mrf.mxu0
    %v8666 = vadd.f32 0.0, %v8665
    %8667 = vmatmul.f32.gmra.mxu0 %v8503
    %v8668 = vpop.f32.mrf.mxu0
    %v8669 = vadd.f32 0.0, %v8668
    %8670 = vmatmul.f32.gmra.mxu0 %v8506
    %v8671 = vpop.f32.mrf.mxu0
    %v8672 = vadd.f32 0.0, %v8671
    %8673 = vmatmul.f32.gmra.mxu0 %v8509
    %v8674 = vpop.f32.mrf.mxu0
    %8675 = vmatmul.f32.gmra.mxu0 %v8512
    %v8676 = vpop.f32.mrf.mxu0
    %v8677 = vadd.f32 0.0, %v8676
    %8678 = vmatmul.f32.gmra.mxu0 %v8515
    %v8679 = vpop.f32.mrf.mxu0
    %v8680 = vadd.f32 0.0, %v8679
    %8681 = vmatmul.f32.gmra.mxu0 %v8518
    %v8682 = vpop.f32.mrf.mxu0
    %v8683 = vadd.f32 0.0, %v8682
    %8684 = vmatmul.f32.gmra.mxu0 %v8521
    %v8685 = vpop.f32.mrf.mxu0
    %v8686 = vadd.f32 0.0, %v8685
    %8687 = vmatmul.f32.gmra.mxu0 %v8524
    %v8688 = vpop.f32.mrf.mxu0
    %v8689 = vadd.f32 0.0, %v8688
    %8690 = vmatmul.f32.gmra.mxu0 %v8527
    %v8691 = vpop.f32.mrf.mxu0
    %v8692 = vadd.f32 0.0, %v8691
    %8693 = vmatmul.f32.gmra.mxu0 %v8530
    %v8694 = vpop.f32.mrf.mxu0
    %8695 = vmatmul.f32.gmra.mxu0 %v8533
    %v8696 = vpop.f32.mrf.mxu0
    %v8697 = vadd.f32 0.0, %v8696
    %8698 = vmatmul.f32.gmra.mxu0 %v8536
    %v8699 = vpop.f32.mrf.mxu0
    %v8700 = vadd.f32 0.0, %v8699
    %8701 = vmatmul.f32.gmra.mxu0 %v8539
    %v8702 = vpop.f32.mrf.mxu0
    %v8703 = vadd.f32 0.0, %v8702
    %8704 = vmatmul.f32.gmra.mxu0 %v8542
    %v8705 = vpop.f32.mrf.mxu0
    %v8706 = vadd.f32 0.0, %v8705
    %8707 = vmatmul.f32.gmra.mxu0 %v8545
    %v8708 = vpop.f32.mrf.mxu0
    %v8709 = vadd.f32 0.0, %v8708
    %8710 = vmatmul.f32.gmra.mxu0 %v8548
    %v8711 = vpop.f32.mrf.mxu0
    %v8712 = vadd.f32 0.0, %v8711
    %8713 = vmatmul.f32.gmra.mxu0 %v8551
    %v8714 = vpop.f32.mrf.mxu0
    %8715 = vmatmul.f32.gmra.mxu0 %v8554
    %v8716 = vpop.f32.mrf.mxu0
    %v8717 = vadd.f32 0.0, %v8716
    %8718 = vmatmul.f32.gmra.mxu0 %v8557
    %v8719 = vpop.f32.mrf.mxu0
    %v8720 = vadd.f32 0.0, %v8719
    %8721 = vmatmul.f32.gmra.mxu0 %v8560
    %v8722 = vpop.f32.mrf.mxu0
    %v8723 = vadd.f32 0.0, %v8722
    %8724 = vmatmul.f32.gmra.mxu0 %v8563
    %v8725 = vpop.f32.mrf.mxu0
    %v8726 = vadd.f32 0.0, %v8725
    %8727 = vmatmul.f32.gmra.mxu0 %v8566
    %v8728 = vpop.f32.mrf.mxu0
    %v8729 = vadd.f32 0.0, %v8728
    %8730 = vmatmul.f32.gmra.mxu0 %v8569
    %v8731 = vpop.f32.mrf.mxu0
    %v8732 = vadd.f32 0.0, %v8731
    %8733 = vmatmul.f32.gmra.mxu0 %v8572
    %v8734 = vpop.f32.mrf.mxu0
    %8735 = vmatmul.f32.gmra.mxu0 %v8575
    %v8736 = vpop.f32.mrf.mxu0
    %8737 = vmatmul.f32.gmra.mxu0 %v8578
    %v8738 = vpop.f32.mrf.mxu0
    %8739 = vmatmul.f32.gmra.mxu0 %v8581
    %v8740 = vpop.f32.mrf.mxu0
    %8741 = vmatmul.f32.gmra.mxu0 %v8584
    %v8742 = vpop.f32.mrf.mxu0
    %8743 = vmatmul.f32.gmra.mxu0 %v8587
    %v8744 = vpop.f32.mrf.mxu0
    %8745 = vmatmul.f32.gmra.mxu0 %v8590
    %v8746 = vpop.f32.mrf.mxu0
    %8747 = vmatmul.f32.gmra.mxu0 %v8593
    %v8748 = vpop.f32.mrf.mxu0
    %8749 = vmatmul.f32.gmra.mxu0 %v8596
    %v8750 = vpop.f32.mrf.mxu0
    %8751 = vmatmul.f32.gmra.mxu0 %v8599
    %v8752 = vpop.f32.mrf.mxu0
    %8753 = vmatmul.f32.gmra.mxu0 %v8602
    %v8754 = vpop.f32.mrf.mxu0
    %8755 = vmatmul.f32.gmra.mxu0 %v8605
    %v8756 = vpop.f32.mrf.mxu0
    %8757 = vmatmul.f32.gmra.mxu0 %v8608
    %v8758 = vpop.f32.mrf.mxu0
    %8759 = vmatmul.f32.gmra.mxu0 %v8611
    %v8760 = vpop.f32.mrf.mxu0
    %8761 = vmatmul.f32.gmra.mxu0 %v8614
    %v8762 = vpop.f32.mrf.mxu0
    %8763 = vdwg.mxu0
    %v8764 = vadd.f32 %v8389, %v8637
    %v8765 = vadd.f32 %v8390, %v8640
    %v8766 = vadd.f32 %v8391, %v8643
    %v8767 = vadd.f32 %v8392, %v8646
    %v8768 = vadd.f32 %v8393, %v8649
    %v8769 = vadd.f32 %v8394, %v8652
    %v8770 = vadd.f32 %v8395, %v8657
    %v8771 = vadd.f32 %v8396, %v8660
    %v8772 = vadd.f32 %v8397, %v8663
    %v8773 = vadd.f32 %v8398, %v8666
    %v8774 = vadd.f32 %v8399, %v8669
    %v8775 = vadd.f32 %v8400, %v8672
    %v8776 = vadd.f32 %v8401, %v8677
    %v8777 = vadd.f32 %v8402, %v8680
    %v8778 = vadd.f32 %v8403, %v8683
    %v8779 = vadd.f32 %v8404, %v8686
    %v8780 = vadd.f32 %v8405, %v8689
    %v8781 = vadd.f32 %v8406, %v8692
    %v8782 = vadd.f32 %v8407, %v8697
    %v8783 = vadd.f32 %v8408, %v8700
    %v8784 = vadd.f32 %v8409, %v8703
    %v8785 = vadd.f32 %v8410, %v8706
    %v8786 = vadd.f32 %v8411, %v8709
    %v8787 = vadd.f32 %v8412, %v8712
    %v8788 = vadd.f32 %v8413, %v8717
    %v8789 = vadd.f32 %v8414, %v8720
    %v8790 = vadd.f32 %v8415, %v8723
    %v8791 = vadd.f32 %v8416, %v8726
    %v8792 = vadd.f32 %v8417, %v8729
    %v8793 = vadd.f32 %v8418, %v8732
    %v8794 = vld [vmem:[#allocation2 + $0x70] sm:$0xff]
    %v8795 = vld [vmem:[#allocation2 + $0x78] sm:$0xff]
    %v8796 = vld [vmem:[#allocation2 + $0x80] sm:$0xff]
    %v8797 = vld [vmem:[#allocation2 + $0x88] sm:$0xff]
    %v8798 = vld [vmem:[#allocation2 + $0x90] sm:$0xff]
    %v8799 = vld [vmem:[#allocation2 + $0x98] sm:$0xff]
    %v8800 = vld [vmem:[#allocation2 + $0xa0] sm:$0xff]
    %v8801 = vld [vmem:[#allocation2 + $0xa8] sm:$0xff]
    %v8802 = vld [vmem:[#allocation2 + $0xb0] sm:$0xff]
    %v8803 = vld [vmem:[#allocation2 + $0xb8] sm:$0xff]
    %v8804 = vld [vmem:[#allocation2 + $0xc0] sm:$0xff]
    %v8805 = vld [vmem:[#allocation2 + $0xc8] sm:$0xff]
    %v8806 = vld [vmem:[#allocation2 + $0xd0] sm:$0xff]
    %v8807 = vld [vmem:[#allocation2 + $0xd8] sm:$0xff]
    %v8808 = vld [vmem:[#allocation2 + $0xe0] sm:$0xff]
    %v8809 = vld [vmem:[#allocation2 + $0xe8] sm:$0xff]
    %v8810 = vld [vmem:[#allocation2 + $0xf0] sm:$0xff]
    %v8811 = vld [vmem:[#allocation2 + $0xf8] sm:$0xff]
    %v8812 = vld [vmem:[#allocation2 + $0x100] sm:$0xff]
    %v8813 = vld [vmem:[#allocation2 + $0x108] sm:$0xff]
    %v8814 = vld [vmem:[#allocation2 + $0x110] sm:$0xff]
    %v8815 = vld [vmem:[#allocation2 + $0x118] sm:$0xff]
    %v8816 = vld [vmem:[#allocation2 + $0x120] sm:$0xff]
    %v8817 = vld [vmem:[#allocation2 + $0x128] sm:$0xff]
    %v8818 = vld [vmem:[#allocation2 + $0x130] sm:$0xff]
    %v8819 = vld [vmem:[#allocation2 + $0x138] sm:$0xff]
    %v8820 = vld [vmem:[#allocation2 + $0x140] sm:$0xff]
    %v8821 = vld [vmem:[#allocation2 + $0x148] sm:$0xff]
    %v8822 = vld [vmem:[#allocation2 + $0x150] sm:$0xff]
    %v8823 = vld [vmem:[#allocation2 + $0x158] sm:$0xff]
    %v8824 = vld [vmem:[#allocation2 + $0x160] sm:$0xff]
    %v8825 = vld [vmem:[#allocation2 + $0x168] sm:$0xff]
    %v8826 = vld [vmem:[#allocation2 + $0x170] sm:$0xff]
    %v8827 = vld [vmem:[#allocation2 + $0x178] sm:$0xff]
    %v8828 = vld [vmem:[#allocation2 + $0x180] sm:$0xff]
    %v8829 = vld [vmem:[#allocation2 + $0x188] sm:$0xff]
    %v8830 = vld [vmem:[#allocation2 + $0x190] sm:$0xff]
    %v8831 = vld [vmem:[#allocation2 + $0x198] sm:$0xff]
    %v8832 = vld [vmem:[#allocation2 + $0x1a0] sm:$0xff]
    %v8833 = vld [vmem:[#allocation2 + $0x1a8] sm:$0xff]
    %v8834 = vld [vmem:[#allocation2 + $0x1b0] sm:$0xff]
    %v8835 = vld [vmem:[#allocation2 + $0x1b8] sm:$0xff]
    %v8836 = vld [vmem:[#allocation2 + $0x1c0] sm:$0xff]
    %v8837 = vld [vmem:[#allocation2 + $0x1c8] sm:$0xff]
    %v8838 = vld [vmem:[#allocation2 + $0x1d0] sm:$0xff]
    %v8839 = vld [vmem:[#allocation2 + $0x1d8] sm:$0xff]
    %v8840 = vld [vmem:[#allocation2 + $0x1e0] sm:$0xff]
    %v8841 = vld [vmem:[#allocation2 + $0x1e8] sm:$0xff]
    %v8842 = vld [vmem:[#allocation2 + $0x1f0] sm:$0xff]
    %v8843 = vld [vmem:[%s3 + $0x78] sm:$0x3f]
    %v8845 = vsel %vm1254, %v8794, 0
    %v8848 = vsel %vm1254, %v8795, 0
    %v8851 = vsel %vm1254, %v8796, 0
    %v8854 = vsel %vm1254, %v8797, 0
    %v8857 = vsel %vm1254, %v8798, 0
    %v8860 = vsel %vm1254, %v8799, 0
    %v8863 = vsel %vm1254, %v8800, 0
    %v8866 = vsel %vm1254, %v8801, 0
    %v8869 = vsel %vm1254, %v8802, 0
    %v8872 = vsel %vm1254, %v8803, 0
    %v8875 = vsel %vm1254, %v8804, 0
    %v8878 = vsel %vm1254, %v8805, 0
    %v8881 = vsel %vm1254, %v8806, 0
    %v8884 = vsel %vm1254, %v8807, 0
    %v8887 = vsel %vm1254, %v8808, 0
    %v8890 = vsel %vm1254, %v8809, 0
    %v8893 = vsel %vm1254, %v8810, 0
    %v8896 = vsel %vm1254, %v8811, 0
    %v8899 = vsel %vm1254, %v8812, 0
    %v8902 = vsel %vm1254, %v8813, 0
    %v8905 = vsel %vm1254, %v8814, 0
    %v8908 = vsel %vm1254, %v8815, 0
    %v8911 = vsel %vm1254, %v8816, 0
    %v8914 = vsel %vm1254, %v8817, 0
    %v8917 = vsel %vm1254, %v8818, 0
    %v8920 = vsel %vm1254, %v8819, 0
    %v8923 = vsel %vm1254, %v8820, 0
    %v8926 = vsel %vm1254, %v8821, 0
    %v8929 = vsel %vm1254, %v8822, 0
    %v8932 = vsel %vm1254, %v8823, 0
    %v8935 = vsel %vm1254, %v8824, 0
    %v8938 = vsel %vm1254, %v8825, 0
    %v8941 = vsel %vm1254, %v8826, 0
    %v8944 = vsel %vm1254, %v8827, 0
    %v8947 = vsel %vm1254, %v8828, 0
    %v8950 = vsel %vm1254, %v8829, 0
    %v8953 = vsel %vm1254, %v8830, 0
    %v8956 = vsel %vm1254, %v8831, 0
    %v8959 = vsel %vm1254, %v8832, 0
    %v8962 = vsel %vm1254, %v8833, 0
    %v8965 = vsel %vm1254, %v8834, 0
    %v8968 = vsel %vm1254, %v8835, 0
    %v8971 = vsel %vm1254, %v8836, 0
    %v8974 = vsel %vm1254, %v8837, 0
    %v8977 = vsel %vm1254, %v8838, 0
    %v8980 = vsel %vm1254, %v8839, 0
    %v8983 = vsel %vm1254, %v8840, 0
    %v8986 = vsel %vm1254, %v8841, 0
    %v8989 = vsel %vm1254, %v8842, 0
    %v8992 = vsel %vm1520, %v8843, 0
    %8994 = vmatpush.msra.mxu0 0.0
    %8995 = vmatpush.msra.mxu0 0.0
    %8996 = vmatpush.msra.mxu0 0.0
    %8997 = vmatpush.msra.mxu0 0.0
    %8998 = vmatpush.msra.mxu0 0.0
    %8999 = vmatpush.msra.mxu0 0.0
    %9000 = vmatpush.msra.mxu0 0.0
    %9001 = vmatpush.msra.mxu0 0.0
    %9002 = vmatpush.msra.mxu0 0.0
    %9003 = vmatpush.msra.mxu0 0.0
    %9004 = vmatpush.msra.mxu0 0.0
    %9005 = vmatpush.msra.mxu0 0.0
    %9006 = vmatpush.msra.mxu0 0.0
    %9007 = vmatpush.msra.mxu0 0.0
    %9008 = vmatpush.msra.mxu0 0.0
    %9009 = vmatpush.msra.mxu0 %v8992
    %9010 = vmatmul.f32.gmra.mxu0 %v8845
    %v9011 = vpop.f32.mrf.mxu0
    %v9012 = vadd.f32 0.0, %v9011
    %9013 = vmatmul.f32.gmra.mxu0 %v8848
    %v9014 = vpop.f32.mrf.mxu0
    %v9015 = vadd.f32 0.0, %v9014
    %9016 = vmatmul.f32.gmra.mxu0 %v8851
    %v9017 = vpop.f32.mrf.mxu0
    %v9018 = vadd.f32 0.0, %v9017
    %9019 = vmatmul.f32.gmra.mxu0 %v8854
    %v9020 = vpop.f32.mrf.mxu0
    %v9021 = vadd.f32 0.0, %v9020
    %9022 = vmatmul.f32.gmra.mxu0 %v8857
    %v9023 = vpop.f32.mrf.mxu0
    %v9024 = vadd.f32 0.0, %v9023
    %9025 = vmatmul.f32.gmra.mxu0 %v8860
    %v9026 = vpop.f32.mrf.mxu0
    %v9027 = vadd.f32 0.0, %v9026
    %9028 = vmatmul.f32.gmra.mxu0 %v8863
    %v9029 = vpop.f32.mrf.mxu0
    %9030 = vmatmul.f32.gmra.mxu0 %v8866
    %v9031 = vpop.f32.mrf.mxu0
    %v9032 = vadd.f32 0.0, %v9031
    %9033 = vmatmul.f32.gmra.mxu0 %v8869
    %v9034 = vpop.f32.mrf.mxu0
    %v9035 = vadd.f32 0.0, %v9034
    %9036 = vmatmul.f32.gmra.mxu0 %v8872
    %v9037 = vpop.f32.mrf.mxu0
    %v9038 = vadd.f32 0.0, %v9037
    %9039 = vmatmul.f32.gmra.mxu0 %v8875
    %v9040 = vpop.f32.mrf.mxu0
    %v9041 = vadd.f32 0.0, %v9040
    %9042 = vmatmul.f32.gmra.mxu0 %v8878
    %v9043 = vpop.f32.mrf.mxu0
    %v9044 = vadd.f32 0.0, %v9043
    %9045 = vmatmul.f32.gmra.mxu0 %v8881
    %v9046 = vpop.f32.mrf.mxu0
    %v9047 = vadd.f32 0.0, %v9046
    %9048 = vmatmul.f32.gmra.mxu0 %v8884
    %v9049 = vpop.f32.mrf.mxu0
    %9050 = vmatmul.f32.gmra.mxu0 %v8887
    %v9051 = vpop.f32.mrf.mxu0
    %v9052 = vadd.f32 0.0, %v9051
    %9053 = vmatmul.f32.gmra.mxu0 %v8890
    %v9054 = vpop.f32.mrf.mxu0
    %v9055 = vadd.f32 0.0, %v9054
    %9056 = vmatmul.f32.gmra.mxu0 %v8893
    %v9057 = vpop.f32.mrf.mxu0
    %v9058 = vadd.f32 0.0, %v9057
    %9059 = vmatmul.f32.gmra.mxu0 %v8896
    %v9060 = vpop.f32.mrf.mxu0
    %v9061 = vadd.f32 0.0, %v9060
    %9062 = vmatmul.f32.gmra.mxu0 %v8899
    %v9063 = vpop.f32.mrf.mxu0
    %v9064 = vadd.f32 0.0, %v9063
    %9065 = vmatmul.f32.gmra.mxu0 %v8902
    %v9066 = vpop.f32.mrf.mxu0
    %v9067 = vadd.f32 0.0, %v9066
    %9068 = vmatmul.f32.gmra.mxu0 %v8905
    %v9069 = vpop.f32.mrf.mxu0
    %9070 = vmatmul.f32.gmra.mxu0 %v8908
    %v9071 = vpop.f32.mrf.mxu0
    %v9072 = vadd.f32 0.0, %v9071
    %9073 = vmatmul.f32.gmra.mxu0 %v8911
    %v9074 = vpop.f32.mrf.mxu0
    %v9075 = vadd.f32 0.0, %v9074
    %9076 = vmatmul.f32.gmra.mxu0 %v8914
    %v9077 = vpop.f32.mrf.mxu0
    %v9078 = vadd.f32 0.0, %v9077
    %9079 = vmatmul.f32.gmra.mxu0 %v8917
    %v9080 = vpop.f32.mrf.mxu0
    %v9081 = vadd.f32 0.0, %v9080
    %9082 = vmatmul.f32.gmra.mxu0 %v8920
    %v9083 = vpop.f32.mrf.mxu0
    %v9084 = vadd.f32 0.0, %v9083
    %9085 = vmatmul.f32.gmra.mxu0 %v8923
    %v9086 = vpop.f32.mrf.mxu0
    %v9087 = vadd.f32 0.0, %v9086
    %9088 = vmatmul.f32.gmra.mxu0 %v8926
    %v9089 = vpop.f32.mrf.mxu0
    %9090 = vmatmul.f32.gmra.mxu0 %v8929
    %v9091 = vpop.f32.mrf.mxu0
    %v9092 = vadd.f32 0.0, %v9091
    %9093 = vmatmul.f32.gmra.mxu0 %v8932
    %v9094 = vpop.f32.mrf.mxu0
    %v9095 = vadd.f32 0.0, %v9094
    %9096 = vmatmul.f32.gmra.mxu0 %v8935
    %v9097 = vpop.f32.mrf.mxu0
    %v9098 = vadd.f32 0.0, %v9097
    %9099 = vmatmul.f32.gmra.mxu0 %v8938
    %v9100 = vpop.f32.mrf.mxu0
    %v9101 = vadd.f32 0.0, %v9100
    %9102 = vmatmul.f32.gmra.mxu0 %v8941
    %v9103 = vpop.f32.mrf.mxu0
    %v9104 = vadd.f32 0.0, %v9103
    %9105 = vmatmul.f32.gmra.mxu0 %v8944
    %v9106 = vpop.f32.mrf.mxu0
    %v9107 = vadd.f32 0.0, %v9106
    %9108 = vmatmul.f32.gmra.mxu0 %v8947
    %v9109 = vpop.f32.mrf.mxu0
    %9110 = vmatmul.f32.gmra.mxu0 %v8950
    %v9111 = vpop.f32.mrf.mxu0
    %9112 = vmatmul.f32.gmra.mxu0 %v8953
    %v9113 = vpop.f32.mrf.mxu0
    %9114 = vmatmul.f32.gmra.mxu0 %v8956
    %v9115 = vpop.f32.mrf.mxu0
    %9116 = vmatmul.f32.gmra.mxu0 %v8959
    %v9117 = vpop.f32.mrf.mxu0
    %9118 = vmatmul.f32.gmra.mxu0 %v8962
    %v9119 = vpop.f32.mrf.mxu0
    %9120 = vmatmul.f32.gmra.mxu0 %v8965
    %v9121 = vpop.f32.mrf.mxu0
    %9122 = vmatmul.f32.gmra.mxu0 %v8968
    %v9123 = vpop.f32.mrf.mxu0
    %9124 = vmatmul.f32.gmra.mxu0 %v8971
    %v9125 = vpop.f32.mrf.mxu0
    %9126 = vmatmul.f32.gmra.mxu0 %v8974
    %v9127 = vpop.f32.mrf.mxu0
    %9128 = vmatmul.f32.gmra.mxu0 %v8977
    %v9129 = vpop.f32.mrf.mxu0
    %9130 = vmatmul.f32.gmra.mxu0 %v8980
    %v9131 = vpop.f32.mrf.mxu0
    %9132 = vmatmul.f32.gmra.mxu0 %v8983
    %v9133 = vpop.f32.mrf.mxu0
    %9134 = vmatmul.f32.gmra.mxu0 %v8986
    %v9135 = vpop.f32.mrf.mxu0
    %9136 = vmatmul.f32.gmra.mxu0 %v8989
    %v9137 = vpop.f32.mrf.mxu0
    %9138 = vdwg.mxu0
    %v9139 = vadd.f32 %v8764, %v9012
    %v9140 = vadd.f32 %v8765, %v9015
    %v9141 = vadd.f32 %v8766, %v9018
    %v9142 = vadd.f32 %v8767, %v9021
    %v9143 = vadd.f32 %v8768, %v9024
    %v9144 = vadd.f32 %v8769, %v9027
    %v9145 = vadd.f32 %v8770, %v9032
    %v9146 = vadd.f32 %v8771, %v9035
    %v9147 = vadd.f32 %v8772, %v9038
    %v9148 = vadd.f32 %v8773, %v9041
    %v9149 = vadd.f32 %v8774, %v9044
    %v9150 = vadd.f32 %v8775, %v9047
    %v9151 = vadd.f32 %v8776, %v9052
    %v9152 = vadd.f32 %v8777, %v9055
    %v9153 = vadd.f32 %v8778, %v9058
    %v9154 = vadd.f32 %v8779, %v9061
    %v9155 = vadd.f32 %v8780, %v9064
    %v9156 = vadd.f32 %v8781, %v9067
    %v9157 = vadd.f32 %v8782, %v9072
    %v9158 = vadd.f32 %v8783, %v9075
    %v9159 = vadd.f32 %v8784, %v9078
    %v9160 = vadd.f32 %v8785, %v9081
    %v9161 = vadd.f32 %v8786, %v9084
    %v9162 = vadd.f32 %v8787, %v9087
    %v9163 = vadd.f32 %v8788, %v9092
    %v9164 = vadd.f32 %v8789, %v9095
    %v9165 = vadd.f32 %v8790, %v9098
    %v9166 = vadd.f32 %v8791, %v9101
    %v9167 = vadd.f32 %v8792, %v9104
    %v9168 = vadd.f32 %v8793, %v9107
    %v9169 = vld [vmem:[#allocation2 + $0x72] sm:$0xff]
    %v9170 = vld [vmem:[#allocation2 + $0x7a] sm:$0xff]
    %v9171 = vld [vmem:[#allocation2 + $0x82] sm:$0xff]
    %v9172 = vld [vmem:[#allocation2 + $0x8a] sm:$0xff]
    %v9173 = vld [vmem:[#allocation2 + $0x92] sm:$0xff]
    %v9174 = vld [vmem:[#allocation2 + $0x9a] sm:$0xff]
    %v9175 = vld [vmem:[#allocation2 + $0xa2] sm:$0xff]
    %v9176 = vld [vmem:[#allocation2 + $0xaa] sm:$0xff]
    %v9177 = vld [vmem:[#allocation2 + $0xb2] sm:$0xff]
    %v9178 = vld [vmem:[#allocation2 + $0xba] sm:$0xff]
    %v9179 = vld [vmem:[#allocation2 + $0xc2] sm:$0xff]
    %v9180 = vld [vmem:[#allocation2 + $0xca] sm:$0xff]
    %v9181 = vld [vmem:[#allocation2 + $0xd2] sm:$0xff]
    %v9182 = vld [vmem:[#allocation2 + $0xda] sm:$0xff]
    %v9183 = vld [vmem:[#allocation2 + $0xe2] sm:$0xff]
    %v9184 = vld [vmem:[#allocation2 + $0xea] sm:$0xff]
    %v9185 = vld [vmem:[#allocation2 + $0xf2] sm:$0xff]
    %v9186 = vld [vmem:[#allocation2 + $0xfa] sm:$0xff]
    %v9187 = vld [vmem:[#allocation2 + $0x102] sm:$0xff]
    %v9188 = vld [vmem:[#allocation2 + $0x10a] sm:$0xff]
    %v9189 = vld [vmem:[#allocation2 + $0x112] sm:$0xff]
    %v9190 = vld [vmem:[#allocation2 + $0x11a] sm:$0xff]
    %v9191 = vld [vmem:[#allocation2 + $0x122] sm:$0xff]
    %v9192 = vld [vmem:[#allocation2 + $0x12a] sm:$0xff]
    %v9193 = vld [vmem:[#allocation2 + $0x132] sm:$0xff]
    %v9194 = vld [vmem:[#allocation2 + $0x13a] sm:$0xff]
    %v9195 = vld [vmem:[#allocation2 + $0x142] sm:$0xff]
    %v9196 = vld [vmem:[#allocation2 + $0x14a] sm:$0xff]
    %v9197 = vld [vmem:[#allocation2 + $0x152] sm:$0xff]
    %v9198 = vld [vmem:[#allocation2 + $0x15a] sm:$0xff]
    %v9199 = vld [vmem:[#allocation2 + $0x162] sm:$0xff]
    %v9200 = vld [vmem:[#allocation2 + $0x16a] sm:$0xff]
    %v9201 = vld [vmem:[#allocation2 + $0x172] sm:$0xff]
    %v9202 = vld [vmem:[#allocation2 + $0x17a] sm:$0xff]
    %v9203 = vld [vmem:[#allocation2 + $0x182] sm:$0xff]
    %v9204 = vld [vmem:[#allocation2 + $0x18a] sm:$0xff]
    %v9205 = vld [vmem:[#allocation2 + $0x192] sm:$0xff]
    %v9206 = vld [vmem:[#allocation2 + $0x19a] sm:$0xff]
    %v9207 = vld [vmem:[#allocation2 + $0x1a2] sm:$0xff]
    %v9208 = vld [vmem:[#allocation2 + $0x1aa] sm:$0xff]
    %v9209 = vld [vmem:[#allocation2 + $0x1b2] sm:$0xff]
    %v9210 = vld [vmem:[#allocation2 + $0x1ba] sm:$0xff]
    %v9211 = vld [vmem:[#allocation2 + $0x1c2] sm:$0xff]
    %v9212 = vld [vmem:[#allocation2 + $0x1ca] sm:$0xff]
    %v9213 = vld [vmem:[#allocation2 + $0x1d2] sm:$0xff]
    %v9214 = vld [vmem:[#allocation2 + $0x1da] sm:$0xff]
    %v9215 = vld [vmem:[#allocation2 + $0x1e2] sm:$0xff]
    %v9216 = vld [vmem:[#allocation2 + $0x1ea] sm:$0xff]
    %v9217 = vld [vmem:[#allocation2 + $0x1f2] sm:$0xff]
    %v9218 = vld [vmem:[%s3 + $0x7e] sm:$0x3f]
    %v9220 = vsel %vm1254, %v9169, 0
    %v9223 = vsel %vm1254, %v9170, 0
    %v9226 = vsel %vm1254, %v9171, 0
    %v9229 = vsel %vm1254, %v9172, 0
    %v9232 = vsel %vm1254, %v9173, 0
    %v9235 = vsel %vm1254, %v9174, 0
    %v9238 = vsel %vm1254, %v9175, 0
    %v9241 = vsel %vm1254, %v9176, 0
    %v9244 = vsel %vm1254, %v9177, 0
    %v9247 = vsel %vm1254, %v9178, 0
    %v9250 = vsel %vm1254, %v9179, 0
    %v9253 = vsel %vm1254, %v9180, 0
    %v9256 = vsel %vm1254, %v9181, 0
    %v9259 = vsel %vm1254, %v9182, 0
    %v9262 = vsel %vm1254, %v9183, 0
    %v9265 = vsel %vm1254, %v9184, 0
    %v9268 = vsel %vm1254, %v9185, 0
    %v9271 = vsel %vm1254, %v9186, 0
    %v9274 = vsel %vm1254, %v9187, 0
    %v9277 = vsel %vm1254, %v9188, 0
    %v9280 = vsel %vm1254, %v9189, 0
    %v9283 = vsel %vm1254, %v9190, 0
    %v9286 = vsel %vm1254, %v9191, 0
    %v9289 = vsel %vm1254, %v9192, 0
    %v9292 = vsel %vm1254, %v9193, 0
    %v9295 = vsel %vm1254, %v9194, 0
    %v9298 = vsel %vm1254, %v9195, 0
    %v9301 = vsel %vm1254, %v9196, 0
    %v9304 = vsel %vm1254, %v9197, 0
    %v9307 = vsel %vm1254, %v9198, 0
    %v9310 = vsel %vm1254, %v9199, 0
    %v9313 = vsel %vm1254, %v9200, 0
    %v9316 = vsel %vm1254, %v9201, 0
    %v9319 = vsel %vm1254, %v9202, 0
    %v9322 = vsel %vm1254, %v9203, 0
    %v9325 = vsel %vm1254, %v9204, 0
    %v9328 = vsel %vm1254, %v9205, 0
    %v9331 = vsel %vm1254, %v9206, 0
    %v9334 = vsel %vm1254, %v9207, 0
    %v9337 = vsel %vm1254, %v9208, 0
    %v9340 = vsel %vm1254, %v9209, 0
    %v9343 = vsel %vm1254, %v9210, 0
    %v9346 = vsel %vm1254, %v9211, 0
    %v9349 = vsel %vm1254, %v9212, 0
    %v9352 = vsel %vm1254, %v9213, 0
    %v9355 = vsel %vm1254, %v9214, 0
    %v9358 = vsel %vm1254, %v9215, 0
    %v9361 = vsel %vm1254, %v9216, 0
    %v9364 = vsel %vm1254, %v9217, 0
    %v9367 = vsel %vm1520, %v9218, 0
    %9369 = vmatpush.msra.mxu0 0.0
    %9370 = vmatpush.msra.mxu0 0.0
    %9371 = vmatpush.msra.mxu0 0.0
    %9372 = vmatpush.msra.mxu0 0.0
    %9373 = vmatpush.msra.mxu0 0.0
    %9374 = vmatpush.msra.mxu0 0.0
    %9375 = vmatpush.msra.mxu0 0.0
    %9376 = vmatpush.msra.mxu0 0.0
    %9377 = vmatpush.msra.mxu0 0.0
    %9378 = vmatpush.msra.mxu0 0.0
    %9379 = vmatpush.msra.mxu0 0.0
    %9380 = vmatpush.msra.mxu0 0.0
    %9381 = vmatpush.msra.mxu0 0.0
    %9382 = vmatpush.msra.mxu0 0.0
    %9383 = vmatpush.msra.mxu0 0.0
    %9384 = vmatpush.msra.mxu0 %v9367
    %9385 = vmatmul.f32.gmra.mxu0 %v9220
    %v9386 = vpop.f32.mrf.mxu0
    %v9387 = vadd.f32 0.0, %v9386
    %9388 = vmatmul.f32.gmra.mxu0 %v9223
    %v9389 = vpop.f32.mrf.mxu0
    %v9390 = vadd.f32 0.0, %v9389
    %9391 = vmatmul.f32.gmra.mxu0 %v9226
    %v9392 = vpop.f32.mrf.mxu0
    %v9393 = vadd.f32 0.0, %v9392
    %9394 = vmatmul.f32.gmra.mxu0 %v9229
    %v9395 = vpop.f32.mrf.mxu0
    %v9396 = vadd.f32 0.0, %v9395
    %9397 = vmatmul.f32.gmra.mxu0 %v9232
    %v9398 = vpop.f32.mrf.mxu0
    %v9399 = vadd.f32 0.0, %v9398
    %9400 = vmatmul.f32.gmra.mxu0 %v9235
    %v9401 = vpop.f32.mrf.mxu0
    %v9402 = vadd.f32 0.0, %v9401
    %9403 = vmatmul.f32.gmra.mxu0 %v9238
    %v9404 = vpop.f32.mrf.mxu0
    %9405 = vmatmul.f32.gmra.mxu0 %v9241
    %v9406 = vpop.f32.mrf.mxu0
    %v9407 = vadd.f32 0.0, %v9406
    %9408 = vmatmul.f32.gmra.mxu0 %v9244
    %v9409 = vpop.f32.mrf.mxu0
    %v9410 = vadd.f32 0.0, %v9409
    %9411 = vmatmul.f32.gmra.mxu0 %v9247
    %v9412 = vpop.f32.mrf.mxu0
    %v9413 = vadd.f32 0.0, %v9412
    %9414 = vmatmul.f32.gmra.mxu0 %v9250
    %v9415 = vpop.f32.mrf.mxu0
    %v9416 = vadd.f32 0.0, %v9415
    %9417 = vmatmul.f32.gmra.mxu0 %v9253
    %v9418 = vpop.f32.mrf.mxu0
    %v9419 = vadd.f32 0.0, %v9418
    %9420 = vmatmul.f32.gmra.mxu0 %v9256
    %v9421 = vpop.f32.mrf.mxu0
    %v9422 = vadd.f32 0.0, %v9421
    %9423 = vmatmul.f32.gmra.mxu0 %v9259
    %v9424 = vpop.f32.mrf.mxu0
    %9425 = vmatmul.f32.gmra.mxu0 %v9262
    %v9426 = vpop.f32.mrf.mxu0
    %v9427 = vadd.f32 0.0, %v9426
    %9428 = vmatmul.f32.gmra.mxu0 %v9265
    %v9429 = vpop.f32.mrf.mxu0
    %v9430 = vadd.f32 0.0, %v9429
    %9431 = vmatmul.f32.gmra.mxu0 %v9268
    %v9432 = vpop.f32.mrf.mxu0
    %v9433 = vadd.f32 0.0, %v9432
    %9434 = vmatmul.f32.gmra.mxu0 %v9271
    %v9435 = vpop.f32.mrf.mxu0
    %v9436 = vadd.f32 0.0, %v9435
    %9437 = vmatmul.f32.gmra.mxu0 %v9274
    %v9438 = vpop.f32.mrf.mxu0
    %v9439 = vadd.f32 0.0, %v9438
    %9440 = vmatmul.f32.gmra.mxu0 %v9277
    %v9441 = vpop.f32.mrf.mxu0
    %v9442 = vadd.f32 0.0, %v9441
    %9443 = vmatmul.f32.gmra.mxu0 %v9280
    %v9444 = vpop.f32.mrf.mxu0
    %9445 = vmatmul.f32.gmra.mxu0 %v9283
    %v9446 = vpop.f32.mrf.mxu0
    %v9447 = vadd.f32 0.0, %v9446
    %9448 = vmatmul.f32.gmra.mxu0 %v9286
    %v9449 = vpop.f32.mrf.mxu0
    %v9450 = vadd.f32 0.0, %v9449
    %9451 = vmatmul.f32.gmra.mxu0 %v9289
    %v9452 = vpop.f32.mrf.mxu0
    %v9453 = vadd.f32 0.0, %v9452
    %9454 = vmatmul.f32.gmra.mxu0 %v9292
    %v9455 = vpop.f32.mrf.mxu0
    %v9456 = vadd.f32 0.0, %v9455
    %9457 = vmatmul.f32.gmra.mxu0 %v9295
    %v9458 = vpop.f32.mrf.mxu0
    %v9459 = vadd.f32 0.0, %v9458
    %9460 = vmatmul.f32.gmra.mxu0 %v9298
    %v9461 = vpop.f32.mrf.mxu0
    %v9462 = vadd.f32 0.0, %v9461
    %9463 = vmatmul.f32.gmra.mxu0 %v9301
    %v9464 = vpop.f32.mrf.mxu0
    %9465 = vmatmul.f32.gmra.mxu0 %v9304
    %v9466 = vpop.f32.mrf.mxu0
    %v9467 = vadd.f32 0.0, %v9466
    %9468 = vmatmul.f32.gmra.mxu0 %v9307
    %v9469 = vpop.f32.mrf.mxu0
    %v9470 = vadd.f32 0.0, %v9469
    %9471 = vmatmul.f32.gmra.mxu0 %v9310
    %v9472 = vpop.f32.mrf.mxu0
    %v9473 = vadd.f32 0.0, %v9472
    %9474 = vmatmul.f32.gmra.mxu0 %v9313
    %v9475 = vpop.f32.mrf.mxu0
    %v9476 = vadd.f32 0.0, %v9475
    %9477 = vmatmul.f32.gmra.mxu0 %v9316
    %v9478 = vpop.f32.mrf.mxu0
    %v9479 = vadd.f32 0.0, %v9478
    %9480 = vmatmul.f32.gmra.mxu0 %v9319
    %v9481 = vpop.f32.mrf.mxu0
    %v9482 = vadd.f32 0.0, %v9481
    %9483 = vmatmul.f32.gmra.mxu0 %v9322
    %v9484 = vpop.f32.mrf.mxu0
    %9485 = vmatmul.f32.gmra.mxu0 %v9325
    %v9486 = vpop.f32.mrf.mxu0
    %9487 = vmatmul.f32.gmra.mxu0 %v9328
    %v9488 = vpop.f32.mrf.mxu0
    %9489 = vmatmul.f32.gmra.mxu0 %v9331
    %v9490 = vpop.f32.mrf.mxu0
    %9491 = vmatmul.f32.gmra.mxu0 %v9334
    %v9492 = vpop.f32.mrf.mxu0
    %9493 = vmatmul.f32.gmra.mxu0 %v9337
    %v9494 = vpop.f32.mrf.mxu0
    %9495 = vmatmul.f32.gmra.mxu0 %v9340
    %v9496 = vpop.f32.mrf.mxu0
    %9497 = vmatmul.f32.gmra.mxu0 %v9343
    %v9498 = vpop.f32.mrf.mxu0
    %9499 = vmatmul.f32.gmra.mxu0 %v9346
    %v9500 = vpop.f32.mrf.mxu0
    %9501 = vmatmul.f32.gmra.mxu0 %v9349
    %v9502 = vpop.f32.mrf.mxu0
    %9503 = vmatmul.f32.gmra.mxu0 %v9352
    %v9504 = vpop.f32.mrf.mxu0
    %9505 = vmatmul.f32.gmra.mxu0 %v9355
    %v9506 = vpop.f32.mrf.mxu0
    %9507 = vmatmul.f32.gmra.mxu0 %v9358
    %v9508 = vpop.f32.mrf.mxu0
    %9509 = vmatmul.f32.gmra.mxu0 %v9361
    %v9510 = vpop.f32.mrf.mxu0
    %9511 = vmatmul.f32.gmra.mxu0 %v9364
    %v9512 = vpop.f32.mrf.mxu0
    %9513 = vdwg.mxu0
    %v9514 = vadd.f32 %v9139, %v9387
    %v9515 = vadd.f32 %v9140, %v9390
    %v9516 = vadd.f32 %v9141, %v9393
    %v9517 = vadd.f32 %v9142, %v9396
    %v9518 = vadd.f32 %v9143, %v9399
    %v9519 = vadd.f32 %v9144, %v9402
    %v9520 = vadd.f32 %v9145, %v9407
    %v9521 = vadd.f32 %v9146, %v9410
    %v9522 = vadd.f32 %v9147, %v9413
    %v9523 = vadd.f32 %v9148, %v9416
    %v9524 = vadd.f32 %v9149, %v9419
    %v9525 = vadd.f32 %v9150, %v9422
    %v9526 = vadd.f32 %v9151, %v9427
    %v9527 = vadd.f32 %v9152, %v9430
    %v9528 = vadd.f32 %v9153, %v9433
    %v9529 = vadd.f32 %v9154, %v9436
    %v9530 = vadd.f32 %v9155, %v9439
    %v9531 = vadd.f32 %v9156, %v9442
    %v9532 = vadd.f32 %v9157, %v9447
    %v9533 = vadd.f32 %v9158, %v9450
    %v9534 = vadd.f32 %v9159, %v9453
    %v9535 = vadd.f32 %v9160, %v9456
    %v9536 = vadd.f32 %v9161, %v9459
    %v9537 = vadd.f32 %v9162, %v9462
    %v9538 = vadd.f32 %v9163, %v9467
    %v9539 = vadd.f32 %v9164, %v9470
    %v9540 = vadd.f32 %v9165, %v9473
    %v9541 = vadd.f32 %v9166, %v9476
    %v9542 = vadd.f32 %v9167, %v9479
    %v9543 = vadd.f32 %v9168, %v9482
    %v9544 = vld [vmem:[#allocation2 + $0x74] sm:$0xff]
    %v9545 = vld [vmem:[#allocation2 + $0x7c] sm:$0xff]
    %v9546 = vld [vmem:[#allocation2 + $0x84] sm:$0xff]
    %v9547 = vld [vmem:[#allocation2 + $0x8c] sm:$0xff]
    %v9548 = vld [vmem:[#allocation2 + $0x94] sm:$0xff]
    %v9549 = vld [vmem:[#allocation2 + $0x9c] sm:$0xff]
    %v9550 = vld [vmem:[#allocation2 + $0xa4] sm:$0xff]
    %v9551 = vld [vmem:[#allocation2 + $0xac] sm:$0xff]
    %v9552 = vld [vmem:[#allocation2 + $0xb4] sm:$0xff]
    %v9553 = vld [vmem:[#allocation2 + $0xbc] sm:$0xff]
    %v9554 = vld [vmem:[#allocation2 + $0xc4] sm:$0xff]
    %v9555 = vld [vmem:[#allocation2 + $0xcc] sm:$0xff]
    %v9556 = vld [vmem:[#allocation2 + $0xd4] sm:$0xff]
    %v9557 = vld [vmem:[#allocation2 + $0xdc] sm:$0xff]
    %v9558 = vld [vmem:[#allocation2 + $0xe4] sm:$0xff]
    %v9559 = vld [vmem:[#allocation2 + $0xec] sm:$0xff]
    %v9560 = vld [vmem:[#allocation2 + $0xf4] sm:$0xff]
    %v9561 = vld [vmem:[#allocation2 + $0xfc] sm:$0xff]
    %v9562 = vld [vmem:[#allocation2 + $0x104] sm:$0xff]
    %v9563 = vld [vmem:[#allocation2 + $0x10c] sm:$0xff]
    %v9564 = vld [vmem:[#allocation2 + $0x114] sm:$0xff]
    %v9565 = vld [vmem:[#allocation2 + $0x11c] sm:$0xff]
    %v9566 = vld [vmem:[#allocation2 + $0x124] sm:$0xff]
    %v9567 = vld [vmem:[#allocation2 + $0x12c] sm:$0xff]
    %v9568 = vld [vmem:[#allocation2 + $0x134] sm:$0xff]
    %v9569 = vld [vmem:[#allocation2 + $0x13c] sm:$0xff]
    %v9570 = vld [vmem:[#allocation2 + $0x144] sm:$0xff]
    %v9571 = vld [vmem:[#allocation2 + $0x14c] sm:$0xff]
    %v9572 = vld [vmem:[#allocation2 + $0x154] sm:$0xff]
    %v9573 = vld [vmem:[#allocation2 + $0x15c] sm:$0xff]
    %v9574 = vld [vmem:[#allocation2 + $0x164] sm:$0xff]
    %v9575 = vld [vmem:[#allocation2 + $0x16c] sm:$0xff]
    %v9576 = vld [vmem:[#allocation2 + $0x174] sm:$0xff]
    %v9577 = vld [vmem:[#allocation2 + $0x17c] sm:$0xff]
    %v9578 = vld [vmem:[#allocation2 + $0x184] sm:$0xff]
    %v9579 = vld [vmem:[#allocation2 + $0x18c] sm:$0xff]
    %v9580 = vld [vmem:[#allocation2 + $0x194] sm:$0xff]
    %v9581 = vld [vmem:[#allocation2 + $0x19c] sm:$0xff]
    %v9582 = vld [vmem:[#allocation2 + $0x1a4] sm:$0xff]
    %v9583 = vld [vmem:[#allocation2 + $0x1ac] sm:$0xff]
    %v9584 = vld [vmem:[#allocation2 + $0x1b4] sm:$0xff]
    %v9585 = vld [vmem:[#allocation2 + $0x1bc] sm:$0xff]
    %v9586 = vld [vmem:[#allocation2 + $0x1c4] sm:$0xff]
    %v9587 = vld [vmem:[#allocation2 + $0x1cc] sm:$0xff]
    %v9588 = vld [vmem:[#allocation2 + $0x1d4] sm:$0xff]
    %v9589 = vld [vmem:[#allocation2 + $0x1dc] sm:$0xff]
    %v9590 = vld [vmem:[#allocation2 + $0x1e4] sm:$0xff]
    %v9591 = vld [vmem:[#allocation2 + $0x1ec] sm:$0xff]
    %v9592 = vld [vmem:[#allocation2 + $0x1f4] sm:$0xff]
    %v9593 = vld [vmem:[%s3 + $0x84] sm:$0x3f]
    %v9595 = vsel %vm1254, %v9544, 0
    %v9598 = vsel %vm1254, %v9545, 0
    %v9601 = vsel %vm1254, %v9546, 0
    %v9604 = vsel %vm1254, %v9547, 0
    %v9607 = vsel %vm1254, %v9548, 0
    %v9610 = vsel %vm1254, %v9549, 0
    %v9613 = vsel %vm1254, %v9550, 0
    %v9616 = vsel %vm1254, %v9551, 0
    %v9619 = vsel %vm1254, %v9552, 0
    %v9622 = vsel %vm1254, %v9553, 0
    %v9625 = vsel %vm1254, %v9554, 0
    %v9628 = vsel %vm1254, %v9555, 0
    %v9631 = vsel %vm1254, %v9556, 0
    %v9634 = vsel %vm1254, %v9557, 0
    %v9637 = vsel %vm1254, %v9558, 0
    %v9640 = vsel %vm1254, %v9559, 0
    %v9643 = vsel %vm1254, %v9560, 0
    %v9646 = vsel %vm1254, %v9561, 0
    %v9649 = vsel %vm1254, %v9562, 0
    %v9652 = vsel %vm1254, %v9563, 0
    %v9655 = vsel %vm1254, %v9564, 0
    %v9658 = vsel %vm1254, %v9565, 0
    %v9661 = vsel %vm1254, %v9566, 0
    %v9664 = vsel %vm1254, %v9567, 0
    %v9667 = vsel %vm1254, %v9568, 0
    %v9670 = vsel %vm1254, %v9569, 0
    %v9673 = vsel %vm1254, %v9570, 0
    %v9676 = vsel %vm1254, %v9571, 0
    %v9679 = vsel %vm1254, %v9572, 0
    %v9682 = vsel %vm1254, %v9573, 0
    %v9685 = vsel %vm1254, %v9574, 0
    %v9688 = vsel %vm1254, %v9575, 0
    %v9691 = vsel %vm1254, %v9576, 0
    %v9694 = vsel %vm1254, %v9577, 0
    %v9697 = vsel %vm1254, %v9578, 0
    %v9700 = vsel %vm1254, %v9579, 0
    %v9703 = vsel %vm1254, %v9580, 0
    %v9706 = vsel %vm1254, %v9581, 0
    %v9709 = vsel %vm1254, %v9582, 0
    %v9712 = vsel %vm1254, %v9583, 0
    %v9715 = vsel %vm1254, %v9584, 0
    %v9718 = vsel %vm1254, %v9585, 0
    %v9721 = vsel %vm1254, %v9586, 0
    %v9724 = vsel %vm1254, %v9587, 0
    %v9727 = vsel %vm1254, %v9588, 0
    %v9730 = vsel %vm1254, %v9589, 0
    %v9733 = vsel %vm1254, %v9590, 0
    %v9736 = vsel %vm1254, %v9591, 0
    %v9739 = vsel %vm1254, %v9592, 0
    %v9742 = vsel %vm1520, %v9593, 0
    %9744 = vmatpush.msra.mxu0 0.0
    %9745 = vmatpush.msra.mxu0 0.0
    %9746 = vmatpush.msra.mxu0 0.0
    %9747 = vmatpush.msra.mxu0 0.0
    %9748 = vmatpush.msra.mxu0 0.0
    %9749 = vmatpush.msra.mxu0 0.0
    %9750 = vmatpush.msra.mxu0 0.0
    %9751 = vmatpush.msra.mxu0 0.0
    %9752 = vmatpush.msra.mxu0 0.0
    %9753 = vmatpush.msra.mxu0 0.0
    %9754 = vmatpush.msra.mxu0 0.0
    %9755 = vmatpush.msra.mxu0 0.0
    %9756 = vmatpush.msra.mxu0 0.0
    %9757 = vmatpush.msra.mxu0 0.0
    %9758 = vmatpush.msra.mxu0 0.0
    %9759 = vmatpush.msra.mxu0 %v9742
    %9760 = vmatmul.f32.gmra.mxu0 %v9595
    %v9761 = vpop.f32.mrf.mxu0
    %v9762 = vadd.f32 0.0, %v9761
    %9763 = vmatmul.f32.gmra.mxu0 %v9598
    %v9764 = vpop.f32.mrf.mxu0
    %v9765 = vadd.f32 0.0, %v9764
    %9766 = vmatmul.f32.gmra.mxu0 %v9601
    %v9767 = vpop.f32.mrf.mxu0
    %v9768 = vadd.f32 0.0, %v9767
    %9769 = vmatmul.f32.gmra.mxu0 %v9604
    %v9770 = vpop.f32.mrf.mxu0
    %v9771 = vadd.f32 0.0, %v9770
    %9772 = vmatmul.f32.gmra.mxu0 %v9607
    %v9773 = vpop.f32.mrf.mxu0
    %v9774 = vadd.f32 0.0, %v9773
    %9775 = vmatmul.f32.gmra.mxu0 %v9610
    %v9776 = vpop.f32.mrf.mxu0
    %v9777 = vadd.f32 0.0, %v9776
    %9778 = vmatmul.f32.gmra.mxu0 %v9613
    %v9779 = vpop.f32.mrf.mxu0
    %9780 = vmatmul.f32.gmra.mxu0 %v9616
    %v9781 = vpop.f32.mrf.mxu0
    %v9782 = vadd.f32 0.0, %v9781
    %9783 = vmatmul.f32.gmra.mxu0 %v9619
    %v9784 = vpop.f32.mrf.mxu0
    %v9785 = vadd.f32 0.0, %v9784
    %9786 = vmatmul.f32.gmra.mxu0 %v9622
    %v9787 = vpop.f32.mrf.mxu0
    %v9788 = vadd.f32 0.0, %v9787
    %9789 = vmatmul.f32.gmra.mxu0 %v9625
    %v9790 = vpop.f32.mrf.mxu0
    %v9791 = vadd.f32 0.0, %v9790
    %9792 = vmatmul.f32.gmra.mxu0 %v9628
    %v9793 = vpop.f32.mrf.mxu0
    %v9794 = vadd.f32 0.0, %v9793
    %9795 = vmatmul.f32.gmra.mxu0 %v9631
    %v9796 = vpop.f32.mrf.mxu0
    %v9797 = vadd.f32 0.0, %v9796
    %9798 = vmatmul.f32.gmra.mxu0 %v9634
    %v9799 = vpop.f32.mrf.mxu0
    %9800 = vmatmul.f32.gmra.mxu0 %v9637
    %v9801 = vpop.f32.mrf.mxu0
    %v9802 = vadd.f32 0.0, %v9801
    %9803 = vmatmul.f32.gmra.mxu0 %v9640
    %v9804 = vpop.f32.mrf.mxu0
    %v9805 = vadd.f32 0.0, %v9804
    %9806 = vmatmul.f32.gmra.mxu0 %v9643
    %v9807 = vpop.f32.mrf.mxu0
    %v9808 = vadd.f32 0.0, %v9807
    %9809 = vmatmul.f32.gmra.mxu0 %v9646
    %v9810 = vpop.f32.mrf.mxu0
    %v9811 = vadd.f32 0.0, %v9810
    %9812 = vmatmul.f32.gmra.mxu0 %v9649
    %v9813 = vpop.f32.mrf.mxu0
    %v9814 = vadd.f32 0.0, %v9813
    %9815 = vmatmul.f32.gmra.mxu0 %v9652
    %v9816 = vpop.f32.mrf.mxu0
    %v9817 = vadd.f32 0.0, %v9816
    %9818 = vmatmul.f32.gmra.mxu0 %v9655
    %v9819 = vpop.f32.mrf.mxu0
    %9820 = vmatmul.f32.gmra.mxu0 %v9658
    %v9821 = vpop.f32.mrf.mxu0
    %v9822 = vadd.f32 0.0, %v9821
    %9823 = vmatmul.f32.gmra.mxu0 %v9661
    %v9824 = vpop.f32.mrf.mxu0
    %v9825 = vadd.f32 0.0, %v9824
    %9826 = vmatmul.f32.gmra.mxu0 %v9664
    %v9827 = vpop.f32.mrf.mxu0
    %v9828 = vadd.f32 0.0, %v9827
    %9829 = vmatmul.f32.gmra.mxu0 %v9667
    %v9830 = vpop.f32.mrf.mxu0
    %v9831 = vadd.f32 0.0, %v9830
    %9832 = vmatmul.f32.gmra.mxu0 %v9670
    %v9833 = vpop.f32.mrf.mxu0
    %v9834 = vadd.f32 0.0, %v9833
    %9835 = vmatmul.f32.gmra.mxu0 %v9673
    %v9836 = vpop.f32.mrf.mxu0
    %v9837 = vadd.f32 0.0, %v9836
    %9838 = vmatmul.f32.gmra.mxu0 %v9676
    %v9839 = vpop.f32.mrf.mxu0
    %9840 = vmatmul.f32.gmra.mxu0 %v9679
    %v9841 = vpop.f32.mrf.mxu0
    %v9842 = vadd.f32 0.0, %v9841
    %9843 = vmatmul.f32.gmra.mxu0 %v9682
    %v9844 = vpop.f32.mrf.mxu0
    %v9845 = vadd.f32 0.0, %v9844
    %9846 = vmatmul.f32.gmra.mxu0 %v9685
    %v9847 = vpop.f32.mrf.mxu0
    %v9848 = vadd.f32 0.0, %v9847
    %9849 = vmatmul.f32.gmra.mxu0 %v9688
    %v9850 = vpop.f32.mrf.mxu0
    %v9851 = vadd.f32 0.0, %v9850
    %9852 = vmatmul.f32.gmra.mxu0 %v9691
    %v9853 = vpop.f32.mrf.mxu0
    %v9854 = vadd.f32 0.0, %v9853
    %9855 = vmatmul.f32.gmra.mxu0 %v9694
    %v9856 = vpop.f32.mrf.mxu0
    %v9857 = vadd.f32 0.0, %v9856
    %9858 = vmatmul.f32.gmra.mxu0 %v9697
    %v9859 = vpop.f32.mrf.mxu0
    %9860 = vmatmul.f32.gmra.mxu0 %v9700
    %v9861 = vpop.f32.mrf.mxu0
    %9862 = vmatmul.f32.gmra.mxu0 %v9703
    %v9863 = vpop.f32.mrf.mxu0
    %9864 = vmatmul.f32.gmra.mxu0 %v9706
    %v9865 = vpop.f32.mrf.mxu0
    %9866 = vmatmul.f32.gmra.mxu0 %v9709
    %v9867 = vpop.f32.mrf.mxu0
    %9868 = vmatmul.f32.gmra.mxu0 %v9712
    %v9869 = vpop.f32.mrf.mxu0
    %9870 = vmatmul.f32.gmra.mxu0 %v9715
    %v9871 = vpop.f32.mrf.mxu0
    %9872 = vmatmul.f32.gmra.mxu0 %v9718
    %v9873 = vpop.f32.mrf.mxu0
    %9874 = vmatmul.f32.gmra.mxu0 %v9721
    %v9875 = vpop.f32.mrf.mxu0
    %9876 = vmatmul.f32.gmra.mxu0 %v9724
    %v9877 = vpop.f32.mrf.mxu0
    %9878 = vmatmul.f32.gmra.mxu0 %v9727
    %v9879 = vpop.f32.mrf.mxu0
    %9880 = vmatmul.f32.gmra.mxu0 %v9730
    %v9881 = vpop.f32.mrf.mxu0
    %9882 = vmatmul.f32.gmra.mxu0 %v9733
    %v9883 = vpop.f32.mrf.mxu0
    %9884 = vmatmul.f32.gmra.mxu0 %v9736
    %v9885 = vpop.f32.mrf.mxu0
    %9886 = vmatmul.f32.gmra.mxu0 %v9739
    %v9887 = vpop.f32.mrf.mxu0
    %9888 = vdwg.mxu0
    %v9889 = vadd.f32 %v9514, %v9762
    %v9890 = vadd.f32 %v9515, %v9765
    %v9891 = vadd.f32 %v9516, %v9768
    %v9892 = vadd.f32 %v9517, %v9771
    %v9893 = vadd.f32 %v9518, %v9774
    %v9894 = vadd.f32 %v9519, %v9777
    %v9895 = vadd.f32 %v9520, %v9782
    %v9896 = vadd.f32 %v9521, %v9785
    %v9897 = vadd.f32 %v9522, %v9788
    %v9898 = vadd.f32 %v9523, %v9791
    %v9899 = vadd.f32 %v9524, %v9794
    %v9900 = vadd.f32 %v9525, %v9797
    %v9901 = vadd.f32 %v9526, %v9802
    %v9902 = vadd.f32 %v9527, %v9805
    %v9903 = vadd.f32 %v9528, %v9808
    %v9904 = vadd.f32 %v9529, %v9811
    %v9905 = vadd.f32 %v9530, %v9814
    %v9906 = vadd.f32 %v9531, %v9817
    %v9907 = vadd.f32 %v9532, %v9822
    %v9908 = vadd.f32 %v9533, %v9825
    %v9909 = vadd.f32 %v9534, %v9828
    %v9910 = vadd.f32 %v9535, %v9831
    %v9911 = vadd.f32 %v9536, %v9834
    %v9912 = vadd.f32 %v9537, %v9837
    %v9913 = vadd.f32 %v9538, %v9842
    %v9914 = vadd.f32 %v9539, %v9845
    %v9915 = vadd.f32 %v9540, %v9848
    %v9916 = vadd.f32 %v9541, %v9851
    %v9917 = vadd.f32 %v9542, %v9854
    %v9918 = vadd.f32 %v9543, %v9857
    %v9919 = vld [vmem:[#allocation2 + $0x76] sm:$0xff]
    %v9920 = vld [vmem:[#allocation2 + $0x7e] sm:$0xff]
    %v9921 = vld [vmem:[#allocation2 + $0x86] sm:$0xff]
    %v9922 = vld [vmem:[#allocation2 + $0x8e] sm:$0xff]
    %v9923 = vld [vmem:[#allocation2 + $0x96] sm:$0xff]
    %v9924 = vld [vmem:[#allocation2 + $0x9e] sm:$0xff]
    %v9925 = vld [vmem:[#allocation2 + $0xa6] sm:$0xff]
    %v9926 = vld [vmem:[#allocation2 + $0xae] sm:$0xff]
    %v9927 = vld [vmem:[#allocation2 + $0xb6] sm:$0xff]
    %v9928 = vld [vmem:[#allocation2 + $0xbe] sm:$0xff]
    %v9929 = vld [vmem:[#allocation2 + $0xc6] sm:$0xff]
    %v9930 = vld [vmem:[#allocation2 + $0xce] sm:$0xff]
    %v9931 = vld [vmem:[#allocation2 + $0xd6] sm:$0xff]
    %v9932 = vld [vmem:[#allocation2 + $0xde] sm:$0xff]
    %v9933 = vld [vmem:[#allocation2 + $0xe6] sm:$0xff]
    %v9934 = vld [vmem:[#allocation2 + $0xee] sm:$0xff]
    %v9935 = vld [vmem:[#allocation2 + $0xf6] sm:$0xff]
    %v9936 = vld [vmem:[#allocation2 + $0xfe] sm:$0xff]
    %v9937 = vld [vmem:[#allocation2 + $0x106] sm:$0xff]
    %v9938 = vld [vmem:[#allocation2 + $0x10e] sm:$0xff]
    %v9939 = vld [vmem:[#allocation2 + $0x116] sm:$0xff]
    %v9940 = vld [vmem:[#allocation2 + $0x11e] sm:$0xff]
    %v9941 = vld [vmem:[#allocation2 + $0x126] sm:$0xff]
    %v9942 = vld [vmem:[#allocation2 + $0x12e] sm:$0xff]
    %v9943 = vld [vmem:[#allocation2 + $0x136] sm:$0xff]
    %v9944 = vld [vmem:[#allocation2 + $0x13e] sm:$0xff]
    %v9945 = vld [vmem:[#allocation2 + $0x146] sm:$0xff]
    %v9946 = vld [vmem:[#allocation2 + $0x14e] sm:$0xff]
    %v9947 = vld [vmem:[#allocation2 + $0x156] sm:$0xff]
    %v9948 = vld [vmem:[#allocation2 + $0x15e] sm:$0xff]
    %v9949 = vld [vmem:[#allocation2 + $0x166] sm:$0xff]
    %v9950 = vld [vmem:[#allocation2 + $0x16e] sm:$0xff]
    %v9951 = vld [vmem:[#allocation2 + $0x176] sm:$0xff]
    %v9952 = vld [vmem:[#allocation2 + $0x17e] sm:$0xff]
    %v9953 = vld [vmem:[#allocation2 + $0x186] sm:$0xff]
    %v9954 = vld [vmem:[#allocation2 + $0x18e] sm:$0xff]
    %v9955 = vld [vmem:[#allocation2 + $0x196] sm:$0xff]
    %v9956 = vld [vmem:[#allocation2 + $0x19e] sm:$0xff]
    %v9957 = vld [vmem:[#allocation2 + $0x1a6] sm:$0xff]
    %v9958 = vld [vmem:[#allocation2 + $0x1ae] sm:$0xff]
    %v9959 = vld [vmem:[#allocation2 + $0x1b6] sm:$0xff]
    %v9960 = vld [vmem:[#allocation2 + $0x1be] sm:$0xff]
    %v9961 = vld [vmem:[#allocation2 + $0x1c6] sm:$0xff]
    %v9962 = vld [vmem:[#allocation2 + $0x1ce] sm:$0xff]
    %v9963 = vld [vmem:[#allocation2 + $0x1d6] sm:$0xff]
    %v9964 = vld [vmem:[#allocation2 + $0x1de] sm:$0xff]
    %v9965 = vld [vmem:[#allocation2 + $0x1e6] sm:$0xff]
    %v9966 = vld [vmem:[#allocation2 + $0x1ee] sm:$0xff]
    %v9967 = vld [vmem:[#allocation2 + $0x1f6] sm:$0xff]
    %v9968 = vld [vmem:[%s3 + $0x8a] sm:$0x3f]
    %v9970 = vsel %vm1254, %v9919, 0
    %v9973 = vsel %vm1254, %v9920, 0
    %v9976 = vsel %vm1254, %v9921, 0
    %v9979 = vsel %vm1254, %v9922, 0
    %v9982 = vsel %vm1254, %v9923, 0
    %v9985 = vsel %vm1254, %v9924, 0
    %v9988 = vsel %vm1254, %v9925, 0
    %v9991 = vsel %vm1254, %v9926, 0
    %v9994 = vsel %vm1254, %v9927, 0
    %v9997 = vsel %vm1254, %v9928, 0
    %v10000 = vsel %vm1254, %v9929, 0
    %v10003 = vsel %vm1254, %v9930, 0
    %v10006 = vsel %vm1254, %v9931, 0
    %v10009 = vsel %vm1254, %v9932, 0
    %v10012 = vsel %vm1254, %v9933, 0
    %v10015 = vsel %vm1254, %v9934, 0
    %v10018 = vsel %vm1254, %v9935, 0
    %v10021 = vsel %vm1254, %v9936, 0
    %v10024 = vsel %vm1254, %v9937, 0
    %v10027 = vsel %vm1254, %v9938, 0
    %v10030 = vsel %vm1254, %v9939, 0
    %v10033 = vsel %vm1254, %v9940, 0
    %v10036 = vsel %vm1254, %v9941, 0
    %v10039 = vsel %vm1254, %v9942, 0
    %v10042 = vsel %vm1254, %v9943, 0
    %v10045 = vsel %vm1254, %v9944, 0
    %v10048 = vsel %vm1254, %v9945, 0
    %v10051 = vsel %vm1254, %v9946, 0
    %v10054 = vsel %vm1254, %v9947, 0
    %v10057 = vsel %vm1254, %v9948, 0
    %v10060 = vsel %vm1254, %v9949, 0
    %v10063 = vsel %vm1254, %v9950, 0
    %v10066 = vsel %vm1254, %v9951, 0
    %v10069 = vsel %vm1254, %v9952, 0
    %v10072 = vsel %vm1254, %v9953, 0
    %v10075 = vsel %vm1254, %v9954, 0
    %v10078 = vsel %vm1254, %v9955, 0
    %v10081 = vsel %vm1254, %v9956, 0
    %v10084 = vsel %vm1254, %v9957, 0
    %v10087 = vsel %vm1254, %v9958, 0
    %v10090 = vsel %vm1254, %v9959, 0
    %v10093 = vsel %vm1254, %v9960, 0
    %v10096 = vsel %vm1254, %v9961, 0
    %v10099 = vsel %vm1254, %v9962, 0
    %v10102 = vsel %vm1254, %v9963, 0
    %v10105 = vsel %vm1254, %v9964, 0
    %v10108 = vsel %vm1254, %v9965, 0
    %v10111 = vsel %vm1254, %v9966, 0
    %v10114 = vsel %vm1254, %v9967, 0
    %v10117 = vsel %vm1520, %v9968, 0
    %10119 = vmatpush.msra.mxu0 0.0
    %10120 = vmatpush.msra.mxu0 0.0
    %10121 = vmatpush.msra.mxu0 0.0
    %10122 = vmatpush.msra.mxu0 0.0
    %10123 = vmatpush.msra.mxu0 0.0
    %10124 = vmatpush.msra.mxu0 0.0
    %10125 = vmatpush.msra.mxu0 0.0
    %10126 = vmatpush.msra.mxu0 0.0
    %10127 = vmatpush.msra.mxu0 0.0
    %10128 = vmatpush.msra.mxu0 0.0
    %10129 = vmatpush.msra.mxu0 0.0
    %10130 = vmatpush.msra.mxu0 0.0
    %10131 = vmatpush.msra.mxu0 0.0
    %10132 = vmatpush.msra.mxu0 0.0
    %10133 = vmatpush.msra.mxu0 0.0
    %10134 = vmatpush.msra.mxu0 %v10117
    %10135 = vmatmul.f32.gmra.mxu0 %v9970
    %v10136 = vpop.f32.mrf.mxu0
    %v10137 = vadd.f32 0.0, %v10136
    %10138 = vmatmul.f32.gmra.mxu0 %v9973
    %v10139 = vpop.f32.mrf.mxu0
    %v10140 = vadd.f32 0.0, %v10139
    %10141 = vmatmul.f32.gmra.mxu0 %v9976
    %v10142 = vpop.f32.mrf.mxu0
    %v10143 = vadd.f32 0.0, %v10142
    %10144 = vmatmul.f32.gmra.mxu0 %v9979
    %v10145 = vpop.f32.mrf.mxu0
    %v10146 = vadd.f32 0.0, %v10145
    %10147 = vmatmul.f32.gmra.mxu0 %v9982
    %v10148 = vpop.f32.mrf.mxu0
    %v10149 = vadd.f32 0.0, %v10148
    %10150 = vmatmul.f32.gmra.mxu0 %v9985
    %v10151 = vpop.f32.mrf.mxu0
    %v10152 = vadd.f32 0.0, %v10151
    %10153 = vmatmul.f32.gmra.mxu0 %v9988
    %v10154 = vpop.f32.mrf.mxu0
    %10155 = vmatmul.f32.gmra.mxu0 %v9991
    %v10156 = vpop.f32.mrf.mxu0
    %v10157 = vadd.f32 0.0, %v10156
    %10158 = vmatmul.f32.gmra.mxu0 %v9994
    %v10159 = vpop.f32.mrf.mxu0
    %v10160 = vadd.f32 0.0, %v10159
    %10161 = vmatmul.f32.gmra.mxu0 %v9997
    %v10162 = vpop.f32.mrf.mxu0
    %v10163 = vadd.f32 0.0, %v10162
    %10164 = vmatmul.f32.gmra.mxu0 %v10000
    %v10165 = vpop.f32.mrf.mxu0
    %v10166 = vadd.f32 0.0, %v10165
    %10167 = vmatmul.f32.gmra.mxu0 %v10003
    %v10168 = vpop.f32.mrf.mxu0
    %v10169 = vadd.f32 0.0, %v10168
    %10170 = vmatmul.f32.gmra.mxu0 %v10006
    %v10171 = vpop.f32.mrf.mxu0
    %v10172 = vadd.f32 0.0, %v10171
    %10173 = vmatmul.f32.gmra.mxu0 %v10009
    %v10174 = vpop.f32.mrf.mxu0
    %10175 = vmatmul.f32.gmra.mxu0 %v10012
    %v10176 = vpop.f32.mrf.mxu0
    %v10177 = vadd.f32 0.0, %v10176
    %10178 = vmatmul.f32.gmra.mxu0 %v10015
    %v10179 = vpop.f32.mrf.mxu0
    %v10180 = vadd.f32 0.0, %v10179
    %10181 = vmatmul.f32.gmra.mxu0 %v10018
    %v10182 = vpop.f32.mrf.mxu0
    %v10183 = vadd.f32 0.0, %v10182
    %10184 = vmatmul.f32.gmra.mxu0 %v10021
    %v10185 = vpop.f32.mrf.mxu0
    %v10186 = vadd.f32 0.0, %v10185
    %10187 = vmatmul.f32.gmra.mxu0 %v10024
    %v10188 = vpop.f32.mrf.mxu0
    %v10189 = vadd.f32 0.0, %v10188
    %10190 = vmatmul.f32.gmra.mxu0 %v10027
    %v10191 = vpop.f32.mrf.mxu0
    %v10192 = vadd.f32 0.0, %v10191
    %10193 = vmatmul.f32.gmra.mxu0 %v10030
    %v10194 = vpop.f32.mrf.mxu0
    %10195 = vmatmul.f32.gmra.mxu0 %v10033
    %v10196 = vpop.f32.mrf.mxu0
    %v10197 = vadd.f32 0.0, %v10196
    %10198 = vmatmul.f32.gmra.mxu0 %v10036
    %v10199 = vpop.f32.mrf.mxu0
    %v10200 = vadd.f32 0.0, %v10199
    %10201 = vmatmul.f32.gmra.mxu0 %v10039
    %v10202 = vpop.f32.mrf.mxu0
    %v10203 = vadd.f32 0.0, %v10202
    %10204 = vmatmul.f32.gmra.mxu0 %v10042
    %v10205 = vpop.f32.mrf.mxu0
    %v10206 = vadd.f32 0.0, %v10205
    %10207 = vmatmul.f32.gmra.mxu0 %v10045
    %v10208 = vpop.f32.mrf.mxu0
    %v10209 = vadd.f32 0.0, %v10208
    %10210 = vmatmul.f32.gmra.mxu0 %v10048
    %v10211 = vpop.f32.mrf.mxu0
    %v10212 = vadd.f32 0.0, %v10211
    %10213 = vmatmul.f32.gmra.mxu0 %v10051
    %v10214 = vpop.f32.mrf.mxu0
    %10215 = vmatmul.f32.gmra.mxu0 %v10054
    %v10216 = vpop.f32.mrf.mxu0
    %v10217 = vadd.f32 0.0, %v10216
    %10218 = vmatmul.f32.gmra.mxu0 %v10057
    %v10219 = vpop.f32.mrf.mxu0
    %v10220 = vadd.f32 0.0, %v10219
    %10221 = vmatmul.f32.gmra.mxu0 %v10060
    %v10222 = vpop.f32.mrf.mxu0
    %v10223 = vadd.f32 0.0, %v10222
    %10224 = vmatmul.f32.gmra.mxu0 %v10063
    %v10225 = vpop.f32.mrf.mxu0
    %v10226 = vadd.f32 0.0, %v10225
    %10227 = vmatmul.f32.gmra.mxu0 %v10066
    %v10228 = vpop.f32.mrf.mxu0
    %v10229 = vadd.f32 0.0, %v10228
    %10230 = vmatmul.f32.gmra.mxu0 %v10069
    %v10231 = vpop.f32.mrf.mxu0
    %v10232 = vadd.f32 0.0, %v10231
    %10233 = vmatmul.f32.gmra.mxu0 %v10072
    %v10234 = vpop.f32.mrf.mxu0
    %10235 = vmatmul.f32.gmra.mxu0 %v10075
    %v10236 = vpop.f32.mrf.mxu0
    %10237 = vmatmul.f32.gmra.mxu0 %v10078
    %v10238 = vpop.f32.mrf.mxu0
    %10239 = vmatmul.f32.gmra.mxu0 %v10081
    %v10240 = vpop.f32.mrf.mxu0
    %10241 = vmatmul.f32.gmra.mxu0 %v10084
    %v10242 = vpop.f32.mrf.mxu0
    %10243 = vmatmul.f32.gmra.mxu0 %v10087
    %v10244 = vpop.f32.mrf.mxu0
    %10245 = vmatmul.f32.gmra.mxu0 %v10090
    %v10246 = vpop.f32.mrf.mxu0
    %10247 = vmatmul.f32.gmra.mxu0 %v10093
    %v10248 = vpop.f32.mrf.mxu0
    %10249 = vmatmul.f32.gmra.mxu0 %v10096
    %v10250 = vpop.f32.mrf.mxu0
    %10251 = vmatmul.f32.gmra.mxu0 %v10099
    %v10252 = vpop.f32.mrf.mxu0
    %10253 = vmatmul.f32.gmra.mxu0 %v10102
    %v10254 = vpop.f32.mrf.mxu0
    %10255 = vmatmul.f32.gmra.mxu0 %v10105
    %v10256 = vpop.f32.mrf.mxu0
    %10257 = vmatmul.f32.gmra.mxu0 %v10108
    %v10258 = vpop.f32.mrf.mxu0
    %10259 = vmatmul.f32.gmra.mxu0 %v10111
    %v10260 = vpop.f32.mrf.mxu0
    %10261 = vmatmul.f32.gmra.mxu0 %v10114
    %v10262 = vpop.f32.mrf.mxu0
    %10263 = vdwg.mxu0
    %v10264 = vadd.f32 %v9889, %v10137
    %v10265 = vadd.f32 %v9890, %v10140
    %v10266 = vadd.f32 %v9891, %v10143
    %v10267 = vadd.f32 %v9892, %v10146
    %v10268 = vadd.f32 %v9893, %v10149
    %v10269 = vadd.f32 %v9894, %v10152
    %v10270 = vadd.f32 %v9895, %v10157
    %v10271 = vadd.f32 %v9896, %v10160
    %v10272 = vadd.f32 %v9897, %v10163
    %v10273 = vadd.f32 %v9898, %v10166
    %v10274 = vadd.f32 %v9899, %v10169
    %v10275 = vadd.f32 %v9900, %v10172
    %v10276 = vadd.f32 %v9901, %v10177
    %v10277 = vadd.f32 %v9902, %v10180
    %v10278 = vadd.f32 %v9903, %v10183
    %v10279 = vadd.f32 %v9904, %v10186
    %v10280 = vadd.f32 %v9905, %v10189
    %v10281 = vadd.f32 %v9906, %v10192
    %v10282 = vadd.f32 %v9907, %v10197
    %v10283 = vadd.f32 %v9908, %v10200
    %v10284 = vadd.f32 %v9909, %v10203
    %v10285 = vadd.f32 %v9910, %v10206
    %v10286 = vadd.f32 %v9911, %v10209
    %v10287 = vadd.f32 %v9912, %v10212
    %v10288 = vadd.f32 %v9913, %v10217
    %v10289 = vadd.f32 %v9914, %v10220
    %v10290 = vadd.f32 %v9915, %v10223
    %v10291 = vadd.f32 %v9916, %v10226
    %v10292 = vadd.f32 %v9917, %v10229
    %v10293 = vadd.f32 %v9918, %v10232
    %v10294 = vld [vmem:[#allocation2 + $0x78] sm:$0xff]
    %v10295 = vld [vmem:[#allocation2 + $0x80] sm:$0xff]
    %v10296 = vld [vmem:[#allocation2 + $0x88] sm:$0xff]
    %v10297 = vld [vmem:[#allocation2 + $0x90] sm:$0xff]
    %v10298 = vld [vmem:[#allocation2 + $0x98] sm:$0xff]
    %v10299 = vld [vmem:[#allocation2 + $0xa0] sm:$0xff]
    %v10300 = vld [vmem:[#allocation2 + $0xa8] sm:$0xff]
    %v10301 = vld [vmem:[#allocation2 + $0xb0] sm:$0xff]
    %v10302 = vld [vmem:[#allocation2 + $0xb8] sm:$0xff]
    %v10303 = vld [vmem:[#allocation2 + $0xc0] sm:$0xff]
    %v10304 = vld [vmem:[#allocation2 + $0xc8] sm:$0xff]
    %v10305 = vld [vmem:[#allocation2 + $0xd0] sm:$0xff]
    %v10306 = vld [vmem:[#allocation2 + $0xd8] sm:$0xff]
    %v10307 = vld [vmem:[#allocation2 + $0xe0] sm:$0xff]
    %v10308 = vld [vmem:[#allocation2 + $0xe8] sm:$0xff]
    %v10309 = vld [vmem:[#allocation2 + $0xf0] sm:$0xff]
    %v10310 = vld [vmem:[#allocation2 + $0xf8] sm:$0xff]
    %v10311 = vld [vmem:[#allocation2 + $0x100] sm:$0xff]
    %v10312 = vld [vmem:[#allocation2 + $0x108] sm:$0xff]
    %v10313 = vld [vmem:[#allocation2 + $0x110] sm:$0xff]
    %v10314 = vld [vmem:[#allocation2 + $0x118] sm:$0xff]
    %v10315 = vld [vmem:[#allocation2 + $0x120] sm:$0xff]
    %v10316 = vld [vmem:[#allocation2 + $0x128] sm:$0xff]
    %v10317 = vld [vmem:[#allocation2 + $0x130] sm:$0xff]
    %v10318 = vld [vmem:[#allocation2 + $0x138] sm:$0xff]
    %v10319 = vld [vmem:[#allocation2 + $0x140] sm:$0xff]
    %v10320 = vld [vmem:[#allocation2 + $0x148] sm:$0xff]
    %v10321 = vld [vmem:[#allocation2 + $0x150] sm:$0xff]
    %v10322 = vld [vmem:[#allocation2 + $0x158] sm:$0xff]
    %v10323 = vld [vmem:[#allocation2 + $0x160] sm:$0xff]
    %v10324 = vld [vmem:[#allocation2 + $0x168] sm:$0xff]
    %v10325 = vld [vmem:[#allocation2 + $0x170] sm:$0xff]
    %v10326 = vld [vmem:[#allocation2 + $0x178] sm:$0xff]
    %v10327 = vld [vmem:[#allocation2 + $0x180] sm:$0xff]
    %v10328 = vld [vmem:[#allocation2 + $0x188] sm:$0xff]
    %v10329 = vld [vmem:[#allocation2 + $0x190] sm:$0xff]
    %v10330 = vld [vmem:[#allocation2 + $0x198] sm:$0xff]
    %v10331 = vld [vmem:[#allocation2 + $0x1a0] sm:$0xff]
    %v10332 = vld [vmem:[#allocation2 + $0x1a8] sm:$0xff]
    %v10333 = vld [vmem:[#allocation2 + $0x1b0] sm:$0xff]
    %v10334 = vld [vmem:[#allocation2 + $0x1b8] sm:$0xff]
    %v10335 = vld [vmem:[#allocation2 + $0x1c0] sm:$0xff]
    %v10336 = vld [vmem:[#allocation2 + $0x1c8] sm:$0xff]
    %v10337 = vld [vmem:[#allocation2 + $0x1d0] sm:$0xff]
    %v10338 = vld [vmem:[#allocation2 + $0x1d8] sm:$0xff]
    %v10339 = vld [vmem:[#allocation2 + $0x1e0] sm:$0xff]
    %v10340 = vld [vmem:[#allocation2 + $0x1e8] sm:$0xff]
    %v10341 = vld [vmem:[#allocation2 + $0x1f0] sm:$0xff]
    %v10342 = vld [vmem:[#allocation2 + $0x1f8] sm:$0xff]
    %v10343 = vld [vmem:[%s3 + $0x90] sm:$0x3f]
    %v10345 = vsel %vm1254, %v10294, 0
    %v10348 = vsel %vm1254, %v10295, 0
    %v10351 = vsel %vm1254, %v10296, 0
    %v10354 = vsel %vm1254, %v10297, 0
    %v10357 = vsel %vm1254, %v10298, 0
    %v10360 = vsel %vm1254, %v10299, 0
    %v10363 = vsel %vm1254, %v10300, 0
    %v10366 = vsel %vm1254, %v10301, 0
    %v10369 = vsel %vm1254, %v10302, 0
    %v10372 = vsel %vm1254, %v10303, 0
    %v10375 = vsel %vm1254, %v10304, 0
    %v10378 = vsel %vm1254, %v10305, 0
    %v10381 = vsel %vm1254, %v10306, 0
    %v10384 = vsel %vm1254, %v10307, 0
    %v10387 = vsel %vm1254, %v10308, 0
    %v10390 = vsel %vm1254, %v10309, 0
    %v10393 = vsel %vm1254, %v10310, 0
    %v10396 = vsel %vm1254, %v10311, 0
    %v10399 = vsel %vm1254, %v10312, 0
    %v10402 = vsel %vm1254, %v10313, 0
    %v10405 = vsel %vm1254, %v10314, 0
    %v10408 = vsel %vm1254, %v10315, 0
    %v10411 = vsel %vm1254, %v10316, 0
    %v10414 = vsel %vm1254, %v10317, 0
    %v10417 = vsel %vm1254, %v10318, 0
    %v10420 = vsel %vm1254, %v10319, 0
    %v10423 = vsel %vm1254, %v10320, 0
    %v10426 = vsel %vm1254, %v10321, 0
    %v10429 = vsel %vm1254, %v10322, 0
    %v10432 = vsel %vm1254, %v10323, 0
    %v10435 = vsel %vm1254, %v10324, 0
    %v10438 = vsel %vm1254, %v10325, 0
    %v10441 = vsel %vm1254, %v10326, 0
    %v10444 = vsel %vm1254, %v10327, 0
    %v10447 = vsel %vm1254, %v10328, 0
    %v10450 = vsel %vm1254, %v10329, 0
    %v10453 = vsel %vm1254, %v10330, 0
    %v10456 = vsel %vm1254, %v10331, 0
    %v10459 = vsel %vm1254, %v10332, 0
    %v10462 = vsel %vm1254, %v10333, 0
    %v10465 = vsel %vm1254, %v10334, 0
    %v10468 = vsel %vm1254, %v10335, 0
    %v10471 = vsel %vm1254, %v10336, 0
    %v10474 = vsel %vm1254, %v10337, 0
    %v10477 = vsel %vm1254, %v10338, 0
    %v10480 = vsel %vm1254, %v10339, 0
    %v10483 = vsel %vm1254, %v10340, 0
    %v10486 = vsel %vm1254, %v10341, 0
    %v10489 = vsel %vm1254, %v10342, 0
    %v10492 = vsel %vm1520, %v10343, 0
    %10494 = vmatpush.msra.mxu0 0.0
    %10495 = vmatpush.msra.mxu0 0.0
    %10496 = vmatpush.msra.mxu0 0.0
    %10497 = vmatpush.msra.mxu0 0.0
    %10498 = vmatpush.msra.mxu0 0.0
    %10499 = vmatpush.msra.mxu0 0.0
    %10500 = vmatpush.msra.mxu0 0.0
    %10501 = vmatpush.msra.mxu0 0.0
    %10502 = vmatpush.msra.mxu0 0.0
    %10503 = vmatpush.msra.mxu0 0.0
    %10504 = vmatpush.msra.mxu0 0.0
    %10505 = vmatpush.msra.mxu0 0.0
    %10506 = vmatpush.msra.mxu0 0.0
    %10507 = vmatpush.msra.mxu0 0.0
    %10508 = vmatpush.msra.mxu0 0.0
    %10509 = vmatpush.msra.mxu0 %v10492
    %10510 = vmatmul.f32.gmra.mxu0 %v10345
    %v10511 = vpop.f32.mrf.mxu0
    %v10512 = vadd.f32 0.0, %v10511
    %10513 = vmatmul.f32.gmra.mxu0 %v10348
    %v10514 = vpop.f32.mrf.mxu0
    %v10515 = vadd.f32 0.0, %v10514
    %10516 = vmatmul.f32.gmra.mxu0 %v10351
    %v10517 = vpop.f32.mrf.mxu0
    %v10518 = vadd.f32 0.0, %v10517
    %10519 = vmatmul.f32.gmra.mxu0 %v10354
    %v10520 = vpop.f32.mrf.mxu0
    %v10521 = vadd.f32 0.0, %v10520
    %10522 = vmatmul.f32.gmra.mxu0 %v10357
    %v10523 = vpop.f32.mrf.mxu0
    %v10524 = vadd.f32 0.0, %v10523
    %10525 = vmatmul.f32.gmra.mxu0 %v10360
    %v10526 = vpop.f32.mrf.mxu0
    %v10527 = vadd.f32 0.0, %v10526
    %10528 = vmatmul.f32.gmra.mxu0 %v10363
    %v10529 = vpop.f32.mrf.mxu0
    %10530 = vmatmul.f32.gmra.mxu0 %v10366
    %v10531 = vpop.f32.mrf.mxu0
    %v10532 = vadd.f32 0.0, %v10531
    %10533 = vmatmul.f32.gmra.mxu0 %v10369
    %v10534 = vpop.f32.mrf.mxu0
    %v10535 = vadd.f32 0.0, %v10534
    %10536 = vmatmul.f32.gmra.mxu0 %v10372
    %v10537 = vpop.f32.mrf.mxu0
    %v10538 = vadd.f32 0.0, %v10537
    %10539 = vmatmul.f32.gmra.mxu0 %v10375
    %v10540 = vpop.f32.mrf.mxu0
    %v10541 = vadd.f32 0.0, %v10540
    %10542 = vmatmul.f32.gmra.mxu0 %v10378
    %v10543 = vpop.f32.mrf.mxu0
    %v10544 = vadd.f32 0.0, %v10543
    %10545 = vmatmul.f32.gmra.mxu0 %v10381
    %v10546 = vpop.f32.mrf.mxu0
    %v10547 = vadd.f32 0.0, %v10546
    %10548 = vmatmul.f32.gmra.mxu0 %v10384
    %v10549 = vpop.f32.mrf.mxu0
    %10550 = vmatmul.f32.gmra.mxu0 %v10387
    %v10551 = vpop.f32.mrf.mxu0
    %v10552 = vadd.f32 0.0, %v10551
    %10553 = vmatmul.f32.gmra.mxu0 %v10390
    %v10554 = vpop.f32.mrf.mxu0
    %v10555 = vadd.f32 0.0, %v10554
    %10556 = vmatmul.f32.gmra.mxu0 %v10393
    %v10557 = vpop.f32.mrf.mxu0
    %v10558 = vadd.f32 0.0, %v10557
    %10559 = vmatmul.f32.gmra.mxu0 %v10396
    %v10560 = vpop.f32.mrf.mxu0
    %v10561 = vadd.f32 0.0, %v10560
    %10562 = vmatmul.f32.gmra.mxu0 %v10399
    %v10563 = vpop.f32.mrf.mxu0
    %v10564 = vadd.f32 0.0, %v10563
    %10565 = vmatmul.f32.gmra.mxu0 %v10402
    %v10566 = vpop.f32.mrf.mxu0
    %v10567 = vadd.f32 0.0, %v10566
    %10568 = vmatmul.f32.gmra.mxu0 %v10405
    %v10569 = vpop.f32.mrf.mxu0
    %10570 = vmatmul.f32.gmra.mxu0 %v10408
    %v10571 = vpop.f32.mrf.mxu0
    %v10572 = vadd.f32 0.0, %v10571
    %10573 = vmatmul.f32.gmra.mxu0 %v10411
    %v10574 = vpop.f32.mrf.mxu0
    %v10575 = vadd.f32 0.0, %v10574
    %10576 = vmatmul.f32.gmra.mxu0 %v10414
    %v10577 = vpop.f32.mrf.mxu0
    %v10578 = vadd.f32 0.0, %v10577
    %10579 = vmatmul.f32.gmra.mxu0 %v10417
    %v10580 = vpop.f32.mrf.mxu0
    %v10581 = vadd.f32 0.0, %v10580
    %10582 = vmatmul.f32.gmra.mxu0 %v10420
    %v10583 = vpop.f32.mrf.mxu0
    %v10584 = vadd.f32 0.0, %v10583
    %10585 = vmatmul.f32.gmra.mxu0 %v10423
    %v10586 = vpop.f32.mrf.mxu0
    %v10587 = vadd.f32 0.0, %v10586
    %10588 = vmatmul.f32.gmra.mxu0 %v10426
    %v10589 = vpop.f32.mrf.mxu0
    %10590 = vmatmul.f32.gmra.mxu0 %v10429
    %v10591 = vpop.f32.mrf.mxu0
    %v10592 = vadd.f32 0.0, %v10591
    %10593 = vmatmul.f32.gmra.mxu0 %v10432
    %v10594 = vpop.f32.mrf.mxu0
    %v10595 = vadd.f32 0.0, %v10594
    %10596 = vmatmul.f32.gmra.mxu0 %v10435
    %v10597 = vpop.f32.mrf.mxu0
    %v10598 = vadd.f32 0.0, %v10597
    %10599 = vmatmul.f32.gmra.mxu0 %v10438
    %v10600 = vpop.f32.mrf.mxu0
    %v10601 = vadd.f32 0.0, %v10600
    %10602 = vmatmul.f32.gmra.mxu0 %v10441
    %v10603 = vpop.f32.mrf.mxu0
    %v10604 = vadd.f32 0.0, %v10603
    %10605 = vmatmul.f32.gmra.mxu0 %v10444
    %v10606 = vpop.f32.mrf.mxu0
    %v10607 = vadd.f32 0.0, %v10606
    %10608 = vmatmul.f32.gmra.mxu0 %v10447
    %v10609 = vpop.f32.mrf.mxu0
    %10610 = vmatmul.f32.gmra.mxu0 %v10450
    %v10611 = vpop.f32.mrf.mxu0
    %10612 = vmatmul.f32.gmra.mxu0 %v10453
    %v10613 = vpop.f32.mrf.mxu0
    %10614 = vmatmul.f32.gmra.mxu0 %v10456
    %v10615 = vpop.f32.mrf.mxu0
    %10616 = vmatmul.f32.gmra.mxu0 %v10459
    %v10617 = vpop.f32.mrf.mxu0
    %10618 = vmatmul.f32.gmra.mxu0 %v10462
    %v10619 = vpop.f32.mrf.mxu0
    %10620 = vmatmul.f32.gmra.mxu0 %v10465
    %v10621 = vpop.f32.mrf.mxu0
    %10622 = vmatmul.f32.gmra.mxu0 %v10468
    %v10623 = vpop.f32.mrf.mxu0
    %10624 = vmatmul.f32.gmra.mxu0 %v10471
    %v10625 = vpop.f32.mrf.mxu0
    %10626 = vmatmul.f32.gmra.mxu0 %v10474
    %v10627 = vpop.f32.mrf.mxu0
    %10628 = vmatmul.f32.gmra.mxu0 %v10477
    %v10629 = vpop.f32.mrf.mxu0
    %10630 = vmatmul.f32.gmra.mxu0 %v10480
    %v10631 = vpop.f32.mrf.mxu0
    %10632 = vmatmul.f32.gmra.mxu0 %v10483
    %v10633 = vpop.f32.mrf.mxu0
    %10634 = vmatmul.f32.gmra.mxu0 %v10486
    %v10635 = vpop.f32.mrf.mxu0
    %10636 = vmatmul.f32.gmra.mxu0 %v10489
    %v10637 = vpop.f32.mrf.mxu0
    %10638 = vdwg.mxu0
    %v10639 = vadd.f32 %v10264, %v10512
    %v10640 = vadd.f32 %v10265, %v10515
    %v10641 = vadd.f32 %v10266, %v10518
    %v10642 = vadd.f32 %v10267, %v10521
    %v10643 = vadd.f32 %v10268, %v10524
    %v10644 = vadd.f32 %v10269, %v10527
    %v10645 = vadd.f32 %v10270, %v10532
    %v10646 = vadd.f32 %v10271, %v10535
    %v10647 = vadd.f32 %v10272, %v10538
    %v10648 = vadd.f32 %v10273, %v10541
    %v10649 = vadd.f32 %v10274, %v10544
    %v10650 = vadd.f32 %v10275, %v10547
    %v10651 = vadd.f32 %v10276, %v10552
    %v10652 = vadd.f32 %v10277, %v10555
    %v10653 = vadd.f32 %v10278, %v10558
    %v10654 = vadd.f32 %v10279, %v10561
    %v10655 = vadd.f32 %v10280, %v10564
    %v10656 = vadd.f32 %v10281, %v10567
    %v10657 = vadd.f32 %v10282, %v10572
    %v10658 = vadd.f32 %v10283, %v10575
    %v10659 = vadd.f32 %v10284, %v10578
    %v10660 = vadd.f32 %v10285, %v10581
    %v10661 = vadd.f32 %v10286, %v10584
    %v10662 = vadd.f32 %v10287, %v10587
    %v10663 = vadd.f32 %v10288, %v10592
    %v10664 = vadd.f32 %v10289, %v10595
    %v10665 = vadd.f32 %v10290, %v10598
    %v10666 = vadd.f32 %v10291, %v10601
    %v10667 = vadd.f32 %v10292, %v10604
    %v10668 = vadd.f32 %v10293, %v10607
    %v10669 = vmul.f32 %v10639, 0.5
    %v10670 = vmul.f32 %v10640, 0.5
    %v10671 = vmul.f32 %v10641, 0.5
    %v10672 = vmul.f32 %v10642, 0.5
    %v10673 = vmul.f32 %v10643, 0.5
    %v10674 = vmul.f32 %v10644, 0.5
    %v10675 = vmul.f32 %v10645, 0.5
    %v10676 = vmul.f32 %v10646, 0.5
    %v10677 = vmul.f32 %v10647, 0.5
    %v10678 = vmul.f32 %v10648, 0.5
    %v10679 = vmul.f32 %v10649, 0.5
    %v10680 = vmul.f32 %v10650, 0.5
    %v10681 = vmul.f32 %v10651, 0.5
    %v10682 = vmul.f32 %v10652, 0.5
    %v10683 = vmul.f32 %v10653, 0.5
    %v10684 = vmul.f32 %v10654, 0.5
    %v10685 = vmul.f32 %v10655, 0.5
    %v10686 = vmul.f32 %v10656, 0.5
    %v10687 = vmul.f32 %v10657, 0.5
    %v10688 = vmul.f32 %v10658, 0.5
    %v10689 = vmul.f32 %v10659, 0.5
    %v10690 = vmul.f32 %v10660, 0.5
    %v10691 = vmul.f32 %v10661, 0.5
    %v10692 = vmul.f32 %v10662, 0.5
    %v10693 = vmul.f32 %v10663, 0.5
    %v10694 = vmul.f32 %v10664, 0.5
    %v10695 = vmul.f32 %v10665, 0.5
    %v10696 = vmul.f32 %v10666, 0.5
    %v10697 = vmul.f32 %v10667, 0.5
    %v10698 = vmul.f32 %v10668, 0.5
    %v10699 = vtanh.pop %v10669
    %v10700 = vtanh.pop %v10670
    %v10701 = vtanh.pop %v10671
    %v10702 = vtanh.pop %v10672
    %v10703 = vtanh.pop %v10673
    %v10704 = vtanh.pop %v10674
    %v10705 = vtanh.pop %v10675
    %v10706 = vtanh.pop %v10676
    %v10707 = vtanh.pop %v10677
    %v10708 = vtanh.pop %v10678
    %v10709 = vtanh.pop %v10679
    %v10710 = vtanh.pop %v10680
    %v10711 = vtanh.pop %v10681
    %v10712 = vtanh.pop %v10682
    %v10713 = vtanh.pop %v10683
    %v10714 = vtanh.pop %v10684
    %v10715 = vtanh.pop %v10685
    %v10716 = vtanh.pop %v10686
    %v10717 = vtanh.pop %v10687
    %v10718 = vtanh.pop %v10688
    %v10719 = vtanh.pop %v10689
    %v10720 = vtanh.pop %v10690
    %v10721 = vtanh.pop %v10691
    %v10722 = vtanh.pop %v10692
    %v10723 = vtanh.pop %v10693
    %v10724 = vtanh.pop %v10694
    %v10725 = vtanh.pop %v10695
    %v10726 = vtanh.pop %v10696
    %v10727 = vtanh.pop %v10697
    %v10728 = vtanh.pop %v10698
    %v10729 = vmul.f32 %v10699, 0.5
    %v10730 = vmul.f32 %v10700, 0.5
    %v10731 = vmul.f32 %v10701, 0.5
    %v10732 = vmul.f32 %v10702, 0.5
    %v10733 = vmul.f32 %v10703, 0.5
    %v10734 = vmul.f32 %v10704, 0.5
    %v10735 = vmul.f32 %v10705, 0.5
    %v10736 = vmul.f32 %v10706, 0.5
    %v10737 = vmul.f32 %v10707, 0.5
    %v10738 = vmul.f32 %v10708, 0.5
    %v10739 = vmul.f32 %v10709, 0.5
    %v10740 = vmul.f32 %v10710, 0.5
    %v10741 = vmul.f32 %v10711, 0.5
    %v10742 = vmul.f32 %v10712, 0.5
    %v10743 = vmul.f32 %v10713, 0.5
    %v10744 = vmul.f32 %v10714, 0.5
    %v10745 = vmul.f32 %v10715, 0.5
    %v10746 = vmul.f32 %v10716, 0.5
    %v10747 = vmul.f32 %v10717, 0.5
    %v10748 = vmul.f32 %v10718, 0.5
    %v10749 = vmul.f32 %v10719, 0.5
    %v10750 = vmul.f32 %v10720, 0.5
    %v10751 = vmul.f32 %v10721, 0.5
    %v10752 = vmul.f32 %v10722, 0.5
    %v10753 = vmul.f32 %v10723, 0.5
    %v10754 = vmul.f32 %v10724, 0.5
    %v10755 = vmul.f32 %v10725, 0.5
    %v10756 = vmul.f32 %v10726, 0.5
    %v10757 = vmul.f32 %v10727, 0.5
    %v10758 = vmul.f32 %v10728, 0.5
    %v10759 = vadd.f32 %v10729, 0.5
    %v10760 = vadd.f32 %v10730, 0.5
    %v10761 = vadd.f32 %v10731, 0.5
    %v10762 = vadd.f32 %v10732, 0.5
    %v10763 = vadd.f32 %v10733, 0.5
    %v10764 = vadd.f32 %v10734, 0.5
    %v10765 = vadd.f32 %v10735, 0.5
    %v10766 = vadd.f32 %v10736, 0.5
    %v10767 = vadd.f32 %v10737, 0.5
    %v10768 = vadd.f32 %v10738, 0.5
    %v10769 = vadd.f32 %v10739, 0.5
    %v10770 = vadd.f32 %v10740, 0.5
    %v10771 = vadd.f32 %v10741, 0.5
    %v10772 = vadd.f32 %v10742, 0.5
    %v10773 = vadd.f32 %v10743, 0.5
    %v10774 = vadd.f32 %v10744, 0.5
    %v10775 = vadd.f32 %v10745, 0.5
    %v10776 = vadd.f32 %v10746, 0.5
    %v10777 = vadd.f32 %v10747, 0.5
    %v10778 = vadd.f32 %v10748, 0.5
    %v10779 = vadd.f32 %v10749, 0.5
    %v10780 = vadd.f32 %v10750, 0.5
    %v10781 = vadd.f32 %v10751, 0.5
    %v10782 = vadd.f32 %v10752, 0.5
    %v10783 = vadd.f32 %v10753, 0.5
    %v10784 = vadd.f32 %v10754, 0.5
    %v10785 = vadd.f32 %v10755, 0.5
    %v10786 = vadd.f32 %v10756, 0.5
    %v10787 = vadd.f32 %v10757, 0.5
    %v10788 = vadd.f32 %v10758, 0.5
    %v10790 = vrot.slane %v10759, 2
    %v10792 = vadd.f32 %v10759, %v10790
    %v10794 = vrot.slane %v10762, 4
    %v10796 = vadd.f32 %v10792, %v10794
    %v10797 = vrot.slane %v10762, 6
    %v10799 = vadd.f32 %v10796, %v10797
    %vm10800 = vcmask 123904
    %10801 = vst.msk [vmem:[#allocation3] sm:$0x3] %vm10800, %v10799
    %v10803 = vrot.slane %v10763, 4
    %v10805 = vadd.f32 %v10792, %v10803
    %v10806 = vrot.slane %v10763, 6
    %v10808 = vadd.f32 %v10805, %v10806
    %10810 = vst.sshfl [vmem:[#allocation1] sm:$0xff pattern:$0x73625140] %v10808
    %s10811 = scalar_lea.vmem [#allocation1], 2
    %v10812 = vld [vmem:[%s10811] ss:$4 sm:$0xff]
    %10813 = vrot.lane.b32.xlu0 %v10812, 16
    %v10814 = vpop.permute.xlu0 %10813
    %vm10816 = vcmask 255104
    %10817 = vst.msk [vmem:[#allocation3] sm:$0x3] %vm10816, %v10814
    %v10819 = vrot.slane %v10760, 2
    %v10821 = vadd.f32 %v10760, %v10819
    %v10822 = vadd.f32 %v10821, %v10803
    %v10823 = vadd.f32 %v10822, %v10806
    %10825 = vrot.lane.b32.xlu0 %v10823, 32
    %v10826 = vpop.permute.xlu0 %10825
    %vm10828 = vcmask 386304
    %10829 = vst.msk [vmem:[#allocation3] sm:$0x3] %vm10828, %v10826
    %v10831 = vrot.slane %v10764, 4
    %v10833 = vadd.f32 %v10821, %v10831
    %v10834 = vrot.slane %v10764, 6
    %v10836 = vadd.f32 %v10833, %v10834
    %10838 = vst.sshfl [vmem:[#allocation1] sm:$0xff pattern:$0x73625140] %v10836
    %s10839 = scalar_lea.vmem [#allocation1], 2
    %v10840 = vld [vmem:[%s10839] ss:$4 sm:$0xff]
    %10841 = vrot.lane.b32.xlu0 %v10840, 48
    %v10842 = vpop.permute.xlu0 %10841
    %vm10844 = vcmask 517504
    %10845 = vst.msk [vmem:[#allocation3] sm:$0x3] %vm10844, %v10842
    %v10847 = vrot.slane %v10761, 2
    %v10849 = vadd.f32 %v10761, %v10847
    %v10850 = vadd.f32 %v10849, %v10831
    %v10851 = vadd.f32 %v10850, %v10834
    %10853 = vrot.lane.b32.xlu0 %v10851, 64
    %v10854 = vpop.permute.xlu0 %10853
    %vm10856 = vcmask 648704
    %10857 = vst.msk [vmem:[#allocation3] sm:$0x3] %vm10856, %v10854
    %v10859 = vrot.slane %v10765, 2
    %v10861 = vadd.f32 %v10765, %v10859
    %v10863 = vrot.slane %v10768, 4
    %v10865 = vadd.f32 %v10861, %v10863
    %v10866 = vrot.slane %v10768, 6
    %v10868 = vadd.f32 %v10865, %v10866
    %10870 = vrot.lane.b32.xlu0 %v10868, 80
    %v10871 = vpop.permute.xlu0 %10870
    %vm10873 = vcmask 779904
    %10874 = vst.msk [vmem:[#allocation3] sm:$0x3] %vm10873, %v10871
    %v10876 = vrot.slane %v10769, 4
    %v10878 = vadd.f32 %v10861, %v10876
    %v10879 = vrot.slane %v10769, 6
    %v10881 = vadd.f32 %v10878, %v10879
    %10883 = vst.sshfl [vmem:[#allocation1] sm:$0xff pattern:$0x73625140] %v10881
    %s10884 = scalar_lea.vmem [#allocation1], 2
    %v10885 = vld [vmem:[%s10884] ss:$4 sm:$0xff]
    %10886 = vrot.lane.b32.xlu0 %v10885, 96
    %v10887 = vpop.permute.xlu0 %10886
    %vm10889 = vcmask 911104
    %10890 = vst.msk [vmem:[#allocation3] sm:$0x3] %vm10889, %v10887
    %v10892 = vrot.slane %v10766, 2
    %v10894 = vadd.f32 %v10766, %v10892
    %v10895 = vadd.f32 %v10894, %v10876
    %v10896 = vadd.f32 %v10895, %v10879
    %10898 = vrot.lane.b32.xlu0 %v10896, 112
    %v10899 = vpop.permute.xlu0 %10898
    %vm10901 = vcmask 1042304
    %10902 = vst.msk [vmem:[#allocation3] sm:$0x3] %vm10901, %v10899
    %v10904 = vrot.slane %v10770, 4
    %v10906 = vadd.f32 %v10894, %v10904
    %v10907 = vrot.slane %v10770, 6
    %v10909 = vadd.f32 %v10906, %v10907
    %10911 = vst.sshfl [vmem:[#allocation1] sm:$0xff pattern:$0x73625140] %v10909
    %s10912 = scalar_lea.vmem [#allocation1], 2
    %v10913 = vld [vmem:[%s10912] ss:$4 sm:$0xff]
    %10915 = vst.msk [vmem:[#allocation3 + $0x2] sm:$0x3] %vm10800, %v10913
    %v10917 = vrot.slane %v10767, 2
    %v10919 = vadd.f32 %v10767, %v10917
    %v10920 = vadd.f32 %v10919, %v10904
    %v10921 = vadd.f32 %v10920, %v10907
    %10923 = vrot.lane.b32.xlu0 %v10921, 16
    %v10924 = vpop.permute.xlu0 %10923
    %10926 = vst.msk [vmem:[#allocation3 + $0x2] sm:$0x3] %vm10816, %v10924
    %v10928 = vrot.slane %v10771, 2
    %v10930 = vadd.f32 %v10771, %v10928
    %v10932 = vrot.slane %v10774, 4
    %v10934 = vadd.f32 %v10930, %v10932
    %v10935 = vrot.slane %v10774, 6
    %v10937 = vadd.f32 %v10934, %v10935
    %10939 = vrot.lane.b32.xlu0 %v10937, 32
    %v10940 = vpop.permute.xlu0 %10939
    %10942 = vst.msk [vmem:[#allocation3 + $0x2] sm:$0x3] %vm10828, %v10940
    %v10944 = vrot.slane %v10775, 4
    %v10946 = vadd.f32 %v10930, %v10944
    %v10947 = vrot.slane %v10775, 6
    %v10949 = vadd.f32 %v10946, %v10947
    %10951 = vst.sshfl [vmem:[#allocation1] sm:$0xff pattern:$0x73625140] %v10949
    %s10952 = scalar_lea.vmem [#allocation1], 2
    %v10953 = vld [vmem:[%s10952] ss:$4 sm:$0xff]
    %10954 = vrot.lane.b32.xlu0 %v10953, 48
    %v10955 = vpop.permute.xlu0 %10954
    %10957 = vst.msk [vmem:[#allocation3 + $0x2] sm:$0x3] %vm10844, %v10955
    %v10959 = vrot.slane %v10772, 2
    %v10961 = vadd.f32 %v10772, %v10959
    %v10962 = vadd.f32 %v10961, %v10944
    %v10963 = vadd.f32 %v10962, %v10947
    %10965 = vrot.lane.b32.xlu0 %v10963, 64
    %v10966 = vpop.permute.xlu0 %10965
    %10968 = vst.msk [vmem:[#allocation3 + $0x2] sm:$0x3] %vm10856, %v10966
    %v10970 = vrot.slane %v10776, 4
    %v10972 = vadd.f32 %v10961, %v10970
    %v10973 = vrot.slane %v10776, 6
    %v10975 = vadd.f32 %v10972, %v10973
    %10977 = vst.sshfl [vmem:[#allocation1] sm:$0xff pattern:$0x73625140] %v10975
    %s10978 = scalar_lea.vmem [#allocation1], 2
    %v10979 = vld [vmem:[%s10978] ss:$4 sm:$0xff]
    %10980 = vrot.lane.b32.xlu0 %v10979, 80
    %v10981 = vpop.permute.xlu0 %10980
    %10983 = vst.msk [vmem:[#allocation3 + $0x2] sm:$0x3] %vm10873, %v10981
    %v10985 = vrot.slane %v10773, 2
    %v10987 = vadd.f32 %v10773, %v10985
    %v10988 = vadd.f32 %v10987, %v10970
    %v10989 = vadd.f32 %v10988, %v10973
    %10991 = vrot.lane.b32.xlu0 %v10989, 96
    %v10992 = vpop.permute.xlu0 %10991
    %10994 = vst.msk [vmem:[#allocation3 + $0x2] sm:$0x3] %vm10889, %v10992
    %v10996 = vrot.slane %v10777, 2
    %v10998 = vadd.f32 %v10777, %v10996
    %v11000 = vrot.slane %v10780, 4
    %v11002 = vadd.f32 %v10998, %v11000
    %v11003 = vrot.slane %v10780, 6
    %v11005 = vadd.f32 %v11002, %v11003
    %11007 = vrot.lane.b32.xlu0 %v11005, 112
    %v11008 = vpop.permute.xlu0 %11007
    %11010 = vst.msk [vmem:[#allocation3 + $0x2] sm:$0x3] %vm10901, %v11008
    %v11012 = vrot.slane %v10781, 4
    %v11014 = vadd.f32 %v10998, %v11012
    %v11015 = vrot.slane %v10781, 6
    %v11017 = vadd.f32 %v11014, %v11015
    %11019 = vst.sshfl [vmem:[#allocation1] sm:$0xff pattern:$0x73625140] %v11017
    %s11020 = scalar_lea.vmem [#allocation1], 2
    %v11021 = vld [vmem:[%s11020] ss:$4 sm:$0xff]
    %11023 = vst.msk [vmem:[#allocation3 + $0x4] sm:$0x3] %vm10800, %v11021
    %v11025 = vrot.slane %v10778, 2
    %v11027 = vadd.f32 %v10778, %v11025
    %v11028 = vadd.f32 %v11027, %v11012
    %v11029 = vadd.f32 %v11028, %v11015
    %11031 = vrot.lane.b32.xlu0 %v11029, 16
    %v11032 = vpop.permute.xlu0 %11031
    %11034 = vst.msk [vmem:[#allocation3 + $0x4] sm:$0x3] %vm10816, %v11032
    %v11036 = vrot.slane %v10782, 4
    %v11038 = vadd.f32 %v11027, %v11036
    %v11039 = vrot.slane %v10782, 6
    %v11041 = vadd.f32 %v11038, %v11039
    %11043 = vst.sshfl [vmem:[#allocation1] sm:$0xff pattern:$0x73625140] %v11041
    %s11044 = scalar_lea.vmem [#allocation1], 2
    %v11045 = vld [vmem:[%s11044] ss:$4 sm:$0xff]
    %11046 = vrot.lane.b32.xlu0 %v11045, 32
    %v11047 = vpop.permute.xlu0 %11046
    %11049 = vst.msk [vmem:[#allocation3 + $0x4] sm:$0x3] %vm10828, %v11047
    %v11051 = vrot.slane %v10779, 2
    %v11053 = vadd.f32 %v10779, %v11051
    %v11054 = vadd.f32 %v11053, %v11036
    %v11055 = vadd.f32 %v11054, %v11039
    %11057 = vrot.lane.b32.xlu0 %v11055, 48
    %v11058 = vpop.permute.xlu0 %11057
    %11060 = vst.msk [vmem:[#allocation3 + $0x4] sm:$0x3] %vm10844, %v11058
    %v11062 = vrot.slane %v10783, 2
    %v11064 = vadd.f32 %v10783, %v11062
    %v11066 = vrot.slane %v10786, 4
    %v11068 = vadd.f32 %v11064, %v11066
    %v11069 = vrot.slane %v10786, 6
    %v11071 = vadd.f32 %v11068, %v11069
    %11073 = vrot.lane.b32.xlu0 %v11071, 64
    %v11074 = vpop.permute.xlu0 %11073
    %11076 = vst.msk [vmem:[#allocation3 + $0x4] sm:$0x3] %vm10856, %v11074
    %v11078 = vrot.slane %v10787, 4
    %v11080 = vadd.f32 %v11064, %v11078
    %v11081 = vrot.slane %v10787, 6
    %v11083 = vadd.f32 %v11080, %v11081
    %11085 = vst.sshfl [vmem:[#allocation1] sm:$0xff pattern:$0x73625140] %v11083
    %s11086 = scalar_lea.vmem [#allocation1], 2
    %v11087 = vld [vmem:[%s11086] ss:$4 sm:$0xff]
    %11088 = vrot.lane.b32.xlu0 %v11087, 80
    %v11089 = vpop.permute.xlu0 %11088
    %11091 = vst.msk [vmem:[#allocation3 + $0x4] sm:$0x3] %vm10873, %v11089
    %v11093 = vrot.slane %v10784, 2
    %v11095 = vadd.f32 %v10784, %v11093
    %v11096 = vadd.f32 %v11095, %v11078
    %v11097 = vadd.f32 %v11096, %v11081
    %11099 = vrot.lane.b32.xlu0 %v11097, 96
    %v11100 = vpop.permute.xlu0 %11099
    %11102 = vst.msk [vmem:[#allocation3 + $0x4] sm:$0x3] %vm10889, %v11100
    %v11104 = vrot.slane %v10788, 4
    %v11106 = vadd.f32 %v11095, %v11104
    %v11107 = vrot.slane %v10788, 6
    %v11109 = vadd.f32 %v11106, %v11107
    %11111 = vst.sshfl [vmem:[#allocation1] sm:$0xff pattern:$0x73625140] %v11109
    %s11112 = scalar_lea.vmem [#allocation1], 2
    %v11113 = vld [vmem:[%s11112] ss:$4 sm:$0xff]
    %11114 = vrot.lane.b32.xlu0 %v11113, 112
    %v11115 = vpop.permute.xlu0 %11114
    %11117 = vst.msk [vmem:[#allocation3 + $0x4] sm:$0x3] %vm10901, %v11115
    %v11119 = vrot.slane %v10785, 2
    %v11121 = vadd.f32 %v10785, %v11119
    %v11122 = vadd.f32 %v11121, %v11104
    %v11123 = vadd.f32 %v11122, %v11107
    %11124 = vst.msk [vmem:[#allocation3 + $0x6] sm:$0x3] %vm10800, %v11123
    %v11125 = vld [vmem:[#allocation3] sm:$0xff]
    %v11126 = vld [vmem:[%s5] sm:$0xff]
    %v11127 = vld [vmem:[%s5 + $0x8] sm:$0xff]
    %v11128 = vld [vmem:[%s5 + $0x10] sm:$0xff]
    %v11129 = vld [vmem:[%s5 + $0x18] sm:$0xff]
    %v11130 = vld [vmem:[%s5 + $0x20] sm:$0xff]
    %v11131 = vld [vmem:[%s5 + $0x28] sm:$0xff]
    %v11132 = vld [vmem:[%s5 + $0x30] sm:$0xff]
    %v11133 = vld [vmem:[%s5 + $0x38] sm:$0xff]
    %v11134 = vld [vmem:[%s5 + $0x40] sm:$0xff]
    %v11135 = vld [vmem:[%s5 + $0x48] sm:$0xff]
    %v11136 = vld [vmem:[%s5 + $0x50] sm:$0xff]
    %v11137 = vld [vmem:[%s5 + $0x58] sm:$0xff]
    %v11138 = vld [vmem:[%s5 + $0x60] sm:$0xff]
    %v11139 = vld [vmem:[%s5 + $0x68] sm:$0xff]
    %v11140 = vld [vmem:[%s5 + $0x70] sm:$0xff]
    %v11141 = vld [vmem:[%s5 + $0x78] sm:$0xff]
    %v11142 = vld [vmem:[%s5 + $0x80] sm:$0xff]
    %v11143 = vld [vmem:[%s5 + $0x88] sm:$0xff]
    %v11144 = vld [vmem:[%s5 + $0x90] sm:$0xff]
    %v11145 = vld [vmem:[%s5 + $0x98] sm:$0xff]
    %v11146 = vld [vmem:[%s5 + $0xa0] sm:$0xff]
    %v11147 = vld [vmem:[%s5 + $0xa8] sm:$0xff]
    %v11148 = vld [vmem:[%s5 + $0xb0] sm:$0xff]
    %v11149 = vld [vmem:[%s5 + $0xb8] sm:$0xff]
    %v11150 = vld [vmem:[%s5 + $0xc0] sm:$0xff]
    %v11151 = vld [vmem:[%s5 + $0xc8] sm:$0xff]
    %v11152 = vld [vmem:[%s5 + $0xd0] sm:$0xff]
    %v11153 = vld [vmem:[%s5 + $0xd8] sm:$0xff]
    %v11154 = vld [vmem:[%s5 + $0xe0] sm:$0xff]
    %v11155 = vld [vmem:[%s5 + $0xe8] sm:$0xff]
    %v11156 = vld [vmem:[%s5 + $0xf0] sm:$0xff]
    %v11157 = vld [vmem:[%s5 + $0xf8] sm:$0xff]
    %v11158 = vld [vmem:[%s5 + $0x100] sm:$0xff]
    %v11159 = vld [vmem:[%s5 + $0x108] sm:$0xff]
    %v11160 = vld [vmem:[%s5 + $0x110] sm:$0xff]
    %v11161 = vld [vmem:[%s5 + $0x118] sm:$0xff]
    %v11162 = vld [vmem:[%s5 + $0x120] sm:$0xff]
    %v11163 = vld [vmem:[%s5 + $0x128] sm:$0xff]
    %v11164 = vld [vmem:[%s5 + $0x130] sm:$0xff]
    %v11165 = vld [vmem:[%s5 + $0x138] sm:$0xff]
    %v11166 = vld [vmem:[%s5 + $0x140] sm:$0xff]
    %v11167 = vld [vmem:[%s5 + $0x148] sm:$0xff]
    %v11168 = vld [vmem:[%s5 + $0x150] sm:$0xff]
    %v11169 = vld [vmem:[%s5 + $0x158] sm:$0xff]
    %v11170 = vld [vmem:[%s5 + $0x160] sm:$0xff]
    %v11171 = vld [vmem:[%s5 + $0x168] sm:$0xff]
    %v11172 = vld [vmem:[%s5 + $0x170] sm:$0xff]
    %v11173 = vld [vmem:[%s5 + $0x178] sm:$0xff]
    %v11174 = vld [vmem:[%s5 + $0x180] sm:$0xff]
    %v11175 = vld [vmem:[%s5 + $0x188] sm:$0xff]
    %v11176 = vld [vmem:[%s6] sm:$0x1]
    %v11178 = vperm.slane %v11176, 0
    %11181 = vst [vmem:[#allocation1] ss:$4 sm:$0xff] %v11125
    %v11182 = vld.sshfl [vmem:[#allocation1] sm:$0xff pattern:$0x73625140]
    %v11183 = vld.sshfl [vmem:[#allocation1 + $0x8] sm:$0xff pattern:$0x73625140]
    %v11184 = vld.sshfl [vmem:[#allocation1 + $0x10] sm:$0xff pattern:$0x73625140]
    %v11185 = vld.sshfl [vmem:[#allocation1 + $0x18] sm:$0xff pattern:$0x73625140]
    %vm11189 = vcmask 130048
    %v11190 = vsel %vm11189, %v11185, 0
    %11192 = vmatpush.msra.mxu0 %v11141
    %11193 = vmatpush.msra.mxu0 %v11140
    %11194 = vmatpush.msra.mxu0 %v11139
    %11195 = vmatpush.msra.mxu0 %v11138
    %11196 = vmatpush.msra.mxu0 %v11137
    %11197 = vmatpush.msra.mxu0 %v11136
    %11198 = vmatpush.msra.mxu0 %v11135
    %11199 = vmatpush.msra.mxu0 %v11134
    %11200 = vmatpush.msra.mxu0 %v11133
    %11201 = vmatpush.msra.mxu0 %v11132
    %11202 = vmatpush.msra.mxu0 %v11131
    %11203 = vmatpush.msra.mxu0 %v11130
    %11204 = vmatpush.msra.mxu0 %v11129
    %11205 = vmatpush.msra.mxu0 %v11128
    %11206 = vmatpush.msra.mxu0 %v11127
    %11207 = vmatpush.msra.mxu0 %v11126
    %11208 = vmatmul.f32.gmra.mxu0 %v11182
    %v11209 = vpop.f32.mrf.mxu0
    %v11210 = vadd.f32 %v11178, %v11209
    %11211 = vdwg.mxu0
    %11212 = vmatpush.msra.mxu0 %v11157
    %11213 = vmatpush.msra.mxu0 %v11156
    %11214 = vmatpush.msra.mxu0 %v11155
    %11215 = vmatpush.msra.mxu0 %v11154
    %11216 = vmatpush.msra.mxu0 %v11153
    %11217 = vmatpush.msra.mxu0 %v11152
    %11218 = vmatpush.msra.mxu0 %v11151
    %11219 = vmatpush.msra.mxu0 %v11150
    %11220 = vmatpush.msra.mxu0 %v11149
    %11221 = vmatpush.msra.mxu0 %v11148
    %11222 = vmatpush.msra.mxu0 %v11147
    %11223 = vmatpush.msra.mxu0 %v11146
    %11224 = vmatpush.msra.mxu0 %v11145
    %11225 = vmatpush.msra.mxu0 %v11144
    %11226 = vmatpush.msra.mxu0 %v11143
    %11227 = vmatpush.msra.mxu0 %v11142
    %11228 = vmatmul.f32.gmra.mxu0 %v11183
    %v11229 = vpop.f32.mrf.mxu0
    %v11230 = vadd.f32 %v11210, %v11229
    %11231 = vdwg.mxu0
    %11232 = vmatpush.msra.mxu0 %v11173
    %11233 = vmatpush.msra.mxu0 %v11172
    %11234 = vmatpush.msra.mxu0 %v11171
    %11235 = vmatpush.msra.mxu0 %v11170
    %11236 = vmatpush.msra.mxu0 %v11169
    %11237 = vmatpush.msra.mxu0 %v11168
    %11238 = vmatpush.msra.mxu0 %v11167
    %11239 = vmatpush.msra.mxu0 %v11166
    %11240 = vmatpush.msra.mxu0 %v11165
    %11241 = vmatpush.msra.mxu0 %v11164
    %11242 = vmatpush.msra.mxu0 %v11163
    %11243 = vmatpush.msra.mxu0 %v11162
    %11244 = vmatpush.msra.mxu0 %v11161
    %11245 = vmatpush.msra.mxu0 %v11160
    %11246 = vmatpush.msra.mxu0 %v11159
    %11247 = vmatpush.msra.mxu0 %v11158
    %11248 = vmatmul.f32.gmra.mxu0 %v11184
    %v11249 = vpop.f32.mrf.mxu0
    %v11250 = vadd.f32 %v11230, %v11249
    %11251 = vdwg.mxu0
    %11252 = vmatpush.msra.mxu0 0.0
    %11253 = vmatpush.msra.mxu0 0.0
    %11254 = vmatpush.msra.mxu0 0.0
    %11255 = vmatpush.msra.mxu0 0.0
    %11256 = vmatpush.msra.mxu0 0.0
    %11257 = vmatpush.msra.mxu0 0.0
    %11258 = vmatpush.msra.mxu0 0.0
    %11259 = vmatpush.msra.mxu0 0.0
    %11260 = vmatpush.msra.mxu0 0.0
    %11261 = vmatpush.msra.mxu0 0.0
    %11262 = vmatpush.msra.mxu0 0.0
    %11263 = vmatpush.msra.mxu0 0.0
    %11264 = vmatpush.msra.mxu0 0.0
    %11265 = vmatpush.msra.mxu0 0.0
    %11266 = vmatpush.msra.mxu0 %v11175
    %11267 = vmatpush.msra.mxu0 %v11174
    %11268 = vmatmul.f32.gmra.mxu0 %v11190
    %v11269 = vpop.f32.mrf.mxu0
    %v11270 = vadd.f32 %v11250, %v11269
    %11271 = vdwg.mxu0
    %v11272 = vmul.f32 %v11270, 0.5
    %v11273 = vtanh.pop %v11272
    %v11274 = vmul.f32 %v11273, 0.5
    %v11275 = vadd.f32 %v11274, 0.5
    %v11276 = vld [vmem:[%s7] sm:$0xff]
    %v11277 = vld [vmem:[%s7 + $0x8] sm:$0xff]
    %v11278 = vld [vmem:[%s7 + $0x10] sm:$0xff]
    %v11279 = vld [vmem:[%s7 + $0x18] sm:$0xff]
    %v11280 = vld [vmem:[%s7 + $0x20] sm:$0xff]
    %v11281 = vld [vmem:[%s7 + $0x28] sm:$0xff]
    %v11282 = vld [vmem:[%s7 + $0x30] sm:$0xff]
    %v11283 = vld [vmem:[%s7 + $0x38] sm:$0xff]
    %v11284 = vld [vmem:[%s7 + $0x40] sm:$0xff]
    %v11285 = vld [vmem:[%s7 + $0x48] sm:$0xff]
    %v11286 = vld [vmem:[%s7 + $0x50] sm:$0xff]
    %v11287 = vld [vmem:[%s7 + $0x58] sm:$0xff]
    %v11288 = vld [vmem:[%s7 + $0x60] sm:$0xff]
    %v11289 = vld [vmem:[%s7 + $0x68] sm:$0xff]
    %v11290 = vld [vmem:[%s7 + $0x70] sm:$0xff]
    %v11291 = vld [vmem:[%s8] sm:$0x1]
    %v11293 = vperm.slane %v11291, 0
    %vm11295 = vcmask 982016
    %v11297 = vsel %vm11295, %v11275, 0
    %11299 = vmatpush.msra.mxu0 0.0
    %11300 = vmatpush.msra.mxu0 %v11290
    %11301 = vmatpush.msra.mxu0 %v11289
    %11302 = vmatpush.msra.mxu0 %v11288
    %11303 = vmatpush.msra.mxu0 %v11287
    %11304 = vmatpush.msra.mxu0 %v11286
    %11305 = vmatpush.msra.mxu0 %v11285
    %11306 = vmatpush.msra.mxu0 %v11284
    %11307 = vmatpush.msra.mxu0 %v11283
    %11308 = vmatpush.msra.mxu0 %v11282
    %11309 = vmatpush.msra.mxu0 %v11281
    %11310 = vmatpush.msra.mxu0 %v11280
    %11311 = vmatpush.msra.mxu0 %v11279
    %11312 = vmatpush.msra.mxu0 %v11278
    %11313 = vmatpush.msra.mxu0 %v11277
    %11314 = vmatpush.msra.mxu0 %v11276
    %11315 = vmatmul.f32.gmra.mxu0 %v11297
    %v11316 = vpop.f32.mrf.mxu0
    %v11317 = vadd.f32 %v11293, %v11316
    %11318 = vdwg.mxu0
    %v11319 = vmul.f32 %v11317, 0.5
    %v11320 = vtanh.pop %v11319
    %v11321 = vmul.f32 %v11320, 0.5
    %v11322 = vadd.f32 %v11321, 0.5
    %v11323 = vld [vmem:[%s9] sm:$0xff]
    %v11324 = vld [vmem:[%s9 + $0x8] sm:$0xff]
    %v11325 = vld [vmem:[%s9 + $0x10] sm:$0xff]
    %v11326 = vld [vmem:[%s9 + $0x18] sm:$0xff]
    %v11327 = vld [vmem:[%s9 + $0x20] sm:$0xff]
    %v11328 = vld [vmem:[%s9 + $0x28] sm:$0xff]
    %v11329 = vld [vmem:[%s9 + $0x30] sm:$0xff]
    %v11330 = vld [vmem:[%s9 + $0x38] sm:$0xff]
    %v11331 = vld [vmem:[%s9 + $0x40] sm:$0xff]
    %v11332 = vld [vmem:[%s9 + $0x48] sm:$0xff]
    %v11333 = vld [vmem:[%s9 + $0x50] sm:$0xf]
    %v11334 = vld [vmem:[%s10] sm:$0x1]
    %v11336 = vperm.slane %v11334, 0
    %vm11338 = vcmask 687104
    %v11340 = vsel %vm11338, %v11322, 0
    %v11343 = vsel %vm253, %v11333, 0
    %11345 = vmatpush.msra.mxu0 0.0
    %11346 = vmatpush.msra.mxu0 0.0
    %11347 = vmatpush.msra.mxu0 0.0
    %11348 = vmatpush.msra.mxu0 0.0
    %11349 = vmatpush.msra.mxu0 0.0
    %11350 = vmatpush.msra.mxu0 %v11343
    %11351 = vmatpush.msra.mxu0 %v11332
    %11352 = vmatpush.msra.mxu0 %v11331
    %11353 = vmatpush.msra.mxu0 %v11330
    %11354 = vmatpush.msra.mxu0 %v11329
    %11355 = vmatpush.msra.mxu0 %v11328
    %11356 = vmatpush.msra.mxu0 %v11327
    %11357 = vmatpush.msra.mxu0 %v11326
    %11358 = vmatpush.msra.mxu0 %v11325
    %11359 = vmatpush.msra.mxu0 %v11324
    %11360 = vmatpush.msra.mxu0 %v11323
    %11361 = vmatmul.f32.gmra.mxu0 %v11340
    %v11362 = vpop.f32.mrf.mxu0
    %v11363 = vadd.f32 %v11336, %v11362
    %11364 = vdwg.mxu0
    %vm11365 = vcmask 74752
    %11366 = vst.msk [vmem:[#allocation4] sm:$0x3] %vm11365, %v11363
    // Predicated region
    $region46: #{lenet_forward.1} parent=1 // pred_check
      _
    $region47: #{lenet_forward.1} parent=1 // pred_check_branch
      %11368 = sbr.rel (0) target = $region49
    $region48: #{lenet_forward.1} parent=1 // pred_region
      %11370 = vsyncadd [#allocation5], 0
      %s11372 = sshll.u32 [#allocation4], 4
      %s11373 = int_to_ptr.vmem [resolvable:$true] %s11372
      %s11374 = sshll.u32 %s11, 4
      %s11375 = int_to_ptr.hbm [resolvable:$true] %s11374
      %11377 = dma.vmem_to_hbm [thread:$0]  %s11373, 32, %s11375, [#allocation5]
    $region49: #{lenet_forward.1} parent=1 // pred_fallthru
      _
    // Predicated region
    $region50: #{lenet_forward.1} parent=1 // pred_check
      _
    $region51: #{lenet_forward.1} parent=1 // pred_check_branch
      %11379 = sbr.rel (0) target = $region53
    $region52: #{lenet_forward.1} parent=1 // pred_region
      %11381 = dma.done [#allocation5], 32
    $region53: #{lenet_forward.1} parent=1 // pred_fallthru
      _
    %11382 = vsyncpa [#allocation5], 1

</llo_original>
